<compile_context>
chip_gen: v6e
topology: v6e:2x2x1
jax: 0.10.0
libtpu: 0.0.40
codegen_flags: <defaults>
</compile_context>

<pallas_src>
import math

import jax
import jax.numpy as jnp
from jax import lax
from jax.experimental import pallas as pl
from jax.experimental.pallas import tpu as pltpu


# ------------------------------ fused kernel -------------------------------


def _unet_fused_kernel(x_ref, sincos_ref, w_time_ref, b_time_ref,
                       w1_ref, b1_ref, w2_ref, b2_ref,
                       w3_ref, b3_ref, w4_ref, b4_ref,
                       wout_ref, bout_ref, up_ref,
                       o_ref,
                       pad1, pad2, pad3, pad4, x2img):
    f32 = jnp.float32
    bf16 = jnp.bfloat16
    H, W, Cin = x_ref.shape
    C = w1_ref.shape[1]
    H2, W2 = H // 2, W // 2

    def conv3x3_relu(pad_ref, x_img, w_ref, b_ref, add=None):
        # pad_ref: (h+2, w+2, cin) VMEM scratch; x_img: (h, w, cin) value.
        hp, wp, cin = pad_ref.shape
        h, w = hp - 2, wp - 2
        # Halo handling entirely in VMEM: zero the pad buffer, write interior.
        pad_ref[...] = jnp.zeros(pad_ref.shape, pad_ref.dtype)
        pad_ref[1:h + 1, 1:w + 1, :] = x_img.astype(pad_ref.dtype)
        # im2col: 9 shifted views -> one lane-concat -> a single MXU matmul
        # with K = 9*cin (instead of 9 tiny K=cin matmuls).
        cols = []
        for ky in range(3):
            for kx in range(3):
                cols.append(pad_ref[ky:ky + h, kx:kx + w, :]
                            .reshape(h * w, cin).astype(bf16))
        patches = jnp.concatenate(cols, axis=-1)               # (h*w, 9*cin) bf16
        y = jnp.dot(patches, w_ref[...], preferred_element_type=f32)
        y = y + b_ref[...]                                     # f32 epilogue
        if add is not None:
            y = y + add
        return jnp.maximum(y, 0.0)                             # (h*w, cout) f32

    # --- time-embedding MLP: Linear + ReLU (t_emb has dim == base channels) ---
    temb = jnp.dot(sincos_ref[...].astype(bf16), w_time_ref[...],
                   preferred_element_type=f32) + b_time_ref[...]
    temb = jnp.maximum(temb, 0.0)                              # (1, C)

    # --- encoder ---
    x1 = conv3x3_relu(pad1, x_ref[...], w1_ref, b1_ref, add=temb)       # (H*W, C)
    x2 = conv3x3_relu(pad2, x1.reshape(H, W, C), w2_ref, b2_ref)        # (H*W, C)

    # --- fused 2x2 max pool (stride 2): x2 never leaves VMEM ---
    x2img[...] = x2.reshape(H, W, C)
    p00 = x2img[pl.ds(0, H2, 2), pl.ds(0, W2, 2), :]
    p01 = x2img[pl.ds(0, H2, 2), pl.ds(1, W2, 2), :]
    p10 = x2img[pl.ds(1, H2, 2), pl.ds(0, W2, 2), :]
    p11 = x2img[pl.ds(1, H2, 2), pl.ds(1, W2, 2), :]
    x3 = jnp.maximum(jnp.maximum(p00, p01), jnp.maximum(p10, p11))      # (H2, W2, C)

    # --- bottleneck conv (2C channels) ---
    # TODO(synk): the PyTorch code adds a (B, time_emb_dim, 1, 1) embedding to a
    # 2*base_channels tensor here (a broadcast error for any valid config); we
    # tile the embedding across the doubled channel axis as the nearest semantics.
    temb2 = jnp.concatenate([temb, temb], axis=-1)                      # (1, 2C)
    x4 = conv3x3_relu(pad3, x3, w3_ref, b3_ref, add=temb2)              # (H2*W2, 2C)

    # --- bilinear x2 upsample (precomputed matrix) fused with the skip add ---
    x5 = jnp.dot(up_ref[...], x4.astype(bf16),
                 preferred_element_type=f32)                            # (H*W, 2C)
    # TODO(synk): `x5 + x2` in PyTorch mixes 2*base with base channels (also a
    # broadcast error); we tile x2 along channels before adding.
    skip = jnp.concatenate([x2, x2], axis=-1)                           # (H*W, 2C)
    x5p = x5 + skip

    # --- decoder conv ---
    x6 = conv3x3_relu(pad4, x5p.reshape(H, W, 2 * C), w4_ref, b4_ref)   # (H*W, C)

    # --- 1x1 output conv, channels-major: out^T = W_out^T @ x6^T ---
    # Lane-dense (C_img, H*W) store; makes the NCHW output layout a free reshape.
    out_t = lax.dot_general(wout_ref[...], x6.astype(bf16),
                            (((1,), (1,)), ((), ())),
                            preferred_element_type=f32)                 # (C_img, H*W)
    o_ref[...] = (out_t + bout_ref[...]).astype(o_ref.dtype)


# ------------------------------- UNet forward ------------------------------


def _sinusoidal_emb(t, dim):
    half = dim // 2
    scale = math.log(10000.0) / (half - 1)
    freqs = jnp.exp(jnp.arange(half, dtype=jnp.float32) * -scale)
    emb = t[:, None] * freqs[None, :]
    return jnp.concatenate([jnp.sin(emb), jnp.cos(emb)], axis=1)        # (B, dim)


def _bilinear_matrix(in_size, out_size):
    # Reproduces PyTorch bilinear upsampling (align_corners=False).
    o = jnp.arange(out_size, dtype=jnp.float32)
    src = jnp.maximum((o + 0.5) * (in_size / out_size) - 0.5, 0.0)
    i0 = jnp.minimum(jnp.floor(src).astype(jnp.int32), in_size - 1)
    lam = src - i0.astype(jnp.float32)
    i1 = jnp.minimum(i0 + 1, in_size - 1)
    m = jnp.zeros((out_size, in_size), jnp.float32)
    rows = jnp.arange(out_size)
    m = m.at[rows, i0].add(1.0 - lam)
    m = m.at[rows, i1].add(lam)
    return m


def unet_forward(params, x_nchw, t):
    B, Cimg, H, W = x_nchw.shape
    C = params["w1"].shape[-1]
    tdim = params["w_time"].shape[0]
    H2, W2 = H // 2, W // 2
    bf16 = jnp.bfloat16

    x_nhwc = jnp.transpose(x_nchw, (0, 2, 3, 1)).astype(jnp.float32)    # NCHW -> NHWC
    sincos = _sinusoidal_emb(t.astype(jnp.float32), tdim)[:, None, :]   # (B, 1, tdim)

    # Kernel-side parameter layouts: bf16 matmul operands, f32 biases,
    # 3x3 weights flattened to (9*Cin, Cout) for the im2col matmul.
    w_time = params["w_time"].astype(bf16)
    w1 = params["w1"].astype(bf16).reshape(9 * Cimg, C)
    w2 = params["w2"].astype(bf16).reshape(9 * C, C)
    w3 = params["w3"].astype(bf16).reshape(9 * C, 2 * C)
    w4 = params["w4"].astype(bf16).reshape(9 * 2 * C, C)
    wout_t = params["w_out"].astype(bf16).T                             # (Cimg, C)
    bout = params["b_out"].reshape(Cimg, 1)

    # Bilinear x2 upsample as one (H*W, H2*W2) matrix (exact in bf16).
    # TODO(synk): at larger resolutions replace with separable Mh/Mw matmuls.
    up = jnp.kron(_bilinear_matrix(H2, H), _bilinear_matrix(W2, W)).astype(bf16)

    def full(shape):
        return pl.BlockSpec(shape, lambda b, _n=len(shape): (0,) * _n)

    out = pl.pallas_call(
        _unet_fused_kernel,
        grid=(B,),
        in_specs=[
            pl.BlockSpec((None, H, W, Cimg), lambda b: (b, 0, 0, 0)),   # x
            pl.BlockSpec((None, 1, tdim), lambda b: (b, 0, 0)),         # sincos
            full((tdim, tdim)), full((1, tdim)),                        # time MLP
            full((9 * Cimg, C)), full((1, C)),                          # conv1
            full((9 * C, C)), full((1, C)),                             # conv2
            full((9 * C, 2 * C)), full((1, 2 * C)),                     # conv3
            full((9 * 2 * C, C)), full((1, C)),                         # conv4
            full((Cimg, C)), full((Cimg, 1)),                           # 1x1 out
            full((H * W, H2 * W2)),                                     # upsample
        ],
        out_specs=pl.BlockSpec((None, Cimg, H * W), lambda b: (b, 0, 0)),
        out_shape=jax.ShapeDtypeStruct((B, Cimg, H * W), jnp.float32),
        scratch_shapes=[
            pltpu.VMEM((H + 2, W + 2, Cimg), jnp.float32),   # pad1
            pltpu.VMEM((H + 2, W + 2, C), jnp.float32),      # pad2
            pltpu.VMEM((H2 + 2, W2 + 2, C), jnp.float32),    # pad3
            pltpu.VMEM((H + 2, W + 2, 2 * C), jnp.float32),  # pad4
            pltpu.VMEM((H, W, C), jnp.float32),              # x2 image (pool)
        ],
        compiler_params=pltpu.CompilerParams(dimension_semantics=("parallel",)),
    )(x_nhwc, sincos, w_time, params["b_time"],
      w1, params["b1"], w2, params["b2"], w3, params["b3"], w4, params["b4"],
      wout_t, bout, up)

    return out.reshape(B, Cimg, H, W)                                   # already NCHW


# ------------------------- pure-JAX reference (check) -----------------------


def reference_forward(params, x_nchw, t):
    f32 = lambda a: a.astype(jnp.float32)
    x = jnp.transpose(x_nchw, (0, 2, 3, 1)).astype(jnp.float32)
    tdim = params["w_time"].shape[0]
    sincos = _sinusoidal_emb(t.astype(jnp.float32), tdim)
    t_emb = jax.nn.relu(sincos @ f32(params["w_time"]) + params["b_time"])

    def conv(xx, w9, bias):
        k = f32(w9).reshape(3, 3, w9.shape[1], w9.shape[2])
        y = lax.conv_general_dilated(xx, k, (1, 1), ((1, 1), (1, 1)),
                                     dimension_numbers=("NHWC", "HWIO", "NHWC"))
        return y + bias.reshape(1, 1, 1, -1)

    x1 = jax.nn.relu(conv(x, params["w1"], params["b1"]) + t_emb[:, None, None, :])
    x2 = jax.nn.relu(conv(x1, params["w2"], params["b2"]))
    x3 = lax.reduce_window(x2, -jnp.inf, lax.max, (1, 2, 2, 1), (1, 2, 2, 1), "VALID")
    t2 = jnp.concatenate([t_emb, t_emb], axis=-1)
    x4 = jax.nn.relu(conv(x3, params["w3"], params["b3"]) + t2[:, None, None, :])
    _, Hh, Ww, _ = x4.shape
    Mh = _bilinear_matrix(Hh, 2 * Hh)
    Mw = _bilinear_matrix(Ww, 2 * Ww)
    x5 = jnp.einsum("ph,bhwc->bpwc", Mh, x4)
    x5 = jnp.einsum("qw,bpwc->bpqc", Mw, x5)
    skip = jnp.concatenate([x2, x2], axis=-1)
    x6 = jax.nn.relu(conv(x5 + skip, params["w4"], params["b4"]))
    out = (jnp.einsum("bhwc,cd->bhwd", x6, f32(params["w_out"]))
           + params["b_out"].reshape(1, 1, 1, -1))
    return jnp.transpose(out, (0, 3, 1, 2))


# --------------------------------- params -----------------------------------


def init_params(key, img_channels, base, tdim):
    ks = jax.random.split(key, 12)

    def w(k, shape, scale=0.05):
        # matmul weights live in bf16 (halves their DMA bytes; MXU-native)
        return (scale * jax.random.normal(k, shape, jnp.float32)).astype(jnp.bfloat16)

    def b(k, shape, scale=0.05):
        return scale * jax.random.normal(k, shape, jnp.float32)

    return {
        "w_time": w(ks[0], (tdim, tdim)),
        "b_time": b(ks[1], (1, tdim)),
        "w1": w(ks[2], (9, img_channels, base)),
        "b1": b(ks[3], (1, base)),
        "w2": w(ks[4], (9, base, base)),
        "b2": b(ks[5], (1, base)),
        "w3": w(ks[6], (9, base, 2 * base)),
        "b3": b(ks[7], (1, 2 * base)),
        "w4": w(ks[8], (9, 2 * base, base)),
        "b4": b(ks[9], (1, base)),
        "w_out": w(ks[10], (base, img_channels)),
        "b_out": b(ks[11], (1, img_channels)),
    }


if __name__ == "__main__":
    B, IMG_C, BASE, TDIM, HW = 2, 4, 32, 32, 16    # time_emb_dim == base_channels
    assert TDIM == BASE

    key = jax.random.PRNGKey(0)
    k_x, k_t, k_p = jax.random.split(key, 3)
    x = jax.random.normal(k_x, (B, IMG_C, HW, HW), jnp.float32)        # NCHW like PyTorch
    t = jax.random.uniform(k_t, (B,), jnp.float32, 0.0, 1000.0)
    params = init_params(k_p, IMG_C, BASE, TDIM)

    out = jax.block_until_ready(jax.jit(unet_forward)(params, x, t))
    ref = jax.block_until_ready(reference_forward(params, x, t))

    assert out.shape == (B, IMG_C, HW, HW), out.shape
    err = float(jnp.max(jnp.abs(out - ref)))
    assert jnp.allclose(out, ref, atol=3e-3, rtol=3e-3), err
    print("KERNEL_OK")
</pallas_src>

<mosaic_0001>
module attributes {stable_mosaic.version = 11 : i64} {
  func.func private @main(%arg0: i32) attributes {dimension_semantics = [#tpu.dimension_semantics<core_parallel>], iteration_bounds = array<i64: 2>, tpu.core_type = #tpu.core_type<sc_scalar_subcore>, window_params = []} {
    return
  }
}

module attributes {stable_mosaic.version = 11 : i64} {
  func.func private @main(%arg0: i32) attributes {dimension_semantics = [#tpu.dimension_semantics<core_parallel>], iteration_bounds = array<i64: 2>, tpu.core_type = #tpu.core_type<sc_scalar_subcore>, window_params = []} {
    return
  }
}

module attributes {stable_mosaic.version = 11 : i64} {
  func.func @_unet_fused_kernel(%arg0: i32, %arg1: memref<1x16x16x4xf32, #tpu.memory_space<vmem>>, %arg2: memref<1x1x32xf32, #tpu.memory_space<vmem>>, %arg3: memref<32x32xbf16, #tpu.memory_space<vmem>>, %arg4: memref<1x32xf32, #tpu.memory_space<vmem>>, %arg5: memref<36x32xbf16, #tpu.memory_space<vmem>>, %arg6: memref<1x32xf32, #tpu.memory_space<vmem>>, %arg7: memref<288x32xbf16, #tpu.memory_space<vmem>>, %arg8: memref<1x32xf32, #tpu.memory_space<vmem>>, %arg9: memref<288x64xbf16, #tpu.memory_space<vmem>>, %arg10: memref<1x64xf32, #tpu.memory_space<vmem>>, %arg11: memref<576x32xbf16, #tpu.memory_space<vmem>>, %arg12: memref<1x32xf32, #tpu.memory_space<vmem>>, %arg13: memref<4x32xbf16, #tpu.memory_space<vmem>>, %arg14: memref<4x1xf32, #tpu.memory_space<vmem>>, %arg15: memref<256x64xbf16, #tpu.memory_space<vmem>>, %arg16: memref<1x4x256xf32, #tpu.memory_space<vmem>>, %arg17: memref<18x18x4xf32, #tpu.memory_space<vmem>>, %arg18: memref<18x18x32xf32, #tpu.memory_space<vmem>>, %arg19: memref<10x10x32xf32, #tpu.memory_space<vmem>>, %arg20: memref<18x18x64xf32, #tpu.memory_space<vmem>>, %arg21: memref<16x16x32xf32, #tpu.memory_space<vmem>>) attributes {dimension_semantics = [#tpu.dimension_semantics<parallel>], iteration_bounds = array<i64: 2>, scalar_prefetch = 0 : i64, scratch_operands = 5 : i64, tpu.core_type = #tpu.core_type<tc>, window_params = [{transform_indices = @transform_0, window_bounds = array<i64: 1, 16, 16, 4>}, {transform_indices = @transform_1, window_bounds = array<i64: 1, 1, 32>}, {pipeline_mode = #tpu.pipeline_mode<synchronous>, transform_indices = @transform_2, window_bounds = array<i64: 32, 32>}, {pipeline_mode = #tpu.pipeline_mode<synchronous>, transform_indices = @transform_3, window_bounds = array<i64: 1, 32>}, {pipeline_mode = #tpu.pipeline_mode<synchronous>, transform_indices = @transform_4, window_bounds = array<i64: 36, 32>}, {pipeline_mode = #tpu.pipeline_mode<synchronous>, transform_indices = @transform_5, window_bounds = array<i64: 1, 32>}, {pipeline_mode = #tpu.pipeline_mode<synchronous>, transform_indices = @transform_6, window_bounds = array<i64: 288, 32>}, {pipeline_mode = #tpu.pipeline_mode<synchronous>, transform_indices = @transform_7, window_bounds = array<i64: 1, 32>}, {pipeline_mode = #tpu.pipeline_mode<synchronous>, transform_indices = @transform_8, window_bounds = array<i64: 288, 64>}, {pipeline_mode = #tpu.pipeline_mode<synchronous>, transform_indices = @transform_9, window_bounds = array<i64: 1, 64>}, {pipeline_mode = #tpu.pipeline_mode<synchronous>, transform_indices = @transform_10, window_bounds = array<i64: 576, 32>}, {pipeline_mode = #tpu.pipeline_mode<synchronous>, transform_indices = @transform_11, window_bounds = array<i64: 1, 32>}, {pipeline_mode = #tpu.pipeline_mode<synchronous>, transform_indices = @transform_12, window_bounds = array<i64: 4, 32>}, {pipeline_mode = #tpu.pipeline_mode<synchronous>, transform_indices = @transform_13, window_bounds = array<i64: 4, 1>}, {pipeline_mode = #tpu.pipeline_mode<synchronous>, transform_indices = @transform_14, window_bounds = array<i64: 256, 64>}, {transform_indices = @transform_15, window_bounds = array<i64: 1, 4, 256>}]} {
    %c0 = arith.constant 0 : index
    %c0_0 = arith.constant 0 : index
    %c0_1 = arith.constant 0 : index
    %0 = vector.load %arg2[%c0, %c0_0, %c0_1] : memref<1x1x32xf32, #tpu.memory_space<vmem>>, vector<1x1x32xf32>
    %1 = vector.shape_cast %0 : vector<1x1x32xf32> to vector<1x32xf32>
    %2 = arith.truncf %1 : vector<1x32xf32> to vector<1x32xbf16>
    %c0_2 = arith.constant 0 : index
    %c0_3 = arith.constant 0 : index
    %3 = vector.load %arg3[%c0_2, %c0_3] : memref<32x32xbf16, #tpu.memory_space<vmem>>, vector<32x32xbf16>
    %cst = arith.constant dense<0.000000e+00> : vector<1x32xf32>
    %4 = tpu.matmul %2, %3, %cst {dimension_numbers = #tpu.dot_dimension_numbers<[1], [0], [0], [1], [0, 0, 1, 1], [], []>} : vector<1x32xbf16>, vector<32x32xbf16>, vector<1x32xf32> -> vector<1x32xf32>
    %c0_4 = arith.constant 0 : index
    %c0_5 = arith.constant 0 : index
    %5 = vector.load %arg4[%c0_4, %c0_5] : memref<1x32xf32, #tpu.memory_space<vmem>>, vector<1x32xf32>
    %6 = arith.addf %4, %5 : vector<1x32xf32>
    %cst_6 = arith.constant 0.000000e+00 : f32
    %7 = vector.broadcast %cst_6 : f32 to vector<1x32xf32>
    %8 = arith.maximumf %6, %7 : vector<1x32xf32>
    %c0_7 = arith.constant 0 : index
    %c0_8 = arith.constant 0 : index
    %c0_9 = arith.constant 0 : index
    %c0_10 = arith.constant 0 : index
    %9 = vector.load %arg1[%c0_7, %c0_8, %c0_9, %c0_10] : memref<1x16x16x4xf32, #tpu.memory_space<vmem>>, vector<1x16x16x4xf32>
    %10 = vector.shape_cast %9 : vector<1x16x16x4xf32> to vector<16x16x4xf32>
    %cst_11 = arith.constant 0.000000e+00 : f32
    %11 = vector.broadcast %cst_11 : f32 to vector<18x18x4xf32>
    %c0_12 = arith.constant 0 : index
    %c0_13 = arith.constant 0 : index
    %c0_14 = arith.constant 0 : index
    %12 = vector.load %arg17[%c0_12, %c0_13, %c0_14] : memref<18x18x4xf32, #tpu.memory_space<vmem>>, vector<18x18x4xf32>
    tpu.vector_store %arg17[%c0_12, %c0_13, %c0_14], %11 {strides = array<i32>} : memref<18x18x4xf32, #tpu.memory_space<vmem>>, vector<18x18x4xf32>,
    %c1 = arith.constant 1 : index
    %c1_15 = arith.constant 1 : index
    %c0_16 = arith.constant 0 : index
    %13 = vector.load %arg17[%c1, %c1_15, %c0_16] : memref<18x18x4xf32, #tpu.memory_space<vmem>>, vector<16x16x4xf32>
    tpu.vector_store %arg17[%c1, %c1_15, %c0_16], %10 {strides = array<i32>} : memref<18x18x4xf32, #tpu.memory_space<vmem>>, vector<16x16x4xf32>,
    %c0_17 = arith.constant 0 : index
    %c0_18 = arith.constant 0 : index
    %c0_19 = arith.constant 0 : index
    %14 = vector.load %arg17[%c0_17, %c0_18, %c0_19] : memref<18x18x4xf32, #tpu.memory_space<vmem>>, vector<16x16x4xf32>
    %15 = vector.shape_cast %14 : vector<16x16x4xf32> to vector<256x4xf32>
    %16 = arith.truncf %15 : vector<256x4xf32> to vector<256x4xbf16>
    %c0_20 = arith.constant 0 : index
    %c1_21 = arith.constant 1 : index
    %c0_22 = arith.constant 0 : index
    %17 = vector.load %arg17[%c0_20, %c1_21, %c0_22] : memref<18x18x4xf32, #tpu.memory_space<vmem>>, vector<16x16x4xf32>
    %18 = vector.shape_cast %17 : vector<16x16x4xf32> to vector<256x4xf32>
    %19 = arith.truncf %18 : vector<256x4xf32> to vector<256x4xbf16>
    %c0_23 = arith.constant 0 : index
    %c2 = arith.constant 2 : index
    %c0_24 = arith.constant 0 : index
    %20 = vector.load %arg17[%c0_23, %c2, %c0_24] : memref<18x18x4xf32, #tpu.memory_space<vmem>>, vector<16x16x4xf32>
    %21 = vector.shape_cast %20 : vector<16x16x4xf32> to vector<256x4xf32>
    %22 = arith.truncf %21 : vector<256x4xf32> to vector<256x4xbf16>
    %c1_25 = arith.constant 1 : index
    %c0_26 = arith.constant 0 : index
    %c0_27 = arith.constant 0 : index
    %23 = vector.load %arg17[%c1_25, %c0_26, %c0_27] : memref<18x18x4xf32, #tpu.memory_space<vmem>>, vector<16x16x4xf32>
    %24 = vector.shape_cast %23 : vector<16x16x4xf32> to vector<256x4xf32>
    %25 = arith.truncf %24 : vector<256x4xf32> to vector<256x4xbf16>
    %c1_28 = arith.constant 1 : index
    %c1_29 = arith.constant 1 : index
    %c0_30 = arith.constant 0 : index
    %26 = vector.load %arg17[%c1_28, %c1_29, %c0_30] : memref<18x18x4xf32, #tpu.memory_space<vmem>>, vector<16x16x4xf32>
    %27 = vector.shape_cast %26 : vector<16x16x4xf32> to vector<256x4xf32>
    %28 = arith.truncf %27 : vector<256x4xf32> to vector<256x4xbf16>
    %c1_31 = arith.constant 1 : index
    %c2_32 = arith.constant 2 : index
    %c0_33 = arith.constant 0 : index
    %29 = vector.load %arg17[%c1_31, %c2_32, %c0_33] : memref<18x18x4xf32, #tpu.memory_space<vmem>>, vector<16x16x4xf32>
    %30 = vector.shape_cast %29 : vector<16x16x4xf32> to vector<256x4xf32>
    %31 = arith.truncf %30 : vector<256x4xf32> to vector<256x4xbf16>
    %c2_34 = arith.constant 2 : index
    %c0_35 = arith.constant 0 : index
    %c0_36 = arith.constant 0 : index
    %32 = vector.load %arg17[%c2_34, %c0_35, %c0_36] : memref<18x18x4xf32, #tpu.memory_space<vmem>>, vector<16x16x4xf32>
    %33 = vector.shape_cast %32 : vector<16x16x4xf32> to vector<256x4xf32>
    %34 = arith.truncf %33 : vector<256x4xf32> to vector<256x4xbf16>
    %c2_37 = arith.constant 2 : index
    %c1_38 = arith.constant 1 : index
    %c0_39 = arith.constant 0 : index
    %35 = vector.load %arg17[%c2_37, %c1_38, %c0_39] : memref<18x18x4xf32, #tpu.memory_space<vmem>>, vector<16x16x4xf32>
    %36 = vector.shape_cast %35 : vector<16x16x4xf32> to vector<256x4xf32>
    %37 = arith.truncf %36 : vector<256x4xf32> to vector<256x4xbf16>
    %c2_40 = arith.constant 2 : index
    %c2_41 = arith.constant 2 : index
    %c0_42 = arith.constant 0 : index
    %38 = vector.load %arg17[%c2_40, %c2_41, %c0_42] : memref<18x18x4xf32, #tpu.memory_space<vmem>>, vector<16x16x4xf32>
    %39 = vector.shape_cast %38 : vector<16x16x4xf32> to vector<256x4xf32>
    %40 = arith.truncf %39 : vector<256x4xf32> to vector<256x4xbf16>
    %41 = tpu.concatenate %16, %19, %22, %25, %28, %31, %34, %37, %40 in 1 : vector<256x4xbf16>, vector<256x4xbf16>, vector<256x4xbf16>, vector<256x4xbf16>, vector<256x4xbf16>, vector<256x4xbf16>, vector<256x4xbf16>, vector<256x4xbf16>, vector<256x4xbf16> -> vector<256x36xbf16>
    %c0_43 = arith.constant 0 : index
    %c0_44 = arith.constant 0 : index
    %42 = vector.load %arg5[%c0_43, %c0_44] : memref<36x32xbf16, #tpu.memory_space<vmem>>, vector<36x32xbf16>
    %cst_45 = arith.constant dense<0.000000e+00> : vector<256x32xf32>
    %43 = tpu.matmul %41, %42, %cst_45 {dimension_numbers = #tpu.dot_dimension_numbers<[1], [0], [0], [1], [0, 0, 1, 1], [], []>} : vector<256x36xbf16>, vector<36x32xbf16>, vector<256x32xf32> -> vector<256x32xf32>
    %c0_46 = arith.constant 0 : index
    %c0_47 = arith.constant 0 : index
    %44 = vector.load %arg6[%c0_46, %c0_47] : memref<1x32xf32, #tpu.memory_space<vmem>>, vector<1x32xf32>
    %45 = vector.broadcast %44 : vector<1x32xf32> to vector<256x32xf32>
    %46 = arith.addf %43, %45 : vector<256x32xf32>
    %47 = vector.broadcast %8 : vector<1x32xf32> to vector<256x32xf32>
    %48 = arith.addf %46, %47 : vector<256x32xf32>
    %cst_48 = arith.constant 0.000000e+00 : f32
    %49 = vector.broadcast %cst_48 : f32 to vector<256x32xf32>
    %50 = arith.maximumf %48, %49 : vector<256x32xf32>
    %51 = vector.shape_cast %50 : vector<256x32xf32> to vector<16x16x32xf32>
    %cst_49 = arith.constant 0.000000e+00 : f32
    %52 = vector.broadcast %cst_49 : f32 to vector<18x18x32xf32>
    %c0_50 = arith.constant 0 : index
    %c0_51 = arith.constant 0 : index
    %c0_52 = arith.constant 0 : index
    %53 = vector.load %arg18[%c0_50, %c0_51, %c0_52] : memref<18x18x32xf32, #tpu.memory_space<vmem>>, vector<18x18x32xf32>
    tpu.vector_store %arg18[%c0_50, %c0_51, %c0_52], %52 {strides = array<i32>} : memref<18x18x32xf32, #tpu.memory_space<vmem>>, vector<18x18x32xf32>,
    %c1_53 = arith.constant 1 : index
    %c1_54 = arith.constant 1 : index
    %c0_55 = arith.constant 0 : index
    %54 = vector.load %arg18[%c1_53, %c1_54, %c0_55] : memref<18x18x32xf32, #tpu.memory_space<vmem>>, vector<16x16x32xf32>
    tpu.vector_store %arg18[%c1_53, %c1_54, %c0_55], %51 {strides = array<i32>} : memref<18x18x32xf32, #tpu.memory_space<vmem>>, vector<16x16x32xf32>,
    %c0_56 = arith.constant 0 : index
    %c0_57 = arith.constant 0 : index
    %c0_58 = arith.constant 0 : index
    %55 = vector.load %arg18[%c0_56, %c0_57, %c0_58] : memref<18x18x32xf32, #tpu.memory_space<vmem>>, vector<16x16x32xf32>
    %56 = vector.shape_cast %55 : vector<16x16x32xf32> to vector<256x32xf32>
    %57 = arith.truncf %56 : vector<256x32xf32> to vector<256x32xbf16>
    %c0_59 = arith.constant 0 : index
    %c1_60 = arith.constant 1 : index
    %c0_61 = arith.constant 0 : index
    %58 = vector.load %arg18[%c0_59, %c1_60, %c0_61] : memref<18x18x32xf32, #tpu.memory_space<vmem>>, vector<16x16x32xf32>
    %59 = vector.shape_cast %58 : vector<16x16x32xf32> to vector<256x32xf32>
    %60 = arith.truncf %59 : vector<256x32xf32> to vector<256x32xbf16>
    %c0_62 = arith.constant 0 : index
    %c2_63 = arith.constant 2 : index
    %c0_64 = arith.constant 0 : index
    %61 = vector.load %arg18[%c0_62, %c2_63, %c0_64] : memref<18x18x32xf32, #tpu.memory_space<vmem>>, vector<16x16x32xf32>
    %62 = vector.shape_cast %61 : vector<16x16x32xf32> to vector<256x32xf32>
    %63 = arith.truncf %62 : vector<256x32xf32> to vector<256x32xbf16>
    %c1_65 = arith.constant 1 : index
    %c0_66 = arith.constant 0 : index
    %c0_67 = arith.constant 0 : index
    %64 = vector.load %arg18[%c1_65, %c0_66, %c0_67] : memref<18x18x32xf32, #tpu.memory_space<vmem>>, vector<16x16x32xf32>
    %65 = vector.shape_cast %64 : vector<16x16x32xf32> to vector<256x32xf32>
    %66 = arith.truncf %65 : vector<256x32xf32> to vector<256x32xbf16>
    %c1_68 = arith.constant 1 : index
    %c1_69 = arith.constant 1 : index
    %c0_70 = arith.constant 0 : index
    %67 = vector.load %arg18[%c1_68, %c1_69, %c0_70] : memref<18x18x32xf32, #tpu.memory_space<vmem>>, vector<16x16x32xf32>
    %68 = vector.shape_cast %67 : vector<16x16x32xf32> to vector<256x32xf32>
    %69 = arith.truncf %68 : vector<256x32xf32> to vector<256x32xbf16>
    %c1_71 = arith.constant 1 : index
    %c2_72 = arith.constant 2 : index
    %c0_73 = arith.constant 0 : index
    %70 = vector.load %arg18[%c1_71, %c2_72, %c0_73] : memref<18x18x32xf32, #tpu.memory_space<vmem>>, vector<16x16x32xf32>
    %71 = vector.shape_cast %70 : vector<16x16x32xf32> to vector<256x32xf32>
    %72 = arith.truncf %71 : vector<256x32xf32> to vector<256x32xbf16>
    %c2_74 = arith.constant 2 : index
    %c0_75 = arith.constant 0 : index
    %c0_76 = arith.constant 0 : index
    %73 = vector.load %arg18[%c2_74, %c0_75, %c0_76] : memref<18x18x32xf32, #tpu.memory_space<vmem>>, vector<16x16x32xf32>
    %74 = vector.shape_cast %73 : vector<16x16x32xf32> to vector<256x32xf32>
    %75 = arith.truncf %74 : vector<256x32xf32> to vector<256x32xbf16>
    %c2_77 = arith.constant 2 : index
    %c1_78 = arith.constant 1 : index
    %c0_79 = arith.constant 0 : index
    %76 = vector.load %arg18[%c2_77, %c1_78, %c0_79] : memref<18x18x32xf32, #tpu.memory_space<vmem>>, vector<16x16x32xf32>
    %77 = vector.shape_cast %76 : vector<16x16x32xf32> to vector<256x32xf32>
    %78 = arith.truncf %77 : vector<256x32xf32> to vector<256x32xbf16>
    %c2_80 = arith.constant 2 : index
    %c2_81 = arith.constant 2 : index
    %c0_82 = arith.constant 0 : index
    %79 = vector.load %arg18[%c2_80, %c2_81, %c0_82] : memref<18x18x32xf32, #tpu.memory_space<vmem>>, vector<16x16x32xf32>
    %80 = vector.shape_cast %79 : vector<16x16x32xf32> to vector<256x32xf32>
    %81 = arith.truncf %80 : vector<256x32xf32> to vector<256x32xbf16>
    %82 = tpu.concatenate %57, %60, %63, %66, %69, %72, %75, %78, %81 in 1 : vector<256x32xbf16>, vector<256x32xbf16>, vector<256x32xbf16>, vector<256x32xbf16>, vector<256x32xbf16>, vector<256x32xbf16>, vector<256x32xbf16>, vector<256x32xbf16>, vector<256x32xbf16> -> vector<256x288xbf16>
    %c0_83 = arith.constant 0 : index
    %c0_84 = arith.constant 0 : index
    %83 = vector.load %arg7[%c0_83, %c0_84] : memref<288x32xbf16, #tpu.memory_space<vmem>>, vector<288x32xbf16>
    %cst_85 = arith.constant dense<0.000000e+00> : vector<256x32xf32>
    %84 = tpu.matmul %82, %83, %cst_85 {dimension_numbers = #tpu.dot_dimension_numbers<[1], [0], [0], [1], [0, 0, 1, 1], [], []>} : vector<256x288xbf16>, vector<288x32xbf16>, vector<256x32xf32> -> vector<256x32xf32>
    %c0_86 = arith.constant 0 : index
    %c0_87 = arith.constant 0 : index
    %85 = vector.load %arg8[%c0_86, %c0_87] : memref<1x32xf32, #tpu.memory_space<vmem>>, vector<1x32xf32>
    %86 = vector.broadcast %85 : vector<1x32xf32> to vector<256x32xf32>
    %87 = arith.addf %84, %86 : vector<256x32xf32>
    %cst_88 = arith.constant 0.000000e+00 : f32
    %88 = vector.broadcast %cst_88 : f32 to vector<256x32xf32>
    %89 = arith.maximumf %87, %88 : vector<256x32xf32>
    %90 = vector.shape_cast %89 : vector<256x32xf32> to vector<16x16x32xf32>
    %c0_89 = arith.constant 0 : index
    %c0_90 = arith.constant 0 : index
    %c0_91 = arith.constant 0 : index
    %91 = vector.load %arg21[%c0_89, %c0_90, %c0_91] : memref<16x16x32xf32, #tpu.memory_space<vmem>>, vector<16x16x32xf32>
    tpu.vector_store %arg21[%c0_89, %c0_90, %c0_91], %90 {strides = array<i32>} : memref<16x16x32xf32, #tpu.memory_space<vmem>>, vector<16x16x32xf32>,
    %c0_92 = arith.constant 0 : index
    %c0_93 = arith.constant 0 : index
    %c0_94 = arith.constant 0 : index
    %92 = tpu.strided_load %arg21[%c0_92, %c0_93, %c0_94] {strides = array<i32: 2, 2, 1>} : memref<16x16x32xf32, #tpu.memory_space<vmem>>, vector<8x8x32xf32>
    %c0_95 = arith.constant 0 : index
    %c1_96 = arith.constant 1 : index
    %c0_97 = arith.constant 0 : index
    %93 = tpu.strided_load %arg21[%c0_95, %c1_96, %c0_97] {strides = array<i32: 2, 2, 1>} : memref<16x16x32xf32, #tpu.memory_space<vmem>>, vector<8x8x32xf32>
    %c1_98 = arith.constant 1 : index
    %c0_99 = arith.constant 0 : index
    %c0_100 = arith.constant 0 : index
    %94 = tpu.strided_load %arg21[%c1_98, %c0_99, %c0_100] {strides = array<i32: 2, 2, 1>} : memref<16x16x32xf32, #tpu.memory_space<vmem>>, vector<8x8x32xf32>
    %c1_101 = arith.constant 1 : index
    %c1_102 = arith.constant 1 : index
    %c0_103 = arith.constant 0 : index
    %95 = tpu.strided_load %arg21[%c1_101, %c1_102, %c0_103] {strides = array<i32: 2, 2, 1>} : memref<16x16x32xf32, #tpu.memory_space<vmem>>, vector<8x8x32xf32>
    %96 = arith.maximumf %92, %93 : vector<8x8x32xf32>
    %97 = arith.maximumf %94, %95 : vector<8x8x32xf32>
    %98 = arith.maximumf %96, %97 : vector<8x8x32xf32>
    %99 = tpu.concatenate %8, %8 in 1 : vector<1x32xf32>, vector<1x32xf32> -> vector<1x64xf32>
    %cst_104 = arith.constant 0.000000e+00 : f32
    %100 = vector.broadcast %cst_104 : f32 to vector<10x10x32xf32>
    %c0_105 = arith.constant 0 : index
    %c0_106 = arith.constant 0 : index
    %c0_107 = arith.constant 0 : index
    %101 = vector.load %arg19[%c0_105, %c0_106, %c0_107] : memref<10x10x32xf32, #tpu.memory_space<vmem>>, vector<10x10x32xf32>
    tpu.vector_store %arg19[%c0_105, %c0_106, %c0_107], %100 {strides = array<i32>} : memref<10x10x32xf32, #tpu.memory_space<vmem>>, vector<10x10x32xf32>,
    %c1_108 = arith.constant 1 : index
    %c1_109 = arith.constant 1 : index
    %c0_110 = arith.constant 0 : index
    %102 = vector.load %arg19[%c1_108, %c1_109, %c0_110] : memref<10x10x32xf32, #tpu.memory_space<vmem>>, vector<8x8x32xf32>
    tpu.vector_store %arg19[%c1_108, %c1_109, %c0_110], %98 {strides = array<i32>} : memref<10x10x32xf32, #tpu.memory_space<vmem>>, vector<8x8x32xf32>,
    %c0_111 = arith.constant 0 : index
    %c0_112 = arith.constant 0 : index
    %c0_113 = arith.constant 0 : index
    %103 = vector.load %arg19[%c0_111, %c0_112, %c0_113] : memref<10x10x32xf32, #tpu.memory_space<vmem>>, vector<8x8x32xf32>
    %104 = vector.shape_cast %103 : vector<8x8x32xf32> to vector<64x32xf32>
    %105 = arith.truncf %104 : vector<64x32xf32> to vector<64x32xbf16>
    %c0_114 = arith.constant 0 : index
    %c1_115 = arith.constant 1 : index
    %c0_116 = arith.constant 0 : index
    %106 = vector.load %arg19[%c0_114, %c1_115, %c0_116] : memref<10x10x32xf32, #tpu.memory_space<vmem>>, vector<8x8x32xf32>
    %107 = vector.shape_cast %106 : vector<8x8x32xf32> to vector<64x32xf32>
    %108 = arith.truncf %107 : vector<64x32xf32> to vector<64x32xbf16>
    %c0_117 = arith.constant 0 : index
    %c2_118 = arith.constant 2 : index
    %c0_119 = arith.constant 0 : index
    %109 = vector.load %arg19[%c0_117, %c2_118, %c0_119] : memref<10x10x32xf32, #tpu.memory_space<vmem>>, vector<8x8x32xf32>
    %110 = vector.shape_cast %109 : vector<8x8x32xf32> to vector<64x32xf32>
    %111 = arith.truncf %110 : vector<64x32xf32> to vector<64x32xbf16>
    %c1_120 = arith.constant 1 : index
    %c0_121 = arith.constant 0 : index
    %c0_122 = arith.constant 0 : index
    %112 = vector.load %arg19[%c1_120, %c0_121, %c0_122] : memref<10x10x32xf32, #tpu.memory_space<vmem>>, vector<8x8x32xf32>
    %113 = vector.shape_cast %112 : vector<8x8x32xf32> to vector<64x32xf32>
    %114 = arith.truncf %113 : vector<64x32xf32> to vector<64x32xbf16>
    %c1_123 = arith.constant 1 : index
    %c1_124 = arith.constant 1 : index
    %c0_125 = arith.constant 0 : index
    %115 = vector.load %arg19[%c1_123, %c1_124, %c0_125] : memref<10x10x32xf32, #tpu.memory_space<vmem>>, vector<8x8x32xf32>
    %116 = vector.shape_cast %115 : vector<8x8x32xf32> to vector<64x32xf32>
    %117 = arith.truncf %116 : vector<64x32xf32> to vector<64x32xbf16>
    %c1_126 = arith.constant 1 : index
    %c2_127 = arith.constant 2 : index
    %c0_128 = arith.constant 0 : index
    %118 = vector.load %arg19[%c1_126, %c2_127, %c0_128] : memref<10x10x32xf32, #tpu.memory_space<vmem>>, vector<8x8x32xf32>
    %119 = vector.shape_cast %118 : vector<8x8x32xf32> to vector<64x32xf32>
    %120 = arith.truncf %119 : vector<64x32xf32> to vector<64x32xbf16>
    %c2_129 = arith.constant 2 : index
    %c0_130 = arith.constant 0 : index
    %c0_131 = arith.constant 0 : index
    %121 = vector.load %arg19[%c2_129, %c0_130, %c0_131] : memref<10x10x32xf32, #tpu.memory_space<vmem>>, vector<8x8x32xf32>
    %122 = vector.shape_cast %121 : vector<8x8x32xf32> to vector<64x32xf32>
    %123 = arith.truncf %122 : vector<64x32xf32> to vector<64x32xbf16>
    %c2_132 = arith.constant 2 : index
    %c1_133 = arith.constant 1 : index
    %c0_134 = arith.constant 0 : index
    %124 = vector.load %arg19[%c2_132, %c1_133, %c0_134] : memref<10x10x32xf32, #tpu.memory_space<vmem>>, vector<8x8x32xf32>
    %125 = vector.shape_cast %124 : vector<8x8x32xf32> to vector<64x32xf32>
    %126 = arith.truncf %125 : vector<64x32xf32> to vector<64x32xbf16>
    %c2_135 = arith.constant 2 : index
    %c2_136 = arith.constant 2 : index
    %c0_137 = arith.constant 0 : index
    %127 = vector.load %arg19[%c2_135, %c2_136, %c0_137] : memref<10x10x32xf32, #tpu.memory_space<vmem>>, vector<8x8x32xf32>
    %128 = vector.shape_cast %127 : vector<8x8x32xf32> to vector<64x32xf32>
    %129 = arith.truncf %128 : vector<64x32xf32> to vector<64x32xbf16>
    %130 = tpu.concatenate %105, %108, %111, %114, %117, %120, %123, %126, %129 in 1 : vector<64x32xbf16>, vector<64x32xbf16>, vector<64x32xbf16>, vector<64x32xbf16>, vector<64x32xbf16>, vector<64x32xbf16>, vector<64x32xbf16>, vector<64x32xbf16>, vector<64x32xbf16> -> vector<64x288xbf16>
    %c0_138 = arith.constant 0 : index
    %c0_139 = arith.constant 0 : index
    %131 = vector.load %arg9[%c0_138, %c0_139] : memref<288x64xbf16, #tpu.memory_space<vmem>>, vector<288x64xbf16>
    %cst_140 = arith.constant dense<0.000000e+00> : vector<64x64xf32>
    %132 = tpu.matmul %130, %131, %cst_140 {dimension_numbers = #tpu.dot_dimension_numbers<[1], [0], [0], [1], [0, 0, 1, 1], [], []>} : vector<64x288xbf16>, vector<288x64xbf16>, vector<64x64xf32> -> vector<64x64xf32>
    %c0_141 = arith.constant 0 : index
    %c0_142 = arith.constant 0 : index
    %133 = vector.load %arg10[%c0_141, %c0_142] : memref<1x64xf32, #tpu.memory_space<vmem>>, vector<1x64xf32>
    %134 = vector.broadcast %133 : vector<1x64xf32> to vector<64x64xf32>
    %135 = arith.addf %132, %134 : vector<64x64xf32>
    %136 = vector.broadcast %99 : vector<1x64xf32> to vector<64x64xf32>
    %137 = arith.addf %135, %136 : vector<64x64xf32>
    %cst_143 = arith.constant 0.000000e+00 : f32
    %138 = vector.broadcast %cst_143 : f32 to vector<64x64xf32>
    %139 = arith.maximumf %137, %138 : vector<64x64xf32>
    %c0_144 = arith.constant 0 : index
    %c0_145 = arith.constant 0 : index
    %140 = vector.load %arg15[%c0_144, %c0_145] : memref<256x64xbf16, #tpu.memory_space<vmem>>, vector<256x64xbf16>
    %141 = arith.truncf %139 : vector<64x64xf32> to vector<64x64xbf16>
    %cst_146 = arith.constant dense<0.000000e+00> : vector<256x64xf32>
    %142 = tpu.matmul %140, %141, %cst_146 {dimension_numbers = #tpu.dot_dimension_numbers<[1], [0], [0], [1], [0, 0, 1, 1], [], []>} : vector<256x64xbf16>, vector<64x64xbf16>, vector<256x64xf32> -> vector<256x64xf32>
    %143 = tpu.concatenate %89, %89 in 1 : vector<256x32xf32>, vector<256x32xf32> -> vector<256x64xf32>
    %144 = arith.addf %142, %143 : vector<256x64xf32>
    %145 = vector.shape_cast %144 : vector<256x64xf32> to vector<16x16x64xf32>
    %cst_147 = arith.constant 0.000000e+00 : f32
    %146 = vector.broadcast %cst_147 : f32 to vector<18x18x64xf32>
    %c0_148 = arith.constant 0 : index
    %c0_149 = arith.constant 0 : index
    %c0_150 = arith.constant 0 : index
    %147 = vector.load %arg20[%c0_148, %c0_149, %c0_150] : memref<18x18x64xf32, #tpu.memory_space<vmem>>, vector<18x18x64xf32>
    tpu.vector_store %arg20[%c0_148, %c0_149, %c0_150], %146 {strides = array<i32>} : memref<18x18x64xf32, #tpu.memory_space<vmem>>, vector<18x18x64xf32>,
    %c1_151 = arith.constant 1 : index
    %c1_152 = arith.constant 1 : index
    %c0_153 = arith.constant 0 : index
    %148 = vector.load %arg20[%c1_151, %c1_152, %c0_153] : memref<18x18x64xf32, #tpu.memory_space<vmem>>, vector<16x16x64xf32>
    tpu.vector_store %arg20[%c1_151, %c1_152, %c0_153], %145 {strides = array<i32>} : memref<18x18x64xf32, #tpu.memory_space<vmem>>, vector<16x16x64xf32>,
    %c0_154 = arith.constant 0 : index
    %c0_155 = arith.constant 0 : index
    %c0_156 = arith.constant 0 : index
    %149 = vector.load %arg20[%c0_154, %c0_155, %c0_156] : memref<18x18x64xf32, #tpu.memory_space<vmem>>, vector<16x16x64xf32>
    %150 = vector.shape_cast %149 : vector<16x16x64xf32> to vector<256x64xf32>
    %151 = arith.truncf %150 : vector<256x64xf32> to vector<256x64xbf16>
    %c0_157 = arith.constant 0 : index
    %c1_158 = arith.constant 1 : index
    %c0_159 = arith.constant 0 : index
    %152 = vector.load %arg20[%c0_157, %c1_158, %c0_159] : memref<18x18x64xf32, #tpu.memory_space<vmem>>, vector<16x16x64xf32>
    %153 = vector.shape_cast %152 : vector<16x16x64xf32> to vector<256x64xf32>
    %154 = arith.truncf %153 : vector<256x64xf32> to vector<256x64xbf16>
    %c0_160 = arith.constant 0 : index
    %c2_161 = arith.constant 2 : index
    %c0_162 = arith.constant 0 : index
    %155 = vector.load %arg20[%c0_160, %c2_161, %c0_162] : memref<18x18x64xf32, #tpu.memory_space<vmem>>, vector<16x16x64xf32>
    %156 = vector.shape_cast %155 : vector<16x16x64xf32> to vector<256x64xf32>
    %157 = arith.truncf %156 : vector<256x64xf32> to vector<256x64xbf16>
    %c1_163 = arith.constant 1 : index
    %c0_164 = arith.constant 0 : index
    %c0_165 = arith.constant 0 : index
    %158 = vector.load %arg20[%c1_163, %c0_164, %c0_165] : memref<18x18x64xf32, #tpu.memory_space<vmem>>, vector<16x16x64xf32>
    %159 = vector.shape_cast %158 : vector<16x16x64xf32> to vector<256x64xf32>
    %160 = arith.truncf %159 : vector<256x64xf32> to vector<256x64xbf16>
    %c1_166 = arith.constant 1 : index
    %c1_167 = arith.constant 1 : index
    %c0_168 = arith.constant 0 : index
    %161 = vector.load %arg20[%c1_166, %c1_167, %c0_168] : memref<18x18x64xf32, #tpu.memory_space<vmem>>, vector<16x16x64xf32>
    %162 = vector.shape_cast %161 : vector<16x16x64xf32> to vector<256x64xf32>
    %163 = arith.truncf %162 : vector<256x64xf32> to vector<256x64xbf16>
    %c1_169 = arith.constant 1 : index
    %c2_170 = arith.constant 2 : index
    %c0_171 = arith.constant 0 : index
    %164 = vector.load %arg20[%c1_169, %c2_170, %c0_171] : memref<18x18x64xf32, #tpu.memory_space<vmem>>, vector<16x16x64xf32>
    %165 = vector.shape_cast %164 : vector<16x16x64xf32> to vector<256x64xf32>
    %166 = arith.truncf %165 : vector<256x64xf32> to vector<256x64xbf16>
    %c2_172 = arith.constant 2 : index
    %c0_173 = arith.constant 0 : index
    %c0_174 = arith.constant 0 : index
    %167 = vector.load %arg20[%c2_172, %c0_173, %c0_174] : memref<18x18x64xf32, #tpu.memory_space<vmem>>, vector<16x16x64xf32>
    %168 = vector.shape_cast %167 : vector<16x16x64xf32> to vector<256x64xf32>
    %169 = arith.truncf %168 : vector<256x64xf32> to vector<256x64xbf16>
    %c2_175 = arith.constant 2 : index
    %c1_176 = arith.constant 1 : index
    %c0_177 = arith.constant 0 : index
    %170 = vector.load %arg20[%c2_175, %c1_176, %c0_177] : memref<18x18x64xf32, #tpu.memory_space<vmem>>, vector<16x16x64xf32>
    %171 = vector.shape_cast %170 : vector<16x16x64xf32> to vector<256x64xf32>
    %172 = arith.truncf %171 : vector<256x64xf32> to vector<256x64xbf16>
    %c2_178 = arith.constant 2 : index
    %c2_179 = arith.constant 2 : index
    %c0_180 = arith.constant 0 : index
    %173 = vector.load %arg20[%c2_178, %c2_179, %c0_180] : memref<18x18x64xf32, #tpu.memory_space<vmem>>, vector<16x16x64xf32>
    %174 = vector.shape_cast %173 : vector<16x16x64xf32> to vector<256x64xf32>
    %175 = arith.truncf %174 : vector<256x64xf32> to vector<256x64xbf16>
    %176 = tpu.concatenate %151, %154, %157, %160, %163, %166, %169, %172, %175 in 1 : vector<256x64xbf16>, vector<256x64xbf16>, vector<256x64xbf16>, vector<256x64xbf16>, vector<256x64xbf16>, vector<256x64xbf16>, vector<256x64xbf16>, vector<256x64xbf16>, vector<256x64xbf16> -> vector<256x576xbf16>
    %c0_181 = arith.constant 0 : index
    %c0_182 = arith.constant 0 : index
    %177 = vector.load %arg11[%c0_181, %c0_182] : memref<576x32xbf16, #tpu.memory_space<vmem>>, vector<576x32xbf16>
    %cst_183 = arith.constant dense<0.000000e+00> : vector<256x32xf32>
    %178 = tpu.matmul %176, %177, %cst_183 {dimension_numbers = #tpu.dot_dimension_numbers<[1], [0], [0], [1], [0, 0, 1, 1], [], []>} : vector<256x576xbf16>, vector<576x32xbf16>, vector<256x32xf32> -> vector<256x32xf32>
    %c0_184 = arith.constant 0 : index
    %c0_185 = arith.constant 0 : index
    %179 = vector.load %arg12[%c0_184, %c0_185] : memref<1x32xf32, #tpu.memory_space<vmem>>, vector<1x32xf32>
    %180 = vector.broadcast %179 : vector<1x32xf32> to vector<256x32xf32>
    %181 = arith.addf %178, %180 : vector<256x32xf32>
    %cst_186 = arith.constant 0.000000e+00 : f32
    %182 = vector.broadcast %cst_186 : f32 to vector<256x32xf32>
    %183 = arith.maximumf %181, %182 : vector<256x32xf32>
    %c0_187 = arith.constant 0 : index
    %c0_188 = arith.constant 0 : index
    %184 = vector.load %arg13[%c0_187, %c0_188] : memref<4x32xbf16, #tpu.memory_space<vmem>>, vector<4x32xbf16>
    %185 = arith.truncf %183 : vector<256x32xf32> to vector<256x32xbf16>
    %cst_189 = arith.constant dense<0.000000e+00> : vector<4x256xf32>
    %186 = tpu.matmul %184, %185, %cst_189 {dimension_numbers = #tpu.dot_dimension_numbers<[1], [1], [0], [0], [0, 0, 1, 0], [], []>} : vector<4x32xbf16>, vector<256x32xbf16>, vector<4x256xf32> -> vector<4x256xf32>
    %c0_190 = arith.constant 0 : index
    %c0_191 = arith.constant 0 : index
    %187 = vector.load %arg14[%c0_190, %c0_191] : memref<4x1xf32, #tpu.memory_space<vmem>>, vector<4x1xf32>
    %188 = vector.broadcast %187 : vector<4x1xf32> to vector<4x256xf32>
    %189 = arith.addf %186, %188 : vector<4x256xf32>
    %c0_192 = arith.constant 0 : index
    %c0_193 = arith.constant 0 : index
    %c0_194 = arith.constant 0 : index
    %190 = vector.load %arg16[%c0_192, %c0_193, %c0_194] : memref<1x4x256xf32, #tpu.memory_space<vmem>>, vector<1x4x256xf32>
    %191 = vector.shape_cast %190 : vector<1x4x256xf32> to vector<4x256xf32>
    %192 = vector.shape_cast %189 : vector<4x256xf32> to vector<1x4x256xf32>
    tpu.vector_store %arg16[%c0_192, %c0_193, %c0_194], %192 {strides = array<i32>} : memref<1x4x256xf32, #tpu.memory_space<vmem>>, vector<1x4x256xf32>,
    return
  }
  func.func @transform_0(%arg0: i32) -> (i32, i32, i32, i32) {
    %c0_i32 = arith.constant 0 : i32
    %c0_i32_0 = arith.constant 0 : i32
    %c0_i32_1 = arith.constant 0 : i32
    %c0_i32_2 = arith.constant 0 : i32
    return %arg0, %c0_i32, %c0_i32_0, %c0_i32_1 : i32, i32, i32, i32
  }
  func.func @transform_1(%arg0: i32) -> (i32, i32, i32) {
    %c0_i32 = arith.constant 0 : i32
    %c0_i32_0 = arith.constant 0 : i32
    %c0_i32_1 = arith.constant 0 : i32
    return %arg0, %c0_i32, %c0_i32_0 : i32, i32, i32
  }
  func.func @transform_2(%arg0: i32) -> (i32, i32) {
    %c0_i32 = arith.constant 0 : i32
    %c0_i32_0 = arith.constant 0 : i32
    %c0_i32_1 = arith.constant 0 : i32
    return %c0_i32, %c0_i32_0 : i32, i32
  }
  func.func @transform_3(%arg0: i32) -> (i32, i32) {
    %c0_i32 = arith.constant 0 : i32
    %c0_i32_0 = arith.constant 0 : i32
    %c0_i32_1 = arith.constant 0 : i32
    return %c0_i32, %c0_i32_0 : i32, i32
  }
  func.func @transform_4(%arg0: i32) -> (i32, i32) {
    %c0_i32 = arith.constant 0 : i32
    %c0_i32_0 = arith.constant 0 : i32
    %c0_i32_1 = arith.constant 0 : i32
    return %c0_i32, %c0_i32_0 : i32, i32
  }
  func.func @transform_5(%arg0: i32) -> (i32, i32) {
    %c0_i32 = arith.constant 0 : i32
    %c0_i32_0 = arith.constant 0 : i32
    %c0_i32_1 = arith.constant 0 : i32
    return %c0_i32, %c0_i32_0 : i32, i32
  }
  func.func @transform_6(%arg0: i32) -> (i32, i32) {
    %c0_i32 = arith.constant 0 : i32
    %c0_i32_0 = arith.constant 0 : i32
    %c0_i32_1 = arith.constant 0 : i32
    return %c0_i32, %c0_i32_0 : i32, i32
  }
  func.func @transform_7(%arg0: i32) -> (i32, i32) {
    %c0_i32 = arith.constant 0 : i32
    %c0_i32_0 = arith.constant 0 : i32
    %c0_i32_1 = arith.constant 0 : i32
    return %c0_i32, %c0_i32_0 : i32, i32
  }
  func.func @transform_8(%arg0: i32) -> (i32, i32) {
    %c0_i32 = arith.constant 0 : i32
    %c0_i32_0 = arith.constant 0 : i32
    %c0_i32_1 = arith.constant 0 : i32
    return %c0_i32, %c0_i32_0 : i32, i32
  }
  func.func @transform_9(%arg0: i32) -> (i32, i32) {
    %c0_i32 = arith.constant 0 : i32
    %c0_i32_0 = arith.constant 0 : i32
    %c0_i32_1 = arith.constant 0 : i32
    return %c0_i32, %c0_i32_0 : i32, i32
  }
  func.func @transform_10(%arg0: i32) -> (i32, i32) {
    %c0_i32 = arith.constant 0 : i32
    %c0_i32_0 = arith.constant 0 : i32
    %c0_i32_1 = arith.constant 0 : i32
    return %c0_i32, %c0_i32_0 : i32, i32
  }
  func.func @transform_11(%arg0: i32) -> (i32, i32) {
    %c0_i32 = arith.constant 0 : i32
    %c0_i32_0 = arith.constant 0 : i32
    %c0_i32_1 = arith.constant 0 : i32
    return %c0_i32, %c0_i32_0 : i32, i32
  }
  func.func @transform_12(%arg0: i32) -> (i32, i32) {
    %c0_i32 = arith.constant 0 : i32
    %c0_i32_0 = arith.constant 0 : i32
    %c0_i32_1 = arith.constant 0 : i32
    return %c0_i32, %c0_i32_0 : i32, i32
  }
  func.func @transform_13(%arg0: i32) -> (i32, i32) {
    %c0_i32 = arith.constant 0 : i32
    %c0_i32_0 = arith.constant 0 : i32
    %c0_i32_1 = arith.constant 0 : i32
    return %c0_i32, %c0_i32_0 : i32, i32
  }
  func.func @transform_14(%arg0: i32) -> (i32, i32) {
    %c0_i32 = arith.constant 0 : i32
    %c0_i32_0 = arith.constant 0 : i32
    %c0_i32_1 = arith.constant 0 : i32
    return %c0_i32, %c0_i32_0 : i32, i32
  }
  func.func @transform_15(%arg0: i32) -> (i32, i32, i32) {
    %c0_i32 = arith.constant 0 : i32
    %c0_i32_0 = arith.constant 0 : i32
    %c0_i32_1 = arith.constant 0 : i32
    return %arg0, %c0_i32, %c0_i32_0 : i32, i32, i32
  }
}

</mosaic_0001>

<llo_original>
// kernel: unet_forward.1
$region0: #{unet_forward.1}
  #allocation0 [shape = 'u32[]', space=smem, size = 0x4, offset = 0x4, fixed_abs, tag = 'smem constant byte address 0x4 - core index']
  #allocation1 [shape = 'u32[144,128]{1,0:T(1,128)}', space=vmem, size = 0x12000, scoped, tag = 'internal scratch']
  #allocation2 [shape = 'f32[18,18,4]{2,1,0:T(8,128)}', space=vmem, size = 0x36000, scoped, tag = 'scratch operand']
  #allocation3 [shape = 'f32[18,18,32]{2,1,0:T(8,128)}', space=vmem, size = 0x36000, scoped, tag = 'scratch operand']
  #allocation4 [shape = 'f32[10,10,32]{2,1,0:T(8,128)}', space=vmem, size = 0x14000, scoped, tag = 'scratch operand']
  #allocation5 [shape = 'f32[18,18,64]{2,1,0:T(8,128)}', space=vmem, size = 0x36000, scoped, tag = 'scratch operand']
  #allocation6 [shape = 'f32[16,16,32]{2,1,0:T(8,128)}', space=vmem, size = 0x20000, scoped, tag = 'scratch operand']
  %s0 = inlined_call_operand.vmem [shape: f32[2,16,16,4], index: 0, kind: input, shape index: {}]
  %s1 = inlined_call_operand.vmem [shape: f32[2,1,32], index: 1, kind: input, shape index: {}]
  %s2 = inlined_call_operand.vmem [shape: bf16[32,32], index: 2, kind: input, shape index: {}]
  %s3 = inlined_call_operand.vmem [shape: f32[1,32], index: 3, kind: input, shape index: {}]
  %s4 = inlined_call_operand.vmem [shape: bf16[36,32], index: 4, kind: input, shape index: {}]
  %s5 = inlined_call_operand.vmem [shape: f32[1,32], index: 5, kind: input, shape index: {}]
  %s6 = inlined_call_operand.vmem [shape: bf16[288,32], index: 6, kind: input, shape index: {}]
  %s7 = inlined_call_operand.vmem [shape: f32[1,32], index: 7, kind: input, shape index: {}]
  %s8 = inlined_call_operand.vmem [shape: bf16[288,64], index: 8, kind: input, shape index: {}]
  %s9 = inlined_call_operand.vmem [shape: f32[1,64], index: 9, kind: input, shape index: {}]
  %s10 = inlined_call_operand.vmem [shape: bf16[576,32], index: 10, kind: input, shape index: {}]
  %s11 = inlined_call_operand.vmem [shape: f32[1,32], index: 11, kind: input, shape index: {}]
  %s12 = inlined_call_operand.vmem [shape: bf16[4,32], index: 12, kind: input, shape index: {}]
  %s13 = inlined_call_operand.vmem [shape: f32[4,1], index: 13, kind: input, shape index: {}]
  %s14 = inlined_call_operand.vmem [shape: bf16[256,64], index: 14, kind: input, shape index: {}]
  %s15 = inlined_call_operand.vmem [shape: f32[2,4,256], index: 15, kind: output, shape index: {}]
  %s16 = sld [smem:[#allocation0]]
  $region93: #{unet_forward.1} parent=0
    _
  %s18 = ssub.s32 1, %s16
  %s19 = scalar_select 0, %s18, %s16
  loop: start=0, step=1, limit=4
  $region2: #{unet_forward.1} parent=0 // loop_pre_header
    _
  $region3: #{unet_forward.1} parent=0 // loop_header
    %s21 = sphi 0, %s25
    %p22 = scmp.ge.s32.totalorder %s21, 4
    %s31 = sphi 0, %s33
    %s34 = sphi 0, %s31
    %s35 = sphi 0, %s34
    %s51 = sphi 0, %s35
    %s57 = sphi 0, %s59
    %s60 = sphi 0, %s57
    %s61 = sphi 0, %s60
    %s77 = sphi 0, %s61
    %s81 = sphi 0, %s81
    %s83 = sphi 0, %s81
    %s84 = sphi 0, %s83
    %s98 = sphi 0, %s84
    %s102 = sphi 0, %s102
    %s104 = sphi 0, %s102
    %s105 = sphi 0, %s104
    %s119 = sphi 0, %s105
    %s123 = sphi 0, %s123
    %s125 = sphi 0, %s123
    %s126 = sphi 0, %s125
    %s140 = sphi 0, %s126
    %s144 = sphi 0, %s144
    %s146 = sphi 0, %s144
    %s147 = sphi 0, %s146
    %s161 = sphi 0, %s147
    %s165 = sphi 0, %s165
    %s167 = sphi 0, %s165
    %s168 = sphi 0, %s167
    %s182 = sphi 0, %s168
    %s186 = sphi 0, %s186
    %s188 = sphi 0, %s186
    %s189 = sphi 0, %s188
    %s203 = sphi 0, %s189
    %s207 = sphi 0, %s207
    %s209 = sphi 0, %s207
    %s210 = sphi 0, %s209
    %s224 = sphi 0, %s210
    %s228 = sphi 0, %s228
    %s230 = sphi 0, %s228
    %s231 = sphi 0, %s230
    %s245 = sphi 0, %s231
    %s249 = sphi 0, %s249
    %s251 = sphi 0, %s249
    %s252 = sphi 0, %s251
    %s266 = sphi 0, %s252
    %s270 = sphi 0, %s270
    %s272 = sphi 0, %s270
    %s273 = sphi 0, %s272
    %s287 = sphi 0, %s273
    %s291 = sphi 0, %s291
    %s293 = sphi 0, %s291
    %s294 = sphi 0, %s293
    %s308 = sphi 0, %s294
    %s312 = sphi 0, %s312
    %s314 = sphi 0, %s312
    %s315 = sphi 0, %s314
    %s329 = sphi 0, %s315
    %s333 = sphi 0, %s333
    %s335 = sphi 0, %s333
    %s336 = sphi 0, %s335
    %s350 = sphi 0, %s336
    %s356 = sphi 0, %s358
    %s359 = sphi 0, %s356
    %s360 = sphi 0, %s359
    %s376 = sphi 0, %s360
  $region4: #{unet_forward.1} parent=0 // loop_header_branch
    %24 = sbr.rel (%p22) target = $region8
  $region5: #{unet_forward.1} parent=0 // loop_body
    %s26 = ssub.s32 %s21, 1
    %s27 = ssub.s32 %s21, 2
    %s28 = sadd.s32 %s21, 1
    %s29 = ssub.s32 %s21, %s28
    %p30 = scmp.eq.s32.totalorder %s29, 0
    %s32 = sadd.s32 %s31, 1
    %s33 = scalar_select %p30, %s31, %s32
    %p36 = pneg %p30
    %p37 = scmp.eq.s32.totalorder %s21, 1
    %p38 = por %p36, %p37
    %p39 = scmp.ne.s32.totalorder %s31, %s34
    %p40 = scmp.eq.s32.totalorder %s21, 0
    %p41 = por %p39, %p40
    %p42 = scmp.ne.s32.totalorder %s31, %s34
    %p43 = scmp.eq.s32.totalorder %s26, 1
    %p44 = por %p42, %p43
    %p45 = scmp.ne.s32.totalorder %s34, %s35
    %p46 = scmp.eq.s32.totalorder %s26, 0
    %p47 = por %p45, %p46
    %p48 = scmp.ne.s32.totalorder %s34, %s35
    %p49 = scmp.eq.s32.totalorder %s27, 1
    %p50 = por %p48, %p49
    %p52 = scmp.ne.s32.totalorder %s35, %s51
    %p53 = scmp.eq.s32.totalorder %s27, 0
    %p54 = por %p52, %p53
    %s55 = ssub.s32 %s21, %s28
    %p56 = scmp.eq.s32.totalorder %s55, 0
    %s58 = sadd.s32 %s57, 1
    %s59 = scalar_select %p56, %s57, %s58
    %p62 = pneg %p56
    %p63 = scmp.eq.s32.totalorder %s21, 1
    %p64 = por %p62, %p63
    %p65 = scmp.ne.s32.totalorder %s57, %s60
    %p66 = scmp.eq.s32.totalorder %s21, 0
    %p67 = por %p65, %p66
    %p68 = scmp.ne.s32.totalorder %s57, %s60
    %p69 = scmp.eq.s32.totalorder %s26, 1
    %p70 = por %p68, %p69
    %p71 = scmp.ne.s32.totalorder %s60, %s61
    %p72 = scmp.eq.s32.totalorder %s26, 0
    %p73 = por %p71, %p72
    %p74 = scmp.ne.s32.totalorder %s60, %s61
    %p75 = scmp.eq.s32.totalorder %s27, 1
    %p76 = por %p74, %p75
    %p78 = scmp.ne.s32.totalorder %s61, %s77
    %p79 = scmp.eq.s32.totalorder %s27, 0
    %p80 = por %p78, %p79
    %s82 = sadd.s32 %s81, 1
    %p85 = scmp.eq.s32.totalorder %s21, 1
    %p86 = scmp.ne.s32.totalorder %s81, %s83
    %p87 = scmp.eq.s32.totalorder %s21, 0
    %p88 = por %p86, %p87
    %p89 = scmp.ne.s32.totalorder %s81, %s83
    %p90 = scmp.eq.s32.totalorder %s26, 1
    %p91 = por %p89, %p90
    %p92 = scmp.ne.s32.totalorder %s83, %s84
    %p93 = scmp.eq.s32.totalorder %s26, 0
    %p94 = por %p92, %p93
    %p95 = scmp.ne.s32.totalorder %s83, %s84
    %p96 = scmp.eq.s32.totalorder %s27, 1
    %p97 = por %p95, %p96
    %p99 = scmp.ne.s32.totalorder %s84, %s98
    %p100 = scmp.eq.s32.totalorder %s27, 0
    %p101 = por %p99, %p100
    %s103 = sadd.s32 %s102, 1
    %p106 = scmp.eq.s32.totalorder %s21, 1
    %p107 = scmp.ne.s32.totalorder %s102, %s104
    %p108 = scmp.eq.s32.totalorder %s21, 0
    %p109 = por %p107, %p108
    %p110 = scmp.ne.s32.totalorder %s102, %s104
    %p111 = scmp.eq.s32.totalorder %s26, 1
    %p112 = por %p110, %p111
    %p113 = scmp.ne.s32.totalorder %s104, %s105
    %p114 = scmp.eq.s32.totalorder %s26, 0
    %p115 = por %p113, %p114
    %p116 = scmp.ne.s32.totalorder %s104, %s105
    %p117 = scmp.eq.s32.totalorder %s27, 1
    %p118 = por %p116, %p117
    %p120 = scmp.ne.s32.totalorder %s105, %s119
    %p121 = scmp.eq.s32.totalorder %s27, 0
    %p122 = por %p120, %p121
    %s124 = sadd.s32 %s123, 1
    %p127 = scmp.eq.s32.totalorder %s21, 1
    %p128 = scmp.ne.s32.totalorder %s123, %s125
    %p129 = scmp.eq.s32.totalorder %s21, 0
    %p130 = por %p128, %p129
    %p131 = scmp.ne.s32.totalorder %s123, %s125
    %p132 = scmp.eq.s32.totalorder %s26, 1
    %p133 = por %p131, %p132
    %p134 = scmp.ne.s32.totalorder %s125, %s126
    %p135 = scmp.eq.s32.totalorder %s26, 0
    %p136 = por %p134, %p135
    %p137 = scmp.ne.s32.totalorder %s125, %s126
    %p138 = scmp.eq.s32.totalorder %s27, 1
    %p139 = por %p137, %p138
    %p141 = scmp.ne.s32.totalorder %s126, %s140
    %p142 = scmp.eq.s32.totalorder %s27, 0
    %p143 = por %p141, %p142
    %s145 = sadd.s32 %s144, 1
    %p148 = scmp.eq.s32.totalorder %s21, 1
    %p149 = scmp.ne.s32.totalorder %s144, %s146
    %p150 = scmp.eq.s32.totalorder %s21, 0
    %p151 = por %p149, %p150
    %p152 = scmp.ne.s32.totalorder %s144, %s146
    %p153 = scmp.eq.s32.totalorder %s26, 1
    %p154 = por %p152, %p153
    %p155 = scmp.ne.s32.totalorder %s146, %s147
    %p156 = scmp.eq.s32.totalorder %s26, 0
    %p157 = por %p155, %p156
    %p158 = scmp.ne.s32.totalorder %s146, %s147
    %p159 = scmp.eq.s32.totalorder %s27, 1
    %p160 = por %p158, %p159
    %p162 = scmp.ne.s32.totalorder %s147, %s161
    %p163 = scmp.eq.s32.totalorder %s27, 0
    %p164 = por %p162, %p163
    %s166 = sadd.s32 %s165, 1
    %p169 = scmp.eq.s32.totalorder %s21, 1
    %p170 = scmp.ne.s32.totalorder %s165, %s167
    %p171 = scmp.eq.s32.totalorder %s21, 0
    %p172 = por %p170, %p171
    %p173 = scmp.ne.s32.totalorder %s165, %s167
    %p174 = scmp.eq.s32.totalorder %s26, 1
    %p175 = por %p173, %p174
    %p176 = scmp.ne.s32.totalorder %s167, %s168
    %p177 = scmp.eq.s32.totalorder %s26, 0
    %p178 = por %p176, %p177
    %p179 = scmp.ne.s32.totalorder %s167, %s168
    %p180 = scmp.eq.s32.totalorder %s27, 1
    %p181 = por %p179, %p180
    %p183 = scmp.ne.s32.totalorder %s168, %s182
    %p184 = scmp.eq.s32.totalorder %s27, 0
    %p185 = por %p183, %p184
    %s187 = sadd.s32 %s186, 1
    %p190 = scmp.eq.s32.totalorder %s21, 1
    %p191 = scmp.ne.s32.totalorder %s186, %s188
    %p192 = scmp.eq.s32.totalorder %s21, 0
    %p193 = por %p191, %p192
    %p194 = scmp.ne.s32.totalorder %s186, %s188
    %p195 = scmp.eq.s32.totalorder %s26, 1
    %p196 = por %p194, %p195
    %p197 = scmp.ne.s32.totalorder %s188, %s189
    %p198 = scmp.eq.s32.totalorder %s26, 0
    %p199 = por %p197, %p198
    %p200 = scmp.ne.s32.totalorder %s188, %s189
    %p201 = scmp.eq.s32.totalorder %s27, 1
    %p202 = por %p200, %p201
    %p204 = scmp.ne.s32.totalorder %s189, %s203
    %p205 = scmp.eq.s32.totalorder %s27, 0
    %p206 = por %p204, %p205
    %s208 = sadd.s32 %s207, 1
    %p211 = scmp.eq.s32.totalorder %s21, 1
    %p212 = scmp.ne.s32.totalorder %s207, %s209
    %p213 = scmp.eq.s32.totalorder %s21, 0
    %p214 = por %p212, %p213
    %p215 = scmp.ne.s32.totalorder %s207, %s209
    %p216 = scmp.eq.s32.totalorder %s26, 1
    %p217 = por %p215, %p216
    %p218 = scmp.ne.s32.totalorder %s209, %s210
    %p219 = scmp.eq.s32.totalorder %s26, 0
    %p220 = por %p218, %p219
    %p221 = scmp.ne.s32.totalorder %s209, %s210
    %p222 = scmp.eq.s32.totalorder %s27, 1
    %p223 = por %p221, %p222
    %p225 = scmp.ne.s32.totalorder %s210, %s224
    %p226 = scmp.eq.s32.totalorder %s27, 0
    %p227 = por %p225, %p226
    %s229 = sadd.s32 %s228, 1
    %p232 = scmp.eq.s32.totalorder %s21, 1
    %p233 = scmp.ne.s32.totalorder %s228, %s230
    %p234 = scmp.eq.s32.totalorder %s21, 0
    %p235 = por %p233, %p234
    %p236 = scmp.ne.s32.totalorder %s228, %s230
    %p237 = scmp.eq.s32.totalorder %s26, 1
    %p238 = por %p236, %p237
    %p239 = scmp.ne.s32.totalorder %s230, %s231
    %p240 = scmp.eq.s32.totalorder %s26, 0
    %p241 = por %p239, %p240
    %p242 = scmp.ne.s32.totalorder %s230, %s231
    %p243 = scmp.eq.s32.totalorder %s27, 1
    %p244 = por %p242, %p243
    %p246 = scmp.ne.s32.totalorder %s231, %s245
    %p247 = scmp.eq.s32.totalorder %s27, 0
    %p248 = por %p246, %p247
    %s250 = sadd.s32 %s249, 1
    %p253 = scmp.eq.s32.totalorder %s21, 1
    %p254 = scmp.ne.s32.totalorder %s249, %s251
    %p255 = scmp.eq.s32.totalorder %s21, 0
    %p256 = por %p254, %p255
    %p257 = scmp.ne.s32.totalorder %s249, %s251
    %p258 = scmp.eq.s32.totalorder %s26, 1
    %p259 = por %p257, %p258
    %p260 = scmp.ne.s32.totalorder %s251, %s252
    %p261 = scmp.eq.s32.totalorder %s26, 0
    %p262 = por %p260, %p261
    %p263 = scmp.ne.s32.totalorder %s251, %s252
    %p264 = scmp.eq.s32.totalorder %s27, 1
    %p265 = por %p263, %p264
    %p267 = scmp.ne.s32.totalorder %s252, %s266
    %p268 = scmp.eq.s32.totalorder %s27, 0
    %p269 = por %p267, %p268
    %s271 = sadd.s32 %s270, 1
    %p274 = scmp.eq.s32.totalorder %s21, 1
    %p275 = scmp.ne.s32.totalorder %s270, %s272
    %p276 = scmp.eq.s32.totalorder %s21, 0
    %p277 = por %p275, %p276
    %p278 = scmp.ne.s32.totalorder %s270, %s272
    %p279 = scmp.eq.s32.totalorder %s26, 1
    %p280 = por %p278, %p279
    %p281 = scmp.ne.s32.totalorder %s272, %s273
    %p282 = scmp.eq.s32.totalorder %s26, 0
    %p283 = por %p281, %p282
    %p284 = scmp.ne.s32.totalorder %s272, %s273
    %p285 = scmp.eq.s32.totalorder %s27, 1
    %p286 = por %p284, %p285
    %p288 = scmp.ne.s32.totalorder %s273, %s287
    %p289 = scmp.eq.s32.totalorder %s27, 0
    %p290 = por %p288, %p289
    %s292 = sadd.s32 %s291, 1
    %p295 = scmp.eq.s32.totalorder %s21, 1
    %p296 = scmp.ne.s32.totalorder %s291, %s293
    %p297 = scmp.eq.s32.totalorder %s21, 0
    %p298 = por %p296, %p297
    %p299 = scmp.ne.s32.totalorder %s291, %s293
    %p300 = scmp.eq.s32.totalorder %s26, 1
    %p301 = por %p299, %p300
    %p302 = scmp.ne.s32.totalorder %s293, %s294
    %p303 = scmp.eq.s32.totalorder %s26, 0
    %p304 = por %p302, %p303
    %p305 = scmp.ne.s32.totalorder %s293, %s294
    %p306 = scmp.eq.s32.totalorder %s27, 1
    %p307 = por %p305, %p306
    %p309 = scmp.ne.s32.totalorder %s294, %s308
    %p310 = scmp.eq.s32.totalorder %s27, 0
    %p311 = por %p309, %p310
    %s313 = sadd.s32 %s312, 1
    %p316 = scmp.eq.s32.totalorder %s21, 1
    %p317 = scmp.ne.s32.totalorder %s312, %s314
    %p318 = scmp.eq.s32.totalorder %s21, 0
    %p319 = por %p317, %p318
    %p320 = scmp.ne.s32.totalorder %s312, %s314
    %p321 = scmp.eq.s32.totalorder %s26, 1
    %p322 = por %p320, %p321
    %p323 = scmp.ne.s32.totalorder %s314, %s315
    %p324 = scmp.eq.s32.totalorder %s26, 0
    %p325 = por %p323, %p324
    %p326 = scmp.ne.s32.totalorder %s314, %s315
    %p327 = scmp.eq.s32.totalorder %s27, 1
    %p328 = por %p326, %p327
    %p330 = scmp.ne.s32.totalorder %s315, %s329
    %p331 = scmp.eq.s32.totalorder %s27, 0
    %p332 = por %p330, %p331
    %s334 = sadd.s32 %s333, 1
    %p337 = scmp.eq.s32.totalorder %s21, 1
    %p338 = scmp.ne.s32.totalorder %s333, %s335
    %p339 = scmp.eq.s32.totalorder %s21, 0
    %p340 = por %p338, %p339
    %p341 = scmp.ne.s32.totalorder %s333, %s335
    %p342 = scmp.eq.s32.totalorder %s26, 1
    %p343 = por %p341, %p342
    %p344 = scmp.ne.s32.totalorder %s335, %s336
    %p345 = scmp.eq.s32.totalorder %s26, 0
    %p346 = por %p344, %p345
    %p347 = scmp.ne.s32.totalorder %s335, %s336
    %p348 = scmp.eq.s32.totalorder %s27, 1
    %p349 = por %p347, %p348
    %p351 = scmp.ne.s32.totalorder %s336, %s350
    %p352 = scmp.eq.s32.totalorder %s27, 0
    %p353 = por %p351, %p352
    %s354 = ssub.s32 %s21, %s28
    %p355 = scmp.eq.s32.totalorder %s354, 0
    %s357 = sadd.s32 %s356, 1
    %s358 = scalar_select %p355, %s356, %s357
    %p361 = pneg %p355
    %p362 = scmp.eq.s32.totalorder %s21, 1
    %p363 = por %p361, %p362
    %p364 = scmp.ne.s32.totalorder %s356, %s359
    %p365 = scmp.eq.s32.totalorder %s21, 0
    %p366 = por %p364, %p365
    %p367 = scmp.ne.s32.totalorder %s356, %s359
    %p368 = scmp.eq.s32.totalorder %s26, 1
    %p369 = por %p367, %p368
    %p370 = scmp.ne.s32.totalorder %s359, %s360
    %p371 = scmp.eq.s32.totalorder %s26, 0
    %p372 = por %p370, %p371
    %p373 = scmp.ne.s32.totalorder %s359, %s360
    %p374 = scmp.eq.s32.totalorder %s27, 1
    %p375 = por %p373, %p374
    %p377 = scmp.ne.s32.totalorder %s360, %s376
    %p378 = scmp.eq.s32.totalorder %s27, 0
    %p379 = por %p377, %p378
    %p380 = scmp.le.s32.totalorder 1, %s21
    %p381 = scmp.lt.s32.totalorder %s21, 3
    %p382 = pnand %p380, %p381
    %p383 = pneg %p382
    // Predicated region
    $region9: #{unet_forward.1} parent=5 // pred_check
      _
    $region10: #{unet_forward.1} parent=5 // pred_check_branch
      %385 = sbr.rel (%p382) target = $region12
    $region11: #{unet_forward.1} parent=5 // pred_region
      %s386 = ssub.s32 %s21, 1
      // Predicated region
      $region13: #{unet_forward.1} parent=11 // pred_check
        %p387 = pneg %p94
      $region14: #{unet_forward.1} parent=11 // pred_check_branch
        %389 = sbr.rel (%p387) target = $region16
      $region15: #{unet_forward.1} parent=11 // pred_region
        _
      $region16: #{unet_forward.1} parent=11 // pred_fallthru
        _
      // Predicated region
      $region17: #{unet_forward.1} parent=11 // pred_check
        %p390 = pneg %p115
      $region18: #{unet_forward.1} parent=11 // pred_check_branch
        %392 = sbr.rel (%p390) target = $region20
      $region19: #{unet_forward.1} parent=11 // pred_region
        _
      $region20: #{unet_forward.1} parent=11 // pred_fallthru
        _
      // Predicated region
      $region21: #{unet_forward.1} parent=11 // pred_check
        %p393 = pneg %p136
      $region22: #{unet_forward.1} parent=11 // pred_check_branch
        %395 = sbr.rel (%p393) target = $region24
      $region23: #{unet_forward.1} parent=11 // pred_region
        _
      $region24: #{unet_forward.1} parent=11 // pred_fallthru
        _
      // Predicated region
      $region25: #{unet_forward.1} parent=11 // pred_check
        %p396 = pneg %p157
      $region26: #{unet_forward.1} parent=11 // pred_check_branch
        %398 = sbr.rel (%p396) target = $region28
      $region27: #{unet_forward.1} parent=11 // pred_region
        _
      $region28: #{unet_forward.1} parent=11 // pred_fallthru
        _
      // Predicated region
      $region29: #{unet_forward.1} parent=11 // pred_check
        %p399 = pneg %p178
      $region30: #{unet_forward.1} parent=11 // pred_check_branch
        %401 = sbr.rel (%p399) target = $region32
      $region31: #{unet_forward.1} parent=11 // pred_region
        _
      $region32: #{unet_forward.1} parent=11 // pred_fallthru
        _
      // Predicated region
      $region33: #{unet_forward.1} parent=11 // pred_check
        %p402 = pneg %p199
      $region34: #{unet_forward.1} parent=11 // pred_check_branch
        %404 = sbr.rel (%p402) target = $region36
      $region35: #{unet_forward.1} parent=11 // pred_region
        _
      $region36: #{unet_forward.1} parent=11 // pred_fallthru
        _
      // Predicated region
      $region37: #{unet_forward.1} parent=11 // pred_check
        %p405 = pneg %p220
      $region38: #{unet_forward.1} parent=11 // pred_check_branch
        %407 = sbr.rel (%p405) target = $region40
      $region39: #{unet_forward.1} parent=11 // pred_region
        _
      $region40: #{unet_forward.1} parent=11 // pred_fallthru
        _
      // Predicated region
      $region41: #{unet_forward.1} parent=11 // pred_check
        %p408 = pneg %p241
      $region42: #{unet_forward.1} parent=11 // pred_check_branch
        %410 = sbr.rel (%p408) target = $region44
      $region43: #{unet_forward.1} parent=11 // pred_region
        _
      $region44: #{unet_forward.1} parent=11 // pred_fallthru
        _
      // Predicated region
      $region45: #{unet_forward.1} parent=11 // pred_check
        %p411 = pneg %p262
      $region46: #{unet_forward.1} parent=11 // pred_check_branch
        %413 = sbr.rel (%p411) target = $region48
      $region47: #{unet_forward.1} parent=11 // pred_region
        _
      $region48: #{unet_forward.1} parent=11 // pred_fallthru
        _
      // Predicated region
      $region49: #{unet_forward.1} parent=11 // pred_check
        %p414 = pneg %p283
      $region50: #{unet_forward.1} parent=11 // pred_check_branch
        %416 = sbr.rel (%p414) target = $region52
      $region51: #{unet_forward.1} parent=11 // pred_region
        _
      $region52: #{unet_forward.1} parent=11 // pred_fallthru
        _
      // Predicated region
      $region53: #{unet_forward.1} parent=11 // pred_check
        %p417 = pneg %p304
      $region54: #{unet_forward.1} parent=11 // pred_check_branch
        %419 = sbr.rel (%p417) target = $region56
      $region55: #{unet_forward.1} parent=11 // pred_region
        _
      $region56: #{unet_forward.1} parent=11 // pred_fallthru
        _
      // Predicated region
      $region57: #{unet_forward.1} parent=11 // pred_check
        %p420 = pneg %p325
      $region58: #{unet_forward.1} parent=11 // pred_check_branch
        %422 = sbr.rel (%p420) target = $region60
      $region59: #{unet_forward.1} parent=11 // pred_region
        _
      $region60: #{unet_forward.1} parent=11 // pred_fallthru
        _
      // Predicated region
      $region61: #{unet_forward.1} parent=11 // pred_check
        %p423 = pneg %p346
      $region62: #{unet_forward.1} parent=11 // pred_check_branch
        %425 = sbr.rel (%p423) target = $region64
      $region63: #{unet_forward.1} parent=11 // pred_region
        _
      $region64: #{unet_forward.1} parent=11 // pred_fallthru
        _
    $region12: #{unet_forward.1} parent=5 // pred_fallthru
      _
    %p426 = scmp.lt.s32.totalorder %s21, 2
    // Predicated region
    $region65: #{unet_forward.1} parent=5 // pred_check
      %p427 = pneg %p426
    $region66: #{unet_forward.1} parent=5 // pred_check_branch
      %429 = sbr.rel (%p427) target = $region68
    $region67: #{unet_forward.1} parent=5 // pred_region
      // Predicated region
      $region69: #{unet_forward.1} parent=67 // pred_check
        %p430 = pneg %p41
      $region70: #{unet_forward.1} parent=67 // pred_check_branch
        %432 = sbr.rel (%p430) target = $region72
      $region71: #{unet_forward.1} parent=67 // pred_region
        %p433 = scmp.lt.s32.totalorder %s21, 1
        %s434 = scalar_select %p433, %s21, 1
        %s435 = smul.addr %s434, 32
        %s436 = smul.addr %s435, 8
        %s437 = scalar_lea.vmem %s0, %s436
      $region72: #{unet_forward.1} parent=67 // pred_fallthru
        _
      // Predicated region
      $region73: #{unet_forward.1} parent=67 // pred_check
        %p438 = pneg %p67
      $region74: #{unet_forward.1} parent=67 // pred_check_branch
        %440 = sbr.rel (%p438) target = $region76
      $region75: #{unet_forward.1} parent=67 // pred_region
        %p441 = scmp.lt.s32.totalorder %s21, 1
        %s442 = scalar_select %p441, %s21, 1
        %s443 = scalar_lea.vmem %s1, %s442
      $region76: #{unet_forward.1} parent=67 // pred_fallthru
        _
    $region68: #{unet_forward.1} parent=5 // pred_fallthru
      _
    %p444 = scmp.le.s32.totalorder 1, %s21
    %p445 = scmp.lt.s32.totalorder %s21, 3
    %p446 = pnand %p444, %p445
    %p447 = pneg %p446
    // Predicated region
    $region77: #{unet_forward.1} parent=5 // pred_check
      _
    $region78: #{unet_forward.1} parent=5 // pred_check_branch
      %449 = sbr.rel (%p446) target = $region80
    $region79: #{unet_forward.1} parent=5 // pred_region
      %s450 = ssub.s32 %s21, 1
      %p451 = scmp.lt.s32.totalorder %s26, 1
      %s452 = scalar_select %p451, %s26, 1
      %s453 = smul.addr %s452, 32
      %s454 = smul.addr %s453, 8
      %s455 = scalar_lea.vmem %s0, %s454
      %p456 = pneg %p47
      %p457 = pneg %p44
      %p458 = scmp.lt.s32.totalorder %s26, 1
      %s459 = scalar_select %p458, %s26, 1
      %s460 = scalar_lea.vmem %s1, %s459
      %p461 = pneg %p73
      %p462 = pneg %p70
      %p463 = pneg %p94
      %p464 = pneg %p91
      %p465 = pneg %p115
      %p466 = pneg %p112
      %p467 = pneg %p136
      %p468 = pneg %p133
      %p469 = pneg %p157
      %p470 = pneg %p154
      %p471 = pneg %p178
      %p472 = pneg %p175
      %p473 = pneg %p199
      %p474 = pneg %p196
      %p475 = pneg %p220
      %p476 = pneg %p217
      %p477 = pneg %p241
      %p478 = pneg %p238
      %p479 = pneg %p262
      %p480 = pneg %p259
      %p481 = pneg %p283
      %p482 = pneg %p280
      %p483 = pneg %p304
      %p484 = pneg %p301
      %p485 = pneg %p325
      %p486 = pneg %p322
      %p487 = pneg %p346
      %p488 = pneg %p343
      %p489 = pneg %p372
      %p490 = pneg %p369
      %p491 = scmp.lt.s32.totalorder %s26, 1
      %s492 = scalar_select %p491, %s26, 1
      %s493 = smul.addr %s492, 2
      %s494 = smul.addr %s493, 4
      %s495 = scalar_lea.vmem %s15, %s494
      %p496 = scmp.lt.s32.totalorder %s26, 1
      %s497 = scalar_select %p496, %s26, 1
      %s498 = smul.addr %s497, 32
      %s499 = smul.addr %s498, 8
      %s500 = scalar_lea.vmem %s0, %s499
      %p501 = scmp.lt.s32.totalorder %s26, 1
      %s502 = scalar_select %p501, %s26, 1
      %s503 = scalar_lea.vmem %s1, %s502
      %p504 = scmp.lt.s32.totalorder %s26, 1
      %s505 = scalar_select %p504, %s26, 1
      %s506 = smul.addr %s505, 2
      %s507 = smul.addr %s506, 4
      %s508 = scalar_lea.vmem %s15, %s507
      %v510 = vld [vmem:[%s503] sm:$0x1]
      %v511 = vpack.c.bf16 %v510, %v510
      %v512 = vld [vmem:[%s2] sm:$0xf]
      %v513 = vld [vmem:[%s2 + $0x4] sm:$0xf]
      %v514 = vld [vmem:[%s2 + $0x8] sm:$0xf]
      %v515 = vld [vmem:[%s2 + $0xc] sm:$0xf]
      %v516 = vld [vmem:[%s3] sm:$0x1]
      %v521 = vunpack.c.l.b16 %v512
      %v522 = vunpack.c.l.b16 %v513
      %v523 = vunpack.c.l.b16 %v514
      %v524 = vunpack.c.l.b16 %v515
      %v525 = vpack.c.b16 %v522, %v521
      %v526 = vpack.c.b16 %v524, %v523
      %vm529 = vcmask 261120
      %v531 = vsel %vm529, %v511, 0
      %533 = vmatprep.subr.bf16.mxu0 0
      %534 = vmatpush1.bf16.msra.mxu0 0
      %535 = vmatprep.subr.bf16.mxu0 0
      %536 = vmatpush1.bf16.msra.mxu0 0
      %537 = vmatprep.subr.bf16.mxu0 0
      %538 = vmatpush1.bf16.msra.mxu0 0
      %539 = vmatprep.subr.bf16.mxu0 0
      %540 = vmatpush1.bf16.msra.mxu0 0
      %541 = vmatprep.subr.bf16.mxu0 0
      %542 = vmatpush1.bf16.msra.mxu0 0
      %543 = vmatprep.subr.bf16.mxu0 0
      %544 = vmatpush1.bf16.msra.mxu0 0
      %545 = vmatprep.subr.bf16.mxu0 0
      %546 = vmatpush1.bf16.msra.mxu0 %v526
      %547 = vmatprep.subr.bf16.mxu0 0
      %548 = vmatpush1.bf16.msra.mxu0 %v525
      %549 = vmatprep.subr.bf16.mxu0 0
      %550 = vmatpush2.bf16.msra.mxu0 0
      %551 = vmatprep.subr.bf16.mxu0 0
      %552 = vmatpush2.bf16.msra.mxu0 0
      %553 = vmatprep.subr.bf16.mxu0 0
      %554 = vmatpush2.bf16.msra.mxu0 0
      %555 = vmatprep.subr.bf16.mxu0 0
      %556 = vmatpush2.bf16.msra.mxu0 0
      %557 = vmatprep.subr.bf16.mxu0 0
      %558 = vmatpush2.bf16.msra.mxu0 0
      %559 = vmatprep.subr.bf16.mxu0 0
      %560 = vmatpush2.bf16.msra.mxu0 0
      %561 = vmatprep.subr.bf16.mxu0 0
      %562 = vmatpush2.bf16.msra.mxu0 0
      %563 = vmatprep.subr.bf16.mxu0 0
      %564 = vmatpush2.bf16.msra.mxu0 0
      %565 = vmatprep.mubr.bf16.mxu0 0
      %566 = vmatmul.mubr.bf16.gmra.mxu0 %v531
      %v567 = vpop.f32.mrf.mxu0
      %v568 = vadd.f32 %v516, %v567
      %v569 = vpop.f32.mrf.mxu0
      %v570 = vpop.f32.mrf.mxu0
      %v571 = vpop.f32.mrf.mxu0
      %572 = vdwg.mxu0
      %v573 = vmax.f32 %v568, 0.0
      %v574 = vld [vmem:[%s500] sm:$0xff]
      %v575 = vld [vmem:[%s500 + $0x8] sm:$0xff]
      %v576 = vld [vmem:[%s500 + $0x10] sm:$0xff]
      %v577 = vld [vmem:[%s500 + $0x18] sm:$0xff]
      %v578 = vld [vmem:[%s500 + $0x20] sm:$0xff]
      %v579 = vld [vmem:[%s500 + $0x28] sm:$0xff]
      %v580 = vld [vmem:[%s500 + $0x30] sm:$0xff]
      %v581 = vld [vmem:[%s500 + $0x38] sm:$0xff]
      %v582 = vld [vmem:[%s500 + $0x40] sm:$0xff]
      %v583 = vld [vmem:[%s500 + $0x48] sm:$0xff]
      %v584 = vld [vmem:[%s500 + $0x50] sm:$0xff]
      %v585 = vld [vmem:[%s500 + $0x58] sm:$0xff]
      %v586 = vld [vmem:[%s500 + $0x60] sm:$0xff]
      %v587 = vld [vmem:[%s500 + $0x68] sm:$0xff]
      %v588 = vld [vmem:[%s500 + $0x70] sm:$0xff]
      %v589 = vld [vmem:[%s500 + $0x78] sm:$0xff]
      %v590 = vld [vmem:[%s500 + $0x80] sm:$0xff]
      %v591 = vld [vmem:[%s500 + $0x88] sm:$0xff]
      %v592 = vld [vmem:[%s500 + $0x90] sm:$0xff]
      %v593 = vld [vmem:[%s500 + $0x98] sm:$0xff]
      %v594 = vld [vmem:[%s500 + $0xa0] sm:$0xff]
      %v595 = vld [vmem:[%s500 + $0xa8] sm:$0xff]
      %v596 = vld [vmem:[%s500 + $0xb0] sm:$0xff]
      %v597 = vld [vmem:[%s500 + $0xb8] sm:$0xff]
      %v598 = vld [vmem:[%s500 + $0xc0] sm:$0xff]
      %v599 = vld [vmem:[%s500 + $0xc8] sm:$0xff]
      %v600 = vld [vmem:[%s500 + $0xd0] sm:$0xff]
      %v601 = vld [vmem:[%s500 + $0xd8] sm:$0xff]
      %v602 = vld [vmem:[%s500 + $0xe0] sm:$0xff]
      %v603 = vld [vmem:[%s500 + $0xe8] sm:$0xff]
      %v604 = vld [vmem:[%s500 + $0xf0] sm:$0xff]
      %v605 = vld [vmem:[%s500 + $0xf8] sm:$0xff]
      %vm606 = vcmask 31744
      %607 = vst.msk [vmem:[#allocation2] sm:$0xff] %vm606, 0.0
      %608 = vst.msk [vmem:[#allocation2 + $0x8] sm:$0xff] %vm606, 0.0
      %vm609 = vcmask 25600
      %610 = vst.msk [vmem:[#allocation2 + $0x10] sm:$0x3] %vm609, 0.0
      %611 = vst.msk [vmem:[#allocation2 + $0x18] sm:$0xff] %vm606, 0.0
      %612 = vst.msk [vmem:[#allocation2 + $0x20] sm:$0xff] %vm606, 0.0
      %613 = vst.msk [vmem:[#allocation2 + $0x28] sm:$0x3] %vm609, 0.0
      %614 = vst.msk [vmem:[#allocation2 + $0x30] sm:$0xff] %vm606, 0.0
      %615 = vst.msk [vmem:[#allocation2 + $0x38] sm:$0xff] %vm606, 0.0
      %616 = vst.msk [vmem:[#allocation2 + $0x40] sm:$0x3] %vm609, 0.0
      %617 = vst.msk [vmem:[#allocation2 + $0x48] sm:$0xff] %vm606, 0.0
      %618 = vst.msk [vmem:[#allocation2 + $0x50] sm:$0xff] %vm606, 0.0
      %619 = vst.msk [vmem:[#allocation2 + $0x58] sm:$0x3] %vm609, 0.0
      %620 = vst.msk [vmem:[#allocation2 + $0x60] sm:$0xff] %vm606, 0.0
      %621 = vst.msk [vmem:[#allocation2 + $0x68] sm:$0xff] %vm606, 0.0
      %622 = vst.msk [vmem:[#allocation2 + $0x70] sm:$0x3] %vm609, 0.0
      %623 = vst.msk [vmem:[#allocation2 + $0x78] sm:$0xff] %vm606, 0.0
      %624 = vst.msk [vmem:[#allocation2 + $0x80] sm:$0xff] %vm606, 0.0
      %625 = vst.msk [vmem:[#allocation2 + $0x88] sm:$0x3] %vm609, 0.0
      %626 = vst.msk [vmem:[#allocation2 + $0x90] sm:$0xff] %vm606, 0.0
      %627 = vst.msk [vmem:[#allocation2 + $0x98] sm:$0xff] %vm606, 0.0
      %628 = vst.msk [vmem:[#allocation2 + $0xa0] sm:$0x3] %vm609, 0.0
      %629 = vst.msk [vmem:[#allocation2 + $0xa8] sm:$0xff] %vm606, 0.0
      %630 = vst.msk [vmem:[#allocation2 + $0xb0] sm:$0xff] %vm606, 0.0
      %631 = vst.msk [vmem:[#allocation2 + $0xb8] sm:$0x3] %vm609, 0.0
      %632 = vst.msk [vmem:[#allocation2 + $0xc0] sm:$0xff] %vm606, 0.0
      %633 = vst.msk [vmem:[#allocation2 + $0xc8] sm:$0xff] %vm606, 0.0
      %634 = vst.msk [vmem:[#allocation2 + $0xd0] sm:$0x3] %vm609, 0.0
      %635 = vst.msk [vmem:[#allocation2 + $0xd8] sm:$0xff] %vm606, 0.0
      %636 = vst.msk [vmem:[#allocation2 + $0xe0] sm:$0xff] %vm606, 0.0
      %637 = vst.msk [vmem:[#allocation2 + $0xe8] sm:$0x3] %vm609, 0.0
      %638 = vst.msk [vmem:[#allocation2 + $0xf0] sm:$0xff] %vm606, 0.0
      %639 = vst.msk [vmem:[#allocation2 + $0xf8] sm:$0xff] %vm606, 0.0
      %640 = vst.msk [vmem:[#allocation2 + $0x100] sm:$0x3] %vm609, 0.0
      %641 = vst.msk [vmem:[#allocation2 + $0x108] sm:$0xff] %vm606, 0.0
      %642 = vst.msk [vmem:[#allocation2 + $0x110] sm:$0xff] %vm606, 0.0
      %643 = vst.msk [vmem:[#allocation2 + $0x118] sm:$0x3] %vm609, 0.0
      %644 = vst.msk [vmem:[#allocation2 + $0x120] sm:$0xff] %vm606, 0.0
      %645 = vst.msk [vmem:[#allocation2 + $0x128] sm:$0xff] %vm606, 0.0
      %646 = vst.msk [vmem:[#allocation2 + $0x130] sm:$0x3] %vm609, 0.0
      %647 = vst.msk [vmem:[#allocation2 + $0x138] sm:$0xff] %vm606, 0.0
      %648 = vst.msk [vmem:[#allocation2 + $0x140] sm:$0xff] %vm606, 0.0
      %649 = vst.msk [vmem:[#allocation2 + $0x148] sm:$0x3] %vm609, 0.0
      %650 = vst.msk [vmem:[#allocation2 + $0x150] sm:$0xff] %vm606, 0.0
      %651 = vst.msk [vmem:[#allocation2 + $0x158] sm:$0xff] %vm606, 0.0
      %652 = vst.msk [vmem:[#allocation2 + $0x160] sm:$0x3] %vm609, 0.0
      %653 = vst.msk [vmem:[#allocation2 + $0x168] sm:$0xff] %vm606, 0.0
      %654 = vst.msk [vmem:[#allocation2 + $0x170] sm:$0xff] %vm606, 0.0
      %655 = vst.msk [vmem:[#allocation2 + $0x178] sm:$0x3] %vm609, 0.0
      %656 = vst.msk [vmem:[#allocation2 + $0x180] sm:$0xff] %vm606, 0.0
      %657 = vst.msk [vmem:[#allocation2 + $0x188] sm:$0xff] %vm606, 0.0
      %658 = vst.msk [vmem:[#allocation2 + $0x190] sm:$0x3] %vm609, 0.0
      %659 = vst.msk [vmem:[#allocation2 + $0x198] sm:$0xff] %vm606, 0.0
      %660 = vst.msk [vmem:[#allocation2 + $0x1a0] sm:$0xff] %vm606, 0.0
      %661 = vst.msk [vmem:[#allocation2 + $0x1a8] sm:$0x3] %vm609, 0.0
      %s662 = scalar_lea.vmem [#allocation2], 24
      %663 = vst.msk [vmem:[%s662 + $0x1] sm:$0xff] %vm606, %v574
      %664 = vst.msk [vmem:[%s662 + $0x9] sm:$0xff] %vm606, %v575
      %665 = vst.msk [vmem:[%s662 + $0x19] sm:$0xff] %vm606, %v576
      %666 = vst.msk [vmem:[%s662 + $0x21] sm:$0xff] %vm606, %v577
      %667 = vst.msk [vmem:[%s662 + $0x31] sm:$0xff] %vm606, %v578
      %668 = vst.msk [vmem:[%s662 + $0x39] sm:$0xff] %vm606, %v579
      %669 = vst.msk [vmem:[%s662 + $0x49] sm:$0xff] %vm606, %v580
      %670 = vst.msk [vmem:[%s662 + $0x51] sm:$0xff] %vm606, %v581
      %671 = vst.msk [vmem:[%s662 + $0x61] sm:$0xff] %vm606, %v582
      %672 = vst.msk [vmem:[%s662 + $0x69] sm:$0xff] %vm606, %v583
      %673 = vst.msk [vmem:[%s662 + $0x79] sm:$0xff] %vm606, %v584
      %674 = vst.msk [vmem:[%s662 + $0x81] sm:$0xff] %vm606, %v585
      %675 = vst.msk [vmem:[%s662 + $0x91] sm:$0xff] %vm606, %v586
      %676 = vst.msk [vmem:[%s662 + $0x99] sm:$0xff] %vm606, %v587
      %677 = vst.msk [vmem:[%s662 + $0xa9] sm:$0xff] %vm606, %v588
      %678 = vst.msk [vmem:[%s662 + $0xb1] sm:$0xff] %vm606, %v589
      %679 = vst.msk [vmem:[%s662 + $0xc1] sm:$0xff] %vm606, %v590
      %680 = vst.msk [vmem:[%s662 + $0xc9] sm:$0xff] %vm606, %v591
      %681 = vst.msk [vmem:[%s662 + $0xd9] sm:$0xff] %vm606, %v592
      %682 = vst.msk [vmem:[%s662 + $0xe1] sm:$0xff] %vm606, %v593
      %683 = vst.msk [vmem:[%s662 + $0xf1] sm:$0xff] %vm606, %v594
      %684 = vst.msk [vmem:[%s662 + $0xf9] sm:$0xff] %vm606, %v595
      %685 = vst.msk [vmem:[%s662 + $0x109] sm:$0xff] %vm606, %v596
      %686 = vst.msk [vmem:[%s662 + $0x111] sm:$0xff] %vm606, %v597
      %687 = vst.msk [vmem:[%s662 + $0x121] sm:$0xff] %vm606, %v598
      %688 = vst.msk [vmem:[%s662 + $0x129] sm:$0xff] %vm606, %v599
      %689 = vst.msk [vmem:[%s662 + $0x139] sm:$0xff] %vm606, %v600
      %690 = vst.msk [vmem:[%s662 + $0x141] sm:$0xff] %vm606, %v601
      %691 = vst.msk [vmem:[%s662 + $0x151] sm:$0xff] %vm606, %v602
      %692 = vst.msk [vmem:[%s662 + $0x159] sm:$0xff] %vm606, %v603
      %693 = vst.msk [vmem:[%s662 + $0x169] sm:$0xff] %vm606, %v604
      %694 = vst.msk [vmem:[%s662 + $0x171] sm:$0xff] %vm606, %v605
      %v695 = vld [vmem:[#allocation2] sm:$0xff]
      %v696 = vld [vmem:[#allocation2 + $0x8] sm:$0xff]
      %v697 = vld [vmem:[#allocation2 + $0x18] sm:$0xff]
      %v698 = vld [vmem:[#allocation2 + $0x20] sm:$0xff]
      %v699 = vld [vmem:[#allocation2 + $0x30] sm:$0xff]
      %v700 = vld [vmem:[#allocation2 + $0x38] sm:$0xff]
      %v701 = vld [vmem:[#allocation2 + $0x48] sm:$0xff]
      %v702 = vld [vmem:[#allocation2 + $0x50] sm:$0xff]
      %v703 = vld [vmem:[#allocation2 + $0x60] sm:$0xff]
      %v704 = vld [vmem:[#allocation2 + $0x68] sm:$0xff]
      %v705 = vld [vmem:[#allocation2 + $0x78] sm:$0xff]
      %v706 = vld [vmem:[#allocation2 + $0x80] sm:$0xff]
      %v707 = vld [vmem:[#allocation2 + $0x90] sm:$0xff]
      %v708 = vld [vmem:[#allocation2 + $0x98] sm:$0xff]
      %v709 = vld [vmem:[#allocation2 + $0xa8] sm:$0xff]
      %v710 = vld [vmem:[#allocation2 + $0xb0] sm:$0xff]
      %v711 = vld [vmem:[#allocation2 + $0xc0] sm:$0xff]
      %v712 = vld [vmem:[#allocation2 + $0xc8] sm:$0xff]
      %v713 = vld [vmem:[#allocation2 + $0xd8] sm:$0xff]
      %v714 = vld [vmem:[#allocation2 + $0xe0] sm:$0xff]
      %v715 = vld [vmem:[#allocation2 + $0xf0] sm:$0xff]
      %v716 = vld [vmem:[#allocation2 + $0xf8] sm:$0xff]
      %v717 = vld [vmem:[#allocation2 + $0x108] sm:$0xff]
      %v718 = vld [vmem:[#allocation2 + $0x110] sm:$0xff]
      %v719 = vld [vmem:[#allocation2 + $0x120] sm:$0xff]
      %v720 = vld [vmem:[#allocation2 + $0x128] sm:$0xff]
      %v721 = vld [vmem:[#allocation2 + $0x138] sm:$0xff]
      %v722 = vld [vmem:[#allocation2 + $0x140] sm:$0xff]
      %v723 = vld [vmem:[#allocation2 + $0x150] sm:$0xff]
      %v724 = vld [vmem:[#allocation2 + $0x158] sm:$0xff]
      %v725 = vld [vmem:[#allocation2 + $0x168] sm:$0xff]
      %v726 = vld [vmem:[#allocation2 + $0x170] sm:$0xff]
      %v727 = vpack.c.bf16 %v696, %v695
      %v728 = vpack.c.bf16 %v698, %v697
      %v729 = vpack.c.bf16 %v700, %v699
      %v730 = vpack.c.bf16 %v702, %v701
      %v731 = vpack.c.bf16 %v704, %v703
      %v732 = vpack.c.bf16 %v706, %v705
      %v733 = vpack.c.bf16 %v708, %v707
      %v734 = vpack.c.bf16 %v710, %v709
      %v735 = vpack.c.bf16 %v712, %v711
      %v736 = vpack.c.bf16 %v714, %v713
      %v737 = vpack.c.bf16 %v716, %v715
      %v738 = vpack.c.bf16 %v718, %v717
      %v739 = vpack.c.bf16 %v720, %v719
      %v740 = vpack.c.bf16 %v722, %v721
      %v741 = vpack.c.bf16 %v724, %v723
      %v742 = vpack.c.bf16 %v726, %v725
      %v743 = vld [vmem:[#allocation2 + $0x1] sm:$0xff]
      %v744 = vld [vmem:[#allocation2 + $0x9] sm:$0xff]
      %v745 = vld [vmem:[#allocation2 + $0x19] sm:$0xff]
      %v746 = vld [vmem:[#allocation2 + $0x21] sm:$0xff]
      %v747 = vld [vmem:[#allocation2 + $0x31] sm:$0xff]
      %v748 = vld [vmem:[#allocation2 + $0x39] sm:$0xff]
      %v749 = vld [vmem:[#allocation2 + $0x49] sm:$0xff]
      %v750 = vld [vmem:[#allocation2 + $0x51] sm:$0xff]
      %v751 = vld [vmem:[#allocation2 + $0x61] sm:$0xff]
      %v752 = vld [vmem:[#allocation2 + $0x69] sm:$0xff]
      %v753 = vld [vmem:[#allocation2 + $0x79] sm:$0xff]
      %v754 = vld [vmem:[#allocation2 + $0x81] sm:$0xff]
      %v755 = vld [vmem:[#allocation2 + $0x91] sm:$0xff]
      %v756 = vld [vmem:[#allocation2 + $0x99] sm:$0xff]
      %v757 = vld [vmem:[#allocation2 + $0xa9] sm:$0xff]
      %v758 = vld [vmem:[#allocation2 + $0xb1] sm:$0xff]
      %v759 = vld [vmem:[#allocation2 + $0xc1] sm:$0xff]
      %v760 = vld [vmem:[#allocation2 + $0xc9] sm:$0xff]
      %v761 = vld [vmem:[#allocation2 + $0xd9] sm:$0xff]
      %v762 = vld [vmem:[#allocation2 + $0xe1] sm:$0xff]
      %v763 = vld [vmem:[#allocation2 + $0xf1] sm:$0xff]
      %v764 = vld [vmem:[#allocation2 + $0xf9] sm:$0xff]
      %v765 = vld [vmem:[#allocation2 + $0x109] sm:$0xff]
      %v766 = vld [vmem:[#allocation2 + $0x111] sm:$0xff]
      %v767 = vld [vmem:[#allocation2 + $0x121] sm:$0xff]
      %v768 = vld [vmem:[#allocation2 + $0x129] sm:$0xff]
      %v769 = vld [vmem:[#allocation2 + $0x139] sm:$0xff]
      %v770 = vld [vmem:[#allocation2 + $0x141] sm:$0xff]
      %v771 = vld [vmem:[#allocation2 + $0x151] sm:$0xff]
      %v772 = vld [vmem:[#allocation2 + $0x159] sm:$0xff]
      %v773 = vld [vmem:[#allocation2 + $0x169] sm:$0xff]
      %v774 = vld [vmem:[#allocation2 + $0x171] sm:$0xff]
      %v775 = vpack.c.bf16 %v744, %v743
      %v776 = vpack.c.bf16 %v746, %v745
      %v777 = vpack.c.bf16 %v748, %v747
      %v778 = vpack.c.bf16 %v750, %v749
      %v779 = vpack.c.bf16 %v752, %v751
      %v780 = vpack.c.bf16 %v754, %v753
      %v781 = vpack.c.bf16 %v756, %v755
      %v782 = vpack.c.bf16 %v758, %v757
      %v783 = vpack.c.bf16 %v760, %v759
      %v784 = vpack.c.bf16 %v762, %v761
      %v785 = vpack.c.bf16 %v764, %v763
      %v786 = vpack.c.bf16 %v766, %v765
      %v787 = vpack.c.bf16 %v768, %v767
      %v788 = vpack.c.bf16 %v770, %v769
      %v789 = vpack.c.bf16 %v772, %v771
      %v790 = vpack.c.bf16 %v774, %v773
      %v791 = vld [vmem:[#allocation2 + $0x2] sm:$0xff]
      %v792 = vld [vmem:[#allocation2 + $0xa] sm:$0xff]
      %v793 = vld [vmem:[#allocation2 + $0x1a] sm:$0xff]
      %v794 = vld [vmem:[#allocation2 + $0x22] sm:$0xff]
      %v795 = vld [vmem:[#allocation2 + $0x32] sm:$0xff]
      %v796 = vld [vmem:[#allocation2 + $0x3a] sm:$0xff]
      %v797 = vld [vmem:[#allocation2 + $0x4a] sm:$0xff]
      %v798 = vld [vmem:[#allocation2 + $0x52] sm:$0xff]
      %v799 = vld [vmem:[#allocation2 + $0x62] sm:$0xff]
      %v800 = vld [vmem:[#allocation2 + $0x6a] sm:$0xff]
      %v801 = vld [vmem:[#allocation2 + $0x7a] sm:$0xff]
      %v802 = vld [vmem:[#allocation2 + $0x82] sm:$0xff]
      %v803 = vld [vmem:[#allocation2 + $0x92] sm:$0xff]
      %v804 = vld [vmem:[#allocation2 + $0x9a] sm:$0xff]
      %v805 = vld [vmem:[#allocation2 + $0xaa] sm:$0xff]
      %v806 = vld [vmem:[#allocation2 + $0xb2] sm:$0xff]
      %v807 = vld [vmem:[#allocation2 + $0xc2] sm:$0xff]
      %v808 = vld [vmem:[#allocation2 + $0xca] sm:$0xff]
      %v809 = vld [vmem:[#allocation2 + $0xda] sm:$0xff]
      %v810 = vld [vmem:[#allocation2 + $0xe2] sm:$0xff]
      %v811 = vld [vmem:[#allocation2 + $0xf2] sm:$0xff]
      %v812 = vld [vmem:[#allocation2 + $0xfa] sm:$0xff]
      %v813 = vld [vmem:[#allocation2 + $0x10a] sm:$0xff]
      %v814 = vld [vmem:[#allocation2 + $0x112] sm:$0xff]
      %v815 = vld [vmem:[#allocation2 + $0x122] sm:$0xff]
      %v816 = vld [vmem:[#allocation2 + $0x12a] sm:$0xff]
      %v817 = vld [vmem:[#allocation2 + $0x13a] sm:$0xff]
      %v818 = vld [vmem:[#allocation2 + $0x142] sm:$0xff]
      %v819 = vld [vmem:[#allocation2 + $0x152] sm:$0xff]
      %v820 = vld [vmem:[#allocation2 + $0x15a] sm:$0xff]
      %v821 = vld [vmem:[#allocation2 + $0x16a] sm:$0xff]
      %v822 = vld [vmem:[#allocation2 + $0x172] sm:$0xff]
      %v823 = vpack.c.bf16 %v792, %v791
      %v824 = vpack.c.bf16 %v794, %v793
      %v825 = vpack.c.bf16 %v796, %v795
      %v826 = vpack.c.bf16 %v798, %v797
      %v827 = vpack.c.bf16 %v800, %v799
      %v828 = vpack.c.bf16 %v802, %v801
      %v829 = vpack.c.bf16 %v804, %v803
      %v830 = vpack.c.bf16 %v806, %v805
      %v831 = vpack.c.bf16 %v808, %v807
      %v832 = vpack.c.bf16 %v810, %v809
      %v833 = vpack.c.bf16 %v812, %v811
      %v834 = vpack.c.bf16 %v814, %v813
      %v835 = vpack.c.bf16 %v816, %v815
      %v836 = vpack.c.bf16 %v818, %v817
      %v837 = vpack.c.bf16 %v820, %v819
      %v838 = vpack.c.bf16 %v822, %v821
      %v839 = vld [vmem:[%s662] sm:$0xff]
      %v840 = vld [vmem:[%s662 + $0x8] sm:$0xff]
      %v841 = vld [vmem:[%s662 + $0x18] sm:$0xff]
      %v842 = vld [vmem:[%s662 + $0x20] sm:$0xff]
      %v843 = vld [vmem:[%s662 + $0x30] sm:$0xff]
      %v844 = vld [vmem:[%s662 + $0x38] sm:$0xff]
      %v845 = vld [vmem:[%s662 + $0x48] sm:$0xff]
      %v846 = vld [vmem:[%s662 + $0x50] sm:$0xff]
      %v847 = vld [vmem:[%s662 + $0x60] sm:$0xff]
      %v848 = vld [vmem:[%s662 + $0x68] sm:$0xff]
      %v849 = vld [vmem:[%s662 + $0x78] sm:$0xff]
      %v850 = vld [vmem:[%s662 + $0x80] sm:$0xff]
      %v851 = vld [vmem:[%s662 + $0x90] sm:$0xff]
      %v852 = vld [vmem:[%s662 + $0x98] sm:$0xff]
      %v853 = vld [vmem:[%s662 + $0xa8] sm:$0xff]
      %v854 = vld [vmem:[%s662 + $0xb0] sm:$0xff]
      %v855 = vld [vmem:[%s662 + $0xc0] sm:$0xff]
      %v856 = vld [vmem:[%s662 + $0xc8] sm:$0xff]
      %v857 = vld [vmem:[%s662 + $0xd8] sm:$0xff]
      %v858 = vld [vmem:[%s662 + $0xe0] sm:$0xff]
      %v859 = vld [vmem:[%s662 + $0xf0] sm:$0xff]
      %v860 = vld [vmem:[%s662 + $0xf8] sm:$0xff]
      %v861 = vld [vmem:[%s662 + $0x108] sm:$0xff]
      %v862 = vld [vmem:[%s662 + $0x110] sm:$0xff]
      %v863 = vld [vmem:[%s662 + $0x120] sm:$0xff]
      %v864 = vld [vmem:[%s662 + $0x128] sm:$0xff]
      %v865 = vld [vmem:[%s662 + $0x138] sm:$0xff]
      %v866 = vld [vmem:[%s662 + $0x140] sm:$0xff]
      %v867 = vld [vmem:[%s662 + $0x150] sm:$0xff]
      %v868 = vld [vmem:[%s662 + $0x158] sm:$0xff]
      %v869 = vld [vmem:[%s662 + $0x168] sm:$0xff]
      %v870 = vld [vmem:[%s662 + $0x170] sm:$0xff]
      %v871 = vpack.c.bf16 %v840, %v839
      %v872 = vpack.c.bf16 %v842, %v841
      %v873 = vpack.c.bf16 %v844, %v843
      %v874 = vpack.c.bf16 %v846, %v845
      %v875 = vpack.c.bf16 %v848, %v847
      %v876 = vpack.c.bf16 %v850, %v849
      %v877 = vpack.c.bf16 %v852, %v851
      %v878 = vpack.c.bf16 %v854, %v853
      %v879 = vpack.c.bf16 %v856, %v855
      %v880 = vpack.c.bf16 %v858, %v857
      %v881 = vpack.c.bf16 %v860, %v859
      %v882 = vpack.c.bf16 %v862, %v861
      %v883 = vpack.c.bf16 %v864, %v863
      %v884 = vpack.c.bf16 %v866, %v865
      %v885 = vpack.c.bf16 %v868, %v867
      %v886 = vpack.c.bf16 %v870, %v869
      %v887 = vld [vmem:[%s662 + $0x1] sm:$0xff]
      %v888 = vld [vmem:[%s662 + $0x9] sm:$0xff]
      %v889 = vld [vmem:[%s662 + $0x19] sm:$0xff]
      %v890 = vld [vmem:[%s662 + $0x21] sm:$0xff]
      %v891 = vld [vmem:[%s662 + $0x31] sm:$0xff]
      %v892 = vld [vmem:[%s662 + $0x39] sm:$0xff]
      %v893 = vld [vmem:[%s662 + $0x49] sm:$0xff]
      %v894 = vld [vmem:[%s662 + $0x51] sm:$0xff]
      %v895 = vld [vmem:[%s662 + $0x61] sm:$0xff]
      %v896 = vld [vmem:[%s662 + $0x69] sm:$0xff]
      %v897 = vld [vmem:[%s662 + $0x79] sm:$0xff]
      %v898 = vld [vmem:[%s662 + $0x81] sm:$0xff]
      %v899 = vld [vmem:[%s662 + $0x91] sm:$0xff]
      %v900 = vld [vmem:[%s662 + $0x99] sm:$0xff]
      %v901 = vld [vmem:[%s662 + $0xa9] sm:$0xff]
      %v902 = vld [vmem:[%s662 + $0xb1] sm:$0xff]
      %v903 = vld [vmem:[%s662 + $0xc1] sm:$0xff]
      %v904 = vld [vmem:[%s662 + $0xc9] sm:$0xff]
      %v905 = vld [vmem:[%s662 + $0xd9] sm:$0xff]
      %v906 = vld [vmem:[%s662 + $0xe1] sm:$0xff]
      %v907 = vld [vmem:[%s662 + $0xf1] sm:$0xff]
      %v908 = vld [vmem:[%s662 + $0xf9] sm:$0xff]
      %v909 = vld [vmem:[%s662 + $0x109] sm:$0xff]
      %v910 = vld [vmem:[%s662 + $0x111] sm:$0xff]
      %v911 = vld [vmem:[%s662 + $0x121] sm:$0xff]
      %v912 = vld [vmem:[%s662 + $0x129] sm:$0xff]
      %v913 = vld [vmem:[%s662 + $0x139] sm:$0xff]
      %v914 = vld [vmem:[%s662 + $0x141] sm:$0xff]
      %v915 = vld [vmem:[%s662 + $0x151] sm:$0xff]
      %v916 = vld [vmem:[%s662 + $0x159] sm:$0xff]
      %v917 = vld [vmem:[%s662 + $0x169] sm:$0xff]
      %v918 = vld [vmem:[%s662 + $0x171] sm:$0xff]
      %v919 = vpack.c.bf16 %v888, %v887
      %v920 = vpack.c.bf16 %v890, %v889
      %v921 = vpack.c.bf16 %v892, %v891
      %v922 = vpack.c.bf16 %v894, %v893
      %v923 = vpack.c.bf16 %v896, %v895
      %v924 = vpack.c.bf16 %v898, %v897
      %v925 = vpack.c.bf16 %v900, %v899
      %v926 = vpack.c.bf16 %v902, %v901
      %v927 = vpack.c.bf16 %v904, %v903
      %v928 = vpack.c.bf16 %v906, %v905
      %v929 = vpack.c.bf16 %v908, %v907
      %v930 = vpack.c.bf16 %v910, %v909
      %v931 = vpack.c.bf16 %v912, %v911
      %v932 = vpack.c.bf16 %v914, %v913
      %v933 = vpack.c.bf16 %v916, %v915
      %v934 = vpack.c.bf16 %v918, %v917
      %v935 = vld [vmem:[%s662 + $0x2] sm:$0xff]
      %v936 = vld [vmem:[%s662 + $0xa] sm:$0xff]
      %v937 = vld [vmem:[%s662 + $0x1a] sm:$0xff]
      %v938 = vld [vmem:[%s662 + $0x22] sm:$0xff]
      %v939 = vld [vmem:[%s662 + $0x32] sm:$0xff]
      %v940 = vld [vmem:[%s662 + $0x3a] sm:$0xff]
      %v941 = vld [vmem:[%s662 + $0x4a] sm:$0xff]
      %v942 = vld [vmem:[%s662 + $0x52] sm:$0xff]
      %v943 = vld [vmem:[%s662 + $0x62] sm:$0xff]
      %v944 = vld [vmem:[%s662 + $0x6a] sm:$0xff]
      %v945 = vld [vmem:[%s662 + $0x7a] sm:$0xff]
      %v946 = vld [vmem:[%s662 + $0x82] sm:$0xff]
      %v947 = vld [vmem:[%s662 + $0x92] sm:$0xff]
      %v948 = vld [vmem:[%s662 + $0x9a] sm:$0xff]
      %v949 = vld [vmem:[%s662 + $0xaa] sm:$0xff]
      %v950 = vld [vmem:[%s662 + $0xb2] sm:$0xff]
      %v951 = vld [vmem:[%s662 + $0xc2] sm:$0xff]
      %v952 = vld [vmem:[%s662 + $0xca] sm:$0xff]
      %v953 = vld [vmem:[%s662 + $0xda] sm:$0xff]
      %v954 = vld [vmem:[%s662 + $0xe2] sm:$0xff]
      %v955 = vld [vmem:[%s662 + $0xf2] sm:$0xff]
      %v956 = vld [vmem:[%s662 + $0xfa] sm:$0xff]
      %v957 = vld [vmem:[%s662 + $0x10a] sm:$0xff]
      %v958 = vld [vmem:[%s662 + $0x112] sm:$0xff]
      %v959 = vld [vmem:[%s662 + $0x122] sm:$0xff]
      %v960 = vld [vmem:[%s662 + $0x12a] sm:$0xff]
      %v961 = vld [vmem:[%s662 + $0x13a] sm:$0xff]
      %v962 = vld [vmem:[%s662 + $0x142] sm:$0xff]
      %v963 = vld [vmem:[%s662 + $0x152] sm:$0xff]
      %v964 = vld [vmem:[%s662 + $0x15a] sm:$0xff]
      %v965 = vld [vmem:[%s662 + $0x16a] sm:$0xff]
      %v966 = vld [vmem:[%s662 + $0x172] sm:$0xff]
      %v967 = vpack.c.bf16 %v936, %v935
      %v968 = vpack.c.bf16 %v938, %v937
      %v969 = vpack.c.bf16 %v940, %v939
      %v970 = vpack.c.bf16 %v942, %v941
      %v971 = vpack.c.bf16 %v944, %v943
      %v972 = vpack.c.bf16 %v946, %v945
      %v973 = vpack.c.bf16 %v948, %v947
      %v974 = vpack.c.bf16 %v950, %v949
      %v975 = vpack.c.bf16 %v952, %v951
      %v976 = vpack.c.bf16 %v954, %v953
      %v977 = vpack.c.bf16 %v956, %v955
      %v978 = vpack.c.bf16 %v958, %v957
      %v979 = vpack.c.bf16 %v960, %v959
      %v980 = vpack.c.bf16 %v962, %v961
      %v981 = vpack.c.bf16 %v964, %v963
      %v982 = vpack.c.bf16 %v966, %v965
      %s983 = scalar_lea.vmem [#allocation2], 48
      %v984 = vld [vmem:[%s983] sm:$0xff]
      %v985 = vld [vmem:[%s983 + $0x8] sm:$0xff]
      %v986 = vld [vmem:[%s983 + $0x18] sm:$0xff]
      %v987 = vld [vmem:[%s983 + $0x20] sm:$0xff]
      %v988 = vld [vmem:[%s983 + $0x30] sm:$0xff]
      %v989 = vld [vmem:[%s983 + $0x38] sm:$0xff]
      %v990 = vld [vmem:[%s983 + $0x48] sm:$0xff]
      %v991 = vld [vmem:[%s983 + $0x50] sm:$0xff]
      %v992 = vld [vmem:[%s983 + $0x60] sm:$0xff]
      %v993 = vld [vmem:[%s983 + $0x68] sm:$0xff]
      %v994 = vld [vmem:[%s983 + $0x78] sm:$0xff]
      %v995 = vld [vmem:[%s983 + $0x80] sm:$0xff]
      %v996 = vld [vmem:[%s983 + $0x90] sm:$0xff]
      %v997 = vld [vmem:[%s983 + $0x98] sm:$0xff]
      %v998 = vld [vmem:[%s983 + $0xa8] sm:$0xff]
      %v999 = vld [vmem:[%s983 + $0xb0] sm:$0xff]
      %v1000 = vld [vmem:[%s983 + $0xc0] sm:$0xff]
      %v1001 = vld [vmem:[%s983 + $0xc8] sm:$0xff]
      %v1002 = vld [vmem:[%s983 + $0xd8] sm:$0xff]
      %v1003 = vld [vmem:[%s983 + $0xe0] sm:$0xff]
      %v1004 = vld [vmem:[%s983 + $0xf0] sm:$0xff]
      %v1005 = vld [vmem:[%s983 + $0xf8] sm:$0xff]
      %v1006 = vld [vmem:[%s983 + $0x108] sm:$0xff]
      %v1007 = vld [vmem:[%s983 + $0x110] sm:$0xff]
      %v1008 = vld [vmem:[%s983 + $0x120] sm:$0xff]
      %v1009 = vld [vmem:[%s983 + $0x128] sm:$0xff]
      %v1010 = vld [vmem:[%s983 + $0x138] sm:$0xff]
      %v1011 = vld [vmem:[%s983 + $0x140] sm:$0xff]
      %v1012 = vld [vmem:[%s983 + $0x150] sm:$0xff]
      %v1013 = vld [vmem:[%s983 + $0x158] sm:$0xff]
      %v1014 = vld [vmem:[%s983 + $0x168] sm:$0xff]
      %v1015 = vld [vmem:[%s983 + $0x170] sm:$0xff]
      %v1016 = vpack.c.bf16 %v985, %v984
      %v1017 = vpack.c.bf16 %v987, %v986
      %v1018 = vpack.c.bf16 %v989, %v988
      %v1019 = vpack.c.bf16 %v991, %v990
      %v1020 = vpack.c.bf16 %v993, %v992
      %v1021 = vpack.c.bf16 %v995, %v994
      %v1022 = vpack.c.bf16 %v997, %v996
      %v1023 = vpack.c.bf16 %v999, %v998
      %v1024 = vpack.c.bf16 %v1001, %v1000
      %v1025 = vpack.c.bf16 %v1003, %v1002
      %v1026 = vpack.c.bf16 %v1005, %v1004
      %v1027 = vpack.c.bf16 %v1007, %v1006
      %v1028 = vpack.c.bf16 %v1009, %v1008
      %v1029 = vpack.c.bf16 %v1011, %v1010
      %v1030 = vpack.c.bf16 %v1013, %v1012
      %v1031 = vpack.c.bf16 %v1015, %v1014
      %v1032 = vld [vmem:[%s983 + $0x1] sm:$0xff]
      %v1033 = vld [vmem:[%s983 + $0x9] sm:$0xff]
      %v1034 = vld [vmem:[%s983 + $0x19] sm:$0xff]
      %v1035 = vld [vmem:[%s983 + $0x21] sm:$0xff]
      %v1036 = vld [vmem:[%s983 + $0x31] sm:$0xff]
      %v1037 = vld [vmem:[%s983 + $0x39] sm:$0xff]
      %v1038 = vld [vmem:[%s983 + $0x49] sm:$0xff]
      %v1039 = vld [vmem:[%s983 + $0x51] sm:$0xff]
      %v1040 = vld [vmem:[%s983 + $0x61] sm:$0xff]
      %v1041 = vld [vmem:[%s983 + $0x69] sm:$0xff]
      %v1042 = vld [vmem:[%s983 + $0x79] sm:$0xff]
      %v1043 = vld [vmem:[%s983 + $0x81] sm:$0xff]
      %v1044 = vld [vmem:[%s983 + $0x91] sm:$0xff]
      %v1045 = vld [vmem:[%s983 + $0x99] sm:$0xff]
      %v1046 = vld [vmem:[%s983 + $0xa9] sm:$0xff]
      %v1047 = vld [vmem:[%s983 + $0xb1] sm:$0xff]
      %v1048 = vld [vmem:[%s983 + $0xc1] sm:$0xff]
      %v1049 = vld [vmem:[%s983 + $0xc9] sm:$0xff]
      %v1050 = vld [vmem:[%s983 + $0xd9] sm:$0xff]
      %v1051 = vld [vmem:[%s983 + $0xe1] sm:$0xff]
      %v1052 = vld [vmem:[%s983 + $0xf1] sm:$0xff]
      %v1053 = vld [vmem:[%s983 + $0xf9] sm:$0xff]
      %v1054 = vld [vmem:[%s983 + $0x109] sm:$0xff]
      %v1055 = vld [vmem:[%s983 + $0x111] sm:$0xff]
      %v1056 = vld [vmem:[%s983 + $0x121] sm:$0xff]
      %v1057 = vld [vmem:[%s983 + $0x129] sm:$0xff]
      %v1058 = vld [vmem:[%s983 + $0x139] sm:$0xff]
      %v1059 = vld [vmem:[%s983 + $0x141] sm:$0xff]
      %v1060 = vld [vmem:[%s983 + $0x151] sm:$0xff]
      %v1061 = vld [vmem:[%s983 + $0x159] sm:$0xff]
      %v1062 = vld [vmem:[%s983 + $0x169] sm:$0xff]
      %v1063 = vld [vmem:[%s983 + $0x171] sm:$0xff]
      %v1064 = vpack.c.bf16 %v1033, %v1032
      %v1065 = vpack.c.bf16 %v1035, %v1034
      %v1066 = vpack.c.bf16 %v1037, %v1036
      %v1067 = vpack.c.bf16 %v1039, %v1038
      %v1068 = vpack.c.bf16 %v1041, %v1040
      %v1069 = vpack.c.bf16 %v1043, %v1042
      %v1070 = vpack.c.bf16 %v1045, %v1044
      %v1071 = vpack.c.bf16 %v1047, %v1046
      %v1072 = vpack.c.bf16 %v1049, %v1048
      %v1073 = vpack.c.bf16 %v1051, %v1050
      %v1074 = vpack.c.bf16 %v1053, %v1052
      %v1075 = vpack.c.bf16 %v1055, %v1054
      %v1076 = vpack.c.bf16 %v1057, %v1056
      %v1077 = vpack.c.bf16 %v1059, %v1058
      %v1078 = vpack.c.bf16 %v1061, %v1060
      %v1079 = vpack.c.bf16 %v1063, %v1062
      %v1080 = vld [vmem:[%s983 + $0x2] sm:$0xff]
      %v1081 = vld [vmem:[%s983 + $0xa] sm:$0xff]
      %v1082 = vld [vmem:[%s983 + $0x1a] sm:$0xff]
      %v1083 = vld [vmem:[%s983 + $0x22] sm:$0xff]
      %v1084 = vld [vmem:[%s983 + $0x32] sm:$0xff]
      %v1085 = vld [vmem:[%s983 + $0x3a] sm:$0xff]
      %v1086 = vld [vmem:[%s983 + $0x4a] sm:$0xff]
      %v1087 = vld [vmem:[%s983 + $0x52] sm:$0xff]
      %v1088 = vld [vmem:[%s983 + $0x62] sm:$0xff]
      %v1089 = vld [vmem:[%s983 + $0x6a] sm:$0xff]
      %v1090 = vld [vmem:[%s983 + $0x7a] sm:$0xff]
      %v1091 = vld [vmem:[%s983 + $0x82] sm:$0xff]
      %v1092 = vld [vmem:[%s983 + $0x92] sm:$0xff]
      %v1093 = vld [vmem:[%s983 + $0x9a] sm:$0xff]
      %v1094 = vld [vmem:[%s983 + $0xaa] sm:$0xff]
      %v1095 = vld [vmem:[%s983 + $0xb2] sm:$0xff]
      %v1096 = vld [vmem:[%s983 + $0xc2] sm:$0xff]
      %v1097 = vld [vmem:[%s983 + $0xca] sm:$0xff]
      %v1098 = vld [vmem:[%s983 + $0xda] sm:$0xff]
      %v1099 = vld [vmem:[%s983 + $0xe2] sm:$0xff]
      %v1100 = vld [vmem:[%s983 + $0xf2] sm:$0xff]
      %v1101 = vld [vmem:[%s983 + $0xfa] sm:$0xff]
      %v1102 = vld [vmem:[%s983 + $0x10a] sm:$0xff]
      %v1103 = vld [vmem:[%s983 + $0x112] sm:$0xff]
      %v1104 = vld [vmem:[%s983 + $0x122] sm:$0xff]
      %v1105 = vld [vmem:[%s983 + $0x12a] sm:$0xff]
      %v1106 = vld [vmem:[%s983 + $0x13a] sm:$0xff]
      %v1107 = vld [vmem:[%s983 + $0x142] sm:$0xff]
      %v1108 = vld [vmem:[%s983 + $0x152] sm:$0xff]
      %v1109 = vld [vmem:[%s983 + $0x15a] sm:$0xff]
      %v1110 = vld [vmem:[%s983 + $0x16a] sm:$0xff]
      %v1111 = vld [vmem:[%s983 + $0x172] sm:$0xff]
      %v1112 = vpack.c.bf16 %v1081, %v1080
      %v1113 = vpack.c.bf16 %v1083, %v1082
      %v1114 = vpack.c.bf16 %v1085, %v1084
      %v1115 = vpack.c.bf16 %v1087, %v1086
      %v1116 = vpack.c.bf16 %v1089, %v1088
      %v1117 = vpack.c.bf16 %v1091, %v1090
      %v1118 = vpack.c.bf16 %v1093, %v1092
      %v1119 = vpack.c.bf16 %v1095, %v1094
      %v1120 = vpack.c.bf16 %v1097, %v1096
      %v1121 = vpack.c.bf16 %v1099, %v1098
      %v1122 = vpack.c.bf16 %v1101, %v1100
      %v1123 = vpack.c.bf16 %v1103, %v1102
      %v1124 = vpack.c.bf16 %v1105, %v1104
      %v1125 = vpack.c.bf16 %v1107, %v1106
      %v1126 = vpack.c.bf16 %v1109, %v1108
      %v1127 = vpack.c.bf16 %v1111, %v1110
      %1144 = vrot.lane.b32.xlu0 %v775, 4
      %v1145 = vpop.permute.xlu0 %1144
      %1146 = vrot.lane.b32.xlu0 %v776, 4
      %v1147 = vpop.permute.xlu0 %1146
      %1148 = vrot.lane.b32.xlu0 %v777, 4
      %v1149 = vpop.permute.xlu0 %1148
      %1150 = vrot.lane.b32.xlu0 %v778, 4
      %v1151 = vpop.permute.xlu0 %1150
      %1152 = vrot.lane.b32.xlu0 %v779, 4
      %v1153 = vpop.permute.xlu0 %1152
      %1154 = vrot.lane.b32.xlu0 %v780, 4
      %v1155 = vpop.permute.xlu0 %1154
      %1156 = vrot.lane.b32.xlu0 %v781, 4
      %v1157 = vpop.permute.xlu0 %1156
      %1158 = vrot.lane.b32.xlu0 %v782, 4
      %v1159 = vpop.permute.xlu0 %1158
      %1160 = vrot.lane.b32.xlu0 %v783, 4
      %v1161 = vpop.permute.xlu0 %1160
      %1162 = vrot.lane.b32.xlu0 %v784, 4
      %v1163 = vpop.permute.xlu0 %1162
      %1164 = vrot.lane.b32.xlu0 %v785, 4
      %v1165 = vpop.permute.xlu0 %1164
      %1166 = vrot.lane.b32.xlu0 %v786, 4
      %v1167 = vpop.permute.xlu0 %1166
      %1168 = vrot.lane.b32.xlu0 %v787, 4
      %v1169 = vpop.permute.xlu0 %1168
      %1170 = vrot.lane.b32.xlu0 %v788, 4
      %v1171 = vpop.permute.xlu0 %1170
      %1172 = vrot.lane.b32.xlu0 %v789, 4
      %v1173 = vpop.permute.xlu0 %1172
      %1174 = vrot.lane.b32.xlu0 %v790, 4
      %v1175 = vpop.permute.xlu0 %1174
      %1192 = vrot.lane.b32.xlu0 %v823, 8
      %v1193 = vpop.permute.xlu0 %1192
      %1194 = vrot.lane.b32.xlu0 %v824, 8
      %v1195 = vpop.permute.xlu0 %1194
      %1196 = vrot.lane.b32.xlu0 %v825, 8
      %v1197 = vpop.permute.xlu0 %1196
      %1198 = vrot.lane.b32.xlu0 %v826, 8
      %v1199 = vpop.permute.xlu0 %1198
      %1200 = vrot.lane.b32.xlu0 %v827, 8
      %v1201 = vpop.permute.xlu0 %1200
      %1202 = vrot.lane.b32.xlu0 %v828, 8
      %v1203 = vpop.permute.xlu0 %1202
      %1204 = vrot.lane.b32.xlu0 %v829, 8
      %v1205 = vpop.permute.xlu0 %1204
      %1206 = vrot.lane.b32.xlu0 %v830, 8
      %v1207 = vpop.permute.xlu0 %1206
      %1208 = vrot.lane.b32.xlu0 %v831, 8
      %v1209 = vpop.permute.xlu0 %1208
      %1210 = vrot.lane.b32.xlu0 %v832, 8
      %v1211 = vpop.permute.xlu0 %1210
      %1212 = vrot.lane.b32.xlu0 %v833, 8
      %v1213 = vpop.permute.xlu0 %1212
      %1214 = vrot.lane.b32.xlu0 %v834, 8
      %v1215 = vpop.permute.xlu0 %1214
      %1216 = vrot.lane.b32.xlu0 %v835, 8
      %v1217 = vpop.permute.xlu0 %1216
      %1218 = vrot.lane.b32.xlu0 %v836, 8
      %v1219 = vpop.permute.xlu0 %1218
      %1220 = vrot.lane.b32.xlu0 %v837, 8
      %v1221 = vpop.permute.xlu0 %1220
      %1222 = vrot.lane.b32.xlu0 %v838, 8
      %v1223 = vpop.permute.xlu0 %1222
      %1240 = vrot.lane.b32.xlu0 %v871, 12
      %v1241 = vpop.permute.xlu0 %1240
      %1242 = vrot.lane.b32.xlu0 %v872, 12
      %v1243 = vpop.permute.xlu0 %1242
      %1244 = vrot.lane.b32.xlu0 %v873, 12
      %v1245 = vpop.permute.xlu0 %1244
      %1246 = vrot.lane.b32.xlu0 %v874, 12
      %v1247 = vpop.permute.xlu0 %1246
      %1248 = vrot.lane.b32.xlu0 %v875, 12
      %v1249 = vpop.permute.xlu0 %1248
      %1250 = vrot.lane.b32.xlu0 %v876, 12
      %v1251 = vpop.permute.xlu0 %1250
      %1252 = vrot.lane.b32.xlu0 %v877, 12
      %v1253 = vpop.permute.xlu0 %1252
      %1254 = vrot.lane.b32.xlu0 %v878, 12
      %v1255 = vpop.permute.xlu0 %1254
      %1256 = vrot.lane.b32.xlu0 %v879, 12
      %v1257 = vpop.permute.xlu0 %1256
      %1258 = vrot.lane.b32.xlu0 %v880, 12
      %v1259 = vpop.permute.xlu0 %1258
      %1260 = vrot.lane.b32.xlu0 %v881, 12
      %v1261 = vpop.permute.xlu0 %1260
      %1262 = vrot.lane.b32.xlu0 %v882, 12
      %v1263 = vpop.permute.xlu0 %1262
      %1264 = vrot.lane.b32.xlu0 %v883, 12
      %v1265 = vpop.permute.xlu0 %1264
      %1266 = vrot.lane.b32.xlu0 %v884, 12
      %v1267 = vpop.permute.xlu0 %1266
      %1268 = vrot.lane.b32.xlu0 %v885, 12
      %v1269 = vpop.permute.xlu0 %1268
      %1270 = vrot.lane.b32.xlu0 %v886, 12
      %v1271 = vpop.permute.xlu0 %1270
      %1288 = vrot.lane.b32.xlu0 %v919, 16
      %v1289 = vpop.permute.xlu0 %1288
      %1290 = vrot.lane.b32.xlu0 %v920, 16
      %v1291 = vpop.permute.xlu0 %1290
      %1292 = vrot.lane.b32.xlu0 %v921, 16
      %v1293 = vpop.permute.xlu0 %1292
      %1294 = vrot.lane.b32.xlu0 %v922, 16
      %v1295 = vpop.permute.xlu0 %1294
      %1296 = vrot.lane.b32.xlu0 %v923, 16
      %v1297 = vpop.permute.xlu0 %1296
      %1298 = vrot.lane.b32.xlu0 %v924, 16
      %v1299 = vpop.permute.xlu0 %1298
      %1300 = vrot.lane.b32.xlu0 %v925, 16
      %v1301 = vpop.permute.xlu0 %1300
      %1302 = vrot.lane.b32.xlu0 %v926, 16
      %v1303 = vpop.permute.xlu0 %1302
      %1304 = vrot.lane.b32.xlu0 %v927, 16
      %v1305 = vpop.permute.xlu0 %1304
      %1306 = vrot.lane.b32.xlu0 %v928, 16
      %v1307 = vpop.permute.xlu0 %1306
      %1308 = vrot.lane.b32.xlu0 %v929, 16
      %v1309 = vpop.permute.xlu0 %1308
      %1310 = vrot.lane.b32.xlu0 %v930, 16
      %v1311 = vpop.permute.xlu0 %1310
      %1312 = vrot.lane.b32.xlu0 %v931, 16
      %v1313 = vpop.permute.xlu0 %1312
      %1314 = vrot.lane.b32.xlu0 %v932, 16
      %v1315 = vpop.permute.xlu0 %1314
      %1316 = vrot.lane.b32.xlu0 %v933, 16
      %v1317 = vpop.permute.xlu0 %1316
      %1318 = vrot.lane.b32.xlu0 %v934, 16
      %v1319 = vpop.permute.xlu0 %1318
      %1336 = vrot.lane.b32.xlu0 %v967, 20
      %v1337 = vpop.permute.xlu0 %1336
      %1338 = vrot.lane.b32.xlu0 %v968, 20
      %v1339 = vpop.permute.xlu0 %1338
      %1340 = vrot.lane.b32.xlu0 %v969, 20
      %v1341 = vpop.permute.xlu0 %1340
      %1342 = vrot.lane.b32.xlu0 %v970, 20
      %v1343 = vpop.permute.xlu0 %1342
      %1344 = vrot.lane.b32.xlu0 %v971, 20
      %v1345 = vpop.permute.xlu0 %1344
      %1346 = vrot.lane.b32.xlu0 %v972, 20
      %v1347 = vpop.permute.xlu0 %1346
      %1348 = vrot.lane.b32.xlu0 %v973, 20
      %v1349 = vpop.permute.xlu0 %1348
      %1350 = vrot.lane.b32.xlu0 %v974, 20
      %v1351 = vpop.permute.xlu0 %1350
      %1352 = vrot.lane.b32.xlu0 %v975, 20
      %v1353 = vpop.permute.xlu0 %1352
      %1354 = vrot.lane.b32.xlu0 %v976, 20
      %v1355 = vpop.permute.xlu0 %1354
      %1356 = vrot.lane.b32.xlu0 %v977, 20
      %v1357 = vpop.permute.xlu0 %1356
      %1358 = vrot.lane.b32.xlu0 %v978, 20
      %v1359 = vpop.permute.xlu0 %1358
      %1360 = vrot.lane.b32.xlu0 %v979, 20
      %v1361 = vpop.permute.xlu0 %1360
      %1362 = vrot.lane.b32.xlu0 %v980, 20
      %v1363 = vpop.permute.xlu0 %1362
      %1364 = vrot.lane.b32.xlu0 %v981, 20
      %v1365 = vpop.permute.xlu0 %1364
      %1366 = vrot.lane.b32.xlu0 %v982, 20
      %v1367 = vpop.permute.xlu0 %1366
      %1384 = vrot.lane.b32.xlu0 %v1016, 24
      %v1385 = vpop.permute.xlu0 %1384
      %1386 = vrot.lane.b32.xlu0 %v1017, 24
      %v1387 = vpop.permute.xlu0 %1386
      %1388 = vrot.lane.b32.xlu0 %v1018, 24
      %v1389 = vpop.permute.xlu0 %1388
      %1390 = vrot.lane.b32.xlu0 %v1019, 24
      %v1391 = vpop.permute.xlu0 %1390
      %1392 = vrot.lane.b32.xlu0 %v1020, 24
      %v1393 = vpop.permute.xlu0 %1392
      %1394 = vrot.lane.b32.xlu0 %v1021, 24
      %v1395 = vpop.permute.xlu0 %1394
      %1396 = vrot.lane.b32.xlu0 %v1022, 24
      %v1397 = vpop.permute.xlu0 %1396
      %1398 = vrot.lane.b32.xlu0 %v1023, 24
      %v1399 = vpop.permute.xlu0 %1398
      %1400 = vrot.lane.b32.xlu0 %v1024, 24
      %v1401 = vpop.permute.xlu0 %1400
      %1402 = vrot.lane.b32.xlu0 %v1025, 24
      %v1403 = vpop.permute.xlu0 %1402
      %1404 = vrot.lane.b32.xlu0 %v1026, 24
      %v1405 = vpop.permute.xlu0 %1404
      %1406 = vrot.lane.b32.xlu0 %v1027, 24
      %v1407 = vpop.permute.xlu0 %1406
      %1408 = vrot.lane.b32.xlu0 %v1028, 24
      %v1409 = vpop.permute.xlu0 %1408
      %1410 = vrot.lane.b32.xlu0 %v1029, 24
      %v1411 = vpop.permute.xlu0 %1410
      %1412 = vrot.lane.b32.xlu0 %v1030, 24
      %v1413 = vpop.permute.xlu0 %1412
      %1414 = vrot.lane.b32.xlu0 %v1031, 24
      %v1415 = vpop.permute.xlu0 %1414
      %1432 = vrot.lane.b32.xlu0 %v1064, 28
      %v1433 = vpop.permute.xlu0 %1432
      %1434 = vrot.lane.b32.xlu0 %v1065, 28
      %v1435 = vpop.permute.xlu0 %1434
      %1436 = vrot.lane.b32.xlu0 %v1066, 28
      %v1437 = vpop.permute.xlu0 %1436
      %1438 = vrot.lane.b32.xlu0 %v1067, 28
      %v1439 = vpop.permute.xlu0 %1438
      %1440 = vrot.lane.b32.xlu0 %v1068, 28
      %v1441 = vpop.permute.xlu0 %1440
      %1442 = vrot.lane.b32.xlu0 %v1069, 28
      %v1443 = vpop.permute.xlu0 %1442
      %1444 = vrot.lane.b32.xlu0 %v1070, 28
      %v1445 = vpop.permute.xlu0 %1444
      %1446 = vrot.lane.b32.xlu0 %v1071, 28
      %v1447 = vpop.permute.xlu0 %1446
      %1448 = vrot.lane.b32.xlu0 %v1072, 28
      %v1449 = vpop.permute.xlu0 %1448
      %1450 = vrot.lane.b32.xlu0 %v1073, 28
      %v1451 = vpop.permute.xlu0 %1450
      %1452 = vrot.lane.b32.xlu0 %v1074, 28
      %v1453 = vpop.permute.xlu0 %1452
      %1454 = vrot.lane.b32.xlu0 %v1075, 28
      %v1455 = vpop.permute.xlu0 %1454
      %1456 = vrot.lane.b32.xlu0 %v1076, 28
      %v1457 = vpop.permute.xlu0 %1456
      %1458 = vrot.lane.b32.xlu0 %v1077, 28
      %v1459 = vpop.permute.xlu0 %1458
      %1460 = vrot.lane.b32.xlu0 %v1078, 28
      %v1461 = vpop.permute.xlu0 %1460
      %1462 = vrot.lane.b32.xlu0 %v1079, 28
      %v1463 = vpop.permute.xlu0 %1462
      %1480 = vrot.lane.b32.xlu0 %v1112, 32
      %v1481 = vpop.permute.xlu0 %1480
      %1482 = vrot.lane.b32.xlu0 %v1113, 32
      %v1483 = vpop.permute.xlu0 %1482
      %1484 = vrot.lane.b32.xlu0 %v1114, 32
      %v1485 = vpop.permute.xlu0 %1484
      %1486 = vrot.lane.b32.xlu0 %v1115, 32
      %v1487 = vpop.permute.xlu0 %1486
      %1488 = vrot.lane.b32.xlu0 %v1116, 32
      %v1489 = vpop.permute.xlu0 %1488
      %1490 = vrot.lane.b32.xlu0 %v1117, 32
      %v1491 = vpop.permute.xlu0 %1490
      %1492 = vrot.lane.b32.xlu0 %v1118, 32
      %v1493 = vpop.permute.xlu0 %1492
      %1494 = vrot.lane.b32.xlu0 %v1119, 32
      %v1495 = vpop.permute.xlu0 %1494
      %1496 = vrot.lane.b32.xlu0 %v1120, 32
      %v1497 = vpop.permute.xlu0 %1496
      %1498 = vrot.lane.b32.xlu0 %v1121, 32
      %v1499 = vpop.permute.xlu0 %1498
      %1500 = vrot.lane.b32.xlu0 %v1122, 32
      %v1501 = vpop.permute.xlu0 %1500
      %1502 = vrot.lane.b32.xlu0 %v1123, 32
      %v1503 = vpop.permute.xlu0 %1502
      %1504 = vrot.lane.b32.xlu0 %v1124, 32
      %v1505 = vpop.permute.xlu0 %1504
      %1506 = vrot.lane.b32.xlu0 %v1125, 32
      %v1507 = vpop.permute.xlu0 %1506
      %1508 = vrot.lane.b32.xlu0 %v1126, 32
      %v1509 = vpop.permute.xlu0 %1508
      %1510 = vrot.lane.b32.xlu0 %v1127, 32
      %v1511 = vpop.permute.xlu0 %1510
      %v1514 = vsel %vm606, %v727, %v1145
      %v1517 = vsel %vm606, %v728, %v1147
      %v1520 = vsel %vm606, %v729, %v1149
      %v1523 = vsel %vm606, %v730, %v1151
      %v1526 = vsel %vm606, %v731, %v1153
      %v1529 = vsel %vm606, %v732, %v1155
      %v1532 = vsel %vm606, %v733, %v1157
      %v1535 = vsel %vm606, %v734, %v1159
      %v1538 = vsel %vm606, %v735, %v1161
      %v1541 = vsel %vm606, %v736, %v1163
      %v1544 = vsel %vm606, %v737, %v1165
      %v1547 = vsel %vm606, %v738, %v1167
      %v1550 = vsel %vm606, %v739, %v1169
      %v1553 = vsel %vm606, %v740, %v1171
      %v1556 = vsel %vm606, %v741, %v1173
      %v1559 = vsel %vm606, %v742, %v1175
      %vm1560 = vcmask 64512
      %v1562 = vsel %vm1560, %v1514, %v1193
      %v1564 = vsel %vm1560, %v1517, %v1195
      %v1566 = vsel %vm1560, %v1520, %v1197
      %v1568 = vsel %vm1560, %v1523, %v1199
      %v1570 = vsel %vm1560, %v1526, %v1201
      %v1572 = vsel %vm1560, %v1529, %v1203
      %v1574 = vsel %vm1560, %v1532, %v1205
      %v1576 = vsel %vm1560, %v1535, %v1207
      %v1578 = vsel %vm1560, %v1538, %v1209
      %v1580 = vsel %vm1560, %v1541, %v1211
      %v1582 = vsel %vm1560, %v1544, %v1213
      %v1584 = vsel %vm1560, %v1547, %v1215
      %v1586 = vsel %vm1560, %v1550, %v1217
      %v1588 = vsel %vm1560, %v1553, %v1219
      %v1590 = vsel %vm1560, %v1556, %v1221
      %v1592 = vsel %vm1560, %v1559, %v1223
      %vm1593 = vcmask 97280
      %v1595 = vsel %vm1593, %v1562, %v1241
      %v1597 = vsel %vm1593, %v1564, %v1243
      %v1599 = vsel %vm1593, %v1566, %v1245
      %v1601 = vsel %vm1593, %v1568, %v1247
      %v1603 = vsel %vm1593, %v1570, %v1249
      %v1605 = vsel %vm1593, %v1572, %v1251
      %v1607 = vsel %vm1593, %v1574, %v1253
      %v1609 = vsel %vm1593, %v1576, %v1255
      %v1611 = vsel %vm1593, %v1578, %v1257
      %v1613 = vsel %vm1593, %v1580, %v1259
      %v1615 = vsel %vm1593, %v1582, %v1261
      %v1617 = vsel %vm1593, %v1584, %v1263
      %v1619 = vsel %vm1593, %v1586, %v1265
      %v1621 = vsel %vm1593, %v1588, %v1267
      %v1623 = vsel %vm1593, %v1590, %v1269
      %v1625 = vsel %vm1593, %v1592, %v1271
      %vm1626 = vcmask 130048
      %v1628 = vsel %vm1626, %v1595, %v1289
      %v1630 = vsel %vm1626, %v1597, %v1291
      %v1632 = vsel %vm1626, %v1599, %v1293
      %v1634 = vsel %vm1626, %v1601, %v1295
      %v1636 = vsel %vm1626, %v1603, %v1297
      %v1638 = vsel %vm1626, %v1605, %v1299
      %v1640 = vsel %vm1626, %v1607, %v1301
      %v1642 = vsel %vm1626, %v1609, %v1303
      %v1644 = vsel %vm1626, %v1611, %v1305
      %v1646 = vsel %vm1626, %v1613, %v1307
      %v1648 = vsel %vm1626, %v1615, %v1309
      %v1650 = vsel %vm1626, %v1617, %v1311
      %v1652 = vsel %vm1626, %v1619, %v1313
      %v1654 = vsel %vm1626, %v1621, %v1315
      %v1656 = vsel %vm1626, %v1623, %v1317
      %v1658 = vsel %vm1626, %v1625, %v1319
      %vm1659 = vcmask 162816
      %v1661 = vsel %vm1659, %v1628, %v1337
      %v1663 = vsel %vm1659, %v1630, %v1339
      %v1665 = vsel %vm1659, %v1632, %v1341
      %v1667 = vsel %vm1659, %v1634, %v1343
      %v1669 = vsel %vm1659, %v1636, %v1345
      %v1671 = vsel %vm1659, %v1638, %v1347
      %v1673 = vsel %vm1659, %v1640, %v1349
      %v1675 = vsel %vm1659, %v1642, %v1351
      %v1677 = vsel %vm1659, %v1644, %v1353
      %v1679 = vsel %vm1659, %v1646, %v1355
      %v1681 = vsel %vm1659, %v1648, %v1357
      %v1683 = vsel %vm1659, %v1650, %v1359
      %v1685 = vsel %vm1659, %v1652, %v1361
      %v1687 = vsel %vm1659, %v1654, %v1363
      %v1689 = vsel %vm1659, %v1656, %v1365
      %v1691 = vsel %vm1659, %v1658, %v1367
      %vm1692 = vcmask 195584
      %v1694 = vsel %vm1692, %v1661, %v1385
      %v1696 = vsel %vm1692, %v1663, %v1387
      %v1698 = vsel %vm1692, %v1665, %v1389
      %v1700 = vsel %vm1692, %v1667, %v1391
      %v1702 = vsel %vm1692, %v1669, %v1393
      %v1704 = vsel %vm1692, %v1671, %v1395
      %v1706 = vsel %vm1692, %v1673, %v1397
      %v1708 = vsel %vm1692, %v1675, %v1399
      %v1710 = vsel %vm1692, %v1677, %v1401
      %v1712 = vsel %vm1692, %v1679, %v1403
      %v1714 = vsel %vm1692, %v1681, %v1405
      %v1716 = vsel %vm1692, %v1683, %v1407
      %v1718 = vsel %vm1692, %v1685, %v1409
      %v1720 = vsel %vm1692, %v1687, %v1411
      %v1722 = vsel %vm1692, %v1689, %v1413
      %v1724 = vsel %vm1692, %v1691, %v1415
      %vm1725 = vcmask 228352
      %v1727 = vsel %vm1725, %v1694, %v1433
      %v1729 = vsel %vm1725, %v1696, %v1435
      %v1731 = vsel %vm1725, %v1698, %v1437
      %v1733 = vsel %vm1725, %v1700, %v1439
      %v1735 = vsel %vm1725, %v1702, %v1441
      %v1737 = vsel %vm1725, %v1704, %v1443
      %v1739 = vsel %vm1725, %v1706, %v1445
      %v1741 = vsel %vm1725, %v1708, %v1447
      %v1743 = vsel %vm1725, %v1710, %v1449
      %v1745 = vsel %vm1725, %v1712, %v1451
      %v1747 = vsel %vm1725, %v1714, %v1453
      %v1749 = vsel %vm1725, %v1716, %v1455
      %v1751 = vsel %vm1725, %v1718, %v1457
      %v1753 = vsel %vm1725, %v1720, %v1459
      %v1755 = vsel %vm1725, %v1722, %v1461
      %v1757 = vsel %vm1725, %v1724, %v1463
      %v1759 = vsel %vm529, %v1727, %v1481
      %v1761 = vsel %vm529, %v1729, %v1483
      %v1763 = vsel %vm529, %v1731, %v1485
      %v1765 = vsel %vm529, %v1733, %v1487
      %v1767 = vsel %vm529, %v1735, %v1489
      %v1769 = vsel %vm529, %v1737, %v1491
      %v1771 = vsel %vm529, %v1739, %v1493
      %v1773 = vsel %vm529, %v1741, %v1495
      %v1775 = vsel %vm529, %v1743, %v1497
      %v1777 = vsel %vm529, %v1745, %v1499
      %v1779 = vsel %vm529, %v1747, %v1501
      %v1781 = vsel %vm529, %v1749, %v1503
      %v1783 = vsel %vm529, %v1751, %v1505
      %v1785 = vsel %vm529, %v1753, %v1507
      %v1787 = vsel %vm529, %v1755, %v1509
      %v1789 = vsel %vm529, %v1757, %v1511
      %v1790 = vld [vmem:[%s4] sm:$0xf]
      %v1791 = vld [vmem:[%s4 + $0x4] sm:$0xf]
      %v1792 = vld [vmem:[%s4 + $0x8] sm:$0xf]
      %v1793 = vld [vmem:[%s4 + $0xc] sm:$0xf]
      %v1794 = vld [vmem:[%s4 + $0x10] sm:$0x3]
      %v1795 = vld [vmem:[%s5] sm:$0x1]
      %v1797 = vlaneseq
      %v1798 = vshrl.u32 %v1797, 7
      %v1799 = vsub.s32 0, %v1798
      %v1800 = vrot.slane %v1795, %v1799
      %v1807 = vunpack.c.l.b16 %v1790
      %v1808 = vunpack.c.l.b16 %v1791
      %v1809 = vunpack.c.l.b16 %v1792
      %v1810 = vunpack.c.l.b16 %v1793
      %v1811 = vunpack.c.l.b16 %v1794
      %v1812 = vpack.c.b16 %v1808, %v1807
      %v1813 = vpack.c.b16 %v1810, %v1809
      %v1814 = vpack.c.b16 %v1811, %v1811
      %vm1817 = vcmask 293888
      %v1818 = vsel %vm1817, %v1759, 0
      %v1820 = vsel %vm1817, %v1761, 0
      %v1822 = vsel %vm1817, %v1763, 0
      %v1824 = vsel %vm1817, %v1765, 0
      %v1826 = vsel %vm1817, %v1767, 0
      %v1828 = vsel %vm1817, %v1769, 0
      %v1830 = vsel %vm1817, %v1771, 0
      %v1832 = vsel %vm1817, %v1773, 0
      %v1834 = vsel %vm1817, %v1775, 0
      %v1836 = vsel %vm1817, %v1777, 0
      %v1838 = vsel %vm1817, %v1779, 0
      %v1840 = vsel %vm1817, %v1781, 0
      %v1842 = vsel %vm1817, %v1783, 0
      %v1844 = vsel %vm1817, %v1785, 0
      %v1846 = vsel %vm1817, %v1787, 0
      %v1848 = vsel %vm1817, %v1789, 0
      %vm1850 = vcmask 1041408
      %v1852 = vsel %vm1850, %v1814, 0
      %1854 = vmatprep.subr.bf16.mxu0 0
      %1855 = vmatpush1.bf16.msra.mxu0 0
      %1856 = vmatprep.subr.bf16.mxu0 0
      %1857 = vmatpush1.bf16.msra.mxu0 0
      %1858 = vmatprep.subr.bf16.mxu0 0
      %1859 = vmatpush1.bf16.msra.mxu0 0
      %1860 = vmatprep.subr.bf16.mxu0 0
      %1861 = vmatpush1.bf16.msra.mxu0 0
      %1862 = vmatprep.subr.bf16.mxu0 0
      %1863 = vmatpush1.bf16.msra.mxu0 0
      %1864 = vmatprep.subr.bf16.mxu0 0
      %1865 = vmatpush1.bf16.msra.mxu0 %v1852
      %1866 = vmatprep.subr.bf16.mxu0 0
      %1867 = vmatpush1.bf16.msra.mxu0 %v1813
      %1868 = vmatprep.subr.bf16.mxu0 0
      %1869 = vmatpush1.bf16.msra.mxu0 %v1812
      %1870 = vmatprep.subr.bf16.mxu0 0
      %1871 = vmatpush2.bf16.msra.mxu0 0
      %1872 = vmatprep.subr.bf16.mxu0 0
      %1873 = vmatpush2.bf16.msra.mxu0 0
      %1874 = vmatprep.subr.bf16.mxu0 0
      %1875 = vmatpush2.bf16.msra.mxu0 0
      %1876 = vmatprep.subr.bf16.mxu0 0
      %1877 = vmatpush2.bf16.msra.mxu0 0
      %1878 = vmatprep.subr.bf16.mxu0 0
      %1879 = vmatpush2.bf16.msra.mxu0 0
      %1880 = vmatprep.subr.bf16.mxu0 0
      %1881 = vmatpush2.bf16.msra.mxu0 0
      %1882 = vmatprep.subr.bf16.mxu0 0
      %1883 = vmatpush2.bf16.msra.mxu0 0
      %1884 = vmatprep.subr.bf16.mxu0 0
      %1885 = vmatpush2.bf16.msra.mxu0 0
      %1886 = vmatprep.mubr.bf16.mxu0 0
      %1887 = vmatmul.mubr.bf16.gmra.mxu0 %v1818
      %v1888 = vpop.f32.mrf.mxu0
      %v1889 = vadd.f32 %v1800, %v1888
      %v1890 = vpop.f32.mrf.mxu0
      %v1891 = vpop.f32.mrf.mxu0
      %v1892 = vadd.f32 %v1800, %v1891
      %v1893 = vpop.f32.mrf.mxu0
      %1894 = vmatprep.mubr.bf16.mxu0 0
      %1895 = vmatmul.mubr.bf16.gmra.mxu0 %v1820
      %v1896 = vpop.f32.mrf.mxu0
      %v1897 = vadd.f32 %v1800, %v1896
      %v1898 = vpop.f32.mrf.mxu0
      %v1899 = vpop.f32.mrf.mxu0
      %v1900 = vadd.f32 %v1800, %v1899
      %v1901 = vpop.f32.mrf.mxu0
      %1902 = vmatprep.mubr.bf16.mxu0 0
      %1903 = vmatmul.mubr.bf16.gmra.mxu0 %v1822
      %v1904 = vpop.f32.mrf.mxu0
      %v1905 = vadd.f32 %v1800, %v1904
      %v1906 = vpop.f32.mrf.mxu0
      %v1907 = vpop.f32.mrf.mxu0
      %v1908 = vadd.f32 %v1800, %v1907
      %v1909 = vpop.f32.mrf.mxu0
      %1910 = vmatprep.mubr.bf16.mxu0 0
      %1911 = vmatmul.mubr.bf16.gmra.mxu0 %v1824
      %v1912 = vpop.f32.mrf.mxu0
      %v1913 = vadd.f32 %v1800, %v1912
      %v1914 = vpop.f32.mrf.mxu0
      %v1915 = vpop.f32.mrf.mxu0
      %v1916 = vadd.f32 %v1800, %v1915
      %v1917 = vpop.f32.mrf.mxu0
      %1918 = vmatprep.mubr.bf16.mxu0 0
      %1919 = vmatmul.mubr.bf16.gmra.mxu0 %v1826
      %v1920 = vpop.f32.mrf.mxu0
      %v1921 = vadd.f32 %v1800, %v1920
      %v1922 = vpop.f32.mrf.mxu0
      %v1923 = vpop.f32.mrf.mxu0
      %v1924 = vadd.f32 %v1800, %v1923
      %v1925 = vpop.f32.mrf.mxu0
      %1926 = vmatprep.mubr.bf16.mxu0 0
      %1927 = vmatmul.mubr.bf16.gmra.mxu0 %v1828
      %v1928 = vpop.f32.mrf.mxu0
      %v1929 = vadd.f32 %v1800, %v1928
      %v1930 = vpop.f32.mrf.mxu0
      %v1931 = vpop.f32.mrf.mxu0
      %v1932 = vadd.f32 %v1800, %v1931
      %v1933 = vpop.f32.mrf.mxu0
      %1934 = vmatprep.mubr.bf16.mxu0 0
      %1935 = vmatmul.mubr.bf16.gmra.mxu0 %v1830
      %v1936 = vpop.f32.mrf.mxu0
      %v1937 = vadd.f32 %v1800, %v1936
      %v1938 = vpop.f32.mrf.mxu0
      %v1939 = vpop.f32.mrf.mxu0
      %v1940 = vadd.f32 %v1800, %v1939
      %v1941 = vpop.f32.mrf.mxu0
      %1942 = vmatprep.mubr.bf16.mxu0 0
      %1943 = vmatmul.mubr.bf16.gmra.mxu0 %v1832
      %v1944 = vpop.f32.mrf.mxu0
      %v1945 = vadd.f32 %v1800, %v1944
      %v1946 = vpop.f32.mrf.mxu0
      %v1947 = vpop.f32.mrf.mxu0
      %v1948 = vadd.f32 %v1800, %v1947
      %v1949 = vpop.f32.mrf.mxu0
      %1950 = vmatprep.mubr.bf16.mxu0 0
      %1951 = vmatmul.mubr.bf16.gmra.mxu0 %v1834
      %v1952 = vpop.f32.mrf.mxu0
      %v1953 = vadd.f32 %v1800, %v1952
      %v1954 = vpop.f32.mrf.mxu0
      %v1955 = vpop.f32.mrf.mxu0
      %v1956 = vadd.f32 %v1800, %v1955
      %v1957 = vpop.f32.mrf.mxu0
      %1958 = vmatprep.mubr.bf16.mxu0 0
      %1959 = vmatmul.mubr.bf16.gmra.mxu0 %v1836
      %v1960 = vpop.f32.mrf.mxu0
      %v1961 = vadd.f32 %v1800, %v1960
      %v1962 = vpop.f32.mrf.mxu0
      %v1963 = vpop.f32.mrf.mxu0
      %v1964 = vadd.f32 %v1800, %v1963
      %v1965 = vpop.f32.mrf.mxu0
      %1966 = vmatprep.mubr.bf16.mxu0 0
      %1967 = vmatmul.mubr.bf16.gmra.mxu0 %v1838
      %v1968 = vpop.f32.mrf.mxu0
      %v1969 = vadd.f32 %v1800, %v1968
      %v1970 = vpop.f32.mrf.mxu0
      %v1971 = vpop.f32.mrf.mxu0
      %v1972 = vadd.f32 %v1800, %v1971
      %v1973 = vpop.f32.mrf.mxu0
      %1974 = vmatprep.mubr.bf16.mxu0 0
      %1975 = vmatmul.mubr.bf16.gmra.mxu0 %v1840
      %v1976 = vpop.f32.mrf.mxu0
      %v1977 = vadd.f32 %v1800, %v1976
      %v1978 = vpop.f32.mrf.mxu0
      %v1979 = vpop.f32.mrf.mxu0
      %v1980 = vadd.f32 %v1800, %v1979
      %v1981 = vpop.f32.mrf.mxu0
      %1982 = vmatprep.mubr.bf16.mxu0 0
      %1983 = vmatmul.mubr.bf16.gmra.mxu0 %v1842
      %v1984 = vpop.f32.mrf.mxu0
      %v1985 = vadd.f32 %v1800, %v1984
      %v1986 = vpop.f32.mrf.mxu0
      %v1987 = vpop.f32.mrf.mxu0
      %v1988 = vadd.f32 %v1800, %v1987
      %v1989 = vpop.f32.mrf.mxu0
      %1990 = vmatprep.mubr.bf16.mxu0 0
      %1991 = vmatmul.mubr.bf16.gmra.mxu0 %v1844
      %v1992 = vpop.f32.mrf.mxu0
      %v1993 = vadd.f32 %v1800, %v1992
      %v1994 = vpop.f32.mrf.mxu0
      %v1995 = vpop.f32.mrf.mxu0
      %v1996 = vadd.f32 %v1800, %v1995
      %v1997 = vpop.f32.mrf.mxu0
      %1998 = vmatprep.mubr.bf16.mxu0 0
      %1999 = vmatmul.mubr.bf16.gmra.mxu0 %v1846
      %v2000 = vpop.f32.mrf.mxu0
      %v2001 = vadd.f32 %v1800, %v2000
      %v2002 = vpop.f32.mrf.mxu0
      %v2003 = vpop.f32.mrf.mxu0
      %v2004 = vadd.f32 %v1800, %v2003
      %v2005 = vpop.f32.mrf.mxu0
      %2006 = vmatprep.mubr.bf16.mxu0 0
      %2007 = vmatmul.mubr.bf16.gmra.mxu0 %v1848
      %v2008 = vpop.f32.mrf.mxu0
      %v2009 = vadd.f32 %v1800, %v2008
      %v2010 = vpop.f32.mrf.mxu0
      %v2011 = vpop.f32.mrf.mxu0
      %v2012 = vadd.f32 %v1800, %v2011
      %v2013 = vpop.f32.mrf.mxu0
      %2014 = vdwg.mxu0
      %v2015 = vlaneseq
      %v2016 = vshrl.u32 %v2015, 7
      %v2017 = vsub.s32 0, %v2016
      %v2018 = vrot.slane %v573, %v2017
      %v2019 = vadd.f32 %v1889, %v2018
      %v2020 = vadd.f32 %v1892, %v2018
      %v2021 = vadd.f32 %v1897, %v2018
      %v2022 = vadd.f32 %v1900, %v2018
      %v2023 = vadd.f32 %v1905, %v2018
      %v2024 = vadd.f32 %v1908, %v2018
      %v2025 = vadd.f32 %v1913, %v2018
      %v2026 = vadd.f32 %v1916, %v2018
      %v2027 = vadd.f32 %v1921, %v2018
      %v2028 = vadd.f32 %v1924, %v2018
      %v2029 = vadd.f32 %v1929, %v2018
      %v2030 = vadd.f32 %v1932, %v2018
      %v2031 = vadd.f32 %v1937, %v2018
      %v2032 = vadd.f32 %v1940, %v2018
      %v2033 = vadd.f32 %v1945, %v2018
      %v2034 = vadd.f32 %v1948, %v2018
      %v2035 = vadd.f32 %v1953, %v2018
      %v2036 = vadd.f32 %v1956, %v2018
      %v2037 = vadd.f32 %v1961, %v2018
      %v2038 = vadd.f32 %v1964, %v2018
      %v2039 = vadd.f32 %v1969, %v2018
      %v2040 = vadd.f32 %v1972, %v2018
      %v2041 = vadd.f32 %v1977, %v2018
      %v2042 = vadd.f32 %v1980, %v2018
      %v2043 = vadd.f32 %v1985, %v2018
      %v2044 = vadd.f32 %v1988, %v2018
      %v2045 = vadd.f32 %v1993, %v2018
      %v2046 = vadd.f32 %v1996, %v2018
      %v2047 = vadd.f32 %v2001, %v2018
      %v2048 = vadd.f32 %v2004, %v2018
      %v2049 = vadd.f32 %v2009, %v2018
      %v2050 = vadd.f32 %v2012, %v2018
      %v2051 = vmax.f32 %v2019, 0.0
      %v2052 = vmax.f32 %v2020, 0.0
      %v2053 = vmax.f32 %v2021, 0.0
      %v2054 = vmax.f32 %v2022, 0.0
      %v2055 = vmax.f32 %v2023, 0.0
      %v2056 = vmax.f32 %v2024, 0.0
      %v2057 = vmax.f32 %v2025, 0.0
      %v2058 = vmax.f32 %v2026, 0.0
      %v2059 = vmax.f32 %v2027, 0.0
      %v2060 = vmax.f32 %v2028, 0.0
      %v2061 = vmax.f32 %v2029, 0.0
      %v2062 = vmax.f32 %v2030, 0.0
      %v2063 = vmax.f32 %v2031, 0.0
      %v2064 = vmax.f32 %v2032, 0.0
      %v2065 = vmax.f32 %v2033, 0.0
      %v2066 = vmax.f32 %v2034, 0.0
      %v2067 = vmax.f32 %v2035, 0.0
      %v2068 = vmax.f32 %v2036, 0.0
      %v2069 = vmax.f32 %v2037, 0.0
      %v2070 = vmax.f32 %v2038, 0.0
      %v2071 = vmax.f32 %v2039, 0.0
      %v2072 = vmax.f32 %v2040, 0.0
      %v2073 = vmax.f32 %v2041, 0.0
      %v2074 = vmax.f32 %v2042, 0.0
      %v2075 = vmax.f32 %v2043, 0.0
      %v2076 = vmax.f32 %v2044, 0.0
      %v2077 = vmax.f32 %v2045, 0.0
      %v2078 = vmax.f32 %v2046, 0.0
      %v2079 = vmax.f32 %v2047, 0.0
      %v2080 = vmax.f32 %v2048, 0.0
      %v2081 = vmax.f32 %v2049, 0.0
      %v2082 = vmax.f32 %v2050, 0.0
      %2083 = vst.msk [vmem:[#allocation3] sm:$0xff] %vm529, 0.0
      %2084 = vst.msk [vmem:[#allocation3 + $0x8] sm:$0xff] %vm529, 0.0
      %vm2085 = vcmask 254976
      %2086 = vst.msk [vmem:[#allocation3 + $0x10] sm:$0x3] %vm2085, 0.0
      %2087 = vst.msk [vmem:[#allocation3 + $0x18] sm:$0xff] %vm529, 0.0
      %2088 = vst.msk [vmem:[#allocation3 + $0x20] sm:$0xff] %vm529, 0.0
      %2089 = vst.msk [vmem:[#allocation3 + $0x28] sm:$0x3] %vm2085, 0.0
      %2090 = vst.msk [vmem:[#allocation3 + $0x30] sm:$0xff] %vm529, 0.0
      %2091 = vst.msk [vmem:[#allocation3 + $0x38] sm:$0xff] %vm529, 0.0
      %2092 = vst.msk [vmem:[#allocation3 + $0x40] sm:$0x3] %vm2085, 0.0
      %2093 = vst.msk [vmem:[#allocation3 + $0x48] sm:$0xff] %vm529, 0.0
      %2094 = vst.msk [vmem:[#allocation3 + $0x50] sm:$0xff] %vm529, 0.0
      %2095 = vst.msk [vmem:[#allocation3 + $0x58] sm:$0x3] %vm2085, 0.0
      %2096 = vst.msk [vmem:[#allocation3 + $0x60] sm:$0xff] %vm529, 0.0
      %2097 = vst.msk [vmem:[#allocation3 + $0x68] sm:$0xff] %vm529, 0.0
      %2098 = vst.msk [vmem:[#allocation3 + $0x70] sm:$0x3] %vm2085, 0.0
      %2099 = vst.msk [vmem:[#allocation3 + $0x78] sm:$0xff] %vm529, 0.0
      %2100 = vst.msk [vmem:[#allocation3 + $0x80] sm:$0xff] %vm529, 0.0
      %2101 = vst.msk [vmem:[#allocation3 + $0x88] sm:$0x3] %vm2085, 0.0
      %2102 = vst.msk [vmem:[#allocation3 + $0x90] sm:$0xff] %vm529, 0.0
      %2103 = vst.msk [vmem:[#allocation3 + $0x98] sm:$0xff] %vm529, 0.0
      %2104 = vst.msk [vmem:[#allocation3 + $0xa0] sm:$0x3] %vm2085, 0.0
      %2105 = vst.msk [vmem:[#allocation3 + $0xa8] sm:$0xff] %vm529, 0.0
      %2106 = vst.msk [vmem:[#allocation3 + $0xb0] sm:$0xff] %vm529, 0.0
      %2107 = vst.msk [vmem:[#allocation3 + $0xb8] sm:$0x3] %vm2085, 0.0
      %2108 = vst.msk [vmem:[#allocation3 + $0xc0] sm:$0xff] %vm529, 0.0
      %2109 = vst.msk [vmem:[#allocation3 + $0xc8] sm:$0xff] %vm529, 0.0
      %2110 = vst.msk [vmem:[#allocation3 + $0xd0] sm:$0x3] %vm2085, 0.0
      %2111 = vst.msk [vmem:[#allocation3 + $0xd8] sm:$0xff] %vm529, 0.0
      %2112 = vst.msk [vmem:[#allocation3 + $0xe0] sm:$0xff] %vm529, 0.0
      %2113 = vst.msk [vmem:[#allocation3 + $0xe8] sm:$0x3] %vm2085, 0.0
      %2114 = vst.msk [vmem:[#allocation3 + $0xf0] sm:$0xff] %vm529, 0.0
      %2115 = vst.msk [vmem:[#allocation3 + $0xf8] sm:$0xff] %vm529, 0.0
      %2116 = vst.msk [vmem:[#allocation3 + $0x100] sm:$0x3] %vm2085, 0.0
      %2117 = vst.msk [vmem:[#allocation3 + $0x108] sm:$0xff] %vm529, 0.0
      %2118 = vst.msk [vmem:[#allocation3 + $0x110] sm:$0xff] %vm529, 0.0
      %2119 = vst.msk [vmem:[#allocation3 + $0x118] sm:$0x3] %vm2085, 0.0
      %2120 = vst.msk [vmem:[#allocation3 + $0x120] sm:$0xff] %vm529, 0.0
      %2121 = vst.msk [vmem:[#allocation3 + $0x128] sm:$0xff] %vm529, 0.0
      %2122 = vst.msk [vmem:[#allocation3 + $0x130] sm:$0x3] %vm2085, 0.0
      %2123 = vst.msk [vmem:[#allocation3 + $0x138] sm:$0xff] %vm529, 0.0
      %2124 = vst.msk [vmem:[#allocation3 + $0x140] sm:$0xff] %vm529, 0.0
      %2125 = vst.msk [vmem:[#allocation3 + $0x148] sm:$0x3] %vm2085, 0.0
      %2126 = vst.msk [vmem:[#allocation3 + $0x150] sm:$0xff] %vm529, 0.0
      %2127 = vst.msk [vmem:[#allocation3 + $0x158] sm:$0xff] %vm529, 0.0
      %2128 = vst.msk [vmem:[#allocation3 + $0x160] sm:$0x3] %vm2085, 0.0
      %2129 = vst.msk [vmem:[#allocation3 + $0x168] sm:$0xff] %vm529, 0.0
      %2130 = vst.msk [vmem:[#allocation3 + $0x170] sm:$0xff] %vm529, 0.0
      %2131 = vst.msk [vmem:[#allocation3 + $0x178] sm:$0x3] %vm2085, 0.0
      %2132 = vst.msk [vmem:[#allocation3 + $0x180] sm:$0xff] %vm529, 0.0
      %2133 = vst.msk [vmem:[#allocation3 + $0x188] sm:$0xff] %vm529, 0.0
      %2134 = vst.msk [vmem:[#allocation3 + $0x190] sm:$0x3] %vm2085, 0.0
      %2135 = vst.msk [vmem:[#allocation3 + $0x198] sm:$0xff] %vm529, 0.0
      %2136 = vst.msk [vmem:[#allocation3 + $0x1a0] sm:$0xff] %vm529, 0.0
      %2137 = vst.msk [vmem:[#allocation3 + $0x1a8] sm:$0x3] %vm2085, 0.0
      %s2138 = scalar_lea.vmem [#allocation3], 24
      %2139 = vst.msk [vmem:[%s2138 + $0x1] sm:$0xff] %vm529, %v2051
      %2140 = vst.msk [vmem:[%s2138 + $0x9] sm:$0xff] %vm529, %v2052
      %2141 = vst.msk [vmem:[%s2138 + $0x19] sm:$0xff] %vm529, %v2053
      %2142 = vst.msk [vmem:[%s2138 + $0x21] sm:$0xff] %vm529, %v2054
      %2143 = vst.msk [vmem:[%s2138 + $0x31] sm:$0xff] %vm529, %v2055
      %2144 = vst.msk [vmem:[%s2138 + $0x39] sm:$0xff] %vm529, %v2056
      %2145 = vst.msk [vmem:[%s2138 + $0x49] sm:$0xff] %vm529, %v2057
      %2146 = vst.msk [vmem:[%s2138 + $0x51] sm:$0xff] %vm529, %v2058
      %2147 = vst.msk [vmem:[%s2138 + $0x61] sm:$0xff] %vm529, %v2059
      %2148 = vst.msk [vmem:[%s2138 + $0x69] sm:$0xff] %vm529, %v2060
      %2149 = vst.msk [vmem:[%s2138 + $0x79] sm:$0xff] %vm529, %v2061
      %2150 = vst.msk [vmem:[%s2138 + $0x81] sm:$0xff] %vm529, %v2062
      %2151 = vst.msk [vmem:[%s2138 + $0x91] sm:$0xff] %vm529, %v2063
      %2152 = vst.msk [vmem:[%s2138 + $0x99] sm:$0xff] %vm529, %v2064
      %2153 = vst.msk [vmem:[%s2138 + $0xa9] sm:$0xff] %vm529, %v2065
      %2154 = vst.msk [vmem:[%s2138 + $0xb1] sm:$0xff] %vm529, %v2066
      %2155 = vst.msk [vmem:[%s2138 + $0xc1] sm:$0xff] %vm529, %v2067
      %2156 = vst.msk [vmem:[%s2138 + $0xc9] sm:$0xff] %vm529, %v2068
      %2157 = vst.msk [vmem:[%s2138 + $0xd9] sm:$0xff] %vm529, %v2069
      %2158 = vst.msk [vmem:[%s2138 + $0xe1] sm:$0xff] %vm529, %v2070
      %2159 = vst.msk [vmem:[%s2138 + $0xf1] sm:$0xff] %vm529, %v2071
      %2160 = vst.msk [vmem:[%s2138 + $0xf9] sm:$0xff] %vm529, %v2072
      %2161 = vst.msk [vmem:[%s2138 + $0x109] sm:$0xff] %vm529, %v2073
      %2162 = vst.msk [vmem:[%s2138 + $0x111] sm:$0xff] %vm529, %v2074
      %2163 = vst.msk [vmem:[%s2138 + $0x121] sm:$0xff] %vm529, %v2075
      %2164 = vst.msk [vmem:[%s2138 + $0x129] sm:$0xff] %vm529, %v2076
      %2165 = vst.msk [vmem:[%s2138 + $0x139] sm:$0xff] %vm529, %v2077
      %2166 = vst.msk [vmem:[%s2138 + $0x141] sm:$0xff] %vm529, %v2078
      %2167 = vst.msk [vmem:[%s2138 + $0x151] sm:$0xff] %vm529, %v2079
      %2168 = vst.msk [vmem:[%s2138 + $0x159] sm:$0xff] %vm529, %v2080
      %2169 = vst.msk [vmem:[%s2138 + $0x169] sm:$0xff] %vm529, %v2081
      %2170 = vst.msk [vmem:[%s2138 + $0x171] sm:$0xff] %vm529, %v2082
      %v2171 = vld [vmem:[#allocation3] sm:$0xff]
      %v2172 = vld [vmem:[#allocation3 + $0x8] sm:$0xff]
      %v2173 = vld [vmem:[#allocation3 + $0x18] sm:$0xff]
      %v2174 = vld [vmem:[#allocation3 + $0x20] sm:$0xff]
      %v2175 = vld [vmem:[#allocation3 + $0x30] sm:$0xff]
      %v2176 = vld [vmem:[#allocation3 + $0x38] sm:$0xff]
      %v2177 = vld [vmem:[#allocation3 + $0x48] sm:$0xff]
      %v2178 = vld [vmem:[#allocation3 + $0x50] sm:$0xff]
      %v2179 = vld [vmem:[#allocation3 + $0x60] sm:$0xff]
      %v2180 = vld [vmem:[#allocation3 + $0x68] sm:$0xff]
      %v2181 = vld [vmem:[#allocation3 + $0x78] sm:$0xff]
      %v2182 = vld [vmem:[#allocation3 + $0x80] sm:$0xff]
      %v2183 = vld [vmem:[#allocation3 + $0x90] sm:$0xff]
      %v2184 = vld [vmem:[#allocation3 + $0x98] sm:$0xff]
      %v2185 = vld [vmem:[#allocation3 + $0xa8] sm:$0xff]
      %v2186 = vld [vmem:[#allocation3 + $0xb0] sm:$0xff]
      %v2187 = vld [vmem:[#allocation3 + $0xc0] sm:$0xff]
      %v2188 = vld [vmem:[#allocation3 + $0xc8] sm:$0xff]
      %v2189 = vld [vmem:[#allocation3 + $0xd8] sm:$0xff]
      %v2190 = vld [vmem:[#allocation3 + $0xe0] sm:$0xff]
      %v2191 = vld [vmem:[#allocation3 + $0xf0] sm:$0xff]
      %v2192 = vld [vmem:[#allocation3 + $0xf8] sm:$0xff]
      %v2193 = vld [vmem:[#allocation3 + $0x108] sm:$0xff]
      %v2194 = vld [vmem:[#allocation3 + $0x110] sm:$0xff]
      %v2195 = vld [vmem:[#allocation3 + $0x120] sm:$0xff]
      %v2196 = vld [vmem:[#allocation3 + $0x128] sm:$0xff]
      %v2197 = vld [vmem:[#allocation3 + $0x138] sm:$0xff]
      %v2198 = vld [vmem:[#allocation3 + $0x140] sm:$0xff]
      %v2199 = vld [vmem:[#allocation3 + $0x150] sm:$0xff]
      %v2200 = vld [vmem:[#allocation3 + $0x158] sm:$0xff]
      %v2201 = vld [vmem:[#allocation3 + $0x168] sm:$0xff]
      %v2202 = vld [vmem:[#allocation3 + $0x170] sm:$0xff]
      %v2203 = vpack.c.bf16 %v2172, %v2171
      %v2204 = vpack.c.bf16 %v2174, %v2173
      %v2205 = vpack.c.bf16 %v2176, %v2175
      %v2206 = vpack.c.bf16 %v2178, %v2177
      %v2207 = vpack.c.bf16 %v2180, %v2179
      %v2208 = vpack.c.bf16 %v2182, %v2181
      %v2209 = vpack.c.bf16 %v2184, %v2183
      %v2210 = vpack.c.bf16 %v2186, %v2185
      %v2211 = vpack.c.bf16 %v2188, %v2187
      %v2212 = vpack.c.bf16 %v2190, %v2189
      %v2213 = vpack.c.bf16 %v2192, %v2191
      %v2214 = vpack.c.bf16 %v2194, %v2193
      %v2215 = vpack.c.bf16 %v2196, %v2195
      %v2216 = vpack.c.bf16 %v2198, %v2197
      %v2217 = vpack.c.bf16 %v2200, %v2199
      %v2218 = vpack.c.bf16 %v2202, %v2201
      %v2219 = vld [vmem:[#allocation3 + $0x1] sm:$0xff]
      %v2220 = vld [vmem:[#allocation3 + $0x9] sm:$0xff]
      %v2221 = vld [vmem:[#allocation3 + $0x19] sm:$0xff]
      %v2222 = vld [vmem:[#allocation3 + $0x21] sm:$0xff]
      %v2223 = vld [vmem:[#allocation3 + $0x31] sm:$0xff]
      %v2224 = vld [vmem:[#allocation3 + $0x39] sm:$0xff]
      %v2225 = vld [vmem:[#allocation3 + $0x49] sm:$0xff]
      %v2226 = vld [vmem:[#allocation3 + $0x51] sm:$0xff]
      %v2227 = vld [vmem:[#allocation3 + $0x61] sm:$0xff]
      %v2228 = vld [vmem:[#allocation3 + $0x69] sm:$0xff]
      %v2229 = vld [vmem:[#allocation3 + $0x79] sm:$0xff]
      %v2230 = vld [vmem:[#allocation3 + $0x81] sm:$0xff]
      %v2231 = vld [vmem:[#allocation3 + $0x91] sm:$0xff]
      %v2232 = vld [vmem:[#allocation3 + $0x99] sm:$0xff]
      %v2233 = vld [vmem:[#allocation3 + $0xa9] sm:$0xff]
      %v2234 = vld [vmem:[#allocation3 + $0xb1] sm:$0xff]
      %v2235 = vld [vmem:[#allocation3 + $0xc1] sm:$0xff]
      %v2236 = vld [vmem:[#allocation3 + $0xc9] sm:$0xff]
      %v2237 = vld [vmem:[#allocation3 + $0xd9] sm:$0xff]
      %v2238 = vld [vmem:[#allocation3 + $0xe1] sm:$0xff]
      %v2239 = vld [vmem:[#allocation3 + $0xf1] sm:$0xff]
      %v2240 = vld [vmem:[#allocation3 + $0xf9] sm:$0xff]
      %v2241 = vld [vmem:[#allocation3 + $0x109] sm:$0xff]
      %v2242 = vld [vmem:[#allocation3 + $0x111] sm:$0xff]
      %v2243 = vld [vmem:[#allocation3 + $0x121] sm:$0xff]
      %v2244 = vld [vmem:[#allocation3 + $0x129] sm:$0xff]
      %v2245 = vld [vmem:[#allocation3 + $0x139] sm:$0xff]
      %v2246 = vld [vmem:[#allocation3 + $0x141] sm:$0xff]
      %v2247 = vld [vmem:[#allocation3 + $0x151] sm:$0xff]
      %v2248 = vld [vmem:[#allocation3 + $0x159] sm:$0xff]
      %v2249 = vld [vmem:[#allocation3 + $0x169] sm:$0xff]
      %v2250 = vld [vmem:[#allocation3 + $0x171] sm:$0xff]
      %v2251 = vpack.c.bf16 %v2220, %v2219
      %v2252 = vpack.c.bf16 %v2222, %v2221
      %v2253 = vpack.c.bf16 %v2224, %v2223
      %v2254 = vpack.c.bf16 %v2226, %v2225
      %v2255 = vpack.c.bf16 %v2228, %v2227
      %v2256 = vpack.c.bf16 %v2230, %v2229
      %v2257 = vpack.c.bf16 %v2232, %v2231
      %v2258 = vpack.c.bf16 %v2234, %v2233
      %v2259 = vpack.c.bf16 %v2236, %v2235
      %v2260 = vpack.c.bf16 %v2238, %v2237
      %v2261 = vpack.c.bf16 %v2240, %v2239
      %v2262 = vpack.c.bf16 %v2242, %v2241
      %v2263 = vpack.c.bf16 %v2244, %v2243
      %v2264 = vpack.c.bf16 %v2246, %v2245
      %v2265 = vpack.c.bf16 %v2248, %v2247
      %v2266 = vpack.c.bf16 %v2250, %v2249
      %v2267 = vld [vmem:[#allocation3 + $0x2] sm:$0xff]
      %v2268 = vld [vmem:[#allocation3 + $0xa] sm:$0xff]
      %v2269 = vld [vmem:[#allocation3 + $0x1a] sm:$0xff]
      %v2270 = vld [vmem:[#allocation3 + $0x22] sm:$0xff]
      %v2271 = vld [vmem:[#allocation3 + $0x32] sm:$0xff]
      %v2272 = vld [vmem:[#allocation3 + $0x3a] sm:$0xff]
      %v2273 = vld [vmem:[#allocation3 + $0x4a] sm:$0xff]
      %v2274 = vld [vmem:[#allocation3 + $0x52] sm:$0xff]
      %v2275 = vld [vmem:[#allocation3 + $0x62] sm:$0xff]
      %v2276 = vld [vmem:[#allocation3 + $0x6a] sm:$0xff]
      %v2277 = vld [vmem:[#allocation3 + $0x7a] sm:$0xff]
      %v2278 = vld [vmem:[#allocation3 + $0x82] sm:$0xff]
      %v2279 = vld [vmem:[#allocation3 + $0x92] sm:$0xff]
      %v2280 = vld [vmem:[#allocation3 + $0x9a] sm:$0xff]
      %v2281 = vld [vmem:[#allocation3 + $0xaa] sm:$0xff]
      %v2282 = vld [vmem:[#allocation3 + $0xb2] sm:$0xff]
      %v2283 = vld [vmem:[#allocation3 + $0xc2] sm:$0xff]
      %v2284 = vld [vmem:[#allocation3 + $0xca] sm:$0xff]
      %v2285 = vld [vmem:[#allocation3 + $0xda] sm:$0xff]
      %v2286 = vld [vmem:[#allocation3 + $0xe2] sm:$0xff]
      %v2287 = vld [vmem:[#allocation3 + $0xf2] sm:$0xff]
      %v2288 = vld [vmem:[#allocation3 + $0xfa] sm:$0xff]
      %v2289 = vld [vmem:[#allocation3 + $0x10a] sm:$0xff]
      %v2290 = vld [vmem:[#allocation3 + $0x112] sm:$0xff]
      %v2291 = vld [vmem:[#allocation3 + $0x122] sm:$0xff]
      %v2292 = vld [vmem:[#allocation3 + $0x12a] sm:$0xff]
      %v2293 = vld [vmem:[#allocation3 + $0x13a] sm:$0xff]
      %v2294 = vld [vmem:[#allocation3 + $0x142] sm:$0xff]
      %v2295 = vld [vmem:[#allocation3 + $0x152] sm:$0xff]
      %v2296 = vld [vmem:[#allocation3 + $0x15a] sm:$0xff]
      %v2297 = vld [vmem:[#allocation3 + $0x16a] sm:$0xff]
      %v2298 = vld [vmem:[#allocation3 + $0x172] sm:$0xff]
      %v2299 = vpack.c.bf16 %v2268, %v2267
      %v2300 = vpack.c.bf16 %v2270, %v2269
      %v2301 = vpack.c.bf16 %v2272, %v2271
      %v2302 = vpack.c.bf16 %v2274, %v2273
      %v2303 = vpack.c.bf16 %v2276, %v2275
      %v2304 = vpack.c.bf16 %v2278, %v2277
      %v2305 = vpack.c.bf16 %v2280, %v2279
      %v2306 = vpack.c.bf16 %v2282, %v2281
      %v2307 = vpack.c.bf16 %v2284, %v2283
      %v2308 = vpack.c.bf16 %v2286, %v2285
      %v2309 = vpack.c.bf16 %v2288, %v2287
      %v2310 = vpack.c.bf16 %v2290, %v2289
      %v2311 = vpack.c.bf16 %v2292, %v2291
      %v2312 = vpack.c.bf16 %v2294, %v2293
      %v2313 = vpack.c.bf16 %v2296, %v2295
      %v2314 = vpack.c.bf16 %v2298, %v2297
      %v2315 = vld [vmem:[%s2138] sm:$0xff]
      %v2316 = vld [vmem:[%s2138 + $0x8] sm:$0xff]
      %v2317 = vld [vmem:[%s2138 + $0x18] sm:$0xff]
      %v2318 = vld [vmem:[%s2138 + $0x20] sm:$0xff]
      %v2319 = vld [vmem:[%s2138 + $0x30] sm:$0xff]
      %v2320 = vld [vmem:[%s2138 + $0x38] sm:$0xff]
      %v2321 = vld [vmem:[%s2138 + $0x48] sm:$0xff]
      %v2322 = vld [vmem:[%s2138 + $0x50] sm:$0xff]
      %v2323 = vld [vmem:[%s2138 + $0x60] sm:$0xff]
      %v2324 = vld [vmem:[%s2138 + $0x68] sm:$0xff]
      %v2325 = vld [vmem:[%s2138 + $0x78] sm:$0xff]
      %v2326 = vld [vmem:[%s2138 + $0x80] sm:$0xff]
      %v2327 = vld [vmem:[%s2138 + $0x90] sm:$0xff]
      %v2328 = vld [vmem:[%s2138 + $0x98] sm:$0xff]
      %v2329 = vld [vmem:[%s2138 + $0xa8] sm:$0xff]
      %v2330 = vld [vmem:[%s2138 + $0xb0] sm:$0xff]
      %v2331 = vld [vmem:[%s2138 + $0xc0] sm:$0xff]
      %v2332 = vld [vmem:[%s2138 + $0xc8] sm:$0xff]
      %v2333 = vld [vmem:[%s2138 + $0xd8] sm:$0xff]
      %v2334 = vld [vmem:[%s2138 + $0xe0] sm:$0xff]
      %v2335 = vld [vmem:[%s2138 + $0xf0] sm:$0xff]
      %v2336 = vld [vmem:[%s2138 + $0xf8] sm:$0xff]
      %v2337 = vld [vmem:[%s2138 + $0x108] sm:$0xff]
      %v2338 = vld [vmem:[%s2138 + $0x110] sm:$0xff]
      %v2339 = vld [vmem:[%s2138 + $0x120] sm:$0xff]
      %v2340 = vld [vmem:[%s2138 + $0x128] sm:$0xff]
      %v2341 = vld [vmem:[%s2138 + $0x138] sm:$0xff]
      %v2342 = vld [vmem:[%s2138 + $0x140] sm:$0xff]
      %v2343 = vld [vmem:[%s2138 + $0x150] sm:$0xff]
      %v2344 = vld [vmem:[%s2138 + $0x158] sm:$0xff]
      %v2345 = vld [vmem:[%s2138 + $0x168] sm:$0xff]
      %v2346 = vld [vmem:[%s2138 + $0x170] sm:$0xff]
      %v2347 = vpack.c.bf16 %v2316, %v2315
      %v2348 = vpack.c.bf16 %v2318, %v2317
      %v2349 = vpack.c.bf16 %v2320, %v2319
      %v2350 = vpack.c.bf16 %v2322, %v2321
      %v2351 = vpack.c.bf16 %v2324, %v2323
      %v2352 = vpack.c.bf16 %v2326, %v2325
      %v2353 = vpack.c.bf16 %v2328, %v2327
      %v2354 = vpack.c.bf16 %v2330, %v2329
      %v2355 = vpack.c.bf16 %v2332, %v2331
      %v2356 = vpack.c.bf16 %v2334, %v2333
      %v2357 = vpack.c.bf16 %v2336, %v2335
      %v2358 = vpack.c.bf16 %v2338, %v2337
      %v2359 = vpack.c.bf16 %v2340, %v2339
      %v2360 = vpack.c.bf16 %v2342, %v2341
      %v2361 = vpack.c.bf16 %v2344, %v2343
      %v2362 = vpack.c.bf16 %v2346, %v2345
      %v2363 = vld [vmem:[%s2138 + $0x1] sm:$0xff]
      %v2364 = vld [vmem:[%s2138 + $0x9] sm:$0xff]
      %v2365 = vld [vmem:[%s2138 + $0x19] sm:$0xff]
      %v2366 = vld [vmem:[%s2138 + $0x21] sm:$0xff]
      %v2367 = vld [vmem:[%s2138 + $0x31] sm:$0xff]
      %v2368 = vld [vmem:[%s2138 + $0x39] sm:$0xff]
      %v2369 = vld [vmem:[%s2138 + $0x49] sm:$0xff]
      %v2370 = vld [vmem:[%s2138 + $0x51] sm:$0xff]
      %v2371 = vld [vmem:[%s2138 + $0x61] sm:$0xff]
      %v2372 = vld [vmem:[%s2138 + $0x69] sm:$0xff]
      %v2373 = vld [vmem:[%s2138 + $0x79] sm:$0xff]
      %v2374 = vld [vmem:[%s2138 + $0x81] sm:$0xff]
      %v2375 = vld [vmem:[%s2138 + $0x91] sm:$0xff]
      %v2376 = vld [vmem:[%s2138 + $0x99] sm:$0xff]
      %v2377 = vld [vmem:[%s2138 + $0xa9] sm:$0xff]
      %v2378 = vld [vmem:[%s2138 + $0xb1] sm:$0xff]
      %v2379 = vld [vmem:[%s2138 + $0xc1] sm:$0xff]
      %v2380 = vld [vmem:[%s2138 + $0xc9] sm:$0xff]
      %v2381 = vld [vmem:[%s2138 + $0xd9] sm:$0xff]
      %v2382 = vld [vmem:[%s2138 + $0xe1] sm:$0xff]
      %v2383 = vld [vmem:[%s2138 + $0xf1] sm:$0xff]
      %v2384 = vld [vmem:[%s2138 + $0xf9] sm:$0xff]
      %v2385 = vld [vmem:[%s2138 + $0x109] sm:$0xff]
      %v2386 = vld [vmem:[%s2138 + $0x111] sm:$0xff]
      %v2387 = vld [vmem:[%s2138 + $0x121] sm:$0xff]
      %v2388 = vld [vmem:[%s2138 + $0x129] sm:$0xff]
      %v2389 = vld [vmem:[%s2138 + $0x139] sm:$0xff]
      %v2390 = vld [vmem:[%s2138 + $0x141] sm:$0xff]
      %v2391 = vld [vmem:[%s2138 + $0x151] sm:$0xff]
      %v2392 = vld [vmem:[%s2138 + $0x159] sm:$0xff]
      %v2393 = vld [vmem:[%s2138 + $0x169] sm:$0xff]
      %v2394 = vld [vmem:[%s2138 + $0x171] sm:$0xff]
      %v2395 = vpack.c.bf16 %v2364, %v2363
      %v2396 = vpack.c.bf16 %v2366, %v2365
      %v2397 = vpack.c.bf16 %v2368, %v2367
      %v2398 = vpack.c.bf16 %v2370, %v2369
      %v2399 = vpack.c.bf16 %v2372, %v2371
      %v2400 = vpack.c.bf16 %v2374, %v2373
      %v2401 = vpack.c.bf16 %v2376, %v2375
      %v2402 = vpack.c.bf16 %v2378, %v2377
      %v2403 = vpack.c.bf16 %v2380, %v2379
      %v2404 = vpack.c.bf16 %v2382, %v2381
      %v2405 = vpack.c.bf16 %v2384, %v2383
      %v2406 = vpack.c.bf16 %v2386, %v2385
      %v2407 = vpack.c.bf16 %v2388, %v2387
      %v2408 = vpack.c.bf16 %v2390, %v2389
      %v2409 = vpack.c.bf16 %v2392, %v2391
      %v2410 = vpack.c.bf16 %v2394, %v2393
      %v2411 = vld [vmem:[%s2138 + $0x2] sm:$0xff]
      %v2412 = vld [vmem:[%s2138 + $0xa] sm:$0xff]
      %v2413 = vld [vmem:[%s2138 + $0x1a] sm:$0xff]
      %v2414 = vld [vmem:[%s2138 + $0x22] sm:$0xff]
      %v2415 = vld [vmem:[%s2138 + $0x32] sm:$0xff]
      %v2416 = vld [vmem:[%s2138 + $0x3a] sm:$0xff]
      %v2417 = vld [vmem:[%s2138 + $0x4a] sm:$0xff]
      %v2418 = vld [vmem:[%s2138 + $0x52] sm:$0xff]
      %v2419 = vld [vmem:[%s2138 + $0x62] sm:$0xff]
      %v2420 = vld [vmem:[%s2138 + $0x6a] sm:$0xff]
      %v2421 = vld [vmem:[%s2138 + $0x7a] sm:$0xff]
      %v2422 = vld [vmem:[%s2138 + $0x82] sm:$0xff]
      %v2423 = vld [vmem:[%s2138 + $0x92] sm:$0xff]
      %v2424 = vld [vmem:[%s2138 + $0x9a] sm:$0xff]
      %v2425 = vld [vmem:[%s2138 + $0xaa] sm:$0xff]
      %v2426 = vld [vmem:[%s2138 + $0xb2] sm:$0xff]
      %v2427 = vld [vmem:[%s2138 + $0xc2] sm:$0xff]
      %v2428 = vld [vmem:[%s2138 + $0xca] sm:$0xff]
      %v2429 = vld [vmem:[%s2138 + $0xda] sm:$0xff]
      %v2430 = vld [vmem:[%s2138 + $0xe2] sm:$0xff]
      %v2431 = vld [vmem:[%s2138 + $0xf2] sm:$0xff]
      %v2432 = vld [vmem:[%s2138 + $0xfa] sm:$0xff]
      %v2433 = vld [vmem:[%s2138 + $0x10a] sm:$0xff]
      %v2434 = vld [vmem:[%s2138 + $0x112] sm:$0xff]
      %v2435 = vld [vmem:[%s2138 + $0x122] sm:$0xff]
      %v2436 = vld [vmem:[%s2138 + $0x12a] sm:$0xff]
      %v2437 = vld [vmem:[%s2138 + $0x13a] sm:$0xff]
      %v2438 = vld [vmem:[%s2138 + $0x142] sm:$0xff]
      %v2439 = vld [vmem:[%s2138 + $0x152] sm:$0xff]
      %v2440 = vld [vmem:[%s2138 + $0x15a] sm:$0xff]
      %v2441 = vld [vmem:[%s2138 + $0x16a] sm:$0xff]
      %v2442 = vld [vmem:[%s2138 + $0x172] sm:$0xff]
      %v2443 = vpack.c.bf16 %v2412, %v2411
      %v2444 = vpack.c.bf16 %v2414, %v2413
      %v2445 = vpack.c.bf16 %v2416, %v2415
      %v2446 = vpack.c.bf16 %v2418, %v2417
      %v2447 = vpack.c.bf16 %v2420, %v2419
      %v2448 = vpack.c.bf16 %v2422, %v2421
      %v2449 = vpack.c.bf16 %v2424, %v2423
      %v2450 = vpack.c.bf16 %v2426, %v2425
      %v2451 = vpack.c.bf16 %v2428, %v2427
      %v2452 = vpack.c.bf16 %v2430, %v2429
      %v2453 = vpack.c.bf16 %v2432, %v2431
      %v2454 = vpack.c.bf16 %v2434, %v2433
      %v2455 = vpack.c.bf16 %v2436, %v2435
      %v2456 = vpack.c.bf16 %v2438, %v2437
      %v2457 = vpack.c.bf16 %v2440, %v2439
      %v2458 = vpack.c.bf16 %v2442, %v2441
      %s2459 = scalar_lea.vmem [#allocation3], 48
      %v2460 = vld [vmem:[%s2459] sm:$0xff]
      %v2461 = vld [vmem:[%s2459 + $0x8] sm:$0xff]
      %v2462 = vld [vmem:[%s2459 + $0x18] sm:$0xff]
      %v2463 = vld [vmem:[%s2459 + $0x20] sm:$0xff]
      %v2464 = vld [vmem:[%s2459 + $0x30] sm:$0xff]
      %v2465 = vld [vmem:[%s2459 + $0x38] sm:$0xff]
      %v2466 = vld [vmem:[%s2459 + $0x48] sm:$0xff]
      %v2467 = vld [vmem:[%s2459 + $0x50] sm:$0xff]
      %v2468 = vld [vmem:[%s2459 + $0x60] sm:$0xff]
      %v2469 = vld [vmem:[%s2459 + $0x68] sm:$0xff]
      %v2470 = vld [vmem:[%s2459 + $0x78] sm:$0xff]
      %v2471 = vld [vmem:[%s2459 + $0x80] sm:$0xff]
      %v2472 = vld [vmem:[%s2459 + $0x90] sm:$0xff]
      %v2473 = vld [vmem:[%s2459 + $0x98] sm:$0xff]
      %v2474 = vld [vmem:[%s2459 + $0xa8] sm:$0xff]
      %v2475 = vld [vmem:[%s2459 + $0xb0] sm:$0xff]
      %v2476 = vld [vmem:[%s2459 + $0xc0] sm:$0xff]
      %v2477 = vld [vmem:[%s2459 + $0xc8] sm:$0xff]
      %v2478 = vld [vmem:[%s2459 + $0xd8] sm:$0xff]
      %v2479 = vld [vmem:[%s2459 + $0xe0] sm:$0xff]
      %v2480 = vld [vmem:[%s2459 + $0xf0] sm:$0xff]
      %v2481 = vld [vmem:[%s2459 + $0xf8] sm:$0xff]
      %v2482 = vld [vmem:[%s2459 + $0x108] sm:$0xff]
      %v2483 = vld [vmem:[%s2459 + $0x110] sm:$0xff]
      %v2484 = vld [vmem:[%s2459 + $0x120] sm:$0xff]
      %v2485 = vld [vmem:[%s2459 + $0x128] sm:$0xff]
      %v2486 = vld [vmem:[%s2459 + $0x138] sm:$0xff]
      %v2487 = vld [vmem:[%s2459 + $0x140] sm:$0xff]
      %v2488 = vld [vmem:[%s2459 + $0x150] sm:$0xff]
      %v2489 = vld [vmem:[%s2459 + $0x158] sm:$0xff]
      %v2490 = vld [vmem:[%s2459 + $0x168] sm:$0xff]
      %v2491 = vld [vmem:[%s2459 + $0x170] sm:$0xff]
      %v2492 = vpack.c.bf16 %v2461, %v2460
      %v2493 = vpack.c.bf16 %v2463, %v2462
      %v2494 = vpack.c.bf16 %v2465, %v2464
      %v2495 = vpack.c.bf16 %v2467, %v2466
      %v2496 = vpack.c.bf16 %v2469, %v2468
      %v2497 = vpack.c.bf16 %v2471, %v2470
      %v2498 = vpack.c.bf16 %v2473, %v2472
      %v2499 = vpack.c.bf16 %v2475, %v2474
      %v2500 = vpack.c.bf16 %v2477, %v2476
      %v2501 = vpack.c.bf16 %v2479, %v2478
      %v2502 = vpack.c.bf16 %v2481, %v2480
      %v2503 = vpack.c.bf16 %v2483, %v2482
      %v2504 = vpack.c.bf16 %v2485, %v2484
      %v2505 = vpack.c.bf16 %v2487, %v2486
      %v2506 = vpack.c.bf16 %v2489, %v2488
      %v2507 = vpack.c.bf16 %v2491, %v2490
      %v2508 = vld [vmem:[%s2459 + $0x1] sm:$0xff]
      %v2509 = vld [vmem:[%s2459 + $0x9] sm:$0xff]
      %v2510 = vld [vmem:[%s2459 + $0x19] sm:$0xff]
      %v2511 = vld [vmem:[%s2459 + $0x21] sm:$0xff]
      %v2512 = vld [vmem:[%s2459 + $0x31] sm:$0xff]
      %v2513 = vld [vmem:[%s2459 + $0x39] sm:$0xff]
      %v2514 = vld [vmem:[%s2459 + $0x49] sm:$0xff]
      %v2515 = vld [vmem:[%s2459 + $0x51] sm:$0xff]
      %v2516 = vld [vmem:[%s2459 + $0x61] sm:$0xff]
      %v2517 = vld [vmem:[%s2459 + $0x69] sm:$0xff]
      %v2518 = vld [vmem:[%s2459 + $0x79] sm:$0xff]
      %v2519 = vld [vmem:[%s2459 + $0x81] sm:$0xff]
      %v2520 = vld [vmem:[%s2459 + $0x91] sm:$0xff]
      %v2521 = vld [vmem:[%s2459 + $0x99] sm:$0xff]
      %v2522 = vld [vmem:[%s2459 + $0xa9] sm:$0xff]
      %v2523 = vld [vmem:[%s2459 + $0xb1] sm:$0xff]
      %v2524 = vld [vmem:[%s2459 + $0xc1] sm:$0xff]
      %v2525 = vld [vmem:[%s2459 + $0xc9] sm:$0xff]
      %v2526 = vld [vmem:[%s2459 + $0xd9] sm:$0xff]
      %v2527 = vld [vmem:[%s2459 + $0xe1] sm:$0xff]
      %v2528 = vld [vmem:[%s2459 + $0xf1] sm:$0xff]
      %v2529 = vld [vmem:[%s2459 + $0xf9] sm:$0xff]
      %v2530 = vld [vmem:[%s2459 + $0x109] sm:$0xff]
      %v2531 = vld [vmem:[%s2459 + $0x111] sm:$0xff]
      %v2532 = vld [vmem:[%s2459 + $0x121] sm:$0xff]
      %v2533 = vld [vmem:[%s2459 + $0x129] sm:$0xff]
      %v2534 = vld [vmem:[%s2459 + $0x139] sm:$0xff]
      %v2535 = vld [vmem:[%s2459 + $0x141] sm:$0xff]
      %v2536 = vld [vmem:[%s2459 + $0x151] sm:$0xff]
      %v2537 = vld [vmem:[%s2459 + $0x159] sm:$0xff]
      %v2538 = vld [vmem:[%s2459 + $0x169] sm:$0xff]
      %v2539 = vld [vmem:[%s2459 + $0x171] sm:$0xff]
      %v2540 = vpack.c.bf16 %v2509, %v2508
      %v2541 = vpack.c.bf16 %v2511, %v2510
      %v2542 = vpack.c.bf16 %v2513, %v2512
      %v2543 = vpack.c.bf16 %v2515, %v2514
      %v2544 = vpack.c.bf16 %v2517, %v2516
      %v2545 = vpack.c.bf16 %v2519, %v2518
      %v2546 = vpack.c.bf16 %v2521, %v2520
      %v2547 = vpack.c.bf16 %v2523, %v2522
      %v2548 = vpack.c.bf16 %v2525, %v2524
      %v2549 = vpack.c.bf16 %v2527, %v2526
      %v2550 = vpack.c.bf16 %v2529, %v2528
      %v2551 = vpack.c.bf16 %v2531, %v2530
      %v2552 = vpack.c.bf16 %v2533, %v2532
      %v2553 = vpack.c.bf16 %v2535, %v2534
      %v2554 = vpack.c.bf16 %v2537, %v2536
      %v2555 = vpack.c.bf16 %v2539, %v2538
      %v2556 = vld [vmem:[%s2459 + $0x2] sm:$0xff]
      %v2557 = vld [vmem:[%s2459 + $0xa] sm:$0xff]
      %v2558 = vld [vmem:[%s2459 + $0x1a] sm:$0xff]
      %v2559 = vld [vmem:[%s2459 + $0x22] sm:$0xff]
      %v2560 = vld [vmem:[%s2459 + $0x32] sm:$0xff]
      %v2561 = vld [vmem:[%s2459 + $0x3a] sm:$0xff]
      %v2562 = vld [vmem:[%s2459 + $0x4a] sm:$0xff]
      %v2563 = vld [vmem:[%s2459 + $0x52] sm:$0xff]
      %v2564 = vld [vmem:[%s2459 + $0x62] sm:$0xff]
      %v2565 = vld [vmem:[%s2459 + $0x6a] sm:$0xff]
      %v2566 = vld [vmem:[%s2459 + $0x7a] sm:$0xff]
      %v2567 = vld [vmem:[%s2459 + $0x82] sm:$0xff]
      %v2568 = vld [vmem:[%s2459 + $0x92] sm:$0xff]
      %v2569 = vld [vmem:[%s2459 + $0x9a] sm:$0xff]
      %v2570 = vld [vmem:[%s2459 + $0xaa] sm:$0xff]
      %v2571 = vld [vmem:[%s2459 + $0xb2] sm:$0xff]
      %v2572 = vld [vmem:[%s2459 + $0xc2] sm:$0xff]
      %v2573 = vld [vmem:[%s2459 + $0xca] sm:$0xff]
      %v2574 = vld [vmem:[%s2459 + $0xda] sm:$0xff]
      %v2575 = vld [vmem:[%s2459 + $0xe2] sm:$0xff]
      %v2576 = vld [vmem:[%s2459 + $0xf2] sm:$0xff]
      %v2577 = vld [vmem:[%s2459 + $0xfa] sm:$0xff]
      %v2578 = vld [vmem:[%s2459 + $0x10a] sm:$0xff]
      %v2579 = vld [vmem:[%s2459 + $0x112] sm:$0xff]
      %v2580 = vld [vmem:[%s2459 + $0x122] sm:$0xff]
      %v2581 = vld [vmem:[%s2459 + $0x12a] sm:$0xff]
      %v2582 = vld [vmem:[%s2459 + $0x13a] sm:$0xff]
      %v2583 = vld [vmem:[%s2459 + $0x142] sm:$0xff]
      %v2584 = vld [vmem:[%s2459 + $0x152] sm:$0xff]
      %v2585 = vld [vmem:[%s2459 + $0x15a] sm:$0xff]
      %v2586 = vld [vmem:[%s2459 + $0x16a] sm:$0xff]
      %v2587 = vld [vmem:[%s2459 + $0x172] sm:$0xff]
      %v2588 = vpack.c.bf16 %v2557, %v2556
      %v2589 = vpack.c.bf16 %v2559, %v2558
      %v2590 = vpack.c.bf16 %v2561, %v2560
      %v2591 = vpack.c.bf16 %v2563, %v2562
      %v2592 = vpack.c.bf16 %v2565, %v2564
      %v2593 = vpack.c.bf16 %v2567, %v2566
      %v2594 = vpack.c.bf16 %v2569, %v2568
      %v2595 = vpack.c.bf16 %v2571, %v2570
      %v2596 = vpack.c.bf16 %v2573, %v2572
      %v2597 = vpack.c.bf16 %v2575, %v2574
      %v2598 = vpack.c.bf16 %v2577, %v2576
      %v2599 = vpack.c.bf16 %v2579, %v2578
      %v2600 = vpack.c.bf16 %v2581, %v2580
      %v2601 = vpack.c.bf16 %v2583, %v2582
      %v2602 = vpack.c.bf16 %v2585, %v2584
      %v2603 = vpack.c.bf16 %v2587, %v2586
      %2620 = vrot.lane.b32.xlu0 %v2251, 32
      %v2621 = vpop.permute.xlu0 %2620
      %2622 = vrot.lane.b32.xlu0 %v2252, 32
      %v2623 = vpop.permute.xlu0 %2622
      %2624 = vrot.lane.b32.xlu0 %v2253, 32
      %v2625 = vpop.permute.xlu0 %2624
      %2626 = vrot.lane.b32.xlu0 %v2254, 32
      %v2627 = vpop.permute.xlu0 %2626
      %2628 = vrot.lane.b32.xlu0 %v2255, 32
      %v2629 = vpop.permute.xlu0 %2628
      %2630 = vrot.lane.b32.xlu0 %v2256, 32
      %v2631 = vpop.permute.xlu0 %2630
      %2632 = vrot.lane.b32.xlu0 %v2257, 32
      %v2633 = vpop.permute.xlu0 %2632
      %2634 = vrot.lane.b32.xlu0 %v2258, 32
      %v2635 = vpop.permute.xlu0 %2634
      %2636 = vrot.lane.b32.xlu0 %v2259, 32
      %v2637 = vpop.permute.xlu0 %2636
      %2638 = vrot.lane.b32.xlu0 %v2260, 32
      %v2639 = vpop.permute.xlu0 %2638
      %2640 = vrot.lane.b32.xlu0 %v2261, 32
      %v2641 = vpop.permute.xlu0 %2640
      %2642 = vrot.lane.b32.xlu0 %v2262, 32
      %v2643 = vpop.permute.xlu0 %2642
      %2644 = vrot.lane.b32.xlu0 %v2263, 32
      %v2645 = vpop.permute.xlu0 %2644
      %2646 = vrot.lane.b32.xlu0 %v2264, 32
      %v2647 = vpop.permute.xlu0 %2646
      %2648 = vrot.lane.b32.xlu0 %v2265, 32
      %v2649 = vpop.permute.xlu0 %2648
      %2650 = vrot.lane.b32.xlu0 %v2266, 32
      %v2651 = vpop.permute.xlu0 %2650
      %2668 = vrot.lane.b32.xlu0 %v2299, 64
      %v2669 = vpop.permute.xlu0 %2668
      %2670 = vrot.lane.b32.xlu0 %v2300, 64
      %v2671 = vpop.permute.xlu0 %2670
      %2672 = vrot.lane.b32.xlu0 %v2301, 64
      %v2673 = vpop.permute.xlu0 %2672
      %2674 = vrot.lane.b32.xlu0 %v2302, 64
      %v2675 = vpop.permute.xlu0 %2674
      %2676 = vrot.lane.b32.xlu0 %v2303, 64
      %v2677 = vpop.permute.xlu0 %2676
      %2678 = vrot.lane.b32.xlu0 %v2304, 64
      %v2679 = vpop.permute.xlu0 %2678
      %2680 = vrot.lane.b32.xlu0 %v2305, 64
      %v2681 = vpop.permute.xlu0 %2680
      %2682 = vrot.lane.b32.xlu0 %v2306, 64
      %v2683 = vpop.permute.xlu0 %2682
      %2684 = vrot.lane.b32.xlu0 %v2307, 64
      %v2685 = vpop.permute.xlu0 %2684
      %2686 = vrot.lane.b32.xlu0 %v2308, 64
      %v2687 = vpop.permute.xlu0 %2686
      %2688 = vrot.lane.b32.xlu0 %v2309, 64
      %v2689 = vpop.permute.xlu0 %2688
      %2690 = vrot.lane.b32.xlu0 %v2310, 64
      %v2691 = vpop.permute.xlu0 %2690
      %2692 = vrot.lane.b32.xlu0 %v2311, 64
      %v2693 = vpop.permute.xlu0 %2692
      %2694 = vrot.lane.b32.xlu0 %v2312, 64
      %v2695 = vpop.permute.xlu0 %2694
      %2696 = vrot.lane.b32.xlu0 %v2313, 64
      %v2697 = vpop.permute.xlu0 %2696
      %2698 = vrot.lane.b32.xlu0 %v2314, 64
      %v2699 = vpop.permute.xlu0 %2698
      %2716 = vrot.lane.b32.xlu0 %v2347, 96
      %v2717 = vpop.permute.xlu0 %2716
      %2718 = vrot.lane.b32.xlu0 %v2348, 96
      %v2719 = vpop.permute.xlu0 %2718
      %2720 = vrot.lane.b32.xlu0 %v2349, 96
      %v2721 = vpop.permute.xlu0 %2720
      %2722 = vrot.lane.b32.xlu0 %v2350, 96
      %v2723 = vpop.permute.xlu0 %2722
      %2724 = vrot.lane.b32.xlu0 %v2351, 96
      %v2725 = vpop.permute.xlu0 %2724
      %2726 = vrot.lane.b32.xlu0 %v2352, 96
      %v2727 = vpop.permute.xlu0 %2726
      %2728 = vrot.lane.b32.xlu0 %v2353, 96
      %v2729 = vpop.permute.xlu0 %2728
      %2730 = vrot.lane.b32.xlu0 %v2354, 96
      %v2731 = vpop.permute.xlu0 %2730
      %2732 = vrot.lane.b32.xlu0 %v2355, 96
      %v2733 = vpop.permute.xlu0 %2732
      %2734 = vrot.lane.b32.xlu0 %v2356, 96
      %v2735 = vpop.permute.xlu0 %2734
      %2736 = vrot.lane.b32.xlu0 %v2357, 96
      %v2737 = vpop.permute.xlu0 %2736
      %2738 = vrot.lane.b32.xlu0 %v2358, 96
      %v2739 = vpop.permute.xlu0 %2738
      %2740 = vrot.lane.b32.xlu0 %v2359, 96
      %v2741 = vpop.permute.xlu0 %2740
      %2742 = vrot.lane.b32.xlu0 %v2360, 96
      %v2743 = vpop.permute.xlu0 %2742
      %2744 = vrot.lane.b32.xlu0 %v2361, 96
      %v2745 = vpop.permute.xlu0 %2744
      %2746 = vrot.lane.b32.xlu0 %v2362, 96
      %v2747 = vpop.permute.xlu0 %2746
      %2764 = vrot.lane.b32.xlu0 %v2443, 32
      %v2765 = vpop.permute.xlu0 %2764
      %2766 = vrot.lane.b32.xlu0 %v2444, 32
      %v2767 = vpop.permute.xlu0 %2766
      %2768 = vrot.lane.b32.xlu0 %v2445, 32
      %v2769 = vpop.permute.xlu0 %2768
      %2770 = vrot.lane.b32.xlu0 %v2446, 32
      %v2771 = vpop.permute.xlu0 %2770
      %2772 = vrot.lane.b32.xlu0 %v2447, 32
      %v2773 = vpop.permute.xlu0 %2772
      %2774 = vrot.lane.b32.xlu0 %v2448, 32
      %v2775 = vpop.permute.xlu0 %2774
      %2776 = vrot.lane.b32.xlu0 %v2449, 32
      %v2777 = vpop.permute.xlu0 %2776
      %2778 = vrot.lane.b32.xlu0 %v2450, 32
      %v2779 = vpop.permute.xlu0 %2778
      %2780 = vrot.lane.b32.xlu0 %v2451, 32
      %v2781 = vpop.permute.xlu0 %2780
      %2782 = vrot.lane.b32.xlu0 %v2452, 32
      %v2783 = vpop.permute.xlu0 %2782
      %2784 = vrot.lane.b32.xlu0 %v2453, 32
      %v2785 = vpop.permute.xlu0 %2784
      %2786 = vrot.lane.b32.xlu0 %v2454, 32
      %v2787 = vpop.permute.xlu0 %2786
      %2788 = vrot.lane.b32.xlu0 %v2455, 32
      %v2789 = vpop.permute.xlu0 %2788
      %2790 = vrot.lane.b32.xlu0 %v2456, 32
      %v2791 = vpop.permute.xlu0 %2790
      %2792 = vrot.lane.b32.xlu0 %v2457, 32
      %v2793 = vpop.permute.xlu0 %2792
      %2794 = vrot.lane.b32.xlu0 %v2458, 32
      %v2795 = vpop.permute.xlu0 %2794
      %2812 = vrot.lane.b32.xlu0 %v2492, 64
      %v2813 = vpop.permute.xlu0 %2812
      %2814 = vrot.lane.b32.xlu0 %v2493, 64
      %v2815 = vpop.permute.xlu0 %2814
      %2816 = vrot.lane.b32.xlu0 %v2494, 64
      %v2817 = vpop.permute.xlu0 %2816
      %2818 = vrot.lane.b32.xlu0 %v2495, 64
      %v2819 = vpop.permute.xlu0 %2818
      %2820 = vrot.lane.b32.xlu0 %v2496, 64
      %v2821 = vpop.permute.xlu0 %2820
      %2822 = vrot.lane.b32.xlu0 %v2497, 64
      %v2823 = vpop.permute.xlu0 %2822
      %2824 = vrot.lane.b32.xlu0 %v2498, 64
      %v2825 = vpop.permute.xlu0 %2824
      %2826 = vrot.lane.b32.xlu0 %v2499, 64
      %v2827 = vpop.permute.xlu0 %2826
      %2828 = vrot.lane.b32.xlu0 %v2500, 64
      %v2829 = vpop.permute.xlu0 %2828
      %2830 = vrot.lane.b32.xlu0 %v2501, 64
      %v2831 = vpop.permute.xlu0 %2830
      %2832 = vrot.lane.b32.xlu0 %v2502, 64
      %v2833 = vpop.permute.xlu0 %2832
      %2834 = vrot.lane.b32.xlu0 %v2503, 64
      %v2835 = vpop.permute.xlu0 %2834
      %2836 = vrot.lane.b32.xlu0 %v2504, 64
      %v2837 = vpop.permute.xlu0 %2836
      %2838 = vrot.lane.b32.xlu0 %v2505, 64
      %v2839 = vpop.permute.xlu0 %2838
      %2840 = vrot.lane.b32.xlu0 %v2506, 64
      %v2841 = vpop.permute.xlu0 %2840
      %2842 = vrot.lane.b32.xlu0 %v2507, 64
      %v2843 = vpop.permute.xlu0 %2842
      %2860 = vrot.lane.b32.xlu0 %v2540, 96
      %v2861 = vpop.permute.xlu0 %2860
      %2862 = vrot.lane.b32.xlu0 %v2541, 96
      %v2863 = vpop.permute.xlu0 %2862
      %2864 = vrot.lane.b32.xlu0 %v2542, 96
      %v2865 = vpop.permute.xlu0 %2864
      %2866 = vrot.lane.b32.xlu0 %v2543, 96
      %v2867 = vpop.permute.xlu0 %2866
      %2868 = vrot.lane.b32.xlu0 %v2544, 96
      %v2869 = vpop.permute.xlu0 %2868
      %2870 = vrot.lane.b32.xlu0 %v2545, 96
      %v2871 = vpop.permute.xlu0 %2870
      %2872 = vrot.lane.b32.xlu0 %v2546, 96
      %v2873 = vpop.permute.xlu0 %2872
      %2874 = vrot.lane.b32.xlu0 %v2547, 96
      %v2875 = vpop.permute.xlu0 %2874
      %2876 = vrot.lane.b32.xlu0 %v2548, 96
      %v2877 = vpop.permute.xlu0 %2876
      %2878 = vrot.lane.b32.xlu0 %v2549, 96
      %v2879 = vpop.permute.xlu0 %2878
      %2880 = vrot.lane.b32.xlu0 %v2550, 96
      %v2881 = vpop.permute.xlu0 %2880
      %2882 = vrot.lane.b32.xlu0 %v2551, 96
      %v2883 = vpop.permute.xlu0 %2882
      %2884 = vrot.lane.b32.xlu0 %v2552, 96
      %v2885 = vpop.permute.xlu0 %2884
      %2886 = vrot.lane.b32.xlu0 %v2553, 96
      %v2887 = vpop.permute.xlu0 %2886
      %2888 = vrot.lane.b32.xlu0 %v2554, 96
      %v2889 = vpop.permute.xlu0 %2888
      %2890 = vrot.lane.b32.xlu0 %v2555, 96
      %v2891 = vpop.permute.xlu0 %2890
      %v2894 = vsel %vm529, %v2203, %v2621
      %v2897 = vsel %vm529, %v2204, %v2623
      %v2900 = vsel %vm529, %v2205, %v2625
      %v2903 = vsel %vm529, %v2206, %v2627
      %v2906 = vsel %vm529, %v2207, %v2629
      %v2909 = vsel %vm529, %v2208, %v2631
      %v2912 = vsel %vm529, %v2209, %v2633
      %v2915 = vsel %vm529, %v2210, %v2635
      %v2918 = vsel %vm529, %v2211, %v2637
      %v2921 = vsel %vm529, %v2212, %v2639
      %v2924 = vsel %vm529, %v2213, %v2641
      %v2927 = vsel %vm529, %v2214, %v2643
      %v2930 = vsel %vm529, %v2215, %v2645
      %v2933 = vsel %vm529, %v2216, %v2647
      %v2936 = vsel %vm529, %v2217, %v2649
      %v2939 = vsel %vm529, %v2218, %v2651
      %vm2940 = vcmask 523264
      %v2942 = vsel %vm2940, %v2894, %v2669
      %v2944 = vsel %vm2940, %v2897, %v2671
      %v2946 = vsel %vm2940, %v2900, %v2673
      %v2948 = vsel %vm2940, %v2903, %v2675
      %v2950 = vsel %vm2940, %v2906, %v2677
      %v2952 = vsel %vm2940, %v2909, %v2679
      %v2954 = vsel %vm2940, %v2912, %v2681
      %v2956 = vsel %vm2940, %v2915, %v2683
      %v2958 = vsel %vm2940, %v2918, %v2685
      %v2960 = vsel %vm2940, %v2921, %v2687
      %v2962 = vsel %vm2940, %v2924, %v2689
      %v2964 = vsel %vm2940, %v2927, %v2691
      %v2966 = vsel %vm2940, %v2930, %v2693
      %v2968 = vsel %vm2940, %v2933, %v2695
      %v2970 = vsel %vm2940, %v2936, %v2697
      %v2972 = vsel %vm2940, %v2939, %v2699
      %vm2973 = vcmask 785408
      %v2975 = vsel %vm2973, %v2942, %v2717
      %v2978 = vsel %vm2973, %v2944, %v2719
      %v2981 = vsel %vm2973, %v2946, %v2721
      %v2984 = vsel %vm2973, %v2948, %v2723
      %v2987 = vsel %vm2973, %v2950, %v2725
      %v2990 = vsel %vm2973, %v2952, %v2727
      %v2993 = vsel %vm2973, %v2954, %v2729
      %v2996 = vsel %vm2973, %v2956, %v2731
      %v2999 = vsel %vm2973, %v2958, %v2733
      %v3002 = vsel %vm2973, %v2960, %v2735
      %v3005 = vsel %vm2973, %v2962, %v2737
      %v3008 = vsel %vm2973, %v2964, %v2739
      %v3011 = vsel %vm2973, %v2966, %v2741
      %v3014 = vsel %vm2973, %v2968, %v2743
      %v3017 = vsel %vm2973, %v2970, %v2745
      %v3020 = vsel %vm2973, %v2972, %v2747
      %v3024 = vsel %vm529, %v2395, %v2765
      %v3027 = vsel %vm529, %v2396, %v2767
      %v3030 = vsel %vm529, %v2397, %v2769
      %v3033 = vsel %vm529, %v2398, %v2771
      %v3036 = vsel %vm529, %v2399, %v2773
      %v3039 = vsel %vm529, %v2400, %v2775
      %v3042 = vsel %vm529, %v2401, %v2777
      %v3045 = vsel %vm529, %v2402, %v2779
      %v3048 = vsel %vm529, %v2403, %v2781
      %v3051 = vsel %vm529, %v2404, %v2783
      %v3054 = vsel %vm529, %v2405, %v2785
      %v3057 = vsel %vm529, %v2406, %v2787
      %v3060 = vsel %vm529, %v2407, %v2789
      %v3063 = vsel %vm529, %v2408, %v2791
      %v3066 = vsel %vm529, %v2409, %v2793
      %v3069 = vsel %vm529, %v2410, %v2795
      %v3071 = vsel %vm2940, %v3024, %v2813
      %v3073 = vsel %vm2940, %v3027, %v2815
      %v3075 = vsel %vm2940, %v3030, %v2817
      %v3077 = vsel %vm2940, %v3033, %v2819
      %v3079 = vsel %vm2940, %v3036, %v2821
      %v3081 = vsel %vm2940, %v3039, %v2823
      %v3083 = vsel %vm2940, %v3042, %v2825
      %v3085 = vsel %vm2940, %v3045, %v2827
      %v3087 = vsel %vm2940, %v3048, %v2829
      %v3089 = vsel %vm2940, %v3051, %v2831
      %v3091 = vsel %vm2940, %v3054, %v2833
      %v3093 = vsel %vm2940, %v3057, %v2835
      %v3095 = vsel %vm2940, %v3060, %v2837
      %v3097 = vsel %vm2940, %v3063, %v2839
      %v3099 = vsel %vm2940, %v3066, %v2841
      %v3101 = vsel %vm2940, %v3069, %v2843
      %v3103 = vsel %vm2973, %v3071, %v2861
      %v3106 = vsel %vm2973, %v3073, %v2863
      %v3109 = vsel %vm2973, %v3075, %v2865
      %v3112 = vsel %vm2973, %v3077, %v2867
      %v3115 = vsel %vm2973, %v3079, %v2869
      %v3118 = vsel %vm2973, %v3081, %v2871
      %v3121 = vsel %vm2973, %v3083, %v2873
      %v3124 = vsel %vm2973, %v3085, %v2875
      %v3127 = vsel %vm2973, %v3087, %v2877
      %v3130 = vsel %vm2973, %v3089, %v2879
      %v3133 = vsel %vm2973, %v3091, %v2881
      %v3136 = vsel %vm2973, %v3093, %v2883
      %v3139 = vsel %vm2973, %v3095, %v2885
      %v3142 = vsel %vm2973, %v3097, %v2887
      %v3145 = vsel %vm2973, %v3099, %v2889
      %v3148 = vsel %vm2973, %v3101, %v2891
      %v3150 = vld [vmem:[%s6] sm:$0xf]
      %v3151 = vld [vmem:[%s6 + $0x4] sm:$0xf]
      %v3152 = vld [vmem:[%s6 + $0x8] sm:$0xf]
      %v3153 = vld [vmem:[%s6 + $0xc] sm:$0xf]
      %v3154 = vld [vmem:[%s6 + $0x10] sm:$0xf]
      %v3155 = vld [vmem:[%s6 + $0x14] sm:$0xf]
      %v3156 = vld [vmem:[%s6 + $0x18] sm:$0xf]
      %v3157 = vld [vmem:[%s6 + $0x1c] sm:$0xf]
      %v3158 = vld [vmem:[%s6 + $0x20] sm:$0xf]
      %v3159 = vld [vmem:[%s6 + $0x24] sm:$0xf]
      %v3160 = vld [vmem:[%s6 + $0x28] sm:$0xf]
      %v3161 = vld [vmem:[%s6 + $0x2c] sm:$0xf]
      %v3162 = vld [vmem:[%s6 + $0x30] sm:$0xf]
      %v3163 = vld [vmem:[%s6 + $0x34] sm:$0xf]
      %v3164 = vld [vmem:[%s6 + $0x38] sm:$0xf]
      %v3165 = vld [vmem:[%s6 + $0x3c] sm:$0xf]
      %v3166 = vld [vmem:[%s6 + $0x40] sm:$0xf]
      %v3167 = vld [vmem:[%s6 + $0x44] sm:$0xf]
      %v3168 = vld [vmem:[%s6 + $0x48] sm:$0xf]
      %v3169 = vld [vmem:[%s6 + $0x4c] sm:$0xf]
      %v3170 = vld [vmem:[%s6 + $0x50] sm:$0xf]
      %v3171 = vld [vmem:[%s6 + $0x54] sm:$0xf]
      %v3172 = vld [vmem:[%s6 + $0x58] sm:$0xf]
      %v3173 = vld [vmem:[%s6 + $0x5c] sm:$0xf]
      %v3174 = vld [vmem:[%s6 + $0x60] sm:$0xf]
      %v3175 = vld [vmem:[%s6 + $0x64] sm:$0xf]
      %v3176 = vld [vmem:[%s6 + $0x68] sm:$0xf]
      %v3177 = vld [vmem:[%s6 + $0x6c] sm:$0xf]
      %v3178 = vld [vmem:[%s6 + $0x70] sm:$0xf]
      %v3179 = vld [vmem:[%s6 + $0x74] sm:$0xf]
      %v3180 = vld [vmem:[%s6 + $0x78] sm:$0xf]
      %v3181 = vld [vmem:[%s6 + $0x7c] sm:$0xf]
      %v3182 = vld [vmem:[%s6 + $0x80] sm:$0xf]
      %v3183 = vld [vmem:[%s6 + $0x84] sm:$0xf]
      %v3184 = vld [vmem:[%s6 + $0x88] sm:$0xf]
      %v3185 = vld [vmem:[%s6 + $0x8c] sm:$0xf]
      %v3186 = vld [vmem:[%s7] sm:$0x1]
      %v3188 = vlaneseq
      %v3189 = vshrl.u32 %v3188, 7
      %v3190 = vsub.s32 0, %v3189
      %v3191 = vrot.slane %v3186, %v3190
      %v3229 = vunpack.c.l.b16 %v3150
      %v3230 = vunpack.c.l.b16 %v3151
      %v3231 = vunpack.c.l.b16 %v3152
      %v3232 = vunpack.c.l.b16 %v3153
      %v3233 = vunpack.c.l.b16 %v3154
      %v3234 = vunpack.c.l.b16 %v3155
      %v3235 = vunpack.c.l.b16 %v3156
      %v3236 = vunpack.c.l.b16 %v3157
      %v3237 = vunpack.c.l.b16 %v3158
      %v3238 = vunpack.c.l.b16 %v3159
      %v3239 = vunpack.c.l.b16 %v3160
      %v3240 = vunpack.c.l.b16 %v3161
      %v3241 = vunpack.c.l.b16 %v3162
      %v3242 = vunpack.c.l.b16 %v3163
      %v3243 = vunpack.c.l.b16 %v3164
      %v3244 = vunpack.c.l.b16 %v3165
      %v3245 = vunpack.c.l.b16 %v3166
      %v3246 = vunpack.c.l.b16 %v3167
      %v3247 = vunpack.c.l.b16 %v3168
      %v3248 = vunpack.c.l.b16 %v3169
      %v3249 = vunpack.c.l.b16 %v3170
      %v3250 = vunpack.c.l.b16 %v3171
      %v3251 = vunpack.c.l.b16 %v3172
      %v3252 = vunpack.c.l.b16 %v3173
      %v3253 = vunpack.c.l.b16 %v3174
      %v3254 = vunpack.c.l.b16 %v3175
      %v3255 = vunpack.c.l.b16 %v3176
      %v3256 = vunpack.c.l.b16 %v3177
      %v3257 = vunpack.c.l.b16 %v3178
      %v3258 = vunpack.c.l.b16 %v3179
      %v3259 = vunpack.c.l.b16 %v3180
      %v3260 = vunpack.c.l.b16 %v3181
      %v3261 = vunpack.c.l.b16 %v3182
      %v3262 = vunpack.c.l.b16 %v3183
      %v3263 = vunpack.c.l.b16 %v3184
      %v3264 = vunpack.c.l.b16 %v3185
      %v3265 = vpack.c.b16 %v3230, %v3229
      %v3266 = vpack.c.b16 %v3232, %v3231
      %v3267 = vpack.c.b16 %v3234, %v3233
      %v3268 = vpack.c.b16 %v3236, %v3235
      %v3269 = vpack.c.b16 %v3238, %v3237
      %v3270 = vpack.c.b16 %v3240, %v3239
      %v3271 = vpack.c.b16 %v3242, %v3241
      %v3272 = vpack.c.b16 %v3244, %v3243
      %v3273 = vpack.c.b16 %v3246, %v3245
      %v3274 = vpack.c.b16 %v3248, %v3247
      %v3275 = vpack.c.b16 %v3250, %v3249
      %v3276 = vpack.c.b16 %v3252, %v3251
      %v3277 = vpack.c.b16 %v3254, %v3253
      %v3278 = vpack.c.b16 %v3256, %v3255
      %v3279 = vpack.c.b16 %v3258, %v3257
      %v3280 = vpack.c.b16 %v3260, %v3259
      %v3281 = vpack.c.b16 %v3262, %v3261
      %v3282 = vpack.c.b16 %v3264, %v3263
      %v3302 = vsel %vm529, %v2588, 0
      %v3305 = vsel %vm529, %v2589, 0
      %v3308 = vsel %vm529, %v2590, 0
      %v3311 = vsel %vm529, %v2591, 0
      %v3314 = vsel %vm529, %v2592, 0
      %v3317 = vsel %vm529, %v2593, 0
      %v3320 = vsel %vm529, %v2594, 0
      %v3323 = vsel %vm529, %v2595, 0
      %v3326 = vsel %vm529, %v2596, 0
      %v3329 = vsel %vm529, %v2597, 0
      %v3332 = vsel %vm529, %v2598, 0
      %v3335 = vsel %vm529, %v2599, 0
      %v3338 = vsel %vm529, %v2600, 0
      %v3341 = vsel %vm529, %v2601, 0
      %v3344 = vsel %vm529, %v2602, 0
      %v3347 = vsel %vm529, %v2603, 0
      %3349 = vmatprep.subr.bf16.mxu0 0
      %3350 = vmatpush1.bf16.msra.mxu0 %v3272
      %3351 = vmatprep.subr.bf16.mxu0 0
      %3352 = vmatpush1.bf16.msra.mxu0 %v3271
      %3353 = vmatprep.subr.bf16.mxu0 0
      %3354 = vmatpush1.bf16.msra.mxu0 %v3270
      %3355 = vmatprep.subr.bf16.mxu0 0
      %3356 = vmatpush1.bf16.msra.mxu0 %v3269
      %3357 = vmatprep.subr.bf16.mxu0 0
      %3358 = vmatpush1.bf16.msra.mxu0 %v3268
      %3359 = vmatprep.subr.bf16.mxu0 0
      %3360 = vmatpush1.bf16.msra.mxu0 %v3267
      %3361 = vmatprep.subr.bf16.mxu0 0
      %3362 = vmatpush1.bf16.msra.mxu0 %v3266
      %3363 = vmatprep.subr.bf16.mxu0 0
      %3364 = vmatpush1.bf16.msra.mxu0 %v3265
      %3365 = vmatprep.subr.bf16.mxu0 0
      %3366 = vmatpush2.bf16.msra.mxu0 %v3280
      %3367 = vmatprep.subr.bf16.mxu0 0
      %3368 = vmatpush2.bf16.msra.mxu0 %v3279
      %3369 = vmatprep.subr.bf16.mxu0 0
      %3370 = vmatpush2.bf16.msra.mxu0 %v3278
      %3371 = vmatprep.subr.bf16.mxu0 0
      %3372 = vmatpush2.bf16.msra.mxu0 %v3277
      %3373 = vmatprep.subr.bf16.mxu0 0
      %3374 = vmatpush2.bf16.msra.mxu0 %v3276
      %3375 = vmatprep.subr.bf16.mxu0 0
      %3376 = vmatpush2.bf16.msra.mxu0 %v3275
      %3377 = vmatprep.subr.bf16.mxu0 0
      %3378 = vmatpush2.bf16.msra.mxu0 %v3274
      %3379 = vmatprep.subr.bf16.mxu0 0
      %3380 = vmatpush2.bf16.msra.mxu0 %v3273
      %3381 = vmatprep.mubr.bf16.mxu0 %v3103
      %3382 = vmatmul.mubr.bf16.gmra.mxu0 %v2975
      %v3383 = vpop.f32.mrf.mxu0
      %v3384 = vadd.f32 %v3191, %v3383
      %v3385 = vpop.f32.mrf.mxu0
      %v3386 = vpop.f32.mrf.mxu0
      %v3387 = vadd.f32 %v3191, %v3386
      %v3388 = vpop.f32.mrf.mxu0
      %3389 = vmatprep.mubr.bf16.mxu0 %v3106
      %3390 = vmatmul.mubr.bf16.gmra.mxu0 %v2978
      %v3391 = vpop.f32.mrf.mxu0
      %v3392 = vadd.f32 %v3191, %v3391
      %v3393 = vpop.f32.mrf.mxu0
      %v3394 = vpop.f32.mrf.mxu0
      %v3395 = vadd.f32 %v3191, %v3394
      %v3396 = vpop.f32.mrf.mxu0
      %3397 = vmatprep.mubr.bf16.mxu0 %v3109
      %3398 = vmatmul.mubr.bf16.gmra.mxu0 %v2981
      %v3399 = vpop.f32.mrf.mxu0
      %v3400 = vadd.f32 %v3191, %v3399
      %v3401 = vpop.f32.mrf.mxu0
      %v3402 = vpop.f32.mrf.mxu0
      %v3403 = vadd.f32 %v3191, %v3402
      %v3404 = vpop.f32.mrf.mxu0
      %3405 = vmatprep.mubr.bf16.mxu0 %v3112
      %3406 = vmatmul.mubr.bf16.gmra.mxu0 %v2984
      %v3407 = vpop.f32.mrf.mxu0
      %v3408 = vadd.f32 %v3191, %v3407
      %v3409 = vpop.f32.mrf.mxu0
      %v3410 = vpop.f32.mrf.mxu0
      %v3411 = vadd.f32 %v3191, %v3410
      %v3412 = vpop.f32.mrf.mxu0
      %3413 = vmatprep.mubr.bf16.mxu0 %v3115
      %3414 = vmatmul.mubr.bf16.gmra.mxu0 %v2987
      %v3415 = vpop.f32.mrf.mxu0
      %v3416 = vadd.f32 %v3191, %v3415
      %v3417 = vpop.f32.mrf.mxu0
      %v3418 = vpop.f32.mrf.mxu0
      %v3419 = vadd.f32 %v3191, %v3418
      %v3420 = vpop.f32.mrf.mxu0
      %3421 = vmatprep.mubr.bf16.mxu0 %v3118
      %3422 = vmatmul.mubr.bf16.gmra.mxu0 %v2990
      %v3423 = vpop.f32.mrf.mxu0
      %v3424 = vadd.f32 %v3191, %v3423
      %v3425 = vpop.f32.mrf.mxu0
      %v3426 = vpop.f32.mrf.mxu0
      %v3427 = vadd.f32 %v3191, %v3426
      %v3428 = vpop.f32.mrf.mxu0
      %3429 = vmatprep.mubr.bf16.mxu0 %v3121
      %3430 = vmatmul.mubr.bf16.gmra.mxu0 %v2993
      %v3431 = vpop.f32.mrf.mxu0
      %v3432 = vadd.f32 %v3191, %v3431
      %v3433 = vpop.f32.mrf.mxu0
      %v3434 = vpop.f32.mrf.mxu0
      %v3435 = vadd.f32 %v3191, %v3434
      %v3436 = vpop.f32.mrf.mxu0
      %3437 = vmatprep.mubr.bf16.mxu0 %v3124
      %3438 = vmatmul.mubr.bf16.gmra.mxu0 %v2996
      %v3439 = vpop.f32.mrf.mxu0
      %v3440 = vadd.f32 %v3191, %v3439
      %v3441 = vpop.f32.mrf.mxu0
      %v3442 = vpop.f32.mrf.mxu0
      %v3443 = vadd.f32 %v3191, %v3442
      %v3444 = vpop.f32.mrf.mxu0
      %3445 = vmatprep.mubr.bf16.mxu0 %v3127
      %3446 = vmatmul.mubr.bf16.gmra.mxu0 %v2999
      %v3447 = vpop.f32.mrf.mxu0
      %v3448 = vadd.f32 %v3191, %v3447
      %v3449 = vpop.f32.mrf.mxu0
      %v3450 = vpop.f32.mrf.mxu0
      %v3451 = vadd.f32 %v3191, %v3450
      %v3452 = vpop.f32.mrf.mxu0
      %3453 = vmatprep.mubr.bf16.mxu0 %v3130
      %3454 = vmatmul.mubr.bf16.gmra.mxu0 %v3002
      %v3455 = vpop.f32.mrf.mxu0
      %v3456 = vadd.f32 %v3191, %v3455
      %v3457 = vpop.f32.mrf.mxu0
      %v3458 = vpop.f32.mrf.mxu0
      %v3459 = vadd.f32 %v3191, %v3458
      %v3460 = vpop.f32.mrf.mxu0
      %3461 = vmatprep.mubr.bf16.mxu0 %v3133
      %3462 = vmatmul.mubr.bf16.gmra.mxu0 %v3005
      %v3463 = vpop.f32.mrf.mxu0
      %v3464 = vadd.f32 %v3191, %v3463
      %v3465 = vpop.f32.mrf.mxu0
      %v3466 = vpop.f32.mrf.mxu0
      %v3467 = vadd.f32 %v3191, %v3466
      %v3468 = vpop.f32.mrf.mxu0
      %3469 = vmatprep.mubr.bf16.mxu0 %v3136
      %3470 = vmatmul.mubr.bf16.gmra.mxu0 %v3008
      %v3471 = vpop.f32.mrf.mxu0
      %v3472 = vadd.f32 %v3191, %v3471
      %v3473 = vpop.f32.mrf.mxu0
      %v3474 = vpop.f32.mrf.mxu0
      %v3475 = vadd.f32 %v3191, %v3474
      %v3476 = vpop.f32.mrf.mxu0
      %3477 = vmatprep.mubr.bf16.mxu0 %v3139
      %3478 = vmatmul.mubr.bf16.gmra.mxu0 %v3011
      %v3479 = vpop.f32.mrf.mxu0
      %v3480 = vadd.f32 %v3191, %v3479
      %v3481 = vpop.f32.mrf.mxu0
      %v3482 = vpop.f32.mrf.mxu0
      %v3483 = vadd.f32 %v3191, %v3482
      %v3484 = vpop.f32.mrf.mxu0
      %3485 = vmatprep.mubr.bf16.mxu0 %v3142
      %3486 = vmatmul.mubr.bf16.gmra.mxu0 %v3014
      %v3487 = vpop.f32.mrf.mxu0
      %v3488 = vadd.f32 %v3191, %v3487
      %v3489 = vpop.f32.mrf.mxu0
      %v3490 = vpop.f32.mrf.mxu0
      %v3491 = vadd.f32 %v3191, %v3490
      %v3492 = vpop.f32.mrf.mxu0
      %3493 = vmatprep.mubr.bf16.mxu0 %v3145
      %3494 = vmatmul.mubr.bf16.gmra.mxu0 %v3017
      %v3495 = vpop.f32.mrf.mxu0
      %v3496 = vadd.f32 %v3191, %v3495
      %v3497 = vpop.f32.mrf.mxu0
      %v3498 = vpop.f32.mrf.mxu0
      %v3499 = vadd.f32 %v3191, %v3498
      %v3500 = vpop.f32.mrf.mxu0
      %3501 = vmatprep.mubr.bf16.mxu0 %v3148
      %3502 = vmatmul.mubr.bf16.gmra.mxu0 %v3020
      %v3503 = vpop.f32.mrf.mxu0
      %v3504 = vadd.f32 %v3191, %v3503
      %v3505 = vpop.f32.mrf.mxu0
      %v3506 = vpop.f32.mrf.mxu0
      %v3507 = vadd.f32 %v3191, %v3506
      %v3508 = vpop.f32.mrf.mxu0
      %3509 = vdwg.mxu0
      %3510 = vmatprep.subr.bf16.mxu0 0
      %3511 = vmatpush1.bf16.msra.mxu0 0
      %3512 = vmatprep.subr.bf16.mxu0 0
      %3513 = vmatpush1.bf16.msra.mxu0 0
      %3514 = vmatprep.subr.bf16.mxu0 0
      %3515 = vmatpush1.bf16.msra.mxu0 0
      %3516 = vmatprep.subr.bf16.mxu0 0
      %3517 = vmatpush1.bf16.msra.mxu0 0
      %3518 = vmatprep.subr.bf16.mxu0 0
      %3519 = vmatpush1.bf16.msra.mxu0 0
      %3520 = vmatprep.subr.bf16.mxu0 0
      %3521 = vmatpush1.bf16.msra.mxu0 0
      %3522 = vmatprep.subr.bf16.mxu0 0
      %3523 = vmatpush1.bf16.msra.mxu0 %v3282
      %3524 = vmatprep.subr.bf16.mxu0 0
      %3525 = vmatpush1.bf16.msra.mxu0 %v3281
      %3526 = vmatprep.subr.bf16.mxu0 0
      %3527 = vmatpush2.bf16.msra.mxu0 0
      %3528 = vmatprep.subr.bf16.mxu0 0
      %3529 = vmatpush2.bf16.msra.mxu0 0
      %3530 = vmatprep.subr.bf16.mxu0 0
      %3531 = vmatpush2.bf16.msra.mxu0 0
      %3532 = vmatprep.subr.bf16.mxu0 0
      %3533 = vmatpush2.bf16.msra.mxu0 0
      %3534 = vmatprep.subr.bf16.mxu0 0
      %3535 = vmatpush2.bf16.msra.mxu0 0
      %3536 = vmatprep.subr.bf16.mxu0 0
      %3537 = vmatpush2.bf16.msra.mxu0 0
      %3538 = vmatprep.subr.bf16.mxu0 0
      %3539 = vmatpush2.bf16.msra.mxu0 0
      %3540 = vmatprep.subr.bf16.mxu0 0
      %3541 = vmatpush2.bf16.msra.mxu0 0
      %3542 = vmatprep.mubr.bf16.mxu0 0
      %3543 = vmatmul.mubr.bf16.gmra.mxu0 %v3302
      %v3544 = vpop.f32.mrf.mxu0
      %v3545 = vadd.f32 %v3384, %v3544
      %v3546 = vpop.f32.mrf.mxu0
      %v3547 = vpop.f32.mrf.mxu0
      %v3548 = vadd.f32 %v3387, %v3547
      %v3549 = vpop.f32.mrf.mxu0
      %3550 = vmatprep.mubr.bf16.mxu0 0
      %3551 = vmatmul.mubr.bf16.gmra.mxu0 %v3305
      %v3552 = vpop.f32.mrf.mxu0
      %v3553 = vadd.f32 %v3392, %v3552
      %v3554 = vpop.f32.mrf.mxu0
      %v3555 = vpop.f32.mrf.mxu0
      %v3556 = vadd.f32 %v3395, %v3555
      %v3557 = vpop.f32.mrf.mxu0
      %3558 = vmatprep.mubr.bf16.mxu0 0
      %3559 = vmatmul.mubr.bf16.gmra.mxu0 %v3308
      %v3560 = vpop.f32.mrf.mxu0
      %v3561 = vadd.f32 %v3400, %v3560
      %v3562 = vpop.f32.mrf.mxu0
      %v3563 = vpop.f32.mrf.mxu0
      %v3564 = vadd.f32 %v3403, %v3563
      %v3565 = vpop.f32.mrf.mxu0
      %3566 = vmatprep.mubr.bf16.mxu0 0
      %3567 = vmatmul.mubr.bf16.gmra.mxu0 %v3311
      %v3568 = vpop.f32.mrf.mxu0
      %v3569 = vadd.f32 %v3408, %v3568
      %v3570 = vpop.f32.mrf.mxu0
      %v3571 = vpop.f32.mrf.mxu0
      %v3572 = vadd.f32 %v3411, %v3571
      %v3573 = vpop.f32.mrf.mxu0
      %3574 = vmatprep.mubr.bf16.mxu0 0
      %3575 = vmatmul.mubr.bf16.gmra.mxu0 %v3314
      %v3576 = vpop.f32.mrf.mxu0
      %v3577 = vadd.f32 %v3416, %v3576
      %v3578 = vpop.f32.mrf.mxu0
      %v3579 = vpop.f32.mrf.mxu0
      %v3580 = vadd.f32 %v3419, %v3579
      %v3581 = vpop.f32.mrf.mxu0
      %3582 = vmatprep.mubr.bf16.mxu0 0
      %3583 = vmatmul.mubr.bf16.gmra.mxu0 %v3317
      %v3584 = vpop.f32.mrf.mxu0
      %v3585 = vadd.f32 %v3424, %v3584
      %v3586 = vpop.f32.mrf.mxu0
      %v3587 = vpop.f32.mrf.mxu0
      %v3588 = vadd.f32 %v3427, %v3587
      %v3589 = vpop.f32.mrf.mxu0
      %3590 = vmatprep.mubr.bf16.mxu0 0
      %3591 = vmatmul.mubr.bf16.gmra.mxu0 %v3320
      %v3592 = vpop.f32.mrf.mxu0
      %v3593 = vadd.f32 %v3432, %v3592
      %v3594 = vpop.f32.mrf.mxu0
      %v3595 = vpop.f32.mrf.mxu0
      %v3596 = vadd.f32 %v3435, %v3595
      %v3597 = vpop.f32.mrf.mxu0
      %3598 = vmatprep.mubr.bf16.mxu0 0
      %3599 = vmatmul.mubr.bf16.gmra.mxu0 %v3323
      %v3600 = vpop.f32.mrf.mxu0
      %v3601 = vadd.f32 %v3440, %v3600
      %v3602 = vpop.f32.mrf.mxu0
      %v3603 = vpop.f32.mrf.mxu0
      %v3604 = vadd.f32 %v3443, %v3603
      %v3605 = vpop.f32.mrf.mxu0
      %3606 = vmatprep.mubr.bf16.mxu0 0
      %3607 = vmatmul.mubr.bf16.gmra.mxu0 %v3326
      %v3608 = vpop.f32.mrf.mxu0
      %v3609 = vadd.f32 %v3448, %v3608
      %v3610 = vpop.f32.mrf.mxu0
      %v3611 = vpop.f32.mrf.mxu0
      %v3612 = vadd.f32 %v3451, %v3611
      %v3613 = vpop.f32.mrf.mxu0
      %3614 = vmatprep.mubr.bf16.mxu0 0
      %3615 = vmatmul.mubr.bf16.gmra.mxu0 %v3329
      %v3616 = vpop.f32.mrf.mxu0
      %v3617 = vadd.f32 %v3456, %v3616
      %v3618 = vpop.f32.mrf.mxu0
      %v3619 = vpop.f32.mrf.mxu0
      %v3620 = vadd.f32 %v3459, %v3619
      %v3621 = vpop.f32.mrf.mxu0
      %3622 = vmatprep.mubr.bf16.mxu0 0
      %3623 = vmatmul.mubr.bf16.gmra.mxu0 %v3332
      %v3624 = vpop.f32.mrf.mxu0
      %v3625 = vadd.f32 %v3464, %v3624
      %v3626 = vpop.f32.mrf.mxu0
      %v3627 = vpop.f32.mrf.mxu0
      %v3628 = vadd.f32 %v3467, %v3627
      %v3629 = vpop.f32.mrf.mxu0
      %3630 = vmatprep.mubr.bf16.mxu0 0
      %3631 = vmatmul.mubr.bf16.gmra.mxu0 %v3335
      %v3632 = vpop.f32.mrf.mxu0
      %v3633 = vadd.f32 %v3472, %v3632
      %v3634 = vpop.f32.mrf.mxu0
      %v3635 = vpop.f32.mrf.mxu0
      %v3636 = vadd.f32 %v3475, %v3635
      %v3637 = vpop.f32.mrf.mxu0
      %3638 = vmatprep.mubr.bf16.mxu0 0
      %3639 = vmatmul.mubr.bf16.gmra.mxu0 %v3338
      %v3640 = vpop.f32.mrf.mxu0
      %v3641 = vadd.f32 %v3480, %v3640
      %v3642 = vpop.f32.mrf.mxu0
      %v3643 = vpop.f32.mrf.mxu0
      %v3644 = vadd.f32 %v3483, %v3643
      %v3645 = vpop.f32.mrf.mxu0
      %3646 = vmatprep.mubr.bf16.mxu0 0
      %3647 = vmatmul.mubr.bf16.gmra.mxu0 %v3341
      %v3648 = vpop.f32.mrf.mxu0
      %v3649 = vadd.f32 %v3488, %v3648
      %v3650 = vpop.f32.mrf.mxu0
      %v3651 = vpop.f32.mrf.mxu0
      %v3652 = vadd.f32 %v3491, %v3651
      %v3653 = vpop.f32.mrf.mxu0
      %3654 = vmatprep.mubr.bf16.mxu0 0
      %3655 = vmatmul.mubr.bf16.gmra.mxu0 %v3344
      %v3656 = vpop.f32.mrf.mxu0
      %v3657 = vadd.f32 %v3496, %v3656
      %v3658 = vpop.f32.mrf.mxu0
      %v3659 = vpop.f32.mrf.mxu0
      %v3660 = vadd.f32 %v3499, %v3659
      %v3661 = vpop.f32.mrf.mxu0
      %3662 = vmatprep.mubr.bf16.mxu0 0
      %3663 = vmatmul.mubr.bf16.gmra.mxu0 %v3347
      %v3664 = vpop.f32.mrf.mxu0
      %v3665 = vadd.f32 %v3504, %v3664
      %v3666 = vpop.f32.mrf.mxu0
      %v3667 = vpop.f32.mrf.mxu0
      %v3668 = vadd.f32 %v3507, %v3667
      %v3669 = vpop.f32.mrf.mxu0
      %3670 = vdwg.mxu0
      %v3671 = vmax.f32 %v3545, 0.0
      %v3672 = vmax.f32 %v3548, 0.0
      %v3673 = vmax.f32 %v3553, 0.0
      %v3674 = vmax.f32 %v3556, 0.0
      %v3675 = vmax.f32 %v3561, 0.0
      %v3676 = vmax.f32 %v3564, 0.0
      %v3677 = vmax.f32 %v3569, 0.0
      %v3678 = vmax.f32 %v3572, 0.0
      %v3679 = vmax.f32 %v3577, 0.0
      %v3680 = vmax.f32 %v3580, 0.0
      %v3681 = vmax.f32 %v3585, 0.0
      %v3682 = vmax.f32 %v3588, 0.0
      %v3683 = vmax.f32 %v3593, 0.0
      %v3684 = vmax.f32 %v3596, 0.0
      %v3685 = vmax.f32 %v3601, 0.0
      %v3686 = vmax.f32 %v3604, 0.0
      %v3687 = vmax.f32 %v3609, 0.0
      %v3688 = vmax.f32 %v3612, 0.0
      %v3689 = vmax.f32 %v3617, 0.0
      %v3690 = vmax.f32 %v3620, 0.0
      %v3691 = vmax.f32 %v3625, 0.0
      %v3692 = vmax.f32 %v3628, 0.0
      %v3693 = vmax.f32 %v3633, 0.0
      %v3694 = vmax.f32 %v3636, 0.0
      %v3695 = vmax.f32 %v3641, 0.0
      %v3696 = vmax.f32 %v3644, 0.0
      %v3697 = vmax.f32 %v3649, 0.0
      %v3698 = vmax.f32 %v3652, 0.0
      %v3699 = vmax.f32 %v3657, 0.0
      %v3700 = vmax.f32 %v3660, 0.0
      %v3701 = vmax.f32 %v3665, 0.0
      %v3702 = vmax.f32 %v3668, 0.0
      %3703 = vst.msk [vmem:[#allocation6] sm:$0xff] %vm529, %v3671
      %3704 = vst.msk [vmem:[#allocation6 + $0x8] sm:$0xff] %vm529, %v3672
      %3705 = vst.msk [vmem:[#allocation6 + $0x10] sm:$0xff] %vm529, %v3673
      %3706 = vst.msk [vmem:[#allocation6 + $0x18] sm:$0xff] %vm529, %v3674
      %3707 = vst.msk [vmem:[#allocation6 + $0x20] sm:$0xff] %vm529, %v3675
      %3708 = vst.msk [vmem:[#allocation6 + $0x28] sm:$0xff] %vm529, %v3676
      %3709 = vst.msk [vmem:[#allocation6 + $0x30] sm:$0xff] %vm529, %v3677
      %3710 = vst.msk [vmem:[#allocation6 + $0x38] sm:$0xff] %vm529, %v3678
      %3711 = vst.msk [vmem:[#allocation6 + $0x40] sm:$0xff] %vm529, %v3679
      %3712 = vst.msk [vmem:[#allocation6 + $0x48] sm:$0xff] %vm529, %v3680
      %3713 = vst.msk [vmem:[#allocation6 + $0x50] sm:$0xff] %vm529, %v3681
      %3714 = vst.msk [vmem:[#allocation6 + $0x58] sm:$0xff] %vm529, %v3682
      %3715 = vst.msk [vmem:[#allocation6 + $0x60] sm:$0xff] %vm529, %v3683
      %3716 = vst.msk [vmem:[#allocation6 + $0x68] sm:$0xff] %vm529, %v3684
      %3717 = vst.msk [vmem:[#allocation6 + $0x70] sm:$0xff] %vm529, %v3685
      %3718 = vst.msk [vmem:[#allocation6 + $0x78] sm:$0xff] %vm529, %v3686
      %3719 = vst.msk [vmem:[#allocation6 + $0x80] sm:$0xff] %vm529, %v3687
      %3720 = vst.msk [vmem:[#allocation6 + $0x88] sm:$0xff] %vm529, %v3688
      %3721 = vst.msk [vmem:[#allocation6 + $0x90] sm:$0xff] %vm529, %v3689
      %3722 = vst.msk [vmem:[#allocation6 + $0x98] sm:$0xff] %vm529, %v3690
      %3723 = vst.msk [vmem:[#allocation6 + $0xa0] sm:$0xff] %vm529, %v3691
      %3724 = vst.msk [vmem:[#allocation6 + $0xa8] sm:$0xff] %vm529, %v3692
      %3725 = vst.msk [vmem:[#allocation6 + $0xb0] sm:$0xff] %vm529, %v3693
      %3726 = vst.msk [vmem:[#allocation6 + $0xb8] sm:$0xff] %vm529, %v3694
      %3727 = vst.msk [vmem:[#allocation6 + $0xc0] sm:$0xff] %vm529, %v3695
      %3728 = vst.msk [vmem:[#allocation6 + $0xc8] sm:$0xff] %vm529, %v3696
      %3729 = vst.msk [vmem:[#allocation6 + $0xd0] sm:$0xff] %vm529, %v3697
      %3730 = vst.msk [vmem:[#allocation6 + $0xd8] sm:$0xff] %vm529, %v3698
      %3731 = vst.msk [vmem:[#allocation6 + $0xe0] sm:$0xff] %vm529, %v3699
      %3732 = vst.msk [vmem:[#allocation6 + $0xe8] sm:$0xff] %vm529, %v3700
      %3733 = vst.msk [vmem:[#allocation6 + $0xf0] sm:$0xff] %vm529, %v3701
      %3734 = vst.msk [vmem:[#allocation6 + $0xf8] sm:$0xff] %vm529, %v3702
      %v3735 = vld [vmem:[#allocation6] ss:$2 sm:$0xff]
      %s3736 = scalar_lea.vmem [#allocation6], 32
      %v3737 = vld [vmem:[%s3736] ss:$2 sm:$0xff]
      %s3738 = scalar_lea.vmem [#allocation6], 64
      %v3739 = vld [vmem:[%s3738] ss:$2 sm:$0xff]
      %s3740 = scalar_lea.vmem [#allocation6], 96
      %v3741 = vld [vmem:[%s3740] ss:$2 sm:$0xff]
      %s3742 = scalar_lea.vmem [#allocation6], 128
      %v3743 = vld [vmem:[%s3742] ss:$2 sm:$0xff]
      %s3744 = scalar_lea.vmem [#allocation6], 160
      %v3745 = vld [vmem:[%s3744] ss:$2 sm:$0xff]
      %s3746 = scalar_lea.vmem [#allocation6], 192
      %v3747 = vld [vmem:[%s3746] ss:$2 sm:$0xff]
      %s3748 = scalar_lea.vmem [#allocation6], 224
      %v3749 = vld [vmem:[%s3748] ss:$2 sm:$0xff]
      %s3750 = scalar_lea.vmem [#allocation6], 1
      %v3751 = vld [vmem:[%s3750] ss:$2 sm:$0xff]
      %s3752 = scalar_lea.vmem [#allocation6], 33
      %v3753 = vld [vmem:[%s3752] ss:$2 sm:$0xff]
      %s3754 = scalar_lea.vmem [#allocation6], 65
      %v3755 = vld [vmem:[%s3754] ss:$2 sm:$0xff]
      %s3756 = scalar_lea.vmem [#allocation6], 97
      %v3757 = vld [vmem:[%s3756] ss:$2 sm:$0xff]
      %s3758 = scalar_lea.vmem [#allocation6], 129
      %v3759 = vld [vmem:[%s3758] ss:$2 sm:$0xff]
      %s3760 = scalar_lea.vmem [#allocation6], 161
      %v3761 = vld [vmem:[%s3760] ss:$2 sm:$0xff]
      %s3762 = scalar_lea.vmem [#allocation6], 193
      %v3763 = vld [vmem:[%s3762] ss:$2 sm:$0xff]
      %s3764 = scalar_lea.vmem [#allocation6], 225
      %v3765 = vld [vmem:[%s3764] ss:$2 sm:$0xff]
      %s3766 = scalar_lea.vmem [#allocation6], 16
      %v3767 = vld [vmem:[%s3766] ss:$2 sm:$0xff]
      %s3768 = scalar_lea.vmem %s3766, 32 [#allocation6]
      %v3769 = vld [vmem:[%s3768] ss:$2 sm:$0xff]
      %s3770 = scalar_lea.vmem %s3766, 64 [#allocation6]
      %v3771 = vld [vmem:[%s3770] ss:$2 sm:$0xff]
      %s3772 = scalar_lea.vmem %s3766, 96 [#allocation6]
      %v3773 = vld [vmem:[%s3772] ss:$2 sm:$0xff]
      %s3774 = scalar_lea.vmem %s3766, 128 [#allocation6]
      %v3775 = vld [vmem:[%s3774] ss:$2 sm:$0xff]
      %s3776 = scalar_lea.vmem %s3766, 160 [#allocation6]
      %v3777 = vld [vmem:[%s3776] ss:$2 sm:$0xff]
      %s3778 = scalar_lea.vmem %s3766, 192 [#allocation6]
      %v3779 = vld [vmem:[%s3778] ss:$2 sm:$0xff]
      %s3780 = scalar_lea.vmem %s3766, 224 [#allocation6]
      %v3781 = vld [vmem:[%s3780] ss:$2 sm:$0xff]
      %s3782 = scalar_lea.vmem %s3766, 1 [#allocation6]
      %v3783 = vld [vmem:[%s3782] ss:$2 sm:$0xff]
      %s3784 = scalar_lea.vmem %s3766, 33 [#allocation6]
      %v3785 = vld [vmem:[%s3784] ss:$2 sm:$0xff]
      %s3786 = scalar_lea.vmem %s3766, 65 [#allocation6]
      %v3787 = vld [vmem:[%s3786] ss:$2 sm:$0xff]
      %s3788 = scalar_lea.vmem %s3766, 97 [#allocation6]
      %v3789 = vld [vmem:[%s3788] ss:$2 sm:$0xff]
      %s3790 = scalar_lea.vmem %s3766, 129 [#allocation6]
      %v3791 = vld [vmem:[%s3790] ss:$2 sm:$0xff]
      %s3792 = scalar_lea.vmem %s3766, 161 [#allocation6]
      %v3793 = vld [vmem:[%s3792] ss:$2 sm:$0xff]
      %s3794 = scalar_lea.vmem %s3766, 193 [#allocation6]
      %v3795 = vld [vmem:[%s3794] ss:$2 sm:$0xff]
      %s3796 = scalar_lea.vmem %s3766, 225 [#allocation6]
      %v3797 = vld [vmem:[%s3796] ss:$2 sm:$0xff]
      %v3798 = vmax.f32 %v3735, %v3751
      %v3799 = vmax.f32 %v3737, %v3753
      %v3800 = vmax.f32 %v3739, %v3755
      %v3801 = vmax.f32 %v3741, %v3757
      %v3802 = vmax.f32 %v3743, %v3759
      %v3803 = vmax.f32 %v3745, %v3761
      %v3804 = vmax.f32 %v3747, %v3763
      %v3805 = vmax.f32 %v3749, %v3765
      %v3806 = vmax.f32 %v3767, %v3783
      %v3807 = vmax.f32 %v3769, %v3785
      %v3808 = vmax.f32 %v3771, %v3787
      %v3809 = vmax.f32 %v3773, %v3789
      %v3810 = vmax.f32 %v3775, %v3791
      %v3811 = vmax.f32 %v3777, %v3793
      %v3812 = vmax.f32 %v3779, %v3795
      %v3813 = vmax.f32 %v3781, %v3797
      %v3814 = vmax.f32 %v3798, %v3806
      %v3815 = vmax.f32 %v3799, %v3807
      %v3816 = vmax.f32 %v3800, %v3808
      %v3817 = vmax.f32 %v3801, %v3809
      %v3818 = vmax.f32 %v3802, %v3810
      %v3819 = vmax.f32 %v3803, %v3811
      %v3820 = vmax.f32 %v3804, %v3812
      %v3821 = vmax.f32 %v3805, %v3813
      %3823 = vrot.lane.b32.xlu0 %v573, 32
      %v3824 = vpop.permute.xlu0 %3823
      %v3826 = vsel %vm529, %v573, %v3824
      %3827 = vst.msk [vmem:[#allocation4] sm:$0xff] %vm529, 0.0
      %3828 = vst.msk [vmem:[#allocation4 + $0x8] sm:$0x3] %vm2085, 0.0
      %3829 = vst.msk [vmem:[#allocation4 + $0x10] sm:$0xff] %vm529, 0.0
      %3830 = vst.msk [vmem:[#allocation4 + $0x18] sm:$0x3] %vm2085, 0.0
      %3831 = vst.msk [vmem:[#allocation4 + $0x20] sm:$0xff] %vm529, 0.0
      %3832 = vst.msk [vmem:[#allocation4 + $0x28] sm:$0x3] %vm2085, 0.0
      %3833 = vst.msk [vmem:[#allocation4 + $0x30] sm:$0xff] %vm529, 0.0
      %3834 = vst.msk [vmem:[#allocation4 + $0x38] sm:$0x3] %vm2085, 0.0
      %3835 = vst.msk [vmem:[#allocation4 + $0x40] sm:$0xff] %vm529, 0.0
      %3836 = vst.msk [vmem:[#allocation4 + $0x48] sm:$0x3] %vm2085, 0.0
      %3837 = vst.msk [vmem:[#allocation4 + $0x50] sm:$0xff] %vm529, 0.0
      %3838 = vst.msk [vmem:[#allocation4 + $0x58] sm:$0x3] %vm2085, 0.0
      %3839 = vst.msk [vmem:[#allocation4 + $0x60] sm:$0xff] %vm529, 0.0
      %3840 = vst.msk [vmem:[#allocation4 + $0x68] sm:$0x3] %vm2085, 0.0
      %3841 = vst.msk [vmem:[#allocation4 + $0x70] sm:$0xff] %vm529, 0.0
      %3842 = vst.msk [vmem:[#allocation4 + $0x78] sm:$0x3] %vm2085, 0.0
      %3843 = vst.msk [vmem:[#allocation4 + $0x80] sm:$0xff] %vm529, 0.0
      %3844 = vst.msk [vmem:[#allocation4 + $0x88] sm:$0x3] %vm2085, 0.0
      %3845 = vst.msk [vmem:[#allocation4 + $0x90] sm:$0xff] %vm529, 0.0
      %3846 = vst.msk [vmem:[#allocation4 + $0x98] sm:$0x3] %vm2085, 0.0
      %s3847 = scalar_lea.vmem [#allocation4], 16
      %3848 = vst.msk [vmem:[%s3847 + $0x1] sm:$0xff] %vm529, %v3814
      %3849 = vst.msk [vmem:[%s3847 + $0x11] sm:$0xff] %vm529, %v3815
      %3850 = vst.msk [vmem:[%s3847 + $0x21] sm:$0xff] %vm529, %v3816
      %3851 = vst.msk [vmem:[%s3847 + $0x31] sm:$0xff] %vm529, %v3817
      %3852 = vst.msk [vmem:[%s3847 + $0x41] sm:$0xff] %vm529, %v3818
      %3853 = vst.msk [vmem:[%s3847 + $0x51] sm:$0xff] %vm529, %v3819
      %3854 = vst.msk [vmem:[%s3847 + $0x61] sm:$0xff] %vm529, %v3820
      %3855 = vst.msk [vmem:[%s3847 + $0x71] sm:$0xff] %vm529, %v3821
      %v3856 = vld [vmem:[#allocation4] sm:$0xff]
      %v3857 = vld [vmem:[#allocation4 + $0x10] sm:$0xff]
      %v3858 = vld [vmem:[#allocation4 + $0x20] sm:$0xff]
      %v3859 = vld [vmem:[#allocation4 + $0x30] sm:$0xff]
      %v3860 = vld [vmem:[#allocation4 + $0x40] sm:$0xff]
      %v3861 = vld [vmem:[#allocation4 + $0x50] sm:$0xff]
      %v3862 = vld [vmem:[#allocation4 + $0x60] sm:$0xff]
      %v3863 = vld [vmem:[#allocation4 + $0x70] sm:$0xff]
      %v3864 = vpack.c.bf16 %v3857, %v3856
      %v3865 = vpack.c.bf16 %v3859, %v3858
      %v3866 = vpack.c.bf16 %v3861, %v3860
      %v3867 = vpack.c.bf16 %v3863, %v3862
      %v3868 = vld [vmem:[#allocation4 + $0x1] sm:$0xff]
      %v3869 = vld [vmem:[#allocation4 + $0x11] sm:$0xff]
      %v3870 = vld [vmem:[#allocation4 + $0x21] sm:$0xff]
      %v3871 = vld [vmem:[#allocation4 + $0x31] sm:$0xff]
      %v3872 = vld [vmem:[#allocation4 + $0x41] sm:$0xff]
      %v3873 = vld [vmem:[#allocation4 + $0x51] sm:$0xff]
      %v3874 = vld [vmem:[#allocation4 + $0x61] sm:$0xff]
      %v3875 = vld [vmem:[#allocation4 + $0x71] sm:$0xff]
      %v3876 = vpack.c.bf16 %v3869, %v3868
      %v3877 = vpack.c.bf16 %v3871, %v3870
      %v3878 = vpack.c.bf16 %v3873, %v3872
      %v3879 = vpack.c.bf16 %v3875, %v3874
      %v3880 = vld [vmem:[#allocation4 + $0x2] sm:$0xff]
      %v3881 = vld [vmem:[#allocation4 + $0x12] sm:$0xff]
      %v3882 = vld [vmem:[#allocation4 + $0x22] sm:$0xff]
      %v3883 = vld [vmem:[#allocation4 + $0x32] sm:$0xff]
      %v3884 = vld [vmem:[#allocation4 + $0x42] sm:$0xff]
      %v3885 = vld [vmem:[#allocation4 + $0x52] sm:$0xff]
      %v3886 = vld [vmem:[#allocation4 + $0x62] sm:$0xff]
      %v3887 = vld [vmem:[#allocation4 + $0x72] sm:$0xff]
      %v3888 = vpack.c.bf16 %v3881, %v3880
      %v3889 = vpack.c.bf16 %v3883, %v3882
      %v3890 = vpack.c.bf16 %v3885, %v3884
      %v3891 = vpack.c.bf16 %v3887, %v3886
      %v3892 = vld [vmem:[%s3847] sm:$0xff]
      %v3893 = vld [vmem:[%s3847 + $0x10] sm:$0xff]
      %v3894 = vld [vmem:[%s3847 + $0x20] sm:$0xff]
      %v3895 = vld [vmem:[%s3847 + $0x30] sm:$0xff]
      %v3896 = vld [vmem:[%s3847 + $0x40] sm:$0xff]
      %v3897 = vld [vmem:[%s3847 + $0x50] sm:$0xff]
      %v3898 = vld [vmem:[%s3847 + $0x60] sm:$0xff]
      %v3899 = vld [vmem:[%s3847 + $0x70] sm:$0xff]
      %v3900 = vpack.c.bf16 %v3893, %v3892
      %v3901 = vpack.c.bf16 %v3895, %v3894
      %v3902 = vpack.c.bf16 %v3897, %v3896
      %v3903 = vpack.c.bf16 %v3899, %v3898
      %v3904 = vld [vmem:[%s3847 + $0x1] sm:$0xff]
      %v3905 = vld [vmem:[%s3847 + $0x11] sm:$0xff]
      %v3906 = vld [vmem:[%s3847 + $0x21] sm:$0xff]
      %v3907 = vld [vmem:[%s3847 + $0x31] sm:$0xff]
      %v3908 = vld [vmem:[%s3847 + $0x41] sm:$0xff]
      %v3909 = vld [vmem:[%s3847 + $0x51] sm:$0xff]
      %v3910 = vld [vmem:[%s3847 + $0x61] sm:$0xff]
      %v3911 = vld [vmem:[%s3847 + $0x71] sm:$0xff]
      %v3912 = vpack.c.bf16 %v3905, %v3904
      %v3913 = vpack.c.bf16 %v3907, %v3906
      %v3914 = vpack.c.bf16 %v3909, %v3908
      %v3915 = vpack.c.bf16 %v3911, %v3910
      %v3916 = vld [vmem:[%s3847 + $0x2] sm:$0xff]
      %v3917 = vld [vmem:[%s3847 + $0x12] sm:$0xff]
      %v3918 = vld [vmem:[%s3847 + $0x22] sm:$0xff]
      %v3919 = vld [vmem:[%s3847 + $0x32] sm:$0xff]
      %v3920 = vld [vmem:[%s3847 + $0x42] sm:$0xff]
      %v3921 = vld [vmem:[%s3847 + $0x52] sm:$0xff]
      %v3922 = vld [vmem:[%s3847 + $0x62] sm:$0xff]
      %v3923 = vld [vmem:[%s3847 + $0x72] sm:$0xff]
      %v3924 = vpack.c.bf16 %v3917, %v3916
      %v3925 = vpack.c.bf16 %v3919, %v3918
      %v3926 = vpack.c.bf16 %v3921, %v3920
      %v3927 = vpack.c.bf16 %v3923, %v3922
      %s3928 = scalar_lea.vmem [#allocation4], 32
      %v3929 = vld [vmem:[%s3928] sm:$0xff]
      %v3930 = vld [vmem:[%s3928 + $0x10] sm:$0xff]
      %v3931 = vld [vmem:[%s3928 + $0x20] sm:$0xff]
      %v3932 = vld [vmem:[%s3928 + $0x30] sm:$0xff]
      %v3933 = vld [vmem:[%s3928 + $0x40] sm:$0xff]
      %v3934 = vld [vmem:[%s3928 + $0x50] sm:$0xff]
      %v3935 = vld [vmem:[%s3928 + $0x60] sm:$0xff]
      %v3936 = vld [vmem:[%s3928 + $0x70] sm:$0xff]
      %v3937 = vpack.c.bf16 %v3930, %v3929
      %v3938 = vpack.c.bf16 %v3932, %v3931
      %v3939 = vpack.c.bf16 %v3934, %v3933
      %v3940 = vpack.c.bf16 %v3936, %v3935
      %v3941 = vld [vmem:[%s3928 + $0x1] sm:$0xff]
      %v3942 = vld [vmem:[%s3928 + $0x11] sm:$0xff]
      %v3943 = vld [vmem:[%s3928 + $0x21] sm:$0xff]
      %v3944 = vld [vmem:[%s3928 + $0x31] sm:$0xff]
      %v3945 = vld [vmem:[%s3928 + $0x41] sm:$0xff]
      %v3946 = vld [vmem:[%s3928 + $0x51] sm:$0xff]
      %v3947 = vld [vmem:[%s3928 + $0x61] sm:$0xff]
      %v3948 = vld [vmem:[%s3928 + $0x71] sm:$0xff]
      %v3949 = vpack.c.bf16 %v3942, %v3941
      %v3950 = vpack.c.bf16 %v3944, %v3943
      %v3951 = vpack.c.bf16 %v3946, %v3945
      %v3952 = vpack.c.bf16 %v3948, %v3947
      %v3953 = vld [vmem:[%s3928 + $0x2] sm:$0xff]
      %v3954 = vld [vmem:[%s3928 + $0x12] sm:$0xff]
      %v3955 = vld [vmem:[%s3928 + $0x22] sm:$0xff]
      %v3956 = vld [vmem:[%s3928 + $0x32] sm:$0xff]
      %v3957 = vld [vmem:[%s3928 + $0x42] sm:$0xff]
      %v3958 = vld [vmem:[%s3928 + $0x52] sm:$0xff]
      %v3959 = vld [vmem:[%s3928 + $0x62] sm:$0xff]
      %v3960 = vld [vmem:[%s3928 + $0x72] sm:$0xff]
      %v3961 = vpack.c.bf16 %v3954, %v3953
      %v3962 = vpack.c.bf16 %v3956, %v3955
      %v3963 = vpack.c.bf16 %v3958, %v3957
      %v3964 = vpack.c.bf16 %v3960, %v3959
      %3969 = vrot.lane.b32.xlu0 %v3876, 32
      %v3970 = vpop.permute.xlu0 %3969
      %3971 = vrot.lane.b32.xlu0 %v3877, 32
      %v3972 = vpop.permute.xlu0 %3971
      %3973 = vrot.lane.b32.xlu0 %v3878, 32
      %v3974 = vpop.permute.xlu0 %3973
      %3975 = vrot.lane.b32.xlu0 %v3879, 32
      %v3976 = vpop.permute.xlu0 %3975
      %3981 = vrot.lane.b32.xlu0 %v3888, 64
      %v3982 = vpop.permute.xlu0 %3981
      %3983 = vrot.lane.b32.xlu0 %v3889, 64
      %v3984 = vpop.permute.xlu0 %3983
      %3985 = vrot.lane.b32.xlu0 %v3890, 64
      %v3986 = vpop.permute.xlu0 %3985
      %3987 = vrot.lane.b32.xlu0 %v3891, 64
      %v3988 = vpop.permute.xlu0 %3987
      %3993 = vrot.lane.b32.xlu0 %v3900, 96
      %v3994 = vpop.permute.xlu0 %3993
      %3995 = vrot.lane.b32.xlu0 %v3901, 96
      %v3996 = vpop.permute.xlu0 %3995
      %3997 = vrot.lane.b32.xlu0 %v3902, 96
      %v3998 = vpop.permute.xlu0 %3997
      %3999 = vrot.lane.b32.xlu0 %v3903, 96
      %v4000 = vpop.permute.xlu0 %3999
      %4005 = vrot.lane.b32.xlu0 %v3924, 32
      %v4006 = vpop.permute.xlu0 %4005
      %4007 = vrot.lane.b32.xlu0 %v3925, 32
      %v4008 = vpop.permute.xlu0 %4007
      %4009 = vrot.lane.b32.xlu0 %v3926, 32
      %v4010 = vpop.permute.xlu0 %4009
      %4011 = vrot.lane.b32.xlu0 %v3927, 32
      %v4012 = vpop.permute.xlu0 %4011
      %4017 = vrot.lane.b32.xlu0 %v3937, 64
      %v4018 = vpop.permute.xlu0 %4017
      %4019 = vrot.lane.b32.xlu0 %v3938, 64
      %v4020 = vpop.permute.xlu0 %4019
      %4021 = vrot.lane.b32.xlu0 %v3939, 64
      %v4022 = vpop.permute.xlu0 %4021
      %4023 = vrot.lane.b32.xlu0 %v3940, 64
      %v4024 = vpop.permute.xlu0 %4023
      %4029 = vrot.lane.b32.xlu0 %v3949, 96
      %v4030 = vpop.permute.xlu0 %4029
      %4031 = vrot.lane.b32.xlu0 %v3950, 96
      %v4032 = vpop.permute.xlu0 %4031
      %4033 = vrot.lane.b32.xlu0 %v3951, 96
      %v4034 = vpop.permute.xlu0 %4033
      %4035 = vrot.lane.b32.xlu0 %v3952, 96
      %v4036 = vpop.permute.xlu0 %4035
      %v4039 = vsel %vm529, %v3864, %v3970
      %v4042 = vsel %vm529, %v3865, %v3972
      %v4045 = vsel %vm529, %v3866, %v3974
      %v4048 = vsel %vm529, %v3867, %v3976
      %v4050 = vsel %vm2940, %v4039, %v3982
      %v4052 = vsel %vm2940, %v4042, %v3984
      %v4054 = vsel %vm2940, %v4045, %v3986
      %v4056 = vsel %vm2940, %v4048, %v3988
      %v4058 = vsel %vm2973, %v4050, %v3994
      %v4061 = vsel %vm2973, %v4052, %v3996
      %v4064 = vsel %vm2973, %v4054, %v3998
      %v4067 = vsel %vm2973, %v4056, %v4000
      %v4071 = vsel %vm529, %v3912, %v4006
      %v4074 = vsel %vm529, %v3913, %v4008
      %v4077 = vsel %vm529, %v3914, %v4010
      %v4080 = vsel %vm529, %v3915, %v4012
      %v4082 = vsel %vm2940, %v4071, %v4018
      %v4084 = vsel %vm2940, %v4074, %v4020
      %v4086 = vsel %vm2940, %v4077, %v4022
      %v4088 = vsel %vm2940, %v4080, %v4024
      %v4090 = vsel %vm2973, %v4082, %v4030
      %v4093 = vsel %vm2973, %v4084, %v4032
      %v4096 = vsel %vm2973, %v4086, %v4034
      %v4099 = vsel %vm2973, %v4088, %v4036
      %v4101 = vld [vmem:[%s8] sm:$0xf]
      %v4102 = vld [vmem:[%s8 + $0x4] sm:$0xf]
      %v4103 = vld [vmem:[%s8 + $0x8] sm:$0xf]
      %v4104 = vld [vmem:[%s8 + $0xc] sm:$0xf]
      %v4105 = vld [vmem:[%s8 + $0x10] sm:$0xf]
      %v4106 = vld [vmem:[%s8 + $0x14] sm:$0xf]
      %v4107 = vld [vmem:[%s8 + $0x18] sm:$0xf]
      %v4108 = vld [vmem:[%s8 + $0x1c] sm:$0xf]
      %v4109 = vld [vmem:[%s8 + $0x20] sm:$0xf]
      %v4110 = vld [vmem:[%s8 + $0x24] sm:$0xf]
      %v4111 = vld [vmem:[%s8 + $0x28] sm:$0xf]
      %v4112 = vld [vmem:[%s8 + $0x2c] sm:$0xf]
      %v4113 = vld [vmem:[%s8 + $0x30] sm:$0xf]
      %v4114 = vld [vmem:[%s8 + $0x34] sm:$0xf]
      %v4115 = vld [vmem:[%s8 + $0x38] sm:$0xf]
      %v4116 = vld [vmem:[%s8 + $0x3c] sm:$0xf]
      %v4117 = vld [vmem:[%s8 + $0x40] sm:$0xf]
      %v4118 = vld [vmem:[%s8 + $0x44] sm:$0xf]
      %v4119 = vld [vmem:[%s8 + $0x48] sm:$0xf]
      %v4120 = vld [vmem:[%s8 + $0x4c] sm:$0xf]
      %v4121 = vld [vmem:[%s8 + $0x50] sm:$0xf]
      %v4122 = vld [vmem:[%s8 + $0x54] sm:$0xf]
      %v4123 = vld [vmem:[%s8 + $0x58] sm:$0xf]
      %v4124 = vld [vmem:[%s8 + $0x5c] sm:$0xf]
      %v4125 = vld [vmem:[%s8 + $0x60] sm:$0xf]
      %v4126 = vld [vmem:[%s8 + $0x64] sm:$0xf]
      %v4127 = vld [vmem:[%s8 + $0x68] sm:$0xf]
      %v4128 = vld [vmem:[%s8 + $0x6c] sm:$0xf]
      %v4129 = vld [vmem:[%s8 + $0x70] sm:$0xf]
      %v4130 = vld [vmem:[%s8 + $0x74] sm:$0xf]
      %v4131 = vld [vmem:[%s8 + $0x78] sm:$0xf]
      %v4132 = vld [vmem:[%s8 + $0x7c] sm:$0xf]
      %v4133 = vld [vmem:[%s8 + $0x80] sm:$0xf]
      %v4134 = vld [vmem:[%s8 + $0x84] sm:$0xf]
      %v4135 = vld [vmem:[%s8 + $0x88] sm:$0xf]
      %v4136 = vld [vmem:[%s8 + $0x8c] sm:$0xf]
      %v4137 = vld [vmem:[%s9] sm:$0x1]
      %v4139 = vlaneseq
      %v4140 = vshrl.u32 %v4139, 7
      %v4141 = vsub.s32 0, %v4140
      %v4142 = vrot.slane %v4137, %v4141
      %v4180 = vunpack.c.l.b16 %v4101
      %v4181 = vunpack.c.l.b16 %v4102
      %v4182 = vunpack.c.l.b16 %v4103
      %v4183 = vunpack.c.l.b16 %v4104
      %v4184 = vunpack.c.l.b16 %v4105
      %v4185 = vunpack.c.l.b16 %v4106
      %v4186 = vunpack.c.l.b16 %v4107
      %v4187 = vunpack.c.l.b16 %v4108
      %v4188 = vunpack.c.l.b16 %v4109
      %v4189 = vunpack.c.l.b16 %v4110
      %v4190 = vunpack.c.l.b16 %v4111
      %v4191 = vunpack.c.l.b16 %v4112
      %v4192 = vunpack.c.l.b16 %v4113
      %v4193 = vunpack.c.l.b16 %v4114
      %v4194 = vunpack.c.l.b16 %v4115
      %v4195 = vunpack.c.l.b16 %v4116
      %v4196 = vunpack.c.l.b16 %v4117
      %v4197 = vunpack.c.l.b16 %v4118
      %v4198 = vunpack.c.l.b16 %v4119
      %v4199 = vunpack.c.l.b16 %v4120
      %v4200 = vunpack.c.l.b16 %v4121
      %v4201 = vunpack.c.l.b16 %v4122
      %v4202 = vunpack.c.l.b16 %v4123
      %v4203 = vunpack.c.l.b16 %v4124
      %v4204 = vunpack.c.l.b16 %v4125
      %v4205 = vunpack.c.l.b16 %v4126
      %v4206 = vunpack.c.l.b16 %v4127
      %v4207 = vunpack.c.l.b16 %v4128
      %v4208 = vunpack.c.l.b16 %v4129
      %v4209 = vunpack.c.l.b16 %v4130
      %v4210 = vunpack.c.l.b16 %v4131
      %v4211 = vunpack.c.l.b16 %v4132
      %v4212 = vunpack.c.l.b16 %v4133
      %v4213 = vunpack.c.l.b16 %v4134
      %v4214 = vunpack.c.l.b16 %v4135
      %v4215 = vunpack.c.l.b16 %v4136
      %v4216 = vpack.c.b16 %v4181, %v4180
      %v4217 = vpack.c.b16 %v4183, %v4182
      %v4218 = vpack.c.b16 %v4185, %v4184
      %v4219 = vpack.c.b16 %v4187, %v4186
      %v4220 = vpack.c.b16 %v4189, %v4188
      %v4221 = vpack.c.b16 %v4191, %v4190
      %v4222 = vpack.c.b16 %v4193, %v4192
      %v4223 = vpack.c.b16 %v4195, %v4194
      %v4224 = vpack.c.b16 %v4197, %v4196
      %v4225 = vpack.c.b16 %v4199, %v4198
      %v4226 = vpack.c.b16 %v4201, %v4200
      %v4227 = vpack.c.b16 %v4203, %v4202
      %v4228 = vpack.c.b16 %v4205, %v4204
      %v4229 = vpack.c.b16 %v4207, %v4206
      %v4230 = vpack.c.b16 %v4209, %v4208
      %v4231 = vpack.c.b16 %v4211, %v4210
      %v4232 = vpack.c.b16 %v4213, %v4212
      %v4233 = vpack.c.b16 %v4215, %v4214
      %v4253 = vsel %vm529, %v3961, 0
      %v4256 = vsel %vm529, %v3962, 0
      %v4259 = vsel %vm529, %v3963, 0
      %v4262 = vsel %vm529, %v3964, 0
      %4264 = vmatprep.subr.bf16.mxu0 0
      %4265 = vmatpush1.bf16.msra.mxu0 %v4223
      %4266 = vmatprep.subr.bf16.mxu0 0
      %4267 = vmatpush1.bf16.msra.mxu0 %v4222
      %4268 = vmatprep.subr.bf16.mxu0 0
      %4269 = vmatpush1.bf16.msra.mxu0 %v4221
      %4270 = vmatprep.subr.bf16.mxu0 0
      %4271 = vmatpush1.bf16.msra.mxu0 %v4220
      %4272 = vmatprep.subr.bf16.mxu0 0
      %4273 = vmatpush1.bf16.msra.mxu0 %v4219
      %4274 = vmatprep.subr.bf16.mxu0 0
      %4275 = vmatpush1.bf16.msra.mxu0 %v4218
      %4276 = vmatprep.subr.bf16.mxu0 0
      %4277 = vmatpush1.bf16.msra.mxu0 %v4217
      %4278 = vmatprep.subr.bf16.mxu0 0
      %4279 = vmatpush1.bf16.msra.mxu0 %v4216
      %4280 = vmatprep.subr.bf16.mxu0 0
      %4281 = vmatpush2.bf16.msra.mxu0 %v4231
      %4282 = vmatprep.subr.bf16.mxu0 0
      %4283 = vmatpush2.bf16.msra.mxu0 %v4230
      %4284 = vmatprep.subr.bf16.mxu0 0
      %4285 = vmatpush2.bf16.msra.mxu0 %v4229
      %4286 = vmatprep.subr.bf16.mxu0 0
      %4287 = vmatpush2.bf16.msra.mxu0 %v4228
      %4288 = vmatprep.subr.bf16.mxu0 0
      %4289 = vmatpush2.bf16.msra.mxu0 %v4227
      %4290 = vmatprep.subr.bf16.mxu0 0
      %4291 = vmatpush2.bf16.msra.mxu0 %v4226
      %4292 = vmatprep.subr.bf16.mxu0 0
      %4293 = vmatpush2.bf16.msra.mxu0 %v4225
      %4294 = vmatprep.subr.bf16.mxu0 0
      %4295 = vmatpush2.bf16.msra.mxu0 %v4224
      %4296 = vmatprep.mubr.bf16.mxu0 %v4090
      %4297 = vmatmul.mubr.bf16.gmra.mxu0 %v4058
      %v4298 = vpop.f32.mrf.mxu0
      %v4299 = vadd.f32 %v4142, %v4298
      %v4300 = vpop.f32.mrf.mxu0
      %v4301 = vpop.f32.mrf.mxu0
      %v4302 = vadd.f32 %v4142, %v4301
      %v4303 = vpop.f32.mrf.mxu0
      %4304 = vmatprep.mubr.bf16.mxu0 %v4093
      %4305 = vmatmul.mubr.bf16.gmra.mxu0 %v4061
      %v4306 = vpop.f32.mrf.mxu0
      %v4307 = vadd.f32 %v4142, %v4306
      %v4308 = vpop.f32.mrf.mxu0
      %v4309 = vpop.f32.mrf.mxu0
      %v4310 = vadd.f32 %v4142, %v4309
      %v4311 = vpop.f32.mrf.mxu0
      %4312 = vmatprep.mubr.bf16.mxu0 %v4096
      %4313 = vmatmul.mubr.bf16.gmra.mxu0 %v4064
      %v4314 = vpop.f32.mrf.mxu0
      %v4315 = vadd.f32 %v4142, %v4314
      %v4316 = vpop.f32.mrf.mxu0
      %v4317 = vpop.f32.mrf.mxu0
      %v4318 = vadd.f32 %v4142, %v4317
      %v4319 = vpop.f32.mrf.mxu0
      %4320 = vmatprep.mubr.bf16.mxu0 %v4099
      %4321 = vmatmul.mubr.bf16.gmra.mxu0 %v4067
      %v4322 = vpop.f32.mrf.mxu0
      %v4323 = vadd.f32 %v4142, %v4322
      %v4324 = vpop.f32.mrf.mxu0
      %v4325 = vpop.f32.mrf.mxu0
      %v4326 = vadd.f32 %v4142, %v4325
      %v4327 = vpop.f32.mrf.mxu0
      %4328 = vdwg.mxu0
      %4329 = vmatprep.subr.bf16.mxu0 0
      %4330 = vmatpush1.bf16.msra.mxu0 0
      %4331 = vmatprep.subr.bf16.mxu0 0
      %4332 = vmatpush1.bf16.msra.mxu0 0
      %4333 = vmatprep.subr.bf16.mxu0 0
      %4334 = vmatpush1.bf16.msra.mxu0 0
      %4335 = vmatprep.subr.bf16.mxu0 0
      %4336 = vmatpush1.bf16.msra.mxu0 0
      %4337 = vmatprep.subr.bf16.mxu0 0
      %4338 = vmatpush1.bf16.msra.mxu0 0
      %4339 = vmatprep.subr.bf16.mxu0 0
      %4340 = vmatpush1.bf16.msra.mxu0 0
      %4341 = vmatprep.subr.bf16.mxu0 0
      %4342 = vmatpush1.bf16.msra.mxu0 %v4233
      %4343 = vmatprep.subr.bf16.mxu0 0
      %4344 = vmatpush1.bf16.msra.mxu0 %v4232
      %4345 = vmatprep.subr.bf16.mxu0 0
      %4346 = vmatpush2.bf16.msra.mxu0 0
      %4347 = vmatprep.subr.bf16.mxu0 0
      %4348 = vmatpush2.bf16.msra.mxu0 0
      %4349 = vmatprep.subr.bf16.mxu0 0
      %4350 = vmatpush2.bf16.msra.mxu0 0
      %4351 = vmatprep.subr.bf16.mxu0 0
      %4352 = vmatpush2.bf16.msra.mxu0 0
      %4353 = vmatprep.subr.bf16.mxu0 0
      %4354 = vmatpush2.bf16.msra.mxu0 0
      %4355 = vmatprep.subr.bf16.mxu0 0
      %4356 = vmatpush2.bf16.msra.mxu0 0
      %4357 = vmatprep.subr.bf16.mxu0 0
      %4358 = vmatpush2.bf16.msra.mxu0 0
      %4359 = vmatprep.subr.bf16.mxu0 0
      %4360 = vmatpush2.bf16.msra.mxu0 0
      %4361 = vmatprep.mubr.bf16.mxu0 0
      %4362 = vmatmul.mubr.bf16.gmra.mxu0 %v4253
      %v4363 = vpop.f32.mrf.mxu0
      %v4364 = vadd.f32 %v4299, %v4363
      %v4365 = vpop.f32.mrf.mxu0
      %v4366 = vpop.f32.mrf.mxu0
      %v4367 = vadd.f32 %v4302, %v4366
      %v4368 = vpop.f32.mrf.mxu0
      %4369 = vmatprep.mubr.bf16.mxu0 0
      %4370 = vmatmul.mubr.bf16.gmra.mxu0 %v4256
      %v4371 = vpop.f32.mrf.mxu0
      %v4372 = vadd.f32 %v4307, %v4371
      %v4373 = vpop.f32.mrf.mxu0
      %v4374 = vpop.f32.mrf.mxu0
      %v4375 = vadd.f32 %v4310, %v4374
      %v4376 = vpop.f32.mrf.mxu0
      %4377 = vmatprep.mubr.bf16.mxu0 0
      %4378 = vmatmul.mubr.bf16.gmra.mxu0 %v4259
      %v4379 = vpop.f32.mrf.mxu0
      %v4380 = vadd.f32 %v4315, %v4379
      %v4381 = vpop.f32.mrf.mxu0
      %v4382 = vpop.f32.mrf.mxu0
      %v4383 = vadd.f32 %v4318, %v4382
      %v4384 = vpop.f32.mrf.mxu0
      %4385 = vmatprep.mubr.bf16.mxu0 0
      %4386 = vmatmul.mubr.bf16.gmra.mxu0 %v4262
      %v4387 = vpop.f32.mrf.mxu0
      %v4388 = vadd.f32 %v4323, %v4387
      %v4389 = vpop.f32.mrf.mxu0
      %v4390 = vpop.f32.mrf.mxu0
      %v4391 = vadd.f32 %v4326, %v4390
      %v4392 = vpop.f32.mrf.mxu0
      %4393 = vdwg.mxu0
      %v4394 = vlaneseq
      %v4395 = vshrl.u32 %v4394, 7
      %v4396 = vsub.s32 0, %v4395
      %v4397 = vrot.slane %v3826, %v4396
      %v4398 = vadd.f32 %v4364, %v4397
      %v4399 = vadd.f32 %v4367, %v4397
      %v4400 = vadd.f32 %v4372, %v4397
      %v4401 = vadd.f32 %v4375, %v4397
      %v4402 = vadd.f32 %v4380, %v4397
      %v4403 = vadd.f32 %v4383, %v4397
      %v4404 = vadd.f32 %v4388, %v4397
      %v4405 = vadd.f32 %v4391, %v4397
      %v4406 = vmax.f32 %v4398, 0.0
      %v4407 = vmax.f32 %v4399, 0.0
      %v4408 = vmax.f32 %v4400, 0.0
      %v4409 = vmax.f32 %v4401, 0.0
      %v4410 = vmax.f32 %v4402, 0.0
      %v4411 = vmax.f32 %v4403, 0.0
      %v4412 = vmax.f32 %v4404, 0.0
      %v4413 = vmax.f32 %v4405, 0.0
      %v4414 = vld [vmem:[%s14] sm:$0xf]
      %v4415 = vld [vmem:[%s14 + $0x4] sm:$0xf]
      %v4416 = vld [vmem:[%s14 + $0x8] sm:$0xf]
      %v4417 = vld [vmem:[%s14 + $0xc] sm:$0xf]
      %v4418 = vld [vmem:[%s14 + $0x10] sm:$0xf]
      %v4419 = vld [vmem:[%s14 + $0x14] sm:$0xf]
      %v4420 = vld [vmem:[%s14 + $0x18] sm:$0xf]
      %v4421 = vld [vmem:[%s14 + $0x1c] sm:$0xf]
      %v4422 = vld [vmem:[%s14 + $0x20] sm:$0xf]
      %v4423 = vld [vmem:[%s14 + $0x24] sm:$0xf]
      %v4424 = vld [vmem:[%s14 + $0x28] sm:$0xf]
      %v4425 = vld [vmem:[%s14 + $0x2c] sm:$0xf]
      %v4426 = vld [vmem:[%s14 + $0x30] sm:$0xf]
      %v4427 = vld [vmem:[%s14 + $0x34] sm:$0xf]
      %v4428 = vld [vmem:[%s14 + $0x38] sm:$0xf]
      %v4429 = vld [vmem:[%s14 + $0x3c] sm:$0xf]
      %v4430 = vld [vmem:[%s14 + $0x40] sm:$0xf]
      %v4431 = vld [vmem:[%s14 + $0x44] sm:$0xf]
      %v4432 = vld [vmem:[%s14 + $0x48] sm:$0xf]
      %v4433 = vld [vmem:[%s14 + $0x4c] sm:$0xf]
      %v4434 = vld [vmem:[%s14 + $0x50] sm:$0xf]
      %v4435 = vld [vmem:[%s14 + $0x54] sm:$0xf]
      %v4436 = vld [vmem:[%s14 + $0x58] sm:$0xf]
      %v4437 = vld [vmem:[%s14 + $0x5c] sm:$0xf]
      %v4438 = vld [vmem:[%s14 + $0x60] sm:$0xf]
      %v4439 = vld [vmem:[%s14 + $0x64] sm:$0xf]
      %v4440 = vld [vmem:[%s14 + $0x68] sm:$0xf]
      %v4441 = vld [vmem:[%s14 + $0x6c] sm:$0xf]
      %v4442 = vld [vmem:[%s14 + $0x70] sm:$0xf]
      %v4443 = vld [vmem:[%s14 + $0x74] sm:$0xf]
      %v4444 = vld [vmem:[%s14 + $0x78] sm:$0xf]
      %v4445 = vld [vmem:[%s14 + $0x7c] sm:$0xf]
      %v4446 = vpack.c.bf16 %v4407, %v4406
      %v4447 = vpack.c.bf16 %v4409, %v4408
      %v4448 = vpack.c.bf16 %v4411, %v4410
      %v4449 = vpack.c.bf16 %v4413, %v4412
      %4482 = vrot.lane.b32.xlu0 %v3671, 32
      %v4483 = vpop.permute.xlu0 %4482
      %4484 = vrot.lane.b32.xlu0 %v3672, 32
      %v4485 = vpop.permute.xlu0 %4484
      %4486 = vrot.lane.b32.xlu0 %v3673, 32
      %v4487 = vpop.permute.xlu0 %4486
      %4488 = vrot.lane.b32.xlu0 %v3674, 32
      %v4489 = vpop.permute.xlu0 %4488
      %4490 = vrot.lane.b32.xlu0 %v3675, 32
      %v4491 = vpop.permute.xlu0 %4490
      %4492 = vrot.lane.b32.xlu0 %v3676, 32
      %v4493 = vpop.permute.xlu0 %4492
      %4494 = vrot.lane.b32.xlu0 %v3677, 32
      %v4495 = vpop.permute.xlu0 %4494
      %4496 = vrot.lane.b32.xlu0 %v3678, 32
      %v4497 = vpop.permute.xlu0 %4496
      %4498 = vrot.lane.b32.xlu0 %v3679, 32
      %v4499 = vpop.permute.xlu0 %4498
      %4500 = vrot.lane.b32.xlu0 %v3680, 32
      %v4501 = vpop.permute.xlu0 %4500
      %4502 = vrot.lane.b32.xlu0 %v3681, 32
      %v4503 = vpop.permute.xlu0 %4502
      %4504 = vrot.lane.b32.xlu0 %v3682, 32
      %v4505 = vpop.permute.xlu0 %4504
      %4506 = vrot.lane.b32.xlu0 %v3683, 32
      %v4507 = vpop.permute.xlu0 %4506
      %4508 = vrot.lane.b32.xlu0 %v3684, 32
      %v4509 = vpop.permute.xlu0 %4508
      %4510 = vrot.lane.b32.xlu0 %v3685, 32
      %v4511 = vpop.permute.xlu0 %4510
      %4512 = vrot.lane.b32.xlu0 %v3686, 32
      %v4513 = vpop.permute.xlu0 %4512
      %4514 = vrot.lane.b32.xlu0 %v3687, 32
      %v4515 = vpop.permute.xlu0 %4514
      %4516 = vrot.lane.b32.xlu0 %v3688, 32
      %v4517 = vpop.permute.xlu0 %4516
      %4518 = vrot.lane.b32.xlu0 %v3689, 32
      %v4519 = vpop.permute.xlu0 %4518
      %4520 = vrot.lane.b32.xlu0 %v3690, 32
      %v4521 = vpop.permute.xlu0 %4520
      %4522 = vrot.lane.b32.xlu0 %v3691, 32
      %v4523 = vpop.permute.xlu0 %4522
      %4524 = vrot.lane.b32.xlu0 %v3692, 32
      %v4525 = vpop.permute.xlu0 %4524
      %4526 = vrot.lane.b32.xlu0 %v3693, 32
      %v4527 = vpop.permute.xlu0 %4526
      %4528 = vrot.lane.b32.xlu0 %v3694, 32
      %v4529 = vpop.permute.xlu0 %4528
      %4530 = vrot.lane.b32.xlu0 %v3695, 32
      %v4531 = vpop.permute.xlu0 %4530
      %4532 = vrot.lane.b32.xlu0 %v3696, 32
      %v4533 = vpop.permute.xlu0 %4532
      %4534 = vrot.lane.b32.xlu0 %v3697, 32
      %v4535 = vpop.permute.xlu0 %4534
      %4536 = vrot.lane.b32.xlu0 %v3698, 32
      %v4537 = vpop.permute.xlu0 %4536
      %4538 = vrot.lane.b32.xlu0 %v3699, 32
      %v4539 = vpop.permute.xlu0 %4538
      %4540 = vrot.lane.b32.xlu0 %v3700, 32
      %v4541 = vpop.permute.xlu0 %4540
      %4542 = vrot.lane.b32.xlu0 %v3701, 32
      %v4543 = vpop.permute.xlu0 %4542
      %4544 = vrot.lane.b32.xlu0 %v3702, 32
      %v4545 = vpop.permute.xlu0 %4544
      %v4578 = vsel %vm529, %v3671, %v4483
      %v4579 = vsel %vm529, %v3672, %v4485
      %v4580 = vsel %vm529, %v3673, %v4487
      %v4581 = vsel %vm529, %v3674, %v4489
      %v4582 = vsel %vm529, %v3675, %v4491
      %v4583 = vsel %vm529, %v3676, %v4493
      %v4584 = vsel %vm529, %v3677, %v4495
      %v4585 = vsel %vm529, %v3678, %v4497
      %v4586 = vsel %vm529, %v3679, %v4499
      %v4587 = vsel %vm529, %v3680, %v4501
      %v4588 = vsel %vm529, %v3681, %v4503
      %v4589 = vsel %vm529, %v3682, %v4505
      %v4590 = vsel %vm529, %v3683, %v4507
      %v4591 = vsel %vm529, %v3684, %v4509
      %v4592 = vsel %vm529, %v3685, %v4511
      %v4593 = vsel %vm529, %v3686, %v4513
      %v4594 = vsel %vm529, %v3687, %v4515
      %v4595 = vsel %vm529, %v3688, %v4517
      %v4596 = vsel %vm529, %v3689, %v4519
      %v4597 = vsel %vm529, %v3690, %v4521
      %v4598 = vsel %vm529, %v3691, %v4523
      %v4599 = vsel %vm529, %v3692, %v4525
      %v4600 = vsel %vm529, %v3693, %v4527
      %v4601 = vsel %vm529, %v3694, %v4529
      %v4602 = vsel %vm529, %v3695, %v4531
      %v4603 = vsel %vm529, %v3696, %v4533
      %v4604 = vsel %vm529, %v3697, %v4535
      %v4605 = vsel %vm529, %v3698, %v4537
      %v4606 = vsel %vm529, %v3699, %v4539
      %v4607 = vsel %vm529, %v3700, %v4541
      %v4608 = vsel %vm529, %v3701, %v4543
      %v4609 = vsel %vm529, %v3702, %v4545
      %v4642 = vunpack.c.l.b16 %v4414
      %v4643 = vunpack.c.l.b16 %v4415
      %v4644 = vunpack.c.l.b16 %v4416
      %v4645 = vunpack.c.l.b16 %v4417
      %v4646 = vunpack.c.l.b16 %v4418
      %v4647 = vunpack.c.l.b16 %v4419
      %v4648 = vunpack.c.l.b16 %v4420
      %v4649 = vunpack.c.l.b16 %v4421
      %v4650 = vunpack.c.l.b16 %v4422
      %v4651 = vunpack.c.l.b16 %v4423
      %v4652 = vunpack.c.l.b16 %v4424
      %v4653 = vunpack.c.l.b16 %v4425
      %v4654 = vunpack.c.l.b16 %v4426
      %v4655 = vunpack.c.l.b16 %v4427
      %v4656 = vunpack.c.l.b16 %v4428
      %v4657 = vunpack.c.l.b16 %v4429
      %v4658 = vunpack.c.l.b16 %v4430
      %v4659 = vunpack.c.l.b16 %v4431
      %v4660 = vunpack.c.l.b16 %v4432
      %v4661 = vunpack.c.l.b16 %v4433
      %v4662 = vunpack.c.l.b16 %v4434
      %v4663 = vunpack.c.l.b16 %v4435
      %v4664 = vunpack.c.l.b16 %v4436
      %v4665 = vunpack.c.l.b16 %v4437
      %v4666 = vunpack.c.l.b16 %v4438
      %v4667 = vunpack.c.l.b16 %v4439
      %v4668 = vunpack.c.l.b16 %v4440
      %v4669 = vunpack.c.l.b16 %v4441
      %v4670 = vunpack.c.l.b16 %v4442
      %v4671 = vunpack.c.l.b16 %v4443
      %v4672 = vunpack.c.l.b16 %v4444
      %v4673 = vunpack.c.l.b16 %v4445
      %v4674 = vpack.c.b16 %v4643, %v4642
      %v4675 = vpack.c.b16 %v4645, %v4644
      %v4676 = vpack.c.b16 %v4647, %v4646
      %v4677 = vpack.c.b16 %v4649, %v4648
      %v4678 = vpack.c.b16 %v4651, %v4650
      %v4679 = vpack.c.b16 %v4653, %v4652
      %v4680 = vpack.c.b16 %v4655, %v4654
      %v4681 = vpack.c.b16 %v4657, %v4656
      %v4682 = vpack.c.b16 %v4659, %v4658
      %v4683 = vpack.c.b16 %v4661, %v4660
      %v4684 = vpack.c.b16 %v4663, %v4662
      %v4685 = vpack.c.b16 %v4665, %v4664
      %v4686 = vpack.c.b16 %v4667, %v4666
      %v4687 = vpack.c.b16 %v4669, %v4668
      %v4688 = vpack.c.b16 %v4671, %v4670
      %v4689 = vpack.c.b16 %v4673, %v4672
      %v4691 = vsel %vm2940, %v4674, 0
      %v4694 = vsel %vm2940, %v4675, 0
      %v4697 = vsel %vm2940, %v4676, 0
      %v4700 = vsel %vm2940, %v4677, 0
      %v4703 = vsel %vm2940, %v4678, 0
      %v4706 = vsel %vm2940, %v4679, 0
      %v4709 = vsel %vm2940, %v4680, 0
      %v4712 = vsel %vm2940, %v4681, 0
      %v4715 = vsel %vm2940, %v4682, 0
      %v4718 = vsel %vm2940, %v4683, 0
      %v4721 = vsel %vm2940, %v4684, 0
      %v4724 = vsel %vm2940, %v4685, 0
      %v4727 = vsel %vm2940, %v4686, 0
      %v4730 = vsel %vm2940, %v4687, 0
      %v4733 = vsel %vm2940, %v4688, 0
      %v4736 = vsel %vm2940, %v4689, 0
      %4738 = vmatprep.subr.bf16.mxu0 0
      %4739 = vmatpush1.bf16.msra.mxu0 0
      %4740 = vmatprep.subr.bf16.mxu0 0
      %4741 = vmatpush1.bf16.msra.mxu0 0
      %4742 = vmatprep.subr.bf16.mxu0 0
      %4743 = vmatpush1.bf16.msra.mxu0 0
      %4744 = vmatprep.subr.bf16.mxu0 0
      %4745 = vmatpush1.bf16.msra.mxu0 0
      %4746 = vmatprep.subr.bf16.mxu0 0
      %4747 = vmatpush1.bf16.msra.mxu0 %v4449
      %4748 = vmatprep.subr.bf16.mxu0 0
      %4749 = vmatpush1.bf16.msra.mxu0 %v4448
      %4750 = vmatprep.subr.bf16.mxu0 0
      %4751 = vmatpush1.bf16.msra.mxu0 %v4447
      %4752 = vmatprep.subr.bf16.mxu0 0
      %4753 = vmatpush1.bf16.msra.mxu0 %v4446
      %4754 = vmatprep.subr.bf16.mxu0 0
      %4755 = vmatpush2.bf16.msra.mxu0 0
      %4756 = vmatprep.subr.bf16.mxu0 0
      %4757 = vmatpush2.bf16.msra.mxu0 0
      %4758 = vmatprep.subr.bf16.mxu0 0
      %4759 = vmatpush2.bf16.msra.mxu0 0
      %4760 = vmatprep.subr.bf16.mxu0 0
      %4761 = vmatpush2.bf16.msra.mxu0 0
      %4762 = vmatprep.subr.bf16.mxu0 0
      %4763 = vmatpush2.bf16.msra.mxu0 0
      %4764 = vmatprep.subr.bf16.mxu0 0
      %4765 = vmatpush2.bf16.msra.mxu0 0
      %4766 = vmatprep.subr.bf16.mxu0 0
      %4767 = vmatpush2.bf16.msra.mxu0 0
      %4768 = vmatprep.subr.bf16.mxu0 0
      %4769 = vmatpush2.bf16.msra.mxu0 0
      %4770 = vmatprep.mubr.bf16.mxu0 0
      %4771 = vmatmul.mubr.bf16.gmra.mxu0 %v4691
      %v4772 = vpop.f32.mrf.mxu0
      %v4773 = vadd.f32 %v4578, %v4772
      %v4774 = vpop.f32.mrf.mxu0
      %v4775 = vpop.f32.mrf.mxu0
      %v4776 = vadd.f32 %v4579, %v4775
      %v4777 = vpop.f32.mrf.mxu0
      %4778 = vmatprep.mubr.bf16.mxu0 0
      %4779 = vmatmul.mubr.bf16.gmra.mxu0 %v4694
      %v4780 = vpop.f32.mrf.mxu0
      %v4781 = vadd.f32 %v4580, %v4780
      %v4782 = vpop.f32.mrf.mxu0
      %v4783 = vpop.f32.mrf.mxu0
      %v4784 = vadd.f32 %v4581, %v4783
      %v4785 = vpop.f32.mrf.mxu0
      %4786 = vmatprep.mubr.bf16.mxu0 0
      %4787 = vmatmul.mubr.bf16.gmra.mxu0 %v4697
      %v4788 = vpop.f32.mrf.mxu0
      %v4789 = vadd.f32 %v4582, %v4788
      %v4790 = vpop.f32.mrf.mxu0
      %v4791 = vpop.f32.mrf.mxu0
      %v4792 = vadd.f32 %v4583, %v4791
      %v4793 = vpop.f32.mrf.mxu0
      %4794 = vmatprep.mubr.bf16.mxu0 0
      %4795 = vmatmul.mubr.bf16.gmra.mxu0 %v4700
      %v4796 = vpop.f32.mrf.mxu0
      %v4797 = vadd.f32 %v4584, %v4796
      %v4798 = vpop.f32.mrf.mxu0
      %v4799 = vpop.f32.mrf.mxu0
      %v4800 = vadd.f32 %v4585, %v4799
      %v4801 = vpop.f32.mrf.mxu0
      %4802 = vmatprep.mubr.bf16.mxu0 0
      %4803 = vmatmul.mubr.bf16.gmra.mxu0 %v4703
      %v4804 = vpop.f32.mrf.mxu0
      %v4805 = vadd.f32 %v4586, %v4804
      %v4806 = vpop.f32.mrf.mxu0
      %v4807 = vpop.f32.mrf.mxu0
      %v4808 = vadd.f32 %v4587, %v4807
      %v4809 = vpop.f32.mrf.mxu0
      %4810 = vmatprep.mubr.bf16.mxu0 0
      %4811 = vmatmul.mubr.bf16.gmra.mxu0 %v4706
      %v4812 = vpop.f32.mrf.mxu0
      %v4813 = vadd.f32 %v4588, %v4812
      %v4814 = vpop.f32.mrf.mxu0
      %v4815 = vpop.f32.mrf.mxu0
      %v4816 = vadd.f32 %v4589, %v4815
      %v4817 = vpop.f32.mrf.mxu0
      %4818 = vmatprep.mubr.bf16.mxu0 0
      %4819 = vmatmul.mubr.bf16.gmra.mxu0 %v4709
      %v4820 = vpop.f32.mrf.mxu0
      %v4821 = vadd.f32 %v4590, %v4820
      %v4822 = vpop.f32.mrf.mxu0
      %v4823 = vpop.f32.mrf.mxu0
      %v4824 = vadd.f32 %v4591, %v4823
      %v4825 = vpop.f32.mrf.mxu0
      %4826 = vmatprep.mubr.bf16.mxu0 0
      %4827 = vmatmul.mubr.bf16.gmra.mxu0 %v4712
      %v4828 = vpop.f32.mrf.mxu0
      %v4829 = vadd.f32 %v4592, %v4828
      %v4830 = vpop.f32.mrf.mxu0
      %v4831 = vpop.f32.mrf.mxu0
      %v4832 = vadd.f32 %v4593, %v4831
      %v4833 = vpop.f32.mrf.mxu0
      %4834 = vmatprep.mubr.bf16.mxu0 0
      %4835 = vmatmul.mubr.bf16.gmra.mxu0 %v4715
      %v4836 = vpop.f32.mrf.mxu0
      %v4837 = vadd.f32 %v4594, %v4836
      %v4838 = vpop.f32.mrf.mxu0
      %v4839 = vpop.f32.mrf.mxu0
      %v4840 = vadd.f32 %v4595, %v4839
      %v4841 = vpop.f32.mrf.mxu0
      %4842 = vmatprep.mubr.bf16.mxu0 0
      %4843 = vmatmul.mubr.bf16.gmra.mxu0 %v4718
      %v4844 = vpop.f32.mrf.mxu0
      %v4845 = vadd.f32 %v4596, %v4844
      %v4846 = vpop.f32.mrf.mxu0
      %v4847 = vpop.f32.mrf.mxu0
      %v4848 = vadd.f32 %v4597, %v4847
      %v4849 = vpop.f32.mrf.mxu0
      %4850 = vmatprep.mubr.bf16.mxu0 0
      %4851 = vmatmul.mubr.bf16.gmra.mxu0 %v4721
      %v4852 = vpop.f32.mrf.mxu0
      %v4853 = vadd.f32 %v4598, %v4852
      %v4854 = vpop.f32.mrf.mxu0
      %v4855 = vpop.f32.mrf.mxu0
      %v4856 = vadd.f32 %v4599, %v4855
      %v4857 = vpop.f32.mrf.mxu0
      %4858 = vmatprep.mubr.bf16.mxu0 0
      %4859 = vmatmul.mubr.bf16.gmra.mxu0 %v4724
      %v4860 = vpop.f32.mrf.mxu0
      %v4861 = vadd.f32 %v4600, %v4860
      %v4862 = vpop.f32.mrf.mxu0
      %v4863 = vpop.f32.mrf.mxu0
      %v4864 = vadd.f32 %v4601, %v4863
      %v4865 = vpop.f32.mrf.mxu0
      %4866 = vmatprep.mubr.bf16.mxu0 0
      %4867 = vmatmul.mubr.bf16.gmra.mxu0 %v4727
      %v4868 = vpop.f32.mrf.mxu0
      %v4869 = vadd.f32 %v4602, %v4868
      %v4870 = vpop.f32.mrf.mxu0
      %v4871 = vpop.f32.mrf.mxu0
      %v4872 = vadd.f32 %v4603, %v4871
      %v4873 = vpop.f32.mrf.mxu0
      %4874 = vmatprep.mubr.bf16.mxu0 0
      %4875 = vmatmul.mubr.bf16.gmra.mxu0 %v4730
      %v4876 = vpop.f32.mrf.mxu0
      %v4877 = vadd.f32 %v4604, %v4876
      %v4878 = vpop.f32.mrf.mxu0
      %v4879 = vpop.f32.mrf.mxu0
      %v4880 = vadd.f32 %v4605, %v4879
      %v4881 = vpop.f32.mrf.mxu0
      %4882 = vmatprep.mubr.bf16.mxu0 0
      %4883 = vmatmul.mubr.bf16.gmra.mxu0 %v4733
      %v4884 = vpop.f32.mrf.mxu0
      %v4885 = vadd.f32 %v4606, %v4884
      %v4886 = vpop.f32.mrf.mxu0
      %v4887 = vpop.f32.mrf.mxu0
      %v4888 = vadd.f32 %v4607, %v4887
      %v4889 = vpop.f32.mrf.mxu0
      %4890 = vmatprep.mubr.bf16.mxu0 0
      %4891 = vmatmul.mubr.bf16.gmra.mxu0 %v4736
      %v4892 = vpop.f32.mrf.mxu0
      %v4893 = vadd.f32 %v4608, %v4892
      %v4894 = vpop.f32.mrf.mxu0
      %v4895 = vpop.f32.mrf.mxu0
      %v4896 = vadd.f32 %v4609, %v4895
      %v4897 = vpop.f32.mrf.mxu0
      %4898 = vdwg.mxu0
      %4899 = vst.msk [vmem:[#allocation5] sm:$0xff] %vm2940, 0.0
      %4900 = vst.msk [vmem:[#allocation5 + $0x8] sm:$0xff] %vm2940, 0.0
      %vm4901 = vcmask 517120
      %4902 = vst.msk [vmem:[#allocation5 + $0x10] sm:$0x3] %vm4901, 0.0
      %4903 = vst.msk [vmem:[#allocation5 + $0x18] sm:$0xff] %vm2940, 0.0
      %4904 = vst.msk [vmem:[#allocation5 + $0x20] sm:$0xff] %vm2940, 0.0
      %4905 = vst.msk [vmem:[#allocation5 + $0x28] sm:$0x3] %vm4901, 0.0
      %4906 = vst.msk [vmem:[#allocation5 + $0x30] sm:$0xff] %vm2940, 0.0
      %4907 = vst.msk [vmem:[#allocation5 + $0x38] sm:$0xff] %vm2940, 0.0
      %4908 = vst.msk [vmem:[#allocation5 + $0x40] sm:$0x3] %vm4901, 0.0
      %4909 = vst.msk [vmem:[#allocation5 + $0x48] sm:$0xff] %vm2940, 0.0
      %4910 = vst.msk [vmem:[#allocation5 + $0x50] sm:$0xff] %vm2940, 0.0
      %4911 = vst.msk [vmem:[#allocation5 + $0x58] sm:$0x3] %vm4901, 0.0
      %4912 = vst.msk [vmem:[#allocation5 + $0x60] sm:$0xff] %vm2940, 0.0
      %4913 = vst.msk [vmem:[#allocation5 + $0x68] sm:$0xff] %vm2940, 0.0
      %4914 = vst.msk [vmem:[#allocation5 + $0x70] sm:$0x3] %vm4901, 0.0
      %4915 = vst.msk [vmem:[#allocation5 + $0x78] sm:$0xff] %vm2940, 0.0
      %4916 = vst.msk [vmem:[#allocation5 + $0x80] sm:$0xff] %vm2940, 0.0
      %4917 = vst.msk [vmem:[#allocation5 + $0x88] sm:$0x3] %vm4901, 0.0
      %4918 = vst.msk [vmem:[#allocation5 + $0x90] sm:$0xff] %vm2940, 0.0
      %4919 = vst.msk [vmem:[#allocation5 + $0x98] sm:$0xff] %vm2940, 0.0
      %4920 = vst.msk [vmem:[#allocation5 + $0xa0] sm:$0x3] %vm4901, 0.0
      %4921 = vst.msk [vmem:[#allocation5 + $0xa8] sm:$0xff] %vm2940, 0.0
      %4922 = vst.msk [vmem:[#allocation5 + $0xb0] sm:$0xff] %vm2940, 0.0
      %4923 = vst.msk [vmem:[#allocation5 + $0xb8] sm:$0x3] %vm4901, 0.0
      %4924 = vst.msk [vmem:[#allocation5 + $0xc0] sm:$0xff] %vm2940, 0.0
      %4925 = vst.msk [vmem:[#allocation5 + $0xc8] sm:$0xff] %vm2940, 0.0
      %4926 = vst.msk [vmem:[#allocation5 + $0xd0] sm:$0x3] %vm4901, 0.0
      %4927 = vst.msk [vmem:[#allocation5 + $0xd8] sm:$0xff] %vm2940, 0.0
      %4928 = vst.msk [vmem:[#allocation5 + $0xe0] sm:$0xff] %vm2940, 0.0
      %4929 = vst.msk [vmem:[#allocation5 + $0xe8] sm:$0x3] %vm4901, 0.0
      %4930 = vst.msk [vmem:[#allocation5 + $0xf0] sm:$0xff] %vm2940, 0.0
      %4931 = vst.msk [vmem:[#allocation5 + $0xf8] sm:$0xff] %vm2940, 0.0
      %4932 = vst.msk [vmem:[#allocation5 + $0x100] sm:$0x3] %vm4901, 0.0
      %4933 = vst.msk [vmem:[#allocation5 + $0x108] sm:$0xff] %vm2940, 0.0
      %4934 = vst.msk [vmem:[#allocation5 + $0x110] sm:$0xff] %vm2940, 0.0
      %4935 = vst.msk [vmem:[#allocation5 + $0x118] sm:$0x3] %vm4901, 0.0
      %4936 = vst.msk [vmem:[#allocation5 + $0x120] sm:$0xff] %vm2940, 0.0
      %4937 = vst.msk [vmem:[#allocation5 + $0x128] sm:$0xff] %vm2940, 0.0
      %4938 = vst.msk [vmem:[#allocation5 + $0x130] sm:$0x3] %vm4901, 0.0
      %4939 = vst.msk [vmem:[#allocation5 + $0x138] sm:$0xff] %vm2940, 0.0
      %4940 = vst.msk [vmem:[#allocation5 + $0x140] sm:$0xff] %vm2940, 0.0
      %4941 = vst.msk [vmem:[#allocation5 + $0x148] sm:$0x3] %vm4901, 0.0
      %4942 = vst.msk [vmem:[#allocation5 + $0x150] sm:$0xff] %vm2940, 0.0
      %4943 = vst.msk [vmem:[#allocation5 + $0x158] sm:$0xff] %vm2940, 0.0
      %4944 = vst.msk [vmem:[#allocation5 + $0x160] sm:$0x3] %vm4901, 0.0
      %4945 = vst.msk [vmem:[#allocation5 + $0x168] sm:$0xff] %vm2940, 0.0
      %4946 = vst.msk [vmem:[#allocation5 + $0x170] sm:$0xff] %vm2940, 0.0
      %4947 = vst.msk [vmem:[#allocation5 + $0x178] sm:$0x3] %vm4901, 0.0
      %4948 = vst.msk [vmem:[#allocation5 + $0x180] sm:$0xff] %vm2940, 0.0
      %4949 = vst.msk [vmem:[#allocation5 + $0x188] sm:$0xff] %vm2940, 0.0
      %4950 = vst.msk [vmem:[#allocation5 + $0x190] sm:$0x3] %vm4901, 0.0
      %4951 = vst.msk [vmem:[#allocation5 + $0x198] sm:$0xff] %vm2940, 0.0
      %4952 = vst.msk [vmem:[#allocation5 + $0x1a0] sm:$0xff] %vm2940, 0.0
      %4953 = vst.msk [vmem:[#allocation5 + $0x1a8] sm:$0x3] %vm4901, 0.0
      %s4954 = scalar_lea.vmem [#allocation5], 24
      %4955 = vst.msk [vmem:[%s4954 + $0x1] sm:$0xff] %vm2940, %v4773
      %4956 = vst.msk [vmem:[%s4954 + $0x9] sm:$0xff] %vm2940, %v4776
      %4957 = vst.msk [vmem:[%s4954 + $0x19] sm:$0xff] %vm2940, %v4781
      %4958 = vst.msk [vmem:[%s4954 + $0x21] sm:$0xff] %vm2940, %v4784
      %4959 = vst.msk [vmem:[%s4954 + $0x31] sm:$0xff] %vm2940, %v4789
      %4960 = vst.msk [vmem:[%s4954 + $0x39] sm:$0xff] %vm2940, %v4792
      %4961 = vst.msk [vmem:[%s4954 + $0x49] sm:$0xff] %vm2940, %v4797
      %4962 = vst.msk [vmem:[%s4954 + $0x51] sm:$0xff] %vm2940, %v4800
      %4963 = vst.msk [vmem:[%s4954 + $0x61] sm:$0xff] %vm2940, %v4805
      %4964 = vst.msk [vmem:[%s4954 + $0x69] sm:$0xff] %vm2940, %v4808
      %4965 = vst.msk [vmem:[%s4954 + $0x79] sm:$0xff] %vm2940, %v4813
      %4966 = vst.msk [vmem:[%s4954 + $0x81] sm:$0xff] %vm2940, %v4816
      %4967 = vst.msk [vmem:[%s4954 + $0x91] sm:$0xff] %vm2940, %v4821
      %4968 = vst.msk [vmem:[%s4954 + $0x99] sm:$0xff] %vm2940, %v4824
      %4969 = vst.msk [vmem:[%s4954 + $0xa9] sm:$0xff] %vm2940, %v4829
      %4970 = vst.msk [vmem:[%s4954 + $0xb1] sm:$0xff] %vm2940, %v4832
      %4971 = vst.msk [vmem:[%s4954 + $0xc1] sm:$0xff] %vm2940, %v4837
      %4972 = vst.msk [vmem:[%s4954 + $0xc9] sm:$0xff] %vm2940, %v4840
      %4973 = vst.msk [vmem:[%s4954 + $0xd9] sm:$0xff] %vm2940, %v4845
      %4974 = vst.msk [vmem:[%s4954 + $0xe1] sm:$0xff] %vm2940, %v4848
      %4975 = vst.msk [vmem:[%s4954 + $0xf1] sm:$0xff] %vm2940, %v4853
      %4976 = vst.msk [vmem:[%s4954 + $0xf9] sm:$0xff] %vm2940, %v4856
      %4977 = vst.msk [vmem:[%s4954 + $0x109] sm:$0xff] %vm2940, %v4861
      %4978 = vst.msk [vmem:[%s4954 + $0x111] sm:$0xff] %vm2940, %v4864
      %4979 = vst.msk [vmem:[%s4954 + $0x121] sm:$0xff] %vm2940, %v4869
      %4980 = vst.msk [vmem:[%s4954 + $0x129] sm:$0xff] %vm2940, %v4872
      %4981 = vst.msk [vmem:[%s4954 + $0x139] sm:$0xff] %vm2940, %v4877
      %4982 = vst.msk [vmem:[%s4954 + $0x141] sm:$0xff] %vm2940, %v4880
      %4983 = vst.msk [vmem:[%s4954 + $0x151] sm:$0xff] %vm2940, %v4885
      %4984 = vst.msk [vmem:[%s4954 + $0x159] sm:$0xff] %vm2940, %v4888
      %4985 = vst.msk [vmem:[%s4954 + $0x169] sm:$0xff] %vm2940, %v4893
      %4986 = vst.msk [vmem:[%s4954 + $0x171] sm:$0xff] %vm2940, %v4896
      %v4987 = vld [vmem:[#allocation5] sm:$0xff]
      %v4988 = vld [vmem:[#allocation5 + $0x8] sm:$0xff]
      %v4989 = vld [vmem:[#allocation5 + $0x18] sm:$0xff]
      %v4990 = vld [vmem:[#allocation5 + $0x20] sm:$0xff]
      %v4991 = vld [vmem:[#allocation5 + $0x30] sm:$0xff]
      %v4992 = vld [vmem:[#allocation5 + $0x38] sm:$0xff]
      %v4993 = vld [vmem:[#allocation5 + $0x48] sm:$0xff]
      %v4994 = vld [vmem:[#allocation5 + $0x50] sm:$0xff]
      %v4995 = vld [vmem:[#allocation5 + $0x60] sm:$0xff]
      %v4996 = vld [vmem:[#allocation5 + $0x68] sm:$0xff]
      %v4997 = vld [vmem:[#allocation5 + $0x78] sm:$0xff]
      %v4998 = vld [vmem:[#allocation5 + $0x80] sm:$0xff]
      %v4999 = vld [vmem:[#allocation5 + $0x90] sm:$0xff]
      %v5000 = vld [vmem:[#allocation5 + $0x98] sm:$0xff]
      %v5001 = vld [vmem:[#allocation5 + $0xa8] sm:$0xff]
      %v5002 = vld [vmem:[#allocation5 + $0xb0] sm:$0xff]
      %v5003 = vld [vmem:[#allocation5 + $0xc0] sm:$0xff]
      %v5004 = vld [vmem:[#allocation5 + $0xc8] sm:$0xff]
      %v5005 = vld [vmem:[#allocation5 + $0xd8] sm:$0xff]
      %v5006 = vld [vmem:[#allocation5 + $0xe0] sm:$0xff]
      %v5007 = vld [vmem:[#allocation5 + $0xf0] sm:$0xff]
      %v5008 = vld [vmem:[#allocation5 + $0xf8] sm:$0xff]
      %v5009 = vld [vmem:[#allocation5 + $0x108] sm:$0xff]
      %v5010 = vld [vmem:[#allocation5 + $0x110] sm:$0xff]
      %v5011 = vld [vmem:[#allocation5 + $0x120] sm:$0xff]
      %v5012 = vld [vmem:[#allocation5 + $0x128] sm:$0xff]
      %v5013 = vld [vmem:[#allocation5 + $0x138] sm:$0xff]
      %v5014 = vld [vmem:[#allocation5 + $0x140] sm:$0xff]
      %v5015 = vld [vmem:[#allocation5 + $0x150] sm:$0xff]
      %v5016 = vld [vmem:[#allocation5 + $0x158] sm:$0xff]
      %v5017 = vld [vmem:[#allocation5 + $0x168] sm:$0xff]
      %v5018 = vld [vmem:[#allocation5 + $0x170] sm:$0xff]
      %v5019 = vpack.c.bf16 %v4988, %v4987
      %v5020 = vpack.c.bf16 %v4990, %v4989
      %v5021 = vpack.c.bf16 %v4992, %v4991
      %v5022 = vpack.c.bf16 %v4994, %v4993
      %v5023 = vpack.c.bf16 %v4996, %v4995
      %v5024 = vpack.c.bf16 %v4998, %v4997
      %v5025 = vpack.c.bf16 %v5000, %v4999
      %v5026 = vpack.c.bf16 %v5002, %v5001
      %v5027 = vpack.c.bf16 %v5004, %v5003
      %v5028 = vpack.c.bf16 %v5006, %v5005
      %v5029 = vpack.c.bf16 %v5008, %v5007
      %v5030 = vpack.c.bf16 %v5010, %v5009
      %v5031 = vpack.c.bf16 %v5012, %v5011
      %v5032 = vpack.c.bf16 %v5014, %v5013
      %v5033 = vpack.c.bf16 %v5016, %v5015
      %v5034 = vpack.c.bf16 %v5018, %v5017
      %v5035 = vld [vmem:[#allocation5 + $0x1] sm:$0xff]
      %v5036 = vld [vmem:[#allocation5 + $0x9] sm:$0xff]
      %v5037 = vld [vmem:[#allocation5 + $0x19] sm:$0xff]
      %v5038 = vld [vmem:[#allocation5 + $0x21] sm:$0xff]
      %v5039 = vld [vmem:[#allocation5 + $0x31] sm:$0xff]
      %v5040 = vld [vmem:[#allocation5 + $0x39] sm:$0xff]
      %v5041 = vld [vmem:[#allocation5 + $0x49] sm:$0xff]
      %v5042 = vld [vmem:[#allocation5 + $0x51] sm:$0xff]
      %v5043 = vld [vmem:[#allocation5 + $0x61] sm:$0xff]
      %v5044 = vld [vmem:[#allocation5 + $0x69] sm:$0xff]
      %v5045 = vld [vmem:[#allocation5 + $0x79] sm:$0xff]
      %v5046 = vld [vmem:[#allocation5 + $0x81] sm:$0xff]
      %v5047 = vld [vmem:[#allocation5 + $0x91] sm:$0xff]
      %v5048 = vld [vmem:[#allocation5 + $0x99] sm:$0xff]
      %v5049 = vld [vmem:[#allocation5 + $0xa9] sm:$0xff]
      %v5050 = vld [vmem:[#allocation5 + $0xb1] sm:$0xff]
      %v5051 = vld [vmem:[#allocation5 + $0xc1] sm:$0xff]
      %v5052 = vld [vmem:[#allocation5 + $0xc9] sm:$0xff]
      %v5053 = vld [vmem:[#allocation5 + $0xd9] sm:$0xff]
      %v5054 = vld [vmem:[#allocation5 + $0xe1] sm:$0xff]
      %v5055 = vld [vmem:[#allocation5 + $0xf1] sm:$0xff]
      %v5056 = vld [vmem:[#allocation5 + $0xf9] sm:$0xff]
      %v5057 = vld [vmem:[#allocation5 + $0x109] sm:$0xff]
      %v5058 = vld [vmem:[#allocation5 + $0x111] sm:$0xff]
      %v5059 = vld [vmem:[#allocation5 + $0x121] sm:$0xff]
      %v5060 = vld [vmem:[#allocation5 + $0x129] sm:$0xff]
      %v5061 = vld [vmem:[#allocation5 + $0x139] sm:$0xff]
      %v5062 = vld [vmem:[#allocation5 + $0x141] sm:$0xff]
      %v5063 = vld [vmem:[#allocation5 + $0x151] sm:$0xff]
      %v5064 = vld [vmem:[#allocation5 + $0x159] sm:$0xff]
      %v5065 = vld [vmem:[#allocation5 + $0x169] sm:$0xff]
      %v5066 = vld [vmem:[#allocation5 + $0x171] sm:$0xff]
      %v5067 = vpack.c.bf16 %v5036, %v5035
      %v5068 = vpack.c.bf16 %v5038, %v5037
      %v5069 = vpack.c.bf16 %v5040, %v5039
      %v5070 = vpack.c.bf16 %v5042, %v5041
      %v5071 = vpack.c.bf16 %v5044, %v5043
      %v5072 = vpack.c.bf16 %v5046, %v5045
      %v5073 = vpack.c.bf16 %v5048, %v5047
      %v5074 = vpack.c.bf16 %v5050, %v5049
      %v5075 = vpack.c.bf16 %v5052, %v5051
      %v5076 = vpack.c.bf16 %v5054, %v5053
      %v5077 = vpack.c.bf16 %v5056, %v5055
      %v5078 = vpack.c.bf16 %v5058, %v5057
      %v5079 = vpack.c.bf16 %v5060, %v5059
      %v5080 = vpack.c.bf16 %v5062, %v5061
      %v5081 = vpack.c.bf16 %v5064, %v5063
      %v5082 = vpack.c.bf16 %v5066, %v5065
      %v5083 = vld [vmem:[#allocation5 + $0x2] sm:$0xff]
      %v5084 = vld [vmem:[#allocation5 + $0xa] sm:$0xff]
      %v5085 = vld [vmem:[#allocation5 + $0x1a] sm:$0xff]
      %v5086 = vld [vmem:[#allocation5 + $0x22] sm:$0xff]
      %v5087 = vld [vmem:[#allocation5 + $0x32] sm:$0xff]
      %v5088 = vld [vmem:[#allocation5 + $0x3a] sm:$0xff]
      %v5089 = vld [vmem:[#allocation5 + $0x4a] sm:$0xff]
      %v5090 = vld [vmem:[#allocation5 + $0x52] sm:$0xff]
      %v5091 = vld [vmem:[#allocation5 + $0x62] sm:$0xff]
      %v5092 = vld [vmem:[#allocation5 + $0x6a] sm:$0xff]
      %v5093 = vld [vmem:[#allocation5 + $0x7a] sm:$0xff]
      %v5094 = vld [vmem:[#allocation5 + $0x82] sm:$0xff]
      %v5095 = vld [vmem:[#allocation5 + $0x92] sm:$0xff]
      %v5096 = vld [vmem:[#allocation5 + $0x9a] sm:$0xff]
      %v5097 = vld [vmem:[#allocation5 + $0xaa] sm:$0xff]
      %v5098 = vld [vmem:[#allocation5 + $0xb2] sm:$0xff]
      %v5099 = vld [vmem:[#allocation5 + $0xc2] sm:$0xff]
      %v5100 = vld [vmem:[#allocation5 + $0xca] sm:$0xff]
      %v5101 = vld [vmem:[#allocation5 + $0xda] sm:$0xff]
      %v5102 = vld [vmem:[#allocation5 + $0xe2] sm:$0xff]
      %v5103 = vld [vmem:[#allocation5 + $0xf2] sm:$0xff]
      %v5104 = vld [vmem:[#allocation5 + $0xfa] sm:$0xff]
      %v5105 = vld [vmem:[#allocation5 + $0x10a] sm:$0xff]
      %v5106 = vld [vmem:[#allocation5 + $0x112] sm:$0xff]
      %v5107 = vld [vmem:[#allocation5 + $0x122] sm:$0xff]
      %v5108 = vld [vmem:[#allocation5 + $0x12a] sm:$0xff]
      %v5109 = vld [vmem:[#allocation5 + $0x13a] sm:$0xff]
      %v5110 = vld [vmem:[#allocation5 + $0x142] sm:$0xff]
      %v5111 = vld [vmem:[#allocation5 + $0x152] sm:$0xff]
      %v5112 = vld [vmem:[#allocation5 + $0x15a] sm:$0xff]
      %v5113 = vld [vmem:[#allocation5 + $0x16a] sm:$0xff]
      %v5114 = vld [vmem:[#allocation5 + $0x172] sm:$0xff]
      %v5115 = vpack.c.bf16 %v5084, %v5083
      %v5116 = vpack.c.bf16 %v5086, %v5085
      %v5117 = vpack.c.bf16 %v5088, %v5087
      %v5118 = vpack.c.bf16 %v5090, %v5089
      %v5119 = vpack.c.bf16 %v5092, %v5091
      %v5120 = vpack.c.bf16 %v5094, %v5093
      %v5121 = vpack.c.bf16 %v5096, %v5095
      %v5122 = vpack.c.bf16 %v5098, %v5097
      %v5123 = vpack.c.bf16 %v5100, %v5099
      %v5124 = vpack.c.bf16 %v5102, %v5101
      %v5125 = vpack.c.bf16 %v5104, %v5103
      %v5126 = vpack.c.bf16 %v5106, %v5105
      %v5127 = vpack.c.bf16 %v5108, %v5107
      %v5128 = vpack.c.bf16 %v5110, %v5109
      %v5129 = vpack.c.bf16 %v5112, %v5111
      %v5130 = vpack.c.bf16 %v5114, %v5113
      %v5131 = vld [vmem:[%s4954] sm:$0xff]
      %v5132 = vld [vmem:[%s4954 + $0x8] sm:$0xff]
      %v5133 = vld [vmem:[%s4954 + $0x18] sm:$0xff]
      %v5134 = vld [vmem:[%s4954 + $0x20] sm:$0xff]
      %v5135 = vld [vmem:[%s4954 + $0x30] sm:$0xff]
      %v5136 = vld [vmem:[%s4954 + $0x38] sm:$0xff]
      %v5137 = vld [vmem:[%s4954 + $0x48] sm:$0xff]
      %v5138 = vld [vmem:[%s4954 + $0x50] sm:$0xff]
      %v5139 = vld [vmem:[%s4954 + $0x60] sm:$0xff]
      %v5140 = vld [vmem:[%s4954 + $0x68] sm:$0xff]
      %v5141 = vld [vmem:[%s4954 + $0x78] sm:$0xff]
      %v5142 = vld [vmem:[%s4954 + $0x80] sm:$0xff]
      %v5143 = vld [vmem:[%s4954 + $0x90] sm:$0xff]
      %v5144 = vld [vmem:[%s4954 + $0x98] sm:$0xff]
      %v5145 = vld [vmem:[%s4954 + $0xa8] sm:$0xff]
      %v5146 = vld [vmem:[%s4954 + $0xb0] sm:$0xff]
      %v5147 = vld [vmem:[%s4954 + $0xc0] sm:$0xff]
      %v5148 = vld [vmem:[%s4954 + $0xc8] sm:$0xff]
      %v5149 = vld [vmem:[%s4954 + $0xd8] sm:$0xff]
      %v5150 = vld [vmem:[%s4954 + $0xe0] sm:$0xff]
      %v5151 = vld [vmem:[%s4954 + $0xf0] sm:$0xff]
      %v5152 = vld [vmem:[%s4954 + $0xf8] sm:$0xff]
      %v5153 = vld [vmem:[%s4954 + $0x108] sm:$0xff]
      %v5154 = vld [vmem:[%s4954 + $0x110] sm:$0xff]
      %v5155 = vld [vmem:[%s4954 + $0x120] sm:$0xff]
      %v5156 = vld [vmem:[%s4954 + $0x128] sm:$0xff]
      %v5157 = vld [vmem:[%s4954 + $0x138] sm:$0xff]
      %v5158 = vld [vmem:[%s4954 + $0x140] sm:$0xff]
      %v5159 = vld [vmem:[%s4954 + $0x150] sm:$0xff]
      %v5160 = vld [vmem:[%s4954 + $0x158] sm:$0xff]
      %v5161 = vld [vmem:[%s4954 + $0x168] sm:$0xff]
      %v5162 = vld [vmem:[%s4954 + $0x170] sm:$0xff]
      %v5163 = vpack.c.bf16 %v5132, %v5131
      %v5164 = vpack.c.bf16 %v5134, %v5133
      %v5165 = vpack.c.bf16 %v5136, %v5135
      %v5166 = vpack.c.bf16 %v5138, %v5137
      %v5167 = vpack.c.bf16 %v5140, %v5139
      %v5168 = vpack.c.bf16 %v5142, %v5141
      %v5169 = vpack.c.bf16 %v5144, %v5143
      %v5170 = vpack.c.bf16 %v5146, %v5145
      %v5171 = vpack.c.bf16 %v5148, %v5147
      %v5172 = vpack.c.bf16 %v5150, %v5149
      %v5173 = vpack.c.bf16 %v5152, %v5151
      %v5174 = vpack.c.bf16 %v5154, %v5153
      %v5175 = vpack.c.bf16 %v5156, %v5155
      %v5176 = vpack.c.bf16 %v5158, %v5157
      %v5177 = vpack.c.bf16 %v5160, %v5159
      %v5178 = vpack.c.bf16 %v5162, %v5161
      %v5179 = vld [vmem:[%s4954 + $0x1] sm:$0xff]
      %v5180 = vld [vmem:[%s4954 + $0x9] sm:$0xff]
      %v5181 = vld [vmem:[%s4954 + $0x19] sm:$0xff]
      %v5182 = vld [vmem:[%s4954 + $0x21] sm:$0xff]
      %v5183 = vld [vmem:[%s4954 + $0x31] sm:$0xff]
      %v5184 = vld [vmem:[%s4954 + $0x39] sm:$0xff]
      %v5185 = vld [vmem:[%s4954 + $0x49] sm:$0xff]
      %v5186 = vld [vmem:[%s4954 + $0x51] sm:$0xff]
      %v5187 = vld [vmem:[%s4954 + $0x61] sm:$0xff]
      %v5188 = vld [vmem:[%s4954 + $0x69] sm:$0xff]
      %v5189 = vld [vmem:[%s4954 + $0x79] sm:$0xff]
      %v5190 = vld [vmem:[%s4954 + $0x81] sm:$0xff]
      %v5191 = vld [vmem:[%s4954 + $0x91] sm:$0xff]
      %v5192 = vld [vmem:[%s4954 + $0x99] sm:$0xff]
      %v5193 = vld [vmem:[%s4954 + $0xa9] sm:$0xff]
      %v5194 = vld [vmem:[%s4954 + $0xb1] sm:$0xff]
      %v5195 = vld [vmem:[%s4954 + $0xc1] sm:$0xff]
      %v5196 = vld [vmem:[%s4954 + $0xc9] sm:$0xff]
      %v5197 = vld [vmem:[%s4954 + $0xd9] sm:$0xff]
      %v5198 = vld [vmem:[%s4954 + $0xe1] sm:$0xff]
      %v5199 = vld [vmem:[%s4954 + $0xf1] sm:$0xff]
      %v5200 = vld [vmem:[%s4954 + $0xf9] sm:$0xff]
      %v5201 = vld [vmem:[%s4954 + $0x109] sm:$0xff]
      %v5202 = vld [vmem:[%s4954 + $0x111] sm:$0xff]
      %v5203 = vld [vmem:[%s4954 + $0x121] sm:$0xff]
      %v5204 = vld [vmem:[%s4954 + $0x129] sm:$0xff]
      %v5205 = vld [vmem:[%s4954 + $0x139] sm:$0xff]
      %v5206 = vld [vmem:[%s4954 + $0x141] sm:$0xff]
      %v5207 = vld [vmem:[%s4954 + $0x151] sm:$0xff]
      %v5208 = vld [vmem:[%s4954 + $0x159] sm:$0xff]
      %v5209 = vld [vmem:[%s4954 + $0x169] sm:$0xff]
      %v5210 = vld [vmem:[%s4954 + $0x171] sm:$0xff]
      %v5211 = vpack.c.bf16 %v5180, %v5179
      %v5212 = vpack.c.bf16 %v5182, %v5181
      %v5213 = vpack.c.bf16 %v5184, %v5183
      %v5214 = vpack.c.bf16 %v5186, %v5185
      %v5215 = vpack.c.bf16 %v5188, %v5187
      %v5216 = vpack.c.bf16 %v5190, %v5189
      %v5217 = vpack.c.bf16 %v5192, %v5191
      %v5218 = vpack.c.bf16 %v5194, %v5193
      %v5219 = vpack.c.bf16 %v5196, %v5195
      %v5220 = vpack.c.bf16 %v5198, %v5197
      %v5221 = vpack.c.bf16 %v5200, %v5199
      %v5222 = vpack.c.bf16 %v5202, %v5201
      %v5223 = vpack.c.bf16 %v5204, %v5203
      %v5224 = vpack.c.bf16 %v5206, %v5205
      %v5225 = vpack.c.bf16 %v5208, %v5207
      %v5226 = vpack.c.bf16 %v5210, %v5209
      %v5227 = vld [vmem:[%s4954 + $0x2] sm:$0xff]
      %v5228 = vld [vmem:[%s4954 + $0xa] sm:$0xff]
      %v5229 = vld [vmem:[%s4954 + $0x1a] sm:$0xff]
      %v5230 = vld [vmem:[%s4954 + $0x22] sm:$0xff]
      %v5231 = vld [vmem:[%s4954 + $0x32] sm:$0xff]
      %v5232 = vld [vmem:[%s4954 + $0x3a] sm:$0xff]
      %v5233 = vld [vmem:[%s4954 + $0x4a] sm:$0xff]
      %v5234 = vld [vmem:[%s4954 + $0x52] sm:$0xff]
      %v5235 = vld [vmem:[%s4954 + $0x62] sm:$0xff]
      %v5236 = vld [vmem:[%s4954 + $0x6a] sm:$0xff]
      %v5237 = vld [vmem:[%s4954 + $0x7a] sm:$0xff]
      %v5238 = vld [vmem:[%s4954 + $0x82] sm:$0xff]
      %v5239 = vld [vmem:[%s4954 + $0x92] sm:$0xff]
      %v5240 = vld [vmem:[%s4954 + $0x9a] sm:$0xff]
      %v5241 = vld [vmem:[%s4954 + $0xaa] sm:$0xff]
      %v5242 = vld [vmem:[%s4954 + $0xb2] sm:$0xff]
      %v5243 = vld [vmem:[%s4954 + $0xc2] sm:$0xff]
      %v5244 = vld [vmem:[%s4954 + $0xca] sm:$0xff]
      %v5245 = vld [vmem:[%s4954 + $0xda] sm:$0xff]
      %v5246 = vld [vmem:[%s4954 + $0xe2] sm:$0xff]
      %v5247 = vld [vmem:[%s4954 + $0xf2] sm:$0xff]
      %v5248 = vld [vmem:[%s4954 + $0xfa] sm:$0xff]
      %v5249 = vld [vmem:[%s4954 + $0x10a] sm:$0xff]
      %v5250 = vld [vmem:[%s4954 + $0x112] sm:$0xff]
      %v5251 = vld [vmem:[%s4954 + $0x122] sm:$0xff]
      %v5252 = vld [vmem:[%s4954 + $0x12a] sm:$0xff]
      %v5253 = vld [vmem:[%s4954 + $0x13a] sm:$0xff]
      %v5254 = vld [vmem:[%s4954 + $0x142] sm:$0xff]
      %v5255 = vld [vmem:[%s4954 + $0x152] sm:$0xff]
      %v5256 = vld [vmem:[%s4954 + $0x15a] sm:$0xff]
      %v5257 = vld [vmem:[%s4954 + $0x16a] sm:$0xff]
      %v5258 = vld [vmem:[%s4954 + $0x172] sm:$0xff]
      %v5259 = vpack.c.bf16 %v5228, %v5227
      %v5260 = vpack.c.bf16 %v5230, %v5229
      %v5261 = vpack.c.bf16 %v5232, %v5231
      %v5262 = vpack.c.bf16 %v5234, %v5233
      %v5263 = vpack.c.bf16 %v5236, %v5235
      %v5264 = vpack.c.bf16 %v5238, %v5237
      %v5265 = vpack.c.bf16 %v5240, %v5239
      %v5266 = vpack.c.bf16 %v5242, %v5241
      %v5267 = vpack.c.bf16 %v5244, %v5243
      %v5268 = vpack.c.bf16 %v5246, %v5245
      %v5269 = vpack.c.bf16 %v5248, %v5247
      %v5270 = vpack.c.bf16 %v5250, %v5249
      %v5271 = vpack.c.bf16 %v5252, %v5251
      %v5272 = vpack.c.bf16 %v5254, %v5253
      %v5273 = vpack.c.bf16 %v5256, %v5255
      %v5274 = vpack.c.bf16 %v5258, %v5257
      %s5275 = scalar_lea.vmem [#allocation5], 48
      %v5276 = vld [vmem:[%s5275] sm:$0xff]
      %v5277 = vld [vmem:[%s5275 + $0x8] sm:$0xff]
      %v5278 = vld [vmem:[%s5275 + $0x18] sm:$0xff]
      %v5279 = vld [vmem:[%s5275 + $0x20] sm:$0xff]
      %v5280 = vld [vmem:[%s5275 + $0x30] sm:$0xff]
      %v5281 = vld [vmem:[%s5275 + $0x38] sm:$0xff]
      %v5282 = vld [vmem:[%s5275 + $0x48] sm:$0xff]
      %v5283 = vld [vmem:[%s5275 + $0x50] sm:$0xff]
      %v5284 = vld [vmem:[%s5275 + $0x60] sm:$0xff]
      %v5285 = vld [vmem:[%s5275 + $0x68] sm:$0xff]
      %v5286 = vld [vmem:[%s5275 + $0x78] sm:$0xff]
      %v5287 = vld [vmem:[%s5275 + $0x80] sm:$0xff]
      %v5288 = vld [vmem:[%s5275 + $0x90] sm:$0xff]
      %v5289 = vld [vmem:[%s5275 + $0x98] sm:$0xff]
      %v5290 = vld [vmem:[%s5275 + $0xa8] sm:$0xff]
      %v5291 = vld [vmem:[%s5275 + $0xb0] sm:$0xff]
      %v5292 = vld [vmem:[%s5275 + $0xc0] sm:$0xff]
      %v5293 = vld [vmem:[%s5275 + $0xc8] sm:$0xff]
      %v5294 = vld [vmem:[%s5275 + $0xd8] sm:$0xff]
      %v5295 = vld [vmem:[%s5275 + $0xe0] sm:$0xff]
      %v5296 = vld [vmem:[%s5275 + $0xf0] sm:$0xff]
      %v5297 = vld [vmem:[%s5275 + $0xf8] sm:$0xff]
      %v5298 = vld [vmem:[%s5275 + $0x108] sm:$0xff]
      %v5299 = vld [vmem:[%s5275 + $0x110] sm:$0xff]
      %v5300 = vld [vmem:[%s5275 + $0x120] sm:$0xff]
      %v5301 = vld [vmem:[%s5275 + $0x128] sm:$0xff]
      %v5302 = vld [vmem:[%s5275 + $0x138] sm:$0xff]
      %v5303 = vld [vmem:[%s5275 + $0x140] sm:$0xff]
      %v5304 = vld [vmem:[%s5275 + $0x150] sm:$0xff]
      %v5305 = vld [vmem:[%s5275 + $0x158] sm:$0xff]
      %v5306 = vld [vmem:[%s5275 + $0x168] sm:$0xff]
      %v5307 = vld [vmem:[%s5275 + $0x170] sm:$0xff]
      %v5308 = vpack.c.bf16 %v5277, %v5276
      %v5309 = vpack.c.bf16 %v5279, %v5278
      %v5310 = vpack.c.bf16 %v5281, %v5280
      %v5311 = vpack.c.bf16 %v5283, %v5282
      %v5312 = vpack.c.bf16 %v5285, %v5284
      %v5313 = vpack.c.bf16 %v5287, %v5286
      %v5314 = vpack.c.bf16 %v5289, %v5288
      %v5315 = vpack.c.bf16 %v5291, %v5290
      %v5316 = vpack.c.bf16 %v5293, %v5292
      %v5317 = vpack.c.bf16 %v5295, %v5294
      %v5318 = vpack.c.bf16 %v5297, %v5296
      %v5319 = vpack.c.bf16 %v5299, %v5298
      %v5320 = vpack.c.bf16 %v5301, %v5300
      %v5321 = vpack.c.bf16 %v5303, %v5302
      %v5322 = vpack.c.bf16 %v5305, %v5304
      %v5323 = vpack.c.bf16 %v5307, %v5306
      %v5324 = vld [vmem:[%s5275 + $0x1] sm:$0xff]
      %v5325 = vld [vmem:[%s5275 + $0x9] sm:$0xff]
      %v5326 = vld [vmem:[%s5275 + $0x19] sm:$0xff]
      %v5327 = vld [vmem:[%s5275 + $0x21] sm:$0xff]
      %v5328 = vld [vmem:[%s5275 + $0x31] sm:$0xff]
      %v5329 = vld [vmem:[%s5275 + $0x39] sm:$0xff]
      %v5330 = vld [vmem:[%s5275 + $0x49] sm:$0xff]
      %v5331 = vld [vmem:[%s5275 + $0x51] sm:$0xff]
      %v5332 = vld [vmem:[%s5275 + $0x61] sm:$0xff]
      %v5333 = vld [vmem:[%s5275 + $0x69] sm:$0xff]
      %v5334 = vld [vmem:[%s5275 + $0x79] sm:$0xff]
      %v5335 = vld [vmem:[%s5275 + $0x81] sm:$0xff]
      %v5336 = vld [vmem:[%s5275 + $0x91] sm:$0xff]
      %v5337 = vld [vmem:[%s5275 + $0x99] sm:$0xff]
      %v5338 = vld [vmem:[%s5275 + $0xa9] sm:$0xff]
      %v5339 = vld [vmem:[%s5275 + $0xb1] sm:$0xff]
      %v5340 = vld [vmem:[%s5275 + $0xc1] sm:$0xff]
      %v5341 = vld [vmem:[%s5275 + $0xc9] sm:$0xff]
      %v5342 = vld [vmem:[%s5275 + $0xd9] sm:$0xff]
      %v5343 = vld [vmem:[%s5275 + $0xe1] sm:$0xff]
      %v5344 = vld [vmem:[%s5275 + $0xf1] sm:$0xff]
      %v5345 = vld [vmem:[%s5275 + $0xf9] sm:$0xff]
      %v5346 = vld [vmem:[%s5275 + $0x109] sm:$0xff]
      %v5347 = vld [vmem:[%s5275 + $0x111] sm:$0xff]
      %v5348 = vld [vmem:[%s5275 + $0x121] sm:$0xff]
      %v5349 = vld [vmem:[%s5275 + $0x129] sm:$0xff]
      %v5350 = vld [vmem:[%s5275 + $0x139] sm:$0xff]
      %v5351 = vld [vmem:[%s5275 + $0x141] sm:$0xff]
      %v5352 = vld [vmem:[%s5275 + $0x151] sm:$0xff]
      %v5353 = vld [vmem:[%s5275 + $0x159] sm:$0xff]
      %v5354 = vld [vmem:[%s5275 + $0x169] sm:$0xff]
      %v5355 = vld [vmem:[%s5275 + $0x171] sm:$0xff]
      %v5356 = vpack.c.bf16 %v5325, %v5324
      %v5357 = vpack.c.bf16 %v5327, %v5326
      %v5358 = vpack.c.bf16 %v5329, %v5328
      %v5359 = vpack.c.bf16 %v5331, %v5330
      %v5360 = vpack.c.bf16 %v5333, %v5332
      %v5361 = vpack.c.bf16 %v5335, %v5334
      %v5362 = vpack.c.bf16 %v5337, %v5336
      %v5363 = vpack.c.bf16 %v5339, %v5338
      %v5364 = vpack.c.bf16 %v5341, %v5340
      %v5365 = vpack.c.bf16 %v5343, %v5342
      %v5366 = vpack.c.bf16 %v5345, %v5344
      %v5367 = vpack.c.bf16 %v5347, %v5346
      %v5368 = vpack.c.bf16 %v5349, %v5348
      %v5369 = vpack.c.bf16 %v5351, %v5350
      %v5370 = vpack.c.bf16 %v5353, %v5352
      %v5371 = vpack.c.bf16 %v5355, %v5354
      %v5372 = vld [vmem:[%s5275 + $0x2] sm:$0xff]
      %v5373 = vld [vmem:[%s5275 + $0xa] sm:$0xff]
      %v5374 = vld [vmem:[%s5275 + $0x1a] sm:$0xff]
      %v5375 = vld [vmem:[%s5275 + $0x22] sm:$0xff]
      %v5376 = vld [vmem:[%s5275 + $0x32] sm:$0xff]
      %v5377 = vld [vmem:[%s5275 + $0x3a] sm:$0xff]
      %v5378 = vld [vmem:[%s5275 + $0x4a] sm:$0xff]
      %v5379 = vld [vmem:[%s5275 + $0x52] sm:$0xff]
      %v5380 = vld [vmem:[%s5275 + $0x62] sm:$0xff]
      %v5381 = vld [vmem:[%s5275 + $0x6a] sm:$0xff]
      %v5382 = vld [vmem:[%s5275 + $0x7a] sm:$0xff]
      %v5383 = vld [vmem:[%s5275 + $0x82] sm:$0xff]
      %v5384 = vld [vmem:[%s5275 + $0x92] sm:$0xff]
      %v5385 = vld [vmem:[%s5275 + $0x9a] sm:$0xff]
      %v5386 = vld [vmem:[%s5275 + $0xaa] sm:$0xff]
      %v5387 = vld [vmem:[%s5275 + $0xb2] sm:$0xff]
      %v5388 = vld [vmem:[%s5275 + $0xc2] sm:$0xff]
      %v5389 = vld [vmem:[%s5275 + $0xca] sm:$0xff]
      %v5390 = vld [vmem:[%s5275 + $0xda] sm:$0xff]
      %v5391 = vld [vmem:[%s5275 + $0xe2] sm:$0xff]
      %v5392 = vld [vmem:[%s5275 + $0xf2] sm:$0xff]
      %v5393 = vld [vmem:[%s5275 + $0xfa] sm:$0xff]
      %v5394 = vld [vmem:[%s5275 + $0x10a] sm:$0xff]
      %v5395 = vld [vmem:[%s5275 + $0x112] sm:$0xff]
      %v5396 = vld [vmem:[%s5275 + $0x122] sm:$0xff]
      %v5397 = vld [vmem:[%s5275 + $0x12a] sm:$0xff]
      %v5398 = vld [vmem:[%s5275 + $0x13a] sm:$0xff]
      %v5399 = vld [vmem:[%s5275 + $0x142] sm:$0xff]
      %v5400 = vld [vmem:[%s5275 + $0x152] sm:$0xff]
      %v5401 = vld [vmem:[%s5275 + $0x15a] sm:$0xff]
      %v5402 = vld [vmem:[%s5275 + $0x16a] sm:$0xff]
      %v5403 = vld [vmem:[%s5275 + $0x172] sm:$0xff]
      %v5404 = vpack.c.bf16 %v5373, %v5372
      %v5405 = vpack.c.bf16 %v5375, %v5374
      %v5406 = vpack.c.bf16 %v5377, %v5376
      %v5407 = vpack.c.bf16 %v5379, %v5378
      %v5408 = vpack.c.bf16 %v5381, %v5380
      %v5409 = vpack.c.bf16 %v5383, %v5382
      %v5410 = vpack.c.bf16 %v5385, %v5384
      %v5411 = vpack.c.bf16 %v5387, %v5386
      %v5412 = vpack.c.bf16 %v5389, %v5388
      %v5413 = vpack.c.bf16 %v5391, %v5390
      %v5414 = vpack.c.bf16 %v5393, %v5392
      %v5415 = vpack.c.bf16 %v5395, %v5394
      %v5416 = vpack.c.bf16 %v5397, %v5396
      %v5417 = vpack.c.bf16 %v5399, %v5398
      %v5418 = vpack.c.bf16 %v5401, %v5400
      %v5419 = vpack.c.bf16 %v5403, %v5402
      %5436 = vrot.lane.b32.xlu0 %v5067, 64
      %v5437 = vpop.permute.xlu0 %5436
      %5438 = vrot.lane.b32.xlu0 %v5068, 64
      %v5439 = vpop.permute.xlu0 %5438
      %5440 = vrot.lane.b32.xlu0 %v5069, 64
      %v5441 = vpop.permute.xlu0 %5440
      %5442 = vrot.lane.b32.xlu0 %v5070, 64
      %v5443 = vpop.permute.xlu0 %5442
      %5444 = vrot.lane.b32.xlu0 %v5071, 64
      %v5445 = vpop.permute.xlu0 %5444
      %5446 = vrot.lane.b32.xlu0 %v5072, 64
      %v5447 = vpop.permute.xlu0 %5446
      %5448 = vrot.lane.b32.xlu0 %v5073, 64
      %v5449 = vpop.permute.xlu0 %5448
      %5450 = vrot.lane.b32.xlu0 %v5074, 64
      %v5451 = vpop.permute.xlu0 %5450
      %5452 = vrot.lane.b32.xlu0 %v5075, 64
      %v5453 = vpop.permute.xlu0 %5452
      %5454 = vrot.lane.b32.xlu0 %v5076, 64
      %v5455 = vpop.permute.xlu0 %5454
      %5456 = vrot.lane.b32.xlu0 %v5077, 64
      %v5457 = vpop.permute.xlu0 %5456
      %5458 = vrot.lane.b32.xlu0 %v5078, 64
      %v5459 = vpop.permute.xlu0 %5458
      %5460 = vrot.lane.b32.xlu0 %v5079, 64
      %v5461 = vpop.permute.xlu0 %5460
      %5462 = vrot.lane.b32.xlu0 %v5080, 64
      %v5463 = vpop.permute.xlu0 %5462
      %5464 = vrot.lane.b32.xlu0 %v5081, 64
      %v5465 = vpop.permute.xlu0 %5464
      %5466 = vrot.lane.b32.xlu0 %v5082, 64
      %v5467 = vpop.permute.xlu0 %5466
      %5484 = vrot.lane.b32.xlu0 %v5163, 64
      %v5485 = vpop.permute.xlu0 %5484
      %5486 = vrot.lane.b32.xlu0 %v5164, 64
      %v5487 = vpop.permute.xlu0 %5486
      %5488 = vrot.lane.b32.xlu0 %v5165, 64
      %v5489 = vpop.permute.xlu0 %5488
      %5490 = vrot.lane.b32.xlu0 %v5166, 64
      %v5491 = vpop.permute.xlu0 %5490
      %5492 = vrot.lane.b32.xlu0 %v5167, 64
      %v5493 = vpop.permute.xlu0 %5492
      %5494 = vrot.lane.b32.xlu0 %v5168, 64
      %v5495 = vpop.permute.xlu0 %5494
      %5496 = vrot.lane.b32.xlu0 %v5169, 64
      %v5497 = vpop.permute.xlu0 %5496
      %5498 = vrot.lane.b32.xlu0 %v5170, 64
      %v5499 = vpop.permute.xlu0 %5498
      %5500 = vrot.lane.b32.xlu0 %v5171, 64
      %v5501 = vpop.permute.xlu0 %5500
      %5502 = vrot.lane.b32.xlu0 %v5172, 64
      %v5503 = vpop.permute.xlu0 %5502
      %5504 = vrot.lane.b32.xlu0 %v5173, 64
      %v5505 = vpop.permute.xlu0 %5504
      %5506 = vrot.lane.b32.xlu0 %v5174, 64
      %v5507 = vpop.permute.xlu0 %5506
      %5508 = vrot.lane.b32.xlu0 %v5175, 64
      %v5509 = vpop.permute.xlu0 %5508
      %5510 = vrot.lane.b32.xlu0 %v5176, 64
      %v5511 = vpop.permute.xlu0 %5510
      %5512 = vrot.lane.b32.xlu0 %v5177, 64
      %v5513 = vpop.permute.xlu0 %5512
      %5514 = vrot.lane.b32.xlu0 %v5178, 64
      %v5515 = vpop.permute.xlu0 %5514
      %5532 = vrot.lane.b32.xlu0 %v5259, 64
      %v5533 = vpop.permute.xlu0 %5532
      %5534 = vrot.lane.b32.xlu0 %v5260, 64
      %v5535 = vpop.permute.xlu0 %5534
      %5536 = vrot.lane.b32.xlu0 %v5261, 64
      %v5537 = vpop.permute.xlu0 %5536
      %5538 = vrot.lane.b32.xlu0 %v5262, 64
      %v5539 = vpop.permute.xlu0 %5538
      %5540 = vrot.lane.b32.xlu0 %v5263, 64
      %v5541 = vpop.permute.xlu0 %5540
      %5542 = vrot.lane.b32.xlu0 %v5264, 64
      %v5543 = vpop.permute.xlu0 %5542
      %5544 = vrot.lane.b32.xlu0 %v5265, 64
      %v5545 = vpop.permute.xlu0 %5544
      %5546 = vrot.lane.b32.xlu0 %v5266, 64
      %v5547 = vpop.permute.xlu0 %5546
      %5548 = vrot.lane.b32.xlu0 %v5267, 64
      %v5549 = vpop.permute.xlu0 %5548
      %5550 = vrot.lane.b32.xlu0 %v5268, 64
      %v5551 = vpop.permute.xlu0 %5550
      %5552 = vrot.lane.b32.xlu0 %v5269, 64
      %v5553 = vpop.permute.xlu0 %5552
      %5554 = vrot.lane.b32.xlu0 %v5270, 64
      %v5555 = vpop.permute.xlu0 %5554
      %5556 = vrot.lane.b32.xlu0 %v5271, 64
      %v5557 = vpop.permute.xlu0 %5556
      %5558 = vrot.lane.b32.xlu0 %v5272, 64
      %v5559 = vpop.permute.xlu0 %5558
      %5560 = vrot.lane.b32.xlu0 %v5273, 64
      %v5561 = vpop.permute.xlu0 %5560
      %5562 = vrot.lane.b32.xlu0 %v5274, 64
      %v5563 = vpop.permute.xlu0 %5562
      %5580 = vrot.lane.b32.xlu0 %v5356, 64
      %v5581 = vpop.permute.xlu0 %5580
      %5582 = vrot.lane.b32.xlu0 %v5357, 64
      %v5583 = vpop.permute.xlu0 %5582
      %5584 = vrot.lane.b32.xlu0 %v5358, 64
      %v5585 = vpop.permute.xlu0 %5584
      %5586 = vrot.lane.b32.xlu0 %v5359, 64
      %v5587 = vpop.permute.xlu0 %5586
      %5588 = vrot.lane.b32.xlu0 %v5360, 64
      %v5589 = vpop.permute.xlu0 %5588
      %5590 = vrot.lane.b32.xlu0 %v5361, 64
      %v5591 = vpop.permute.xlu0 %5590
      %5592 = vrot.lane.b32.xlu0 %v5362, 64
      %v5593 = vpop.permute.xlu0 %5592
      %5594 = vrot.lane.b32.xlu0 %v5363, 64
      %v5595 = vpop.permute.xlu0 %5594
      %5596 = vrot.lane.b32.xlu0 %v5364, 64
      %v5597 = vpop.permute.xlu0 %5596
      %5598 = vrot.lane.b32.xlu0 %v5365, 64
      %v5599 = vpop.permute.xlu0 %5598
      %5600 = vrot.lane.b32.xlu0 %v5366, 64
      %v5601 = vpop.permute.xlu0 %5600
      %5602 = vrot.lane.b32.xlu0 %v5367, 64
      %v5603 = vpop.permute.xlu0 %5602
      %5604 = vrot.lane.b32.xlu0 %v5368, 64
      %v5605 = vpop.permute.xlu0 %5604
      %5606 = vrot.lane.b32.xlu0 %v5369, 64
      %v5607 = vpop.permute.xlu0 %5606
      %5608 = vrot.lane.b32.xlu0 %v5370, 64
      %v5609 = vpop.permute.xlu0 %5608
      %5610 = vrot.lane.b32.xlu0 %v5371, 64
      %v5611 = vpop.permute.xlu0 %5610
      %v5614 = vsel %vm2940, %v5019, %v5437
      %v5618 = vsel %vm2940, %v5020, %v5439
      %v5622 = vsel %vm2940, %v5021, %v5441
      %v5626 = vsel %vm2940, %v5022, %v5443
      %v5630 = vsel %vm2940, %v5023, %v5445
      %v5634 = vsel %vm2940, %v5024, %v5447
      %v5638 = vsel %vm2940, %v5025, %v5449
      %v5642 = vsel %vm2940, %v5026, %v5451
      %v5646 = vsel %vm2940, %v5027, %v5453
      %v5650 = vsel %vm2940, %v5028, %v5455
      %v5654 = vsel %vm2940, %v5029, %v5457
      %v5658 = vsel %vm2940, %v5030, %v5459
      %v5662 = vsel %vm2940, %v5031, %v5461
      %v5666 = vsel %vm2940, %v5032, %v5463
      %v5670 = vsel %vm2940, %v5033, %v5465
      %v5674 = vsel %vm2940, %v5034, %v5467
      %v5678 = vsel %vm2940, %v5115, %v5485
      %v5682 = vsel %vm2940, %v5116, %v5487
      %v5686 = vsel %vm2940, %v5117, %v5489
      %v5690 = vsel %vm2940, %v5118, %v5491
      %v5694 = vsel %vm2940, %v5119, %v5493
      %v5698 = vsel %vm2940, %v5120, %v5495
      %v5702 = vsel %vm2940, %v5121, %v5497
      %v5706 = vsel %vm2940, %v5122, %v5499
      %v5710 = vsel %vm2940, %v5123, %v5501
      %v5714 = vsel %vm2940, %v5124, %v5503
      %v5718 = vsel %vm2940, %v5125, %v5505
      %v5722 = vsel %vm2940, %v5126, %v5507
      %v5726 = vsel %vm2940, %v5127, %v5509
      %v5730 = vsel %vm2940, %v5128, %v5511
      %v5734 = vsel %vm2940, %v5129, %v5513
      %v5738 = vsel %vm2940, %v5130, %v5515
      %v5742 = vsel %vm2940, %v5211, %v5533
      %v5746 = vsel %vm2940, %v5212, %v5535
      %v5750 = vsel %vm2940, %v5213, %v5537
      %v5754 = vsel %vm2940, %v5214, %v5539
      %v5758 = vsel %vm2940, %v5215, %v5541
      %v5762 = vsel %vm2940, %v5216, %v5543
      %v5766 = vsel %vm2940, %v5217, %v5545
      %v5770 = vsel %vm2940, %v5218, %v5547
      %v5774 = vsel %vm2940, %v5219, %v5549
      %v5778 = vsel %vm2940, %v5220, %v5551
      %v5782 = vsel %vm2940, %v5221, %v5553
      %v5786 = vsel %vm2940, %v5222, %v5555
      %v5790 = vsel %vm2940, %v5223, %v5557
      %v5794 = vsel %vm2940, %v5224, %v5559
      %v5798 = vsel %vm2940, %v5225, %v5561
      %v5802 = vsel %vm2940, %v5226, %v5563
      %v5806 = vsel %vm2940, %v5308, %v5581
      %v5810 = vsel %vm2940, %v5309, %v5583
      %v5814 = vsel %vm2940, %v5310, %v5585
      %v5818 = vsel %vm2940, %v5311, %v5587
      %v5822 = vsel %vm2940, %v5312, %v5589
      %v5826 = vsel %vm2940, %v5313, %v5591
      %v5830 = vsel %vm2940, %v5314, %v5593
      %v5834 = vsel %vm2940, %v5315, %v5595
      %v5838 = vsel %vm2940, %v5316, %v5597
      %v5842 = vsel %vm2940, %v5317, %v5599
      %v5846 = vsel %vm2940, %v5318, %v5601
      %v5850 = vsel %vm2940, %v5319, %v5603
      %v5854 = vsel %vm2940, %v5320, %v5605
      %v5858 = vsel %vm2940, %v5321, %v5607
      %v5862 = vsel %vm2940, %v5322, %v5609
      %v5866 = vsel %vm2940, %v5323, %v5611
      %v5868 = vld [vmem:[%s10] sm:$0xf]
      %v5869 = vld [vmem:[%s10 + $0x4] sm:$0xf]
      %v5870 = vld [vmem:[%s10 + $0x8] sm:$0xf]
      %v5871 = vld [vmem:[%s10 + $0xc] sm:$0xf]
      %v5872 = vld [vmem:[%s10 + $0x10] sm:$0xf]
      %v5873 = vld [vmem:[%s10 + $0x14] sm:$0xf]
      %v5874 = vld [vmem:[%s10 + $0x18] sm:$0xf]
      %v5875 = vld [vmem:[%s10 + $0x1c] sm:$0xf]
      %v5876 = vld [vmem:[%s10 + $0x20] sm:$0xf]
      %v5877 = vld [vmem:[%s10 + $0x24] sm:$0xf]
      %v5878 = vld [vmem:[%s10 + $0x28] sm:$0xf]
      %v5879 = vld [vmem:[%s10 + $0x2c] sm:$0xf]
      %v5880 = vld [vmem:[%s10 + $0x30] sm:$0xf]
      %v5881 = vld [vmem:[%s10 + $0x34] sm:$0xf]
      %v5882 = vld [vmem:[%s10 + $0x38] sm:$0xf]
      %v5883 = vld [vmem:[%s10 + $0x3c] sm:$0xf]
      %v5884 = vld [vmem:[%s10 + $0x40] sm:$0xf]
      %v5885 = vld [vmem:[%s10 + $0x44] sm:$0xf]
      %v5886 = vld [vmem:[%s10 + $0x48] sm:$0xf]
      %v5887 = vld [vmem:[%s10 + $0x4c] sm:$0xf]
      %v5888 = vld [vmem:[%s10 + $0x50] sm:$0xf]
      %v5889 = vld [vmem:[%s10 + $0x54] sm:$0xf]
      %v5890 = vld [vmem:[%s10 + $0x58] sm:$0xf]
      %v5891 = vld [vmem:[%s10 + $0x5c] sm:$0xf]
      %v5892 = vld [vmem:[%s10 + $0x60] sm:$0xf]
      %v5893 = vld [vmem:[%s10 + $0x64] sm:$0xf]
      %v5894 = vld [vmem:[%s10 + $0x68] sm:$0xf]
      %v5895 = vld [vmem:[%s10 + $0x6c] sm:$0xf]
      %v5896 = vld [vmem:[%s10 + $0x70] sm:$0xf]
      %v5897 = vld [vmem:[%s10 + $0x74] sm:$0xf]
      %v5898 = vld [vmem:[%s10 + $0x78] sm:$0xf]
      %v5899 = vld [vmem:[%s10 + $0x7c] sm:$0xf]
      %v5900 = vld [vmem:[%s10 + $0x80] sm:$0xf]
      %v5901 = vld [vmem:[%s10 + $0x84] sm:$0xf]
      %v5902 = vld [vmem:[%s10 + $0x88] sm:$0xf]
      %v5903 = vld [vmem:[%s10 + $0x8c] sm:$0xf]
      %v5904 = vld [vmem:[%s10 + $0x90] sm:$0xf]
      %v5905 = vld [vmem:[%s10 + $0x94] sm:$0xf]
      %v5906 = vld [vmem:[%s10 + $0x98] sm:$0xf]
      %v5907 = vld [vmem:[%s10 + $0x9c] sm:$0xf]
      %v5908 = vld [vmem:[%s10 + $0xa0] sm:$0xf]
      %v5909 = vld [vmem:[%s10 + $0xa4] sm:$0xf]
      %v5910 = vld [vmem:[%s10 + $0xa8] sm:$0xf]
      %v5911 = vld [vmem:[%s10 + $0xac] sm:$0xf]
      %v5912 = vld [vmem:[%s10 + $0xb0] sm:$0xf]
      %v5913 = vld [vmem:[%s10 + $0xb4] sm:$0xf]
      %v5914 = vld [vmem:[%s10 + $0xb8] sm:$0xf]
      %v5915 = vld [vmem:[%s10 + $0xbc] sm:$0xf]
      %v5916 = vld [vmem:[%s10 + $0xc0] sm:$0xf]
      %v5917 = vld [vmem:[%s10 + $0xc4] sm:$0xf]
      %v5918 = vld [vmem:[%s10 + $0xc8] sm:$0xf]
      %v5919 = vld [vmem:[%s10 + $0xcc] sm:$0xf]
      %v5920 = vld [vmem:[%s10 + $0xd0] sm:$0xf]
      %v5921 = vld [vmem:[%s10 + $0xd4] sm:$0xf]
      %v5922 = vld [vmem:[%s10 + $0xd8] sm:$0xf]
      %v5923 = vld [vmem:[%s10 + $0xdc] sm:$0xf]
      %v5924 = vld [vmem:[%s10 + $0xe0] sm:$0xf]
      %v5925 = vld [vmem:[%s10 + $0xe4] sm:$0xf]
      %v5926 = vld [vmem:[%s10 + $0xe8] sm:$0xf]
      %v5927 = vld [vmem:[%s10 + $0xec] sm:$0xf]
      %v5928 = vld [vmem:[%s10 + $0xf0] sm:$0xf]
      %v5929 = vld [vmem:[%s10 + $0xf4] sm:$0xf]
      %v5930 = vld [vmem:[%s10 + $0xf8] sm:$0xf]
      %v5931 = vld [vmem:[%s10 + $0xfc] sm:$0xf]
      %v5932 = vld [vmem:[%s10 + $0x100] sm:$0xf]
      %v5933 = vld [vmem:[%s10 + $0x104] sm:$0xf]
      %v5934 = vld [vmem:[%s10 + $0x108] sm:$0xf]
      %v5935 = vld [vmem:[%s10 + $0x10c] sm:$0xf]
      %v5936 = vld [vmem:[%s10 + $0x110] sm:$0xf]
      %v5937 = vld [vmem:[%s10 + $0x114] sm:$0xf]
      %v5938 = vld [vmem:[%s10 + $0x118] sm:$0xf]
      %v5939 = vld [vmem:[%s10 + $0x11c] sm:$0xf]
      %v5940 = vld [vmem:[%s11] sm:$0x1]
      %v5942 = vlaneseq
      %v5943 = vshrl.u32 %v5942, 7
      %v5944 = vsub.s32 0, %v5943
      %v5945 = vrot.slane %v5940, %v5944
      %v6019 = vunpack.c.l.b16 %v5868
      %v6020 = vunpack.c.l.b16 %v5869
      %v6021 = vunpack.c.l.b16 %v5870
      %v6022 = vunpack.c.l.b16 %v5871
      %v6023 = vunpack.c.l.b16 %v5872
      %v6024 = vunpack.c.l.b16 %v5873
      %v6025 = vunpack.c.l.b16 %v5874
      %v6026 = vunpack.c.l.b16 %v5875
      %v6027 = vunpack.c.l.b16 %v5876
      %v6028 = vunpack.c.l.b16 %v5877
      %v6029 = vunpack.c.l.b16 %v5878
      %v6030 = vunpack.c.l.b16 %v5879
      %v6031 = vunpack.c.l.b16 %v5880
      %v6032 = vunpack.c.l.b16 %v5881
      %v6033 = vunpack.c.l.b16 %v5882
      %v6034 = vunpack.c.l.b16 %v5883
      %v6035 = vunpack.c.l.b16 %v5884
      %v6036 = vunpack.c.l.b16 %v5885
      %v6037 = vunpack.c.l.b16 %v5886
      %v6038 = vunpack.c.l.b16 %v5887
      %v6039 = vunpack.c.l.b16 %v5888
      %v6040 = vunpack.c.l.b16 %v5889
      %v6041 = vunpack.c.l.b16 %v5890
      %v6042 = vunpack.c.l.b16 %v5891
      %v6043 = vunpack.c.l.b16 %v5892
      %v6044 = vunpack.c.l.b16 %v5893
      %v6045 = vunpack.c.l.b16 %v5894
      %v6046 = vunpack.c.l.b16 %v5895
      %v6047 = vunpack.c.l.b16 %v5896
      %v6048 = vunpack.c.l.b16 %v5897
      %v6049 = vunpack.c.l.b16 %v5898
      %v6050 = vunpack.c.l.b16 %v5899
      %v6051 = vunpack.c.l.b16 %v5900
      %v6052 = vunpack.c.l.b16 %v5901
      %v6053 = vunpack.c.l.b16 %v5902
      %v6054 = vunpack.c.l.b16 %v5903
      %v6055 = vunpack.c.l.b16 %v5904
      %v6056 = vunpack.c.l.b16 %v5905
      %v6057 = vunpack.c.l.b16 %v5906
      %v6058 = vunpack.c.l.b16 %v5907
      %v6059 = vunpack.c.l.b16 %v5908
      %v6060 = vunpack.c.l.b16 %v5909
      %v6061 = vunpack.c.l.b16 %v5910
      %v6062 = vunpack.c.l.b16 %v5911
      %v6063 = vunpack.c.l.b16 %v5912
      %v6064 = vunpack.c.l.b16 %v5913
      %v6065 = vunpack.c.l.b16 %v5914
      %v6066 = vunpack.c.l.b16 %v5915
      %v6067 = vunpack.c.l.b16 %v5916
      %v6068 = vunpack.c.l.b16 %v5917
      %v6069 = vunpack.c.l.b16 %v5918
      %v6070 = vunpack.c.l.b16 %v5919
      %v6071 = vunpack.c.l.b16 %v5920
      %v6072 = vunpack.c.l.b16 %v5921
      %v6073 = vunpack.c.l.b16 %v5922
      %v6074 = vunpack.c.l.b16 %v5923
      %v6075 = vunpack.c.l.b16 %v5924
      %v6076 = vunpack.c.l.b16 %v5925
      %v6077 = vunpack.c.l.b16 %v5926
      %v6078 = vunpack.c.l.b16 %v5927
      %v6079 = vunpack.c.l.b16 %v5928
      %v6080 = vunpack.c.l.b16 %v5929
      %v6081 = vunpack.c.l.b16 %v5930
      %v6082 = vunpack.c.l.b16 %v5931
      %v6083 = vunpack.c.l.b16 %v5932
      %v6084 = vunpack.c.l.b16 %v5933
      %v6085 = vunpack.c.l.b16 %v5934
      %v6086 = vunpack.c.l.b16 %v5935
      %v6087 = vunpack.c.l.b16 %v5936
      %v6088 = vunpack.c.l.b16 %v5937
      %v6089 = vunpack.c.l.b16 %v5938
      %v6090 = vunpack.c.l.b16 %v5939
      %v6091 = vpack.c.b16 %v6020, %v6019
      %v6092 = vpack.c.b16 %v6022, %v6021
      %v6093 = vpack.c.b16 %v6024, %v6023
      %v6094 = vpack.c.b16 %v6026, %v6025
      %v6095 = vpack.c.b16 %v6028, %v6027
      %v6096 = vpack.c.b16 %v6030, %v6029
      %v6097 = vpack.c.b16 %v6032, %v6031
      %v6098 = vpack.c.b16 %v6034, %v6033
      %v6099 = vpack.c.b16 %v6036, %v6035
      %v6100 = vpack.c.b16 %v6038, %v6037
      %v6101 = vpack.c.b16 %v6040, %v6039
      %v6102 = vpack.c.b16 %v6042, %v6041
      %v6103 = vpack.c.b16 %v6044, %v6043
      %v6104 = vpack.c.b16 %v6046, %v6045
      %v6105 = vpack.c.b16 %v6048, %v6047
      %v6106 = vpack.c.b16 %v6050, %v6049
      %v6107 = vpack.c.b16 %v6052, %v6051
      %v6108 = vpack.c.b16 %v6054, %v6053
      %v6109 = vpack.c.b16 %v6056, %v6055
      %v6110 = vpack.c.b16 %v6058, %v6057
      %v6111 = vpack.c.b16 %v6060, %v6059
      %v6112 = vpack.c.b16 %v6062, %v6061
      %v6113 = vpack.c.b16 %v6064, %v6063
      %v6114 = vpack.c.b16 %v6066, %v6065
      %v6115 = vpack.c.b16 %v6068, %v6067
      %v6116 = vpack.c.b16 %v6070, %v6069
      %v6117 = vpack.c.b16 %v6072, %v6071
      %v6118 = vpack.c.b16 %v6074, %v6073
      %v6119 = vpack.c.b16 %v6076, %v6075
      %v6120 = vpack.c.b16 %v6078, %v6077
      %v6121 = vpack.c.b16 %v6080, %v6079
      %v6122 = vpack.c.b16 %v6082, %v6081
      %v6123 = vpack.c.b16 %v6084, %v6083
      %v6124 = vpack.c.b16 %v6086, %v6085
      %v6125 = vpack.c.b16 %v6088, %v6087
      %v6126 = vpack.c.b16 %v6090, %v6089
      %v6164 = vsel %vm2940, %v5404, 0
      %v6167 = vsel %vm2940, %v5405, 0
      %v6170 = vsel %vm2940, %v5406, 0
      %v6173 = vsel %vm2940, %v5407, 0
      %v6176 = vsel %vm2940, %v5408, 0
      %v6179 = vsel %vm2940, %v5409, 0
      %v6182 = vsel %vm2940, %v5410, 0
      %v6185 = vsel %vm2940, %v5411, 0
      %v6188 = vsel %vm2940, %v5412, 0
      %v6191 = vsel %vm2940, %v5413, 0
      %v6194 = vsel %vm2940, %v5414, 0
      %v6197 = vsel %vm2940, %v5415, 0
      %v6200 = vsel %vm2940, %v5416, 0
      %v6203 = vsel %vm2940, %v5417, 0
      %v6206 = vsel %vm2940, %v5418, 0
      %v6209 = vsel %vm2940, %v5419, 0
      %6211 = vmatprep.subr.bf16.mxu0 0
      %6212 = vmatpush1.bf16.msra.mxu0 %v6098
      %6213 = vmatprep.subr.bf16.mxu0 0
      %6214 = vmatpush1.bf16.msra.mxu0 %v6097
      %6215 = vmatprep.subr.bf16.mxu0 0
      %6216 = vmatpush1.bf16.msra.mxu0 %v6096
      %6217 = vmatprep.subr.bf16.mxu0 0
      %6218 = vmatpush1.bf16.msra.mxu0 %v6095
      %6219 = vmatprep.subr.bf16.mxu0 0
      %6220 = vmatpush1.bf16.msra.mxu0 %v6094
      %6221 = vmatprep.subr.bf16.mxu0 0
      %6222 = vmatpush1.bf16.msra.mxu0 %v6093
      %6223 = vmatprep.subr.bf16.mxu0 0
      %6224 = vmatpush1.bf16.msra.mxu0 %v6092
      %6225 = vmatprep.subr.bf16.mxu0 0
      %6226 = vmatpush1.bf16.msra.mxu0 %v6091
      %6227 = vmatprep.subr.bf16.mxu0 0
      %6228 = vmatpush2.bf16.msra.mxu0 %v6106
      %6229 = vmatprep.subr.bf16.mxu0 0
      %6230 = vmatpush2.bf16.msra.mxu0 %v6105
      %6231 = vmatprep.subr.bf16.mxu0 0
      %6232 = vmatpush2.bf16.msra.mxu0 %v6104
      %6233 = vmatprep.subr.bf16.mxu0 0
      %6234 = vmatpush2.bf16.msra.mxu0 %v6103
      %6235 = vmatprep.subr.bf16.mxu0 0
      %6236 = vmatpush2.bf16.msra.mxu0 %v6102
      %6237 = vmatprep.subr.bf16.mxu0 0
      %6238 = vmatpush2.bf16.msra.mxu0 %v6101
      %6239 = vmatprep.subr.bf16.mxu0 0
      %6240 = vmatpush2.bf16.msra.mxu0 %v6100
      %6241 = vmatprep.subr.bf16.mxu0 0
      %6242 = vmatpush2.bf16.msra.mxu0 %v6099
      %6243 = vmatprep.mubr.bf16.mxu0 %v5678
      %6244 = vmatmul.mubr.bf16.gmra.mxu0 %v5614
      %v6245 = vpop.f32.mrf.mxu0
      %v6246 = vadd.f32 %v5945, %v6245
      %v6247 = vpop.f32.mrf.mxu0
      %v6248 = vpop.f32.mrf.mxu0
      %v6249 = vadd.f32 %v5945, %v6248
      %v6250 = vpop.f32.mrf.mxu0
      %6251 = vmatprep.mubr.bf16.mxu0 %v5682
      %6252 = vmatmul.mubr.bf16.gmra.mxu0 %v5618
      %v6253 = vpop.f32.mrf.mxu0
      %v6254 = vadd.f32 %v5945, %v6253
      %v6255 = vpop.f32.mrf.mxu0
      %v6256 = vpop.f32.mrf.mxu0
      %v6257 = vadd.f32 %v5945, %v6256
      %v6258 = vpop.f32.mrf.mxu0
      %6259 = vmatprep.mubr.bf16.mxu0 %v5686
      %6260 = vmatmul.mubr.bf16.gmra.mxu0 %v5622
      %v6261 = vpop.f32.mrf.mxu0
      %v6262 = vadd.f32 %v5945, %v6261
      %v6263 = vpop.f32.mrf.mxu0
      %v6264 = vpop.f32.mrf.mxu0
      %v6265 = vadd.f32 %v5945, %v6264
      %v6266 = vpop.f32.mrf.mxu0
      %6267 = vmatprep.mubr.bf16.mxu0 %v5690
      %6268 = vmatmul.mubr.bf16.gmra.mxu0 %v5626
      %v6269 = vpop.f32.mrf.mxu0
      %v6270 = vadd.f32 %v5945, %v6269
      %v6271 = vpop.f32.mrf.mxu0
      %v6272 = vpop.f32.mrf.mxu0
      %v6273 = vadd.f32 %v5945, %v6272
      %v6274 = vpop.f32.mrf.mxu0
      %6275 = vmatprep.mubr.bf16.mxu0 %v5694
      %6276 = vmatmul.mubr.bf16.gmra.mxu0 %v5630
      %v6277 = vpop.f32.mrf.mxu0
      %v6278 = vadd.f32 %v5945, %v6277
      %v6279 = vpop.f32.mrf.mxu0
      %v6280 = vpop.f32.mrf.mxu0
      %v6281 = vadd.f32 %v5945, %v6280
      %v6282 = vpop.f32.mrf.mxu0
      %6283 = vmatprep.mubr.bf16.mxu0 %v5698
      %6284 = vmatmul.mubr.bf16.gmra.mxu0 %v5634
      %v6285 = vpop.f32.mrf.mxu0
      %v6286 = vadd.f32 %v5945, %v6285
      %v6287 = vpop.f32.mrf.mxu0
      %v6288 = vpop.f32.mrf.mxu0
      %v6289 = vadd.f32 %v5945, %v6288
      %v6290 = vpop.f32.mrf.mxu0
      %6291 = vmatprep.mubr.bf16.mxu0 %v5702
      %6292 = vmatmul.mubr.bf16.gmra.mxu0 %v5638
      %v6293 = vpop.f32.mrf.mxu0
      %v6294 = vadd.f32 %v5945, %v6293
      %v6295 = vpop.f32.mrf.mxu0
      %v6296 = vpop.f32.mrf.mxu0
      %v6297 = vadd.f32 %v5945, %v6296
      %v6298 = vpop.f32.mrf.mxu0
      %6299 = vmatprep.mubr.bf16.mxu0 %v5706
      %6300 = vmatmul.mubr.bf16.gmra.mxu0 %v5642
      %v6301 = vpop.f32.mrf.mxu0
      %v6302 = vadd.f32 %v5945, %v6301
      %v6303 = vpop.f32.mrf.mxu0
      %v6304 = vpop.f32.mrf.mxu0
      %v6305 = vadd.f32 %v5945, %v6304
      %v6306 = vpop.f32.mrf.mxu0
      %6307 = vmatprep.mubr.bf16.mxu0 %v5710
      %6308 = vmatmul.mubr.bf16.gmra.mxu0 %v5646
      %v6309 = vpop.f32.mrf.mxu0
      %v6310 = vadd.f32 %v5945, %v6309
      %v6311 = vpop.f32.mrf.mxu0
      %v6312 = vpop.f32.mrf.mxu0
      %v6313 = vadd.f32 %v5945, %v6312
      %v6314 = vpop.f32.mrf.mxu0
      %6315 = vmatprep.mubr.bf16.mxu0 %v5714
      %6316 = vmatmul.mubr.bf16.gmra.mxu0 %v5650
      %v6317 = vpop.f32.mrf.mxu0
      %v6318 = vadd.f32 %v5945, %v6317
      %v6319 = vpop.f32.mrf.mxu0
      %v6320 = vpop.f32.mrf.mxu0
      %v6321 = vadd.f32 %v5945, %v6320
      %v6322 = vpop.f32.mrf.mxu0
      %6323 = vmatprep.mubr.bf16.mxu0 %v5718
      %6324 = vmatmul.mubr.bf16.gmra.mxu0 %v5654
      %v6325 = vpop.f32.mrf.mxu0
      %v6326 = vadd.f32 %v5945, %v6325
      %v6327 = vpop.f32.mrf.mxu0
      %v6328 = vpop.f32.mrf.mxu0
      %v6329 = vadd.f32 %v5945, %v6328
      %v6330 = vpop.f32.mrf.mxu0
      %6331 = vmatprep.mubr.bf16.mxu0 %v5722
      %6332 = vmatmul.mubr.bf16.gmra.mxu0 %v5658
      %v6333 = vpop.f32.mrf.mxu0
      %v6334 = vadd.f32 %v5945, %v6333
      %v6335 = vpop.f32.mrf.mxu0
      %v6336 = vpop.f32.mrf.mxu0
      %v6337 = vadd.f32 %v5945, %v6336
      %v6338 = vpop.f32.mrf.mxu0
      %6339 = vmatprep.mubr.bf16.mxu0 %v5726
      %6340 = vmatmul.mubr.bf16.gmra.mxu0 %v5662
      %v6341 = vpop.f32.mrf.mxu0
      %v6342 = vadd.f32 %v5945, %v6341
      %v6343 = vpop.f32.mrf.mxu0
      %v6344 = vpop.f32.mrf.mxu0
      %v6345 = vadd.f32 %v5945, %v6344
      %v6346 = vpop.f32.mrf.mxu0
      %6347 = vmatprep.mubr.bf16.mxu0 %v5730
      %6348 = vmatmul.mubr.bf16.gmra.mxu0 %v5666
      %v6349 = vpop.f32.mrf.mxu0
      %v6350 = vadd.f32 %v5945, %v6349
      %v6351 = vpop.f32.mrf.mxu0
      %v6352 = vpop.f32.mrf.mxu0
      %v6353 = vadd.f32 %v5945, %v6352
      %v6354 = vpop.f32.mrf.mxu0
      %6355 = vmatprep.mubr.bf16.mxu0 %v5734
      %6356 = vmatmul.mubr.bf16.gmra.mxu0 %v5670
      %v6357 = vpop.f32.mrf.mxu0
      %v6358 = vadd.f32 %v5945, %v6357
      %v6359 = vpop.f32.mrf.mxu0
      %v6360 = vpop.f32.mrf.mxu0
      %v6361 = vadd.f32 %v5945, %v6360
      %v6362 = vpop.f32.mrf.mxu0
      %6363 = vmatprep.mubr.bf16.mxu0 %v5738
      %6364 = vmatmul.mubr.bf16.gmra.mxu0 %v5674
      %v6365 = vpop.f32.mrf.mxu0
      %v6366 = vadd.f32 %v5945, %v6365
      %v6367 = vpop.f32.mrf.mxu0
      %v6368 = vpop.f32.mrf.mxu0
      %v6369 = vadd.f32 %v5945, %v6368
      %v6370 = vpop.f32.mrf.mxu0
      %6371 = vdwg.mxu0
      %6372 = vmatprep.subr.bf16.mxu0 0
      %6373 = vmatpush1.bf16.msra.mxu0 %v6114
      %6374 = vmatprep.subr.bf16.mxu0 0
      %6375 = vmatpush1.bf16.msra.mxu0 %v6113
      %6376 = vmatprep.subr.bf16.mxu0 0
      %6377 = vmatpush1.bf16.msra.mxu0 %v6112
      %6378 = vmatprep.subr.bf16.mxu0 0
      %6379 = vmatpush1.bf16.msra.mxu0 %v6111
      %6380 = vmatprep.subr.bf16.mxu0 0
      %6381 = vmatpush1.bf16.msra.mxu0 %v6110
      %6382 = vmatprep.subr.bf16.mxu0 0
      %6383 = vmatpush1.bf16.msra.mxu0 %v6109
      %6384 = vmatprep.subr.bf16.mxu0 0
      %6385 = vmatpush1.bf16.msra.mxu0 %v6108
      %6386 = vmatprep.subr.bf16.mxu0 0
      %6387 = vmatpush1.bf16.msra.mxu0 %v6107
      %6388 = vmatprep.subr.bf16.mxu0 0
      %6389 = vmatpush2.bf16.msra.mxu0 %v6122
      %6390 = vmatprep.subr.bf16.mxu0 0
      %6391 = vmatpush2.bf16.msra.mxu0 %v6121
      %6392 = vmatprep.subr.bf16.mxu0 0
      %6393 = vmatpush2.bf16.msra.mxu0 %v6120
      %6394 = vmatprep.subr.bf16.mxu0 0
      %6395 = vmatpush2.bf16.msra.mxu0 %v6119
      %6396 = vmatprep.subr.bf16.mxu0 0
      %6397 = vmatpush2.bf16.msra.mxu0 %v6118
      %6398 = vmatprep.subr.bf16.mxu0 0
      %6399 = vmatpush2.bf16.msra.mxu0 %v6117
      %6400 = vmatprep.subr.bf16.mxu0 0
      %6401 = vmatpush2.bf16.msra.mxu0 %v6116
      %6402 = vmatprep.subr.bf16.mxu0 0
      %6403 = vmatpush2.bf16.msra.mxu0 %v6115
      %6404 = vmatprep.mubr.bf16.mxu0 %v5806
      %6405 = vmatmul.mubr.bf16.gmra.mxu0 %v5742
      %v6406 = vpop.f32.mrf.mxu0
      %v6407 = vadd.f32 %v6246, %v6406
      %v6408 = vpop.f32.mrf.mxu0
      %v6409 = vpop.f32.mrf.mxu0
      %v6410 = vadd.f32 %v6249, %v6409
      %v6411 = vpop.f32.mrf.mxu0
      %6412 = vmatprep.mubr.bf16.mxu0 %v5810
      %6413 = vmatmul.mubr.bf16.gmra.mxu0 %v5746
      %v6414 = vpop.f32.mrf.mxu0
      %v6415 = vadd.f32 %v6254, %v6414
      %v6416 = vpop.f32.mrf.mxu0
      %v6417 = vpop.f32.mrf.mxu0
      %v6418 = vadd.f32 %v6257, %v6417
      %v6419 = vpop.f32.mrf.mxu0
      %6420 = vmatprep.mubr.bf16.mxu0 %v5814
      %6421 = vmatmul.mubr.bf16.gmra.mxu0 %v5750
      %v6422 = vpop.f32.mrf.mxu0
      %v6423 = vadd.f32 %v6262, %v6422
      %v6424 = vpop.f32.mrf.mxu0
      %v6425 = vpop.f32.mrf.mxu0
      %v6426 = vadd.f32 %v6265, %v6425
      %v6427 = vpop.f32.mrf.mxu0
      %6428 = vmatprep.mubr.bf16.mxu0 %v5818
      %6429 = vmatmul.mubr.bf16.gmra.mxu0 %v5754
      %v6430 = vpop.f32.mrf.mxu0
      %v6431 = vadd.f32 %v6270, %v6430
      %v6432 = vpop.f32.mrf.mxu0
      %v6433 = vpop.f32.mrf.mxu0
      %v6434 = vadd.f32 %v6273, %v6433
      %v6435 = vpop.f32.mrf.mxu0
      %6436 = vmatprep.mubr.bf16.mxu0 %v5822
      %6437 = vmatmul.mubr.bf16.gmra.mxu0 %v5758
      %v6438 = vpop.f32.mrf.mxu0
      %v6439 = vadd.f32 %v6278, %v6438
      %v6440 = vpop.f32.mrf.mxu0
      %v6441 = vpop.f32.mrf.mxu0
      %v6442 = vadd.f32 %v6281, %v6441
      %v6443 = vpop.f32.mrf.mxu0
      %6444 = vmatprep.mubr.bf16.mxu0 %v5826
      %6445 = vmatmul.mubr.bf16.gmra.mxu0 %v5762
      %v6446 = vpop.f32.mrf.mxu0
      %v6447 = vadd.f32 %v6286, %v6446
      %v6448 = vpop.f32.mrf.mxu0
      %v6449 = vpop.f32.mrf.mxu0
      %v6450 = vadd.f32 %v6289, %v6449
      %v6451 = vpop.f32.mrf.mxu0
      %6452 = vmatprep.mubr.bf16.mxu0 %v5830
      %6453 = vmatmul.mubr.bf16.gmra.mxu0 %v5766
      %v6454 = vpop.f32.mrf.mxu0
      %v6455 = vadd.f32 %v6294, %v6454
      %v6456 = vpop.f32.mrf.mxu0
      %v6457 = vpop.f32.mrf.mxu0
      %v6458 = vadd.f32 %v6297, %v6457
      %v6459 = vpop.f32.mrf.mxu0
      %6460 = vmatprep.mubr.bf16.mxu0 %v5834
      %6461 = vmatmul.mubr.bf16.gmra.mxu0 %v5770
      %v6462 = vpop.f32.mrf.mxu0
      %v6463 = vadd.f32 %v6302, %v6462
      %v6464 = vpop.f32.mrf.mxu0
      %v6465 = vpop.f32.mrf.mxu0
      %v6466 = vadd.f32 %v6305, %v6465
      %v6467 = vpop.f32.mrf.mxu0
      %6468 = vmatprep.mubr.bf16.mxu0 %v5838
      %6469 = vmatmul.mubr.bf16.gmra.mxu0 %v5774
      %v6470 = vpop.f32.mrf.mxu0
      %v6471 = vadd.f32 %v6310, %v6470
      %v6472 = vpop.f32.mrf.mxu0
      %v6473 = vpop.f32.mrf.mxu0
      %v6474 = vadd.f32 %v6313, %v6473
      %v6475 = vpop.f32.mrf.mxu0
      %6476 = vmatprep.mubr.bf16.mxu0 %v5842
      %6477 = vmatmul.mubr.bf16.gmra.mxu0 %v5778
      %v6478 = vpop.f32.mrf.mxu0
      %v6479 = vadd.f32 %v6318, %v6478
      %v6480 = vpop.f32.mrf.mxu0
      %v6481 = vpop.f32.mrf.mxu0
      %v6482 = vadd.f32 %v6321, %v6481
      %v6483 = vpop.f32.mrf.mxu0
      %6484 = vmatprep.mubr.bf16.mxu0 %v5846
      %6485 = vmatmul.mubr.bf16.gmra.mxu0 %v5782
      %v6486 = vpop.f32.mrf.mxu0
      %v6487 = vadd.f32 %v6326, %v6486
      %v6488 = vpop.f32.mrf.mxu0
      %v6489 = vpop.f32.mrf.mxu0
      %v6490 = vadd.f32 %v6329, %v6489
      %v6491 = vpop.f32.mrf.mxu0
      %6492 = vmatprep.mubr.bf16.mxu0 %v5850
      %6493 = vmatmul.mubr.bf16.gmra.mxu0 %v5786
      %v6494 = vpop.f32.mrf.mxu0
      %v6495 = vadd.f32 %v6334, %v6494
      %v6496 = vpop.f32.mrf.mxu0
      %v6497 = vpop.f32.mrf.mxu0
      %v6498 = vadd.f32 %v6337, %v6497
      %v6499 = vpop.f32.mrf.mxu0
      %6500 = vmatprep.mubr.bf16.mxu0 %v5854
      %6501 = vmatmul.mubr.bf16.gmra.mxu0 %v5790
      %v6502 = vpop.f32.mrf.mxu0
      %v6503 = vadd.f32 %v6342, %v6502
      %v6504 = vpop.f32.mrf.mxu0
      %v6505 = vpop.f32.mrf.mxu0
      %v6506 = vadd.f32 %v6345, %v6505
      %v6507 = vpop.f32.mrf.mxu0
      %6508 = vmatprep.mubr.bf16.mxu0 %v5858
      %6509 = vmatmul.mubr.bf16.gmra.mxu0 %v5794
      %v6510 = vpop.f32.mrf.mxu0
      %v6511 = vadd.f32 %v6350, %v6510
      %v6512 = vpop.f32.mrf.mxu0
      %v6513 = vpop.f32.mrf.mxu0
      %v6514 = vadd.f32 %v6353, %v6513
      %v6515 = vpop.f32.mrf.mxu0
      %6516 = vmatprep.mubr.bf16.mxu0 %v5862
      %6517 = vmatmul.mubr.bf16.gmra.mxu0 %v5798
      %v6518 = vpop.f32.mrf.mxu0
      %v6519 = vadd.f32 %v6358, %v6518
      %v6520 = vpop.f32.mrf.mxu0
      %v6521 = vpop.f32.mrf.mxu0
      %v6522 = vadd.f32 %v6361, %v6521
      %v6523 = vpop.f32.mrf.mxu0
      %6524 = vmatprep.mubr.bf16.mxu0 %v5866
      %6525 = vmatmul.mubr.bf16.gmra.mxu0 %v5802
      %v6526 = vpop.f32.mrf.mxu0
      %v6527 = vadd.f32 %v6366, %v6526
      %v6528 = vpop.f32.mrf.mxu0
      %v6529 = vpop.f32.mrf.mxu0
      %v6530 = vadd.f32 %v6369, %v6529
      %v6531 = vpop.f32.mrf.mxu0
      %6532 = vdwg.mxu0
      %6533 = vmatprep.subr.bf16.mxu0 0
      %6534 = vmatpush1.bf16.msra.mxu0 0
      %6535 = vmatprep.subr.bf16.mxu0 0
      %6536 = vmatpush1.bf16.msra.mxu0 0
      %6537 = vmatprep.subr.bf16.mxu0 0
      %6538 = vmatpush1.bf16.msra.mxu0 0
      %6539 = vmatprep.subr.bf16.mxu0 0
      %6540 = vmatpush1.bf16.msra.mxu0 0
      %6541 = vmatprep.subr.bf16.mxu0 0
      %6542 = vmatpush1.bf16.msra.mxu0 %v6126
      %6543 = vmatprep.subr.bf16.mxu0 0
      %6544 = vmatpush1.bf16.msra.mxu0 %v6125
      %6545 = vmatprep.subr.bf16.mxu0 0
      %6546 = vmatpush1.bf16.msra.mxu0 %v6124
      %6547 = vmatprep.subr.bf16.mxu0 0
      %6548 = vmatpush1.bf16.msra.mxu0 %v6123
      %6549 = vmatprep.subr.bf16.mxu0 0
      %6550 = vmatpush2.bf16.msra.mxu0 0
      %6551 = vmatprep.subr.bf16.mxu0 0
      %6552 = vmatpush2.bf16.msra.mxu0 0
      %6553 = vmatprep.subr.bf16.mxu0 0
      %6554 = vmatpush2.bf16.msra.mxu0 0
      %6555 = vmatprep.subr.bf16.mxu0 0
      %6556 = vmatpush2.bf16.msra.mxu0 0
      %6557 = vmatprep.subr.bf16.mxu0 0
      %6558 = vmatpush2.bf16.msra.mxu0 0
      %6559 = vmatprep.subr.bf16.mxu0 0
      %6560 = vmatpush2.bf16.msra.mxu0 0
      %6561 = vmatprep.subr.bf16.mxu0 0
      %6562 = vmatpush2.bf16.msra.mxu0 0
      %6563 = vmatprep.subr.bf16.mxu0 0
      %6564 = vmatpush2.bf16.msra.mxu0 0
      %6565 = vmatprep.mubr.bf16.mxu0 0
      %6566 = vmatmul.mubr.bf16.gmra.mxu0 %v6164
      %v6567 = vpop.f32.mrf.mxu0
      %v6568 = vadd.f32 %v6407, %v6567
      %v6569 = vpop.f32.mrf.mxu0
      %v6570 = vpop.f32.mrf.mxu0
      %v6571 = vadd.f32 %v6410, %v6570
      %v6572 = vpop.f32.mrf.mxu0
      %6573 = vmatprep.mubr.bf16.mxu0 0
      %6574 = vmatmul.mubr.bf16.gmra.mxu0 %v6167
      %v6575 = vpop.f32.mrf.mxu0
      %v6576 = vadd.f32 %v6415, %v6575
      %v6577 = vpop.f32.mrf.mxu0
      %v6578 = vpop.f32.mrf.mxu0
      %v6579 = vadd.f32 %v6418, %v6578
      %v6580 = vpop.f32.mrf.mxu0
      %6581 = vmatprep.mubr.bf16.mxu0 0
      %6582 = vmatmul.mubr.bf16.gmra.mxu0 %v6170
      %v6583 = vpop.f32.mrf.mxu0
      %v6584 = vadd.f32 %v6423, %v6583
      %v6585 = vpop.f32.mrf.mxu0
      %v6586 = vpop.f32.mrf.mxu0
      %v6587 = vadd.f32 %v6426, %v6586
      %v6588 = vpop.f32.mrf.mxu0
      %6589 = vmatprep.mubr.bf16.mxu0 0
      %6590 = vmatmul.mubr.bf16.gmra.mxu0 %v6173
      %v6591 = vpop.f32.mrf.mxu0
      %v6592 = vadd.f32 %v6431, %v6591
      %v6593 = vpop.f32.mrf.mxu0
      %v6594 = vpop.f32.mrf.mxu0
      %v6595 = vadd.f32 %v6434, %v6594
      %v6596 = vpop.f32.mrf.mxu0
      %6597 = vmatprep.mubr.bf16.mxu0 0
      %6598 = vmatmul.mubr.bf16.gmra.mxu0 %v6176
      %v6599 = vpop.f32.mrf.mxu0
      %v6600 = vadd.f32 %v6439, %v6599
      %v6601 = vpop.f32.mrf.mxu0
      %v6602 = vpop.f32.mrf.mxu0
      %v6603 = vadd.f32 %v6442, %v6602
      %v6604 = vpop.f32.mrf.mxu0
      %6605 = vmatprep.mubr.bf16.mxu0 0
      %6606 = vmatmul.mubr.bf16.gmra.mxu0 %v6179
      %v6607 = vpop.f32.mrf.mxu0
      %v6608 = vadd.f32 %v6447, %v6607
      %v6609 = vpop.f32.mrf.mxu0
      %v6610 = vpop.f32.mrf.mxu0
      %v6611 = vadd.f32 %v6450, %v6610
      %v6612 = vpop.f32.mrf.mxu0
      %6613 = vmatprep.mubr.bf16.mxu0 0
      %6614 = vmatmul.mubr.bf16.gmra.mxu0 %v6182
      %v6615 = vpop.f32.mrf.mxu0
      %v6616 = vadd.f32 %v6455, %v6615
      %v6617 = vpop.f32.mrf.mxu0
      %v6618 = vpop.f32.mrf.mxu0
      %v6619 = vadd.f32 %v6458, %v6618
      %v6620 = vpop.f32.mrf.mxu0
      %6621 = vmatprep.mubr.bf16.mxu0 0
      %6622 = vmatmul.mubr.bf16.gmra.mxu0 %v6185
      %v6623 = vpop.f32.mrf.mxu0
      %v6624 = vadd.f32 %v6463, %v6623
      %v6625 = vpop.f32.mrf.mxu0
      %v6626 = vpop.f32.mrf.mxu0
      %v6627 = vadd.f32 %v6466, %v6626
      %v6628 = vpop.f32.mrf.mxu0
      %6629 = vmatprep.mubr.bf16.mxu0 0
      %6630 = vmatmul.mubr.bf16.gmra.mxu0 %v6188
      %v6631 = vpop.f32.mrf.mxu0
      %v6632 = vadd.f32 %v6471, %v6631
      %v6633 = vpop.f32.mrf.mxu0
      %v6634 = vpop.f32.mrf.mxu0
      %v6635 = vadd.f32 %v6474, %v6634
      %v6636 = vpop.f32.mrf.mxu0
      %6637 = vmatprep.mubr.bf16.mxu0 0
      %6638 = vmatmul.mubr.bf16.gmra.mxu0 %v6191
      %v6639 = vpop.f32.mrf.mxu0
      %v6640 = vadd.f32 %v6479, %v6639
      %v6641 = vpop.f32.mrf.mxu0
      %v6642 = vpop.f32.mrf.mxu0
      %v6643 = vadd.f32 %v6482, %v6642
      %v6644 = vpop.f32.mrf.mxu0
      %6645 = vmatprep.mubr.bf16.mxu0 0
      %6646 = vmatmul.mubr.bf16.gmra.mxu0 %v6194
      %v6647 = vpop.f32.mrf.mxu0
      %v6648 = vadd.f32 %v6487, %v6647
      %v6649 = vpop.f32.mrf.mxu0
      %v6650 = vpop.f32.mrf.mxu0
      %v6651 = vadd.f32 %v6490, %v6650
      %v6652 = vpop.f32.mrf.mxu0
      %6653 = vmatprep.mubr.bf16.mxu0 0
      %6654 = vmatmul.mubr.bf16.gmra.mxu0 %v6197
      %v6655 = vpop.f32.mrf.mxu0
      %v6656 = vadd.f32 %v6495, %v6655
      %v6657 = vpop.f32.mrf.mxu0
      %v6658 = vpop.f32.mrf.mxu0
      %v6659 = vadd.f32 %v6498, %v6658
      %v6660 = vpop.f32.mrf.mxu0
      %6661 = vmatprep.mubr.bf16.mxu0 0
      %6662 = vmatmul.mubr.bf16.gmra.mxu0 %v6200
      %v6663 = vpop.f32.mrf.mxu0
      %v6664 = vadd.f32 %v6503, %v6663
      %v6665 = vpop.f32.mrf.mxu0
      %v6666 = vpop.f32.mrf.mxu0
      %v6667 = vadd.f32 %v6506, %v6666
      %v6668 = vpop.f32.mrf.mxu0
      %6669 = vmatprep.mubr.bf16.mxu0 0
      %6670 = vmatmul.mubr.bf16.gmra.mxu0 %v6203
      %v6671 = vpop.f32.mrf.mxu0
      %v6672 = vadd.f32 %v6511, %v6671
      %v6673 = vpop.f32.mrf.mxu0
      %v6674 = vpop.f32.mrf.mxu0
      %v6675 = vadd.f32 %v6514, %v6674
      %v6676 = vpop.f32.mrf.mxu0
      %6677 = vmatprep.mubr.bf16.mxu0 0
      %6678 = vmatmul.mubr.bf16.gmra.mxu0 %v6206
      %v6679 = vpop.f32.mrf.mxu0
      %v6680 = vadd.f32 %v6519, %v6679
      %v6681 = vpop.f32.mrf.mxu0
      %v6682 = vpop.f32.mrf.mxu0
      %v6683 = vadd.f32 %v6522, %v6682
      %v6684 = vpop.f32.mrf.mxu0
      %6685 = vmatprep.mubr.bf16.mxu0 0
      %6686 = vmatmul.mubr.bf16.gmra.mxu0 %v6209
      %v6687 = vpop.f32.mrf.mxu0
      %v6688 = vadd.f32 %v6527, %v6687
      %v6689 = vpop.f32.mrf.mxu0
      %v6690 = vpop.f32.mrf.mxu0
      %v6691 = vadd.f32 %v6530, %v6690
      %v6692 = vpop.f32.mrf.mxu0
      %6693 = vdwg.mxu0
      %v6694 = vmax.f32 %v6568, 0.0
      %v6695 = vmax.f32 %v6571, 0.0
      %v6696 = vmax.f32 %v6576, 0.0
      %v6697 = vmax.f32 %v6579, 0.0
      %v6698 = vmax.f32 %v6584, 0.0
      %v6699 = vmax.f32 %v6587, 0.0
      %v6700 = vmax.f32 %v6592, 0.0
      %v6701 = vmax.f32 %v6595, 0.0
      %v6702 = vmax.f32 %v6600, 0.0
      %v6703 = vmax.f32 %v6603, 0.0
      %v6704 = vmax.f32 %v6608, 0.0
      %v6705 = vmax.f32 %v6611, 0.0
      %v6706 = vmax.f32 %v6616, 0.0
      %v6707 = vmax.f32 %v6619, 0.0
      %v6708 = vmax.f32 %v6624, 0.0
      %v6709 = vmax.f32 %v6627, 0.0
      %v6710 = vmax.f32 %v6632, 0.0
      %v6711 = vmax.f32 %v6635, 0.0
      %v6712 = vmax.f32 %v6640, 0.0
      %v6713 = vmax.f32 %v6643, 0.0
      %v6714 = vmax.f32 %v6648, 0.0
      %v6715 = vmax.f32 %v6651, 0.0
      %v6716 = vmax.f32 %v6656, 0.0
      %v6717 = vmax.f32 %v6659, 0.0
      %v6718 = vmax.f32 %v6664, 0.0
      %v6719 = vmax.f32 %v6667, 0.0
      %v6720 = vmax.f32 %v6672, 0.0
      %v6721 = vmax.f32 %v6675, 0.0
      %v6722 = vmax.f32 %v6680, 0.0
      %v6723 = vmax.f32 %v6683, 0.0
      %v6724 = vmax.f32 %v6688, 0.0
      %v6725 = vmax.f32 %v6691, 0.0
      %v6726 = vld [vmem:[%s12] sm:$0x3]
      %v6727 = vpack.c.bf16 %v6695, %v6694
      %v6728 = vpack.c.bf16 %v6697, %v6696
      %v6729 = vpack.c.bf16 %v6699, %v6698
      %v6730 = vpack.c.bf16 %v6701, %v6700
      %v6731 = vpack.c.bf16 %v6703, %v6702
      %v6732 = vpack.c.bf16 %v6705, %v6704
      %v6733 = vpack.c.bf16 %v6707, %v6706
      %v6734 = vpack.c.bf16 %v6709, %v6708
      %v6735 = vpack.c.bf16 %v6711, %v6710
      %v6736 = vpack.c.bf16 %v6713, %v6712
      %v6737 = vpack.c.bf16 %v6715, %v6714
      %v6738 = vpack.c.bf16 %v6717, %v6716
      %v6739 = vpack.c.bf16 %v6719, %v6718
      %v6740 = vpack.c.bf16 %v6721, %v6720
      %v6741 = vpack.c.bf16 %v6723, %v6722
      %v6742 = vpack.c.bf16 %v6725, %v6724
      %v6743 = vld [vmem:[%s13] sm:$0xf]
      %6745 = vset.pattern.permute.xlu0 0
      %6746 = vperm.xlu0 %6745, %v6743
      %v6747 = vpop.permute.xlu0 %6746
      %v6750 = vsel %vm529, %v6726, 0
      %v6753 = vsel %vm529, %v6727, 0
      %v6756 = vsel %vm529, %v6728, 0
      %v6759 = vsel %vm529, %v6729, 0
      %v6762 = vsel %vm529, %v6730, 0
      %v6765 = vsel %vm529, %v6731, 0
      %v6768 = vsel %vm529, %v6732, 0
      %v6771 = vsel %vm529, %v6733, 0
      %v6774 = vsel %vm529, %v6734, 0
      %v6777 = vsel %vm529, %v6735, 0
      %v6780 = vsel %vm529, %v6736, 0
      %v6783 = vsel %vm529, %v6737, 0
      %v6786 = vsel %vm529, %v6738, 0
      %v6789 = vsel %vm529, %v6739, 0
      %v6792 = vsel %vm529, %v6740, 0
      %v6795 = vsel %vm529, %v6741, 0
      %v6798 = vsel %vm529, %v6742, 0
      %6800 = vmatprep.subr.bf16.mxu0 0
      %6801 = vmatpush1.bf16.xpose.msra.mxu0 %v6774
      %6802 = vmatprep.subr.bf16.mxu0 0
      %6803 = vmatpush1.bf16.xpose.msra.mxu0 %v6771
      %6804 = vmatprep.subr.bf16.mxu0 0
      %6805 = vmatpush1.bf16.xpose.msra.mxu0 %v6768
      %6806 = vmatprep.subr.bf16.mxu0 0
      %6807 = vmatpush1.bf16.xpose.msra.mxu0 %v6765
      %6808 = vmatprep.subr.bf16.mxu0 0
      %6809 = vmatpush1.bf16.xpose.msra.mxu0 %v6762
      %6810 = vmatprep.subr.bf16.mxu0 0
      %6811 = vmatpush1.bf16.xpose.msra.mxu0 %v6759
      %6812 = vmatprep.subr.bf16.mxu0 0
      %6813 = vmatpush1.bf16.xpose.msra.mxu0 %v6756
      %6814 = vmatprep.subr.bf16.mxu0 0
      %6815 = vmatpush1.bf16.xpose.msra.mxu0 %v6753
      %6816 = vmatprep.subr.bf16.mxu0 0
      %6817 = vmatpush2.bf16.xpose.msra.mxu0 %v6798
      %6818 = vmatprep.subr.bf16.mxu0 0
      %6819 = vmatpush2.bf16.xpose.msra.mxu0 %v6795
      %6820 = vmatprep.subr.bf16.mxu0 0
      %6821 = vmatpush2.bf16.xpose.msra.mxu0 %v6792
      %6822 = vmatprep.subr.bf16.mxu0 0
      %6823 = vmatpush2.bf16.xpose.msra.mxu0 %v6789
      %6824 = vmatprep.subr.bf16.mxu0 0
      %6825 = vmatpush2.bf16.xpose.msra.mxu0 %v6786
      %6826 = vmatprep.subr.bf16.mxu0 0
      %6827 = vmatpush2.bf16.xpose.msra.mxu0 %v6783
      %6828 = vmatprep.subr.bf16.mxu0 0
      %6829 = vmatpush2.bf16.xpose.msra.mxu0 %v6780
      %6830 = vmatprep.subr.bf16.mxu0 0
      %6831 = vmatpush2.bf16.xpose.msra.mxu0 %v6777
      %6832 = vmatprep.mubr.bf16.mxu0 0
      %6833 = vmatmul.mubr.bf16.gmra.mxu0 %v6750
      %v6834 = vpop.f32.mrf.mxu0
      %v6835 = vadd.f32 %v6747, %v6834
      %v6836 = vpop.f32.mrf.mxu0
      %v6837 = vadd.f32 %v6747, %v6836
      %v6838 = vpop.f32.mrf.mxu0
      %v6839 = vpop.f32.mrf.mxu0
      %6840 = vdwg.mxu0
      %v6843 = vcombine.low %v6835, %v6837
      %6845 = vst [vmem:[%s508] sm:$0xff] %v6843
      %p6846 = scmp.lt.s32.totalorder %s26, 1
      %s6847 = scalar_select %p6846, %s26, 1
      %s6848 = smul.addr %s6847, 2
      %s6849 = smul.addr %s6848, 4
      %s6850 = scalar_lea.vmem %s15, %s6849
      // Predicated region
      $region81: #{unet_forward.1} parent=79 // pred_check
        %p6851 = pneg %p369
      $region82: #{unet_forward.1} parent=79 // pred_check_branch
        %6853 = sbr.rel (%p6851) target = $region84
      $region83: #{unet_forward.1} parent=79 // pred_region
        _
      $region84: #{unet_forward.1} parent=79 // pred_fallthru
        _
    $region80: #{unet_forward.1} parent=5 // pred_fallthru
      _
    %p6854 = scmp.le.s32.totalorder 2, %s21
    // Predicated region
    $region85: #{unet_forward.1} parent=5 // pred_check
      %p6855 = pneg %p6854
    $region86: #{unet_forward.1} parent=5 // pred_check_branch
      %6857 = sbr.rel (%p6855) target = $region88
    $region87: #{unet_forward.1} parent=5 // pred_region
      %s6858 = ssub.s32 %s21, 2
      // Predicated region
      $region89: #{unet_forward.1} parent=87 // pred_check
        %p6859 = pneg %p375
      $region90: #{unet_forward.1} parent=87 // pred_check_branch
        %6861 = sbr.rel (%p6859) target = $region92
      $region91: #{unet_forward.1} parent=87 // pred_region
        %p6862 = scmp.lt.s32.totalorder %s27, 1
        %s6863 = scalar_select %p6862, %s27, 1
        %s6864 = smul.addr %s6863, 2
        %s6865 = smul.addr %s6864, 4
        %s6866 = scalar_lea.vmem %s15, %s6865
      $region92: #{unet_forward.1} parent=87 // pred_fallthru
        _
    $region88: #{unet_forward.1} parent=5 // pred_fallthru
      _
  $region6: #{unet_forward.1} parent=0 // loop_footer
    %s25 = sadd.s32 1, %s21
  $region7: #{unet_forward.1} parent=0 // loop_footer_branch
    %20 = sbr.rel target = $region3
  $region8: #{unet_forward.1} parent=0 // loop_exit
    _

</llo_original>
